<compile_context>
chip_gen: v7x
topology: tpu7x:2x2x1
jax: 0.10.0
libtpu: 0.0.40
codegen_flags: <defaults>
</compile_context>

<pallas_src>
import numpy as np
import jax
import jax.numpy as jnp
from jax import lax
from jax.experimental import pallas as pl
from jax.experimental.pallas import tpu as pltpu

# --- RigidUpdate hyper-parameters (module defaults) ---
NODE_DIM = 32      # node_feat_dim (F)
PAIR_DIM = 8       # pair_feat_dim (C)
VALUE_DIM = 16
QK_DIM = 16
N_QPTS = 4         # RigidUpdate default num_query_points
N_VPTS = 4         # RigidUpdate default num_value_points
N_HEADS = 12

# --- example problem size ---
N_BATCH = 2
SEQ_LEN = 8


# ----------------------------------------------------------------------------
# Pallas kernel: one (batch, query-row-tile) step.  All heads are processed in
# an unrolled loop; the IPA output head / transition MLP / rot-tran linear run
# in the epilogue and a single packed (TILE_I, 2F) slab is written.
# ----------------------------------------------------------------------------
def ipa_rigid_kernel(qkl_ref, qkr_ref, vcat_ref, z_ref, wpb_ref,
                     x_ref, rf_ref, t_ref, mr_ref, mc_ref,
                     wh_ref, vecs_ref, mlp_ref, rotw_ref,
                     out_ref):
    H = qkl_ref.shape[1]
    Ti = x_ref.shape[1]
    F = x_ref.shape[2]
    C, Dv, Vp = PAIR_DIM, VALUE_DIM, N_VPTS
    SQRT13 = float(np.sqrt(1.0 / 3.0))

    mr = mr_ref[0]                                   # (Ti, 1) query-row mask
    mc = mc_ref[0]                                   # (1, L)  key-col mask
    row_ok = mr > 0.5
    # pair mask folded once into an additive bias (applied post-scaling,
    # matching the reference `logits - inf`).
    neg_mask = jnp.where((mr * mc) > 0.5, 0.0, -100000.0)   # (Ti, L)

    z_blk = z_ref[0]                                 # (C, Ti, L), resident

    # frame columns (loaded once, reused by every head)
    tb = t_ref[0]                                    # (Ti, 3), nm
    tx, ty, tz = tb[:, 0:1], tb[:, 1:2], tb[:, 2:3]
    rf = rf_ref[0]                                   # (Ti, 9) row-major R

    acc = jnp.zeros((Ti, F), jnp.float32)

    for h in range(H):                               # statically unrolled
        # ---- fused node + spatial logits: one K=30 NN matmul (K pre-transposed)
        q_h = qkl_ref[0, h]                          # (Ti, Dcat)
        kT_h = qkr_ref[0, h]                         # (Dcat, L)
        logits = jnp.dot(q_h, kT_h, preferred_element_type=jnp.float32)

        # ---- pair bias from the resident z block + tiny SMEM weights
        pb = wpb_ref[h, 0] * z_blk[0]
        for c in range(1, C):
            pb = pb + wpb_ref[h, c] * z_blk[c]

        logits = (logits + pb) * SQRT13 + neg_mask

        # ---- softmax over j
        m = jnp.max(logits, axis=1, keepdims=True)
        e = jnp.exp(logits - m)
        s = jnp.sum(e, axis=1, keepdims=True)
        alpha = e * pl.reciprocal(s, approx=True)    # (Ti, L)

        # ---- node values + global value points aggregated in ONE matmul
        agg = jnp.dot(alpha, vcat_ref[0, h], preferred_element_type=jnp.float32)
        feat_node = agg[:, 0:Dv]                     # (Ti, Dv)
        gx = agg[:, Dv:Dv + Vp] - tx
        gy = agg[:, Dv + Vp:Dv + 2 * Vp] - ty
        gz = agg[:, Dv + 2 * Vp:Dv + 3 * Vp] - tz

        # ---- pair aggregation: fused channel reduce + one small transpose
        p2n_ct = jnp.sum(alpha[None, :, :] * z_blk, axis=-1)     # (C, Ti)
        feat_p2n = jnp.transpose(p2n_ct, (1, 0))                 # (Ti, C)

        # ---- global -> local, distance, direction (single rsqrt per head)
        lx = rf[:, 0:1] * gx + rf[:, 3:4] * gy + rf[:, 6:7] * gz  # R^T (g - t)
        ly = rf[:, 1:2] * gx + rf[:, 4:5] * gy + rf[:, 7:8] * gz
        lz = rf[:, 2:3] * gx + rf[:, 5:6] * gy + rf[:, 8:9] * gz
        nrm2 = lx * lx + ly * ly + lz * lz
        inv = lax.rsqrt(nrm2 + 1e-12)
        dist = nrm2 * inv

        feat_h = jnp.concatenate(
            [feat_p2n, feat_node, lx, ly, lz, dist, lx * inv, ly * inv, lz * inv],
            axis=-1)                                 # (Ti, 52)

        # ---- one K=52 matmul per head into the accumulator
        acc = acc + jnp.dot(feat_h, wh_ref[h], preferred_element_type=jnp.float32)

    # ---- epilogue: out bias/mask/residual/LN, transition MLP + LN,
    #      rot/tran linear head; single packed lane-dense store.
    bout = vecs_ref[0:1, :]
    ln1w, ln1b = vecs_ref[1:2, :], vecs_ref[2:3, :]
    b1, b2, b3 = vecs_ref[3:4, :], vecs_ref[4:5, :], vecs_ref[5:6, :]
    ln2w, ln2b = vecs_ref[6:7, :], vecs_ref[7:8, :]
    brt = vecs_ref[8:9, :]                           # brt padded with zeros to F

    feat_all = jnp.where(row_ok, acc + bout, 0.0)    # mask_zero
    h1 = x_ref[0] + feat_all
    mu = jnp.mean(h1, axis=-1, keepdims=True)
    va = jnp.mean((h1 - mu) ** 2, axis=-1, keepdims=True)
    x1 = (h1 - mu) * lax.rsqrt(va + 1e-5) * ln1w + ln1b

    F_ = x_ref.shape[2]
    w1 = mlp_ref[0:F_, :]
    w2 = mlp_ref[F_:2 * F_, :]
    w3 = mlp_ref[2 * F_:3 * F_, :]
    m1 = jnp.maximum(jnp.dot(x1, w1, preferred_element_type=jnp.float32) + b1, 0.0)
    m2 = jnp.maximum(jnp.dot(m1, w2, preferred_element_type=jnp.float32) + b2, 0.0)
    m3 = jnp.dot(m2, w3, preferred_element_type=jnp.float32) + b3
    h2 = x1 + m3
    mu2 = jnp.mean(h2, axis=-1, keepdims=True)
    va2 = jnp.mean((h2 - mu2) ** 2, axis=-1, keepdims=True)
    x2 = (h2 - mu2) * lax.rsqrt(va2 + 1e-5) * ln2w + ln2b

    # rot/tran pre-activation, zero-padded to F lanes (quaternion composition
    # is hoisted to the wrapper — it is O(L * small) plain XLA work).
    y_pad = jnp.dot(x2, rotw_ref[...], preferred_element_type=jnp.float32) + brt

    out_ref[0] = jnp.concatenate([x2, y_pad], axis=-1)   # (Ti, 2F) single store


# ----------------------------------------------------------------------------
# Helpers shared by wrapper and reference.
# ----------------------------------------------------------------------------
def local_to_global(R, t, p):
    # R: (N, L, 3, 3), t: (N, L, 3), p: (N, L, P, 3) -> (N, L, P, 3)
    return jnp.einsum('nlij,nlpj->nlpi', R, p) + t[:, :, None, :]


def _layer_norm(v, w, b, eps=1e-5):
    mu = jnp.mean(v, axis=-1, keepdims=True)
    va = jnp.mean((v - mu) ** 2, axis=-1, keepdims=True)
    return (v - mu) / jnp.sqrt(va + eps) * w + b


def _quaternion_to_rotmat(q):
    q = q / jnp.linalg.norm(q, axis=-1, keepdims=True)
    w, x_, y_, z_ = q[..., 0], q[..., 1], q[..., 2], q[..., 3]
    rows = jnp.stack([
        1 - 2 * (y_ ** 2 + z_ ** 2), 2 * (x_ * y_ - w * z_), 2 * (x_ * z_ + w * y_),
        2 * (x_ * y_ + w * z_), 1 - 2 * (x_ ** 2 + z_ ** 2), 2 * (y_ * z_ - w * x_),
        2 * (x_ * z_ - w * y_), 2 * (y_ * z_ + w * x_), 1 - 2 * (x_ ** 2 + y_ ** 2),
    ], axis=-1)
    return rows.reshape(q.shape[:-1] + (3, 3))


# ----------------------------------------------------------------------------
# Glue: parameters, per-token linear projections, layout packing, pallas_call.
# ----------------------------------------------------------------------------
def make_params(key):
    H, Dk, Dv = N_HEADS, QK_DIM, VALUE_DIM
    Qp, Vp, C, F = N_QPTS, N_VPTS, PAIR_DIM, NODE_DIM
    Din = H * C + H * Dv + H * Vp * 7
    keys = jax.random.split(key, 21)
    s = 0.1

    def rnd(i, shape, scale=s):
        return (scale * jax.random.normal(keys[i], shape)).astype(jnp.float32)

    p = dict(
        Wq=rnd(0, (H * Dk, F)), Wk=rnd(1, (H * Dk, F)), Wv=rnd(2, (H * Dv, F)),
        Wpb=rnd(3, (H, C)),
        Wqp=rnd(4, (Qp * H * 3, F)), Wkp=rnd(5, (Qp * H * 3, F)),
        Wvp=rnd(6, (Vp * H * 3, F)),
        Wout=rnd(7, (F, Din)), bout=rnd(8, (F,)),
        spatial_coef=jnp.full((1, 1, 1, H), np.log(np.exp(1.0) - 1.0), jnp.float32),
        ln1_w=(1.0 + rnd(9, (F,))), ln1_b=rnd(10, (F,)),
        W1=rnd(11, (F, F)), b1=rnd(12, (F,)),
        W2=rnd(13, (F, F)), b2=rnd(14, (F,)),
        W3=rnd(15, (F, F)), b3=rnd(16, (F,)),
        ln2_w=(1.0 + rnd(17, (F,))), ln2_b=rnd(18, (F,)),
        Wrt=rnd(19, (6, F)), brt=rnd(20, (6,)),
    )
    return p


def rigid_update_pallas(params, R, t, x, z, mask):
    H, Dk, Dv = N_HEADS, QK_DIM, VALUE_DIM
    Qp, Vp, C, F = N_QPTS, N_VPTS, PAIR_DIM, NODE_DIM
    N, L = x.shape[0], x.shape[1]
    t_nm = t / 10.0                                    # angstrom -> nm

    # --- per-token projections (glue, plain XLA) ---
    q = (x @ params['Wq'].T).reshape(N, L, H, Dk)
    k = (x @ params['Wk'].T).reshape(N, L, H, Dk)
    v = (x @ params['Wv'].T).reshape(N, L, H, Dv)
    qp_g = local_to_global(R, t_nm, (x @ params['Wqp'].T).reshape(N, L, H * Qp, 3))
    kp_g = local_to_global(R, t_nm, (x @ params['Wkp'].T).reshape(N, L, H * Qp, 3))
    vp_g = local_to_global(R, t_nm, (x @ params['Wvp'].T).reshape(N, L, H * Vp, 3))

    # --- head-major layouts ---
    qh = jnp.transpose(q, (0, 2, 1, 3))                # (N, H, L, Dk)
    kh = jnp.transpose(k, (0, 2, 1, 3))
    vh = jnp.transpose(v, (0, 2, 1, 3))
    qsh = jnp.transpose(qp_g.reshape(N, L, H, Qp * 3), (0, 2, 1, 3))
    ksh = jnp.transpose(kp_g.reshape(N, L, H, Qp * 3), (0, 2, 1, 3))
    vsh = jnp.transpose(vp_g.reshape(N, L, H, Vp, 3), (0, 2, 1, 3, 4))

    gamma = jax.nn.softplus(params['spatial_coef']).reshape(1, H, 1, 1)
    coef = -gamma * float(np.sqrt(2.0 / (9.0 * Qp))) / 2.0   # (1, H, 1, 1), < 0

    # fused logits operands: q.k/sqrt(Dk) + coef*(||qs||^2 + ||ks||^2 - 2 qs.ks)
    qn = coef * jnp.sum(qsh * qsh, axis=-1, keepdims=True)
    kn = coef * jnp.sum(ksh * ksh, axis=-1, keepdims=True)
    ones = jnp.ones_like(qn)
    qk_lhs = jnp.concatenate(
        [qh * float(1.0 / np.sqrt(Dk)), qsh * (-2.0 * coef), qn, ones], axis=-1)
    qk_rhs = jnp.concatenate([kh, ksh, ones, kn], axis=-1)
    qk_rhs_t = jnp.transpose(qk_rhs, (0, 1, 3, 2))           # (N, H, Dcat, L)
    vcat = jnp.concatenate([vh, vsh[..., 0], vsh[..., 1], vsh[..., 2]], axis=-1)

    # pair features with j lane-dense; pair bias is computed IN-KERNEL from z.
    z_t = jnp.transpose(z, (0, 3, 1, 2))                     # (N, C, L, L)
    wpb = params['Wpb'].astype(jnp.float32)                  # (H, C) -> SMEM

    maskf = mask.astype(jnp.float32)
    mr = maskf[:, :, None]
    mc = maskf[:, None, :]
    rf = R.reshape(N, L, 9)

    # --- out_transform weight re-packed into one head-major (H, 52, F) array ---
    WoutT = params['Wout'].T                           # (Din, F)
    iA = H * C
    iB = iA + H * Dv
    iC_ = iB + H * Vp * 3
    iD = iC_ + H * Vp
    iE = iD + H * Vp * 3
    WA = WoutT[:iA].reshape(H, C, F)
    WB = WoutT[iA:iB].reshape(H, Dv, F)
    WC = jnp.transpose(WoutT[iB:iC_].reshape(H, Vp, 3, F), (0, 2, 1, 3)).reshape(H, 3 * Vp, F)
    WD = WoutT[iC_:iD].reshape(H, Vp, F)
    WE = jnp.transpose(WoutT[iD:iE].reshape(H, Vp, 3, F), (0, 2, 1, 3)).reshape(H, 3 * Vp, F)
    W_heads = jnp.concatenate([WA, WB, WC, WD, WE], axis=1)         # (H, 52, F)

    # --- epilogue parameter packs ---
    vecs = jnp.stack([params['bout'], params['ln1_w'], params['ln1_b'],
                      params['b1'], params['b2'], params['b3'],
                      params['ln2_w'], params['ln2_b'],
                      jnp.pad(params['brt'], (0, F - 6))], axis=0)  # (9, F)
    mlp_w = jnp.concatenate([params['W1'].T, params['W2'].T, params['W3'].T], axis=0)
    rot_w_pad = jnp.concatenate(
        [params['Wrt'].T, jnp.zeros((F, F - 6), jnp.float32)], axis=1)   # (F, F)

    Dcat = Dk + 3 * Qp + 2          # 30
    Dvc = Dv + 3 * Vp               # 28
    Dchunk = C + Dv + 7 * Vp        # 52

    TILE_I = L if L <= 128 else 128
    assert L % TILE_I == 0, "sequence length must be a multiple of the row tile"
    n_i = L // TILE_I

    in_specs = [
        pl.BlockSpec((1, H, TILE_I, Dcat), lambda b, i: (b, 0, i, 0)),   # fused q operand
        pl.BlockSpec((1, H, Dcat, L), lambda b, i: (b, 0, 0, 0)),        # fused K^T operand
        pl.BlockSpec((1, H, L, Dvc), lambda b, i: (b, 0, 0, 0)),         # fused value operand
        pl.BlockSpec((1, C, TILE_I, L), lambda b, i: (b, 0, i, 0)),      # z (C-major)
        pl.BlockSpec(memory_space=pltpu.MemorySpace.SMEM),               # Wpb (H, C)
        pl.BlockSpec((1, TILE_I, F), lambda b, i: (b, i, 0)),            # x
        pl.BlockSpec((1, TILE_I, 9), lambda b, i: (b, i, 0)),            # R (flat)
        pl.BlockSpec((1, TILE_I, 3), lambda b, i: (b, i, 0)),            # t (nm)
        pl.BlockSpec((1, TILE_I, 1), lambda b, i: (b, i, 0)),            # mask row
        pl.BlockSpec((1, 1, L), lambda b, i: (b, 0, 0)),                 # mask col
        pl.BlockSpec((H, Dchunk, F), lambda b, i: (0, 0, 0)),            # out weights (all heads)
        pl.BlockSpec((9, F), lambda b, i: (0, 0)),                       # packed biases / LN
        pl.BlockSpec((3 * F, F), lambda b, i: (0, 0)),                   # transition MLP weights
        pl.BlockSpec((F, F), lambda b, i: (0, 0)),                       # rot/tran weight (padded)
    ]
    out_specs = pl.BlockSpec((1, TILE_I, 2 * F), lambda b, i: (b, i, 0))
    out_shape = jax.ShapeDtypeStruct((N, L, 2 * F), jnp.float32)

    slab = pl.pallas_call(
        ipa_rigid_kernel,
        out_shape=out_shape,
        grid=(N, n_i),
        in_specs=in_specs,
        out_specs=out_specs,
        compiler_params=pltpu.CompilerParams(
            dimension_semantics=("parallel", "parallel"),
            vmem_limit_bytes=32 * 1024 * 1024),
    )(qk_lhs, qk_rhs_t, vcat, z_t, wpb, x, rf, t_nm, mr, mc,
      W_heads, vecs, mlp_w, rot_w_pad)

    # --- cheap quaternion / frame-composition tail in plain XLA (hoisted) ---
    x_new = slab[..., :F]
    y = slab[..., F:F + 6]
    quat = jnp.concatenate([jnp.ones_like(y[..., :1]), y[..., 0:3]], axis=-1)
    Rd = _quaternion_to_rotmat(quat)
    td = y[..., 3:6]
    R_new = jnp.einsum('nlij,nljk->nlik', R, Rd)
    t_new = (jnp.einsum('nlij,nlj->nli', R, td) + t_nm) * 10.0      # nm -> A
    return R_new, t_new, x_new


# ----------------------------------------------------------------------------
# Pure-JAX reference (direct translation of the PyTorch forward) for checking.
# ----------------------------------------------------------------------------
def rigid_update_reference(params, R, t, x, z, mask):
    H, Dk, Dv = N_HEADS, QK_DIM, VALUE_DIM
    Qp, Vp, C, F = N_QPTS, N_VPTS, PAIR_DIM, NODE_DIM
    N, L = x.shape[0], x.shape[1]
    t_nm = t / 10.0

    q = (x @ params['Wq'].T).reshape(N, L, H, Dk)
    k = (x @ params['Wk'].T).reshape(N, L, H, Dk)
    logits_node = jnp.einsum('nihd,njhd->nijh', q, k) / np.sqrt(Dk)
    logits_pair = z @ params['Wpb'].T

    qp = local_to_global(R, t_nm, (x @ params['Wqp'].T).reshape(N, L, H * Qp, 3)).reshape(N, L, H, Qp * 3)
    kp = local_to_global(R, t_nm, (x @ params['Wkp'].T).reshape(N, L, H * Qp, 3)).reshape(N, L, H, Qp * 3)
    sumsq = jnp.sum((qp[:, :, None] - kp[:, None, :]) ** 2, axis=-1)
    gamma = jax.nn.softplus(params['spatial_coef'])
    logits_spatial = sumsq * (-gamma * np.sqrt(2.0 / (9.0 * Qp)) / 2.0)

    logits = (logits_node + logits_pair + logits_spatial) * np.sqrt(1.0 / 3.0)
    mask_row = jnp.broadcast_to(mask[:, :, None, None], logits.shape)
    mask_pair = mask_row & jnp.transpose(mask_row, (0, 2, 1, 3))
    logits = jnp.where(mask_pair, logits, logits - 100000.0)
    alpha = jax.nn.softmax(logits, axis=2)
    alpha = jnp.where(mask_row, alpha, 0.0)

    feat_p2n = jnp.sum(alpha[..., None] * z[:, :, :, None, :], axis=2).reshape(N, L, -1)
    vv = (x @ params['Wv'].T).reshape(N, L, H, Dv)
    feat_node = jnp.sum(alpha[..., None] * vv[:, None], axis=2).reshape(N, L, -1)

    vp = local_to_global(R, t_nm, (x @ params['Wvp'].T).reshape(N, L, H * Vp, 3)).reshape(N, L, H, Vp, 3)
    aggr = jnp.sum(alpha.reshape(N, L, L, H, 1, 1) * vp[:, None], axis=2)
    fp = jnp.einsum('nlji,nlhpj->nlhpi', R, aggr - t_nm[:, :, None, None, :])
    fdist = jnp.linalg.norm(fp, axis=-1)
    fdir = fp / (fdist[..., None] + 1e-4)
    feat_spatial = jnp.concatenate([fp.reshape(N, L, -1), fdist.reshape(N, L, -1),
                                    fdir.reshape(N, L, -1)], axis=-1)

    feat_all = jnp.concatenate([feat_p2n, feat_node, feat_spatial], axis=-1)
    out = feat_all @ params['Wout'].T + params['bout']
    out = jnp.where(mask[:, :, None], out, 0.0)
    x1 = _layer_norm(x + out, params['ln1_w'], params['ln1_b'])

    m1 = jax.nn.relu(x1 @ params['W1'].T + params['b1'])
    m2 = jax.nn.relu(m1 @ params['W2'].T + params['b2'])
    m3 = m2 @ params['W3'].T + params['b3']
    x2 = _layer_norm(x1 + m3, params['ln2_w'], params['ln2_b'])

    y = x2 @ params['Wrt'].T + params['brt']
    quat = jnp.concatenate([jnp.ones_like(y[..., :1]), y[..., 0:3]], axis=-1)
    Rd = _quaternion_to_rotmat(quat)
    td = y[..., 3:6]
    R_new = jnp.einsum('nlij,nljk->nlik', R, Rd)
    t_new = (jnp.einsum('nlij,nlj->nli', R, td) + t_nm) * 10.0
    return R_new, t_new, x2


if __name__ == "__main__":
    key = jax.random.PRNGKey(0)
    kp, kR, kt, kx, kz, km = jax.random.split(key, 6)
    params = make_params(kp)

    A = jax.random.normal(kR, (N_BATCH, SEQ_LEN, 3, 3), jnp.float32)
    Rm, _ = jnp.linalg.qr(A)                                   # orthonormal frames
    Rm = Rm.astype(jnp.float32)
    t = jax.random.normal(kt, (N_BATCH, SEQ_LEN, 3), jnp.float32)
    x = jax.random.normal(kx, (N_BATCH, SEQ_LEN, NODE_DIM), jnp.float32)
    z = jax.random.normal(kz, (N_BATCH, SEQ_LEN, SEQ_LEN, PAIR_DIM), jnp.float32)
    mask = jax.random.uniform(km, (N_BATCH, SEQ_LEN)) > 0.2

    R_new, t_new, x_new = jax.block_until_ready(
        rigid_update_pallas(params, Rm, t, x, z, mask))
    R_ref, t_ref, x_ref = jax.block_until_ready(
        rigid_update_reference(params, Rm, t, x, z, mask))

    assert R_new.shape == (N_BATCH, SEQ_LEN, 3, 3)
    assert t_new.shape == (N_BATCH, SEQ_LEN, 3)
    assert x_new.shape == (N_BATCH, SEQ_LEN, NODE_DIM)
    for arr in (R_new, t_new, x_new):
        assert bool(jnp.all(jnp.isfinite(arr)))

    np.testing.assert_allclose(np.asarray(x_new), np.asarray(x_ref), rtol=2e-2, atol=2e-2)
    np.testing.assert_allclose(np.asarray(R_new), np.asarray(R_ref), rtol=2e-2, atol=2e-2)
    np.testing.assert_allclose(np.asarray(t_new), np.asarray(t_ref), rtol=2e-2, atol=2e-2)
    print("KERNEL_OK")
</pallas_src>

<mosaic_0001>
module attributes {stable_mosaic.version = 11 : i64} {
  func.func @ipa_rigid_kernel(%arg0: i32, %arg1: i32, %arg2: memref<1x12x8x30xf32, #tpu.memory_space<vmem>>, %arg3: memref<1x12x30x8xf32, #tpu.memory_space<vmem>>, %arg4: memref<1x12x8x28xf32, #tpu.memory_space<vmem>>, %arg5: memref<1x8x8x8xf32, #tpu.memory_space<vmem>>, %arg6: memref<12x8xf32, #tpu.memory_space<smem>>, %arg7: memref<1x8x32xf32, #tpu.memory_space<vmem>>, %arg8: memref<1x8x9xf32, #tpu.memory_space<vmem>>, %arg9: memref<1x8x3xf32, #tpu.memory_space<vmem>>, %arg10: memref<1x8x1xf32, #tpu.memory_space<vmem>>, %arg11: memref<1x1x8xf32, #tpu.memory_space<vmem>>, %arg12: memref<12x52x32xf32, #tpu.memory_space<vmem>>, %arg13: memref<9x32xf32, #tpu.memory_space<vmem>>, %arg14: memref<96x32xf32, #tpu.memory_space<vmem>>, %arg15: memref<32x32xf32, #tpu.memory_space<vmem>>, %arg16: memref<1x8x64xf32, #tpu.memory_space<vmem>>) attributes {dimension_semantics = [#tpu.dimension_semantics<parallel>, #tpu.dimension_semantics<parallel>], iteration_bounds = array<i64: 2, 1>, scalar_prefetch = 0 : i64, scratch_operands = 0 : i64, tpu.core_type = #tpu.core_type<tc>, window_params = [{transform_indices = @transform_0, window_bounds = array<i64: 1, 12, 8, 30>}, {transform_indices = @transform_1, window_bounds = array<i64: 1, 12, 30, 8>}, {transform_indices = @transform_2, window_bounds = array<i64: 1, 12, 8, 28>}, {transform_indices = @transform_3, window_bounds = array<i64: 1, 8, 8, 8>}, {transform_indices = @transform_4, window_bounds = array<i64: 12, 8>}, {transform_indices = @transform_5, window_bounds = array<i64: 1, 8, 32>}, {transform_indices = @transform_6, window_bounds = array<i64: 1, 8, 9>}, {transform_indices = @transform_7, window_bounds = array<i64: 1, 8, 3>}, {transform_indices = @transform_8, window_bounds = array<i64: 1, 8, 1>}, {transform_indices = @transform_9, window_bounds = array<i64: 1, 1, 8>}, {pipeline_mode = #tpu.pipeline_mode<synchronous>, transform_indices = @transform_10, window_bounds = array<i64: 12, 52, 32>}, {pipeline_mode = #tpu.pipeline_mode<synchronous>, transform_indices = @transform_11, window_bounds = array<i64: 9, 32>}, {pipeline_mode = #tpu.pipeline_mode<synchronous>, transform_indices = @transform_12, window_bounds = array<i64: 96, 32>}, {pipeline_mode = #tpu.pipeline_mode<synchronous>, transform_indices = @transform_13, window_bounds = array<i64: 32, 32>}, {transform_indices = @transform_14, window_bounds = array<i64: 1, 8, 64>}]} {
    %c0 = arith.constant 0 : index
    %c0_0 = arith.constant 0 : index
    %c0_1 = arith.constant 0 : index
    %0 = vector.load %arg10[%c0, %c0_0, %c0_1] : memref<1x8x1xf32, #tpu.memory_space<vmem>>, vector<1x8x1xf32>
    %1 = vector.shape_cast %0 : vector<1x8x1xf32> to vector<8x1xf32>
    %c0_2 = arith.constant 0 : index
    %c0_3 = arith.constant 0 : index
    %c0_4 = arith.constant 0 : index
    %2 = vector.load %arg11[%c0_2, %c0_3, %c0_4] : memref<1x1x8xf32, #tpu.memory_space<vmem>>, vector<1x1x8xf32>
    %3 = vector.shape_cast %2 : vector<1x1x8xf32> to vector<1x8xf32>
    %cst = arith.constant 5.000000e-01 : f32
    %4 = vector.broadcast %cst : f32 to vector<8x1xf32>
    %5 = arith.cmpf ogt, %1, %4 : vector<8x1xf32>
    %6 = vector.broadcast %1 : vector<8x1xf32> to vector<8x8xf32>
    %7 = vector.broadcast %3 : vector<1x8xf32> to vector<8x8xf32>
    %8 = arith.mulf %6, %7 : vector<8x8xf32>
    %cst_5 = arith.constant 5.000000e-01 : f32
    %9 = vector.broadcast %cst_5 : f32 to vector<8x8xf32>
    %10 = arith.cmpf ogt, %8, %9 : vector<8x8xf32>
    %cst_6 = arith.constant 0.000000e+00 : f32
    %cst_7 = arith.constant -1.000000e+05 : f32
    %11 = vector.broadcast %cst_6 : f32 to vector<8x8xf32>
    %12 = vector.broadcast %cst_7 : f32 to vector<8x8xf32>
    %13 = arith.select %10, %11, %12 : vector<8x8xi1>, vector<8x8xf32>
    %c0_8 = arith.constant 0 : index
    %c0_9 = arith.constant 0 : index
    %c0_10 = arith.constant 0 : index
    %c0_11 = arith.constant 0 : index
    %14 = vector.load %arg5[%c0_8, %c0_9, %c0_10, %c0_11] : memref<1x8x8x8xf32, #tpu.memory_space<vmem>>, vector<1x8x8x8xf32>
    %15 = vector.shape_cast %14 : vector<1x8x8x8xf32> to vector<8x8x8xf32>
    %c0_12 = arith.constant 0 : index
    %c0_13 = arith.constant 0 : index
    %c0_14 = arith.constant 0 : index
    %16 = vector.load %arg9[%c0_12, %c0_13, %c0_14] : memref<1x8x3xf32, #tpu.memory_space<vmem>>, vector<1x8x3xf32>
    %17 = vector.shape_cast %16 : vector<1x8x3xf32> to vector<8x3xf32>
    %18 = vector.extract_strided_slice %17 {offsets = [0, 0], sizes = [8, 1], strides = [1, 1]} : vector<8x3xf32> to vector<8x1xf32>
    %19 = vector.extract_strided_slice %17 {offsets = [0, 1], sizes = [8, 1], strides = [1, 1]} : vector<8x3xf32> to vector<8x1xf32>
    %20 = vector.extract_strided_slice %17 {offsets = [0, 2], sizes = [8, 1], strides = [1, 1]} : vector<8x3xf32> to vector<8x1xf32>
    %c0_15 = arith.constant 0 : index
    %c0_16 = arith.constant 0 : index
    %c0_17 = arith.constant 0 : index
    %21 = vector.load %arg8[%c0_15, %c0_16, %c0_17] : memref<1x8x9xf32, #tpu.memory_space<vmem>>, vector<1x8x9xf32>
    %22 = vector.shape_cast %21 : vector<1x8x9xf32> to vector<8x9xf32>
    %cst_18 = arith.constant 0.000000e+00 : f32
    %23 = vector.broadcast %cst_18 : f32 to vector<8x32xf32>
    %c0_19 = arith.constant 0 : index
    %c0_20 = arith.constant 0 : index
    %c0_21 = arith.constant 0 : index
    %c0_22 = arith.constant 0 : index
    %24 = vector.load %arg2[%c0_19, %c0_20, %c0_21, %c0_22] : memref<1x12x8x30xf32, #tpu.memory_space<vmem>>, vector<1x1x8x30xf32>
    %25 = vector.shape_cast %24 : vector<1x1x8x30xf32> to vector<8x30xf32>
    %c0_23 = arith.constant 0 : index
    %c0_24 = arith.constant 0 : index
    %c0_25 = arith.constant 0 : index
    %c0_26 = arith.constant 0 : index
    %26 = vector.load %arg3[%c0_23, %c0_24, %c0_25, %c0_26] : memref<1x12x30x8xf32, #tpu.memory_space<vmem>>, vector<1x1x30x8xf32>
    %27 = vector.shape_cast %26 : vector<1x1x30x8xf32> to vector<30x8xf32>
    %cst_27 = arith.constant dense<0.000000e+00> : vector<8x8xf32>
    %28 = tpu.matmul %25, %27, %cst_27 {dimension_numbers = #tpu.dot_dimension_numbers<[1], [0], [0], [1], [0, 0, 1, 1], [], []>} : vector<8x30xf32>, vector<30x8xf32>, vector<8x8xf32> -> vector<8x8xf32>
    %c0_28 = arith.constant 0 : index
    %c0_29 = arith.constant 0 : index
    %29 = memref.load %arg6[%c0_28, %c0_29] : memref<12x8xf32, #tpu.memory_space<smem>>
    %30 = vector.extract_strided_slice %15 {offsets = [0, 0, 0], sizes = [1, 8, 8], strides = [1, 1, 1]} : vector<8x8x8xf32> to vector<1x8x8xf32>
    %31 = vector.shape_cast %30 : vector<1x8x8xf32> to vector<8x8xf32>
    %32 = vector.broadcast %29 : f32 to vector<8x8xf32>
    %33 = arith.mulf %32, %31 : vector<8x8xf32>
    %c0_30 = arith.constant 0 : index
    %c1 = arith.constant 1 : index
    %34 = memref.load %arg6[%c0_30, %c1] : memref<12x8xf32, #tpu.memory_space<smem>>
    %35 = vector.extract_strided_slice %15 {offsets = [1, 0, 0], sizes = [1, 8, 8], strides = [1, 1, 1]} : vector<8x8x8xf32> to vector<1x8x8xf32>
    %36 = vector.shape_cast %35 : vector<1x8x8xf32> to vector<8x8xf32>
    %37 = vector.broadcast %34 : f32 to vector<8x8xf32>
    %38 = arith.mulf %37, %36 : vector<8x8xf32>
    %39 = arith.addf %33, %38 : vector<8x8xf32>
    %c0_31 = arith.constant 0 : index
    %c2 = arith.constant 2 : index
    %40 = memref.load %arg6[%c0_31, %c2] : memref<12x8xf32, #tpu.memory_space<smem>>
    %41 = vector.extract_strided_slice %15 {offsets = [2, 0, 0], sizes = [1, 8, 8], strides = [1, 1, 1]} : vector<8x8x8xf32> to vector<1x8x8xf32>
    %42 = vector.shape_cast %41 : vector<1x8x8xf32> to vector<8x8xf32>
    %43 = vector.broadcast %40 : f32 to vector<8x8xf32>
    %44 = arith.mulf %43, %42 : vector<8x8xf32>
    %45 = arith.addf %39, %44 : vector<8x8xf32>
    %c0_32 = arith.constant 0 : index
    %c3 = arith.constant 3 : index
    %46 = memref.load %arg6[%c0_32, %c3] : memref<12x8xf32, #tpu.memory_space<smem>>
    %47 = vector.extract_strided_slice %15 {offsets = [3, 0, 0], sizes = [1, 8, 8], strides = [1, 1, 1]} : vector<8x8x8xf32> to vector<1x8x8xf32>
    %48 = vector.shape_cast %47 : vector<1x8x8xf32> to vector<8x8xf32>
    %49 = vector.broadcast %46 : f32 to vector<8x8xf32>
    %50 = arith.mulf %49, %48 : vector<8x8xf32>
    %51 = arith.addf %45, %50 : vector<8x8xf32>
    %c0_33 = arith.constant 0 : index
    %c4 = arith.constant 4 : index
    %52 = memref.load %arg6[%c0_33, %c4] : memref<12x8xf32, #tpu.memory_space<smem>>
    %53 = vector.extract_strided_slice %15 {offsets = [4, 0, 0], sizes = [1, 8, 8], strides = [1, 1, 1]} : vector<8x8x8xf32> to vector<1x8x8xf32>
    %54 = vector.shape_cast %53 : vector<1x8x8xf32> to vector<8x8xf32>
    %55 = vector.broadcast %52 : f32 to vector<8x8xf32>
    %56 = arith.mulf %55, %54 : vector<8x8xf32>
    %57 = arith.addf %51, %56 : vector<8x8xf32>
    %c0_34 = arith.constant 0 : index
    %c5 = arith.constant 5 : index
    %58 = memref.load %arg6[%c0_34, %c5] : memref<12x8xf32, #tpu.memory_space<smem>>
    %59 = vector.extract_strided_slice %15 {offsets = [5, 0, 0], sizes = [1, 8, 8], strides = [1, 1, 1]} : vector<8x8x8xf32> to vector<1x8x8xf32>
    %60 = vector.shape_cast %59 : vector<1x8x8xf32> to vector<8x8xf32>
    %61 = vector.broadcast %58 : f32 to vector<8x8xf32>
    %62 = arith.mulf %61, %60 : vector<8x8xf32>
    %63 = arith.addf %57, %62 : vector<8x8xf32>
    %c0_35 = arith.constant 0 : index
    %c6 = arith.constant 6 : index
    %64 = memref.load %arg6[%c0_35, %c6] : memref<12x8xf32, #tpu.memory_space<smem>>
    %65 = vector.extract_strided_slice %15 {offsets = [6, 0, 0], sizes = [1, 8, 8], strides = [1, 1, 1]} : vector<8x8x8xf32> to vector<1x8x8xf32>
    %66 = vector.shape_cast %65 : vector<1x8x8xf32> to vector<8x8xf32>
    %67 = vector.broadcast %64 : f32 to vector<8x8xf32>
    %68 = arith.mulf %67, %66 : vector<8x8xf32>
    %69 = arith.addf %63, %68 : vector<8x8xf32>
    %c0_36 = arith.constant 0 : index
    %c7 = arith.constant 7 : index
    %70 = memref.load %arg6[%c0_36, %c7] : memref<12x8xf32, #tpu.memory_space<smem>>
    %71 = vector.extract_strided_slice %15 {offsets = [7, 0, 0], sizes = [1, 8, 8], strides = [1, 1, 1]} : vector<8x8x8xf32> to vector<1x8x8xf32>
    %72 = vector.shape_cast %71 : vector<1x8x8xf32> to vector<8x8xf32>
    %73 = vector.broadcast %70 : f32 to vector<8x8xf32>
    %74 = arith.mulf %73, %72 : vector<8x8xf32>
    %75 = arith.addf %69, %74 : vector<8x8xf32>
    %76 = arith.addf %28, %75 : vector<8x8xf32>
    %cst_37 = arith.constant 0.577350259 : f32
    %77 = vector.broadcast %cst_37 : f32 to vector<8x8xf32>
    %78 = arith.mulf %76, %77 : vector<8x8xf32>
    %79 = arith.addf %78, %13 : vector<8x8xf32>
    %cst_38 = arith.constant dense<0xFF800000> : vector<8xf32>
    %80 = vector.multi_reduction <maximumf>, %79, %cst_38 [1] : vector<8x8xf32> to vector<8xf32>
    %81 = vector.shape_cast %80 : vector<8xf32> to vector<8x1xf32>
    %82 = vector.broadcast %81 : vector<8x1xf32> to vector<8x8xf32>
    %83 = arith.subf %79, %82 : vector<8x8xf32>
    %84 = math.exp %83 : vector<8x8xf32>
    %cst_39 = arith.constant dense<0.000000e+00> : vector<8xf32>
    %85 = vector.multi_reduction <add>, %84, %cst_39 [1] : vector<8x8xf32> to vector<8xf32>
    %86 = vector.shape_cast %85 : vector<8xf32> to vector<8x1xf32>
    %87 = tpu.reciprocal %86 {approx = true} : vector<8x1xf32> -> vector<8x1xf32>
    %88 = vector.broadcast %87 : vector<8x1xf32> to vector<8x8xf32>
    %89 = arith.mulf %84, %88 : vector<8x8xf32>
    %c0_40 = arith.constant 0 : index
    %c0_41 = arith.constant 0 : index
    %c0_42 = arith.constant 0 : index
    %c0_43 = arith.constant 0 : index
    %90 = vector.load %arg4[%c0_40, %c0_41, %c0_42, %c0_43] : memref<1x12x8x28xf32, #tpu.memory_space<vmem>>, vector<1x1x8x28xf32>
    %91 = vector.shape_cast %90 : vector<1x1x8x28xf32> to vector<8x28xf32>
    %cst_44 = arith.constant dense<0.000000e+00> : vector<8x28xf32>
    %92 = tpu.matmul %89, %91, %cst_44 {dimension_numbers = #tpu.dot_dimension_numbers<[1], [0], [0], [1], [0, 0, 1, 1], [], []>} : vector<8x8xf32>, vector<8x28xf32>, vector<8x28xf32> -> vector<8x28xf32>
    %93 = vector.extract_strided_slice %92 {offsets = [0, 0], sizes = [8, 16], strides = [1, 1]} : vector<8x28xf32> to vector<8x16xf32>
    %94 = vector.extract_strided_slice %92 {offsets = [0, 16], sizes = [8, 4], strides = [1, 1]} : vector<8x28xf32> to vector<8x4xf32>
    %95 = vector.broadcast %18 : vector<8x1xf32> to vector<8x4xf32>
    %96 = arith.subf %94, %95 : vector<8x4xf32>
    %97 = vector.extract_strided_slice %92 {offsets = [0, 20], sizes = [8, 4], strides = [1, 1]} : vector<8x28xf32> to vector<8x4xf32>
    %98 = vector.broadcast %19 : vector<8x1xf32> to vector<8x4xf32>
    %99 = arith.subf %97, %98 : vector<8x4xf32>
    %100 = vector.extract_strided_slice %92 {offsets = [0, 24], sizes = [8, 4], strides = [1, 1]} : vector<8x28xf32> to vector<8x4xf32>
    %101 = vector.broadcast %20 : vector<8x1xf32> to vector<8x4xf32>
    %102 = arith.subf %100, %101 : vector<8x4xf32>
    %103 = vector.shape_cast %89 : vector<8x8xf32> to vector<1x8x8xf32>
    %104 = vector.broadcast %103 : vector<1x8x8xf32> to vector<8x8x8xf32>
    %105 = arith.mulf %104, %15 : vector<8x8x8xf32>
    %cst_45 = arith.constant dense<0.000000e+00> : vector<8x8xf32>
    %106 = vector.multi_reduction <add>, %105, %cst_45 [2] : vector<8x8x8xf32> to vector<8x8xf32>
    %107 = tpu.transpose %106, [1, 0] : vector<8x8xf32> -> vector<8x8xf32>
    %108 = vector.extract_strided_slice %22 {offsets = [0, 0], sizes = [8, 1], strides = [1, 1]} : vector<8x9xf32> to vector<8x1xf32>
    %109 = vector.broadcast %108 : vector<8x1xf32> to vector<8x4xf32>
    %110 = arith.mulf %109, %96 : vector<8x4xf32>
    %111 = vector.extract_strided_slice %22 {offsets = [0, 3], sizes = [8, 1], strides = [1, 1]} : vector<8x9xf32> to vector<8x1xf32>
    %112 = vector.broadcast %111 : vector<8x1xf32> to vector<8x4xf32>
    %113 = arith.mulf %112, %99 : vector<8x4xf32>
    %114 = arith.addf %110, %113 : vector<8x4xf32>
    %115 = vector.extract_strided_slice %22 {offsets = [0, 6], sizes = [8, 1], strides = [1, 1]} : vector<8x9xf32> to vector<8x1xf32>
    %116 = vector.broadcast %115 : vector<8x1xf32> to vector<8x4xf32>
    %117 = arith.mulf %116, %102 : vector<8x4xf32>
    %118 = arith.addf %114, %117 : vector<8x4xf32>
    %119 = vector.extract_strided_slice %22 {offsets = [0, 1], sizes = [8, 1], strides = [1, 1]} : vector<8x9xf32> to vector<8x1xf32>
    %120 = vector.broadcast %119 : vector<8x1xf32> to vector<8x4xf32>
    %121 = arith.mulf %120, %96 : vector<8x4xf32>
    %122 = vector.extract_strided_slice %22 {offsets = [0, 4], sizes = [8, 1], strides = [1, 1]} : vector<8x9xf32> to vector<8x1xf32>
    %123 = vector.broadcast %122 : vector<8x1xf32> to vector<8x4xf32>
    %124 = arith.mulf %123, %99 : vector<8x4xf32>
    %125 = arith.addf %121, %124 : vector<8x4xf32>
    %126 = vector.extract_strided_slice %22 {offsets = [0, 7], sizes = [8, 1], strides = [1, 1]} : vector<8x9xf32> to vector<8x1xf32>
    %127 = vector.broadcast %126 : vector<8x1xf32> to vector<8x4xf32>
    %128 = arith.mulf %127, %102 : vector<8x4xf32>
    %129 = arith.addf %125, %128 : vector<8x4xf32>
    %130 = vector.extract_strided_slice %22 {offsets = [0, 2], sizes = [8, 1], strides = [1, 1]} : vector<8x9xf32> to vector<8x1xf32>
    %131 = vector.broadcast %130 : vector<8x1xf32> to vector<8x4xf32>
    %132 = arith.mulf %131, %96 : vector<8x4xf32>
    %133 = vector.extract_strided_slice %22 {offsets = [0, 5], sizes = [8, 1], strides = [1, 1]} : vector<8x9xf32> to vector<8x1xf32>
    %134 = vector.broadcast %133 : vector<8x1xf32> to vector<8x4xf32>
    %135 = arith.mulf %134, %99 : vector<8x4xf32>
    %136 = arith.addf %132, %135 : vector<8x4xf32>
    %137 = vector.extract_strided_slice %22 {offsets = [0, 8], sizes = [8, 1], strides = [1, 1]} : vector<8x9xf32> to vector<8x1xf32>
    %138 = vector.broadcast %137 : vector<8x1xf32> to vector<8x4xf32>
    %139 = arith.mulf %138, %102 : vector<8x4xf32>
    %140 = arith.addf %136, %139 : vector<8x4xf32>
    %141 = arith.mulf %118, %118 : vector<8x4xf32>
    %142 = arith.mulf %129, %129 : vector<8x4xf32>
    %143 = arith.addf %141, %142 : vector<8x4xf32>
    %144 = arith.mulf %140, %140 : vector<8x4xf32>
    %145 = arith.addf %143, %144 : vector<8x4xf32>
    %cst_46 = arith.constant 9.99999996E-13 : f32
    %146 = vector.broadcast %cst_46 : f32 to vector<8x4xf32>
    %147 = arith.addf %145, %146 : vector<8x4xf32>
    %148 = math.rsqrt %147 : vector<8x4xf32>
    %149 = arith.mulf %145, %148 : vector<8x4xf32>
    %150 = arith.mulf %118, %148 : vector<8x4xf32>
    %151 = arith.mulf %129, %148 : vector<8x4xf32>
    %152 = arith.mulf %140, %148 : vector<8x4xf32>
    %153 = tpu.concatenate %107, %93, %118, %129, %140, %149, %150, %151, %152 in 1 : vector<8x8xf32>, vector<8x16xf32>, vector<8x4xf32>, vector<8x4xf32>, vector<8x4xf32>, vector<8x4xf32>, vector<8x4xf32>, vector<8x4xf32>, vector<8x4xf32> -> vector<8x52xf32>
    %c0_47 = arith.constant 0 : index
    %c0_48 = arith.constant 0 : index
    %c0_49 = arith.constant 0 : index
    %154 = vector.load %arg12[%c0_47, %c0_48, %c0_49] : memref<12x52x32xf32, #tpu.memory_space<vmem>>, vector<1x52x32xf32>
    %155 = vector.shape_cast %154 : vector<1x52x32xf32> to vector<52x32xf32>
    %cst_50 = arith.constant dense<0.000000e+00> : vector<8x32xf32>
    %156 = tpu.matmul %153, %155, %cst_50 {dimension_numbers = #tpu.dot_dimension_numbers<[1], [0], [0], [1], [0, 0, 1, 1], [], []>} : vector<8x52xf32>, vector<52x32xf32>, vector<8x32xf32> -> vector<8x32xf32>
    %157 = arith.addf %23, %156 : vector<8x32xf32>
    %c0_51 = arith.constant 0 : index
    %c1_52 = arith.constant 1 : index
    %c0_53 = arith.constant 0 : index
    %c0_54 = arith.constant 0 : index
    %158 = vector.load %arg2[%c0_51, %c1_52, %c0_53, %c0_54] : memref<1x12x8x30xf32, #tpu.memory_space<vmem>>, vector<1x1x8x30xf32>
    %159 = vector.shape_cast %158 : vector<1x1x8x30xf32> to vector<8x30xf32>
    %c0_55 = arith.constant 0 : index
    %c1_56 = arith.constant 1 : index
    %c0_57 = arith.constant 0 : index
    %c0_58 = arith.constant 0 : index
    %160 = vector.load %arg3[%c0_55, %c1_56, %c0_57, %c0_58] : memref<1x12x30x8xf32, #tpu.memory_space<vmem>>, vector<1x1x30x8xf32>
    %161 = vector.shape_cast %160 : vector<1x1x30x8xf32> to vector<30x8xf32>
    %cst_59 = arith.constant dense<0.000000e+00> : vector<8x8xf32>
    %162 = tpu.matmul %159, %161, %cst_59 {dimension_numbers = #tpu.dot_dimension_numbers<[1], [0], [0], [1], [0, 0, 1, 1], [], []>} : vector<8x30xf32>, vector<30x8xf32>, vector<8x8xf32> -> vector<8x8xf32>
    %c1_60 = arith.constant 1 : index
    %c0_61 = arith.constant 0 : index
    %163 = memref.load %arg6[%c1_60, %c0_61] : memref<12x8xf32, #tpu.memory_space<smem>>
    %164 = vector.extract_strided_slice %15 {offsets = [0, 0, 0], sizes = [1, 8, 8], strides = [1, 1, 1]} : vector<8x8x8xf32> to vector<1x8x8xf32>
    %165 = vector.shape_cast %164 : vector<1x8x8xf32> to vector<8x8xf32>
    %166 = vector.broadcast %163 : f32 to vector<8x8xf32>
    %167 = arith.mulf %166, %165 : vector<8x8xf32>
    %c1_62 = arith.constant 1 : index
    %c1_63 = arith.constant 1 : index
    %168 = memref.load %arg6[%c1_62, %c1_63] : memref<12x8xf32, #tpu.memory_space<smem>>
    %169 = vector.extract_strided_slice %15 {offsets = [1, 0, 0], sizes = [1, 8, 8], strides = [1, 1, 1]} : vector<8x8x8xf32> to vector<1x8x8xf32>
    %170 = vector.shape_cast %169 : vector<1x8x8xf32> to vector<8x8xf32>
    %171 = vector.broadcast %168 : f32 to vector<8x8xf32>
    %172 = arith.mulf %171, %170 : vector<8x8xf32>
    %173 = arith.addf %167, %172 : vector<8x8xf32>
    %c1_64 = arith.constant 1 : index
    %c2_65 = arith.constant 2 : index
    %174 = memref.load %arg6[%c1_64, %c2_65] : memref<12x8xf32, #tpu.memory_space<smem>>
    %175 = vector.extract_strided_slice %15 {offsets = [2, 0, 0], sizes = [1, 8, 8], strides = [1, 1, 1]} : vector<8x8x8xf32> to vector<1x8x8xf32>
    %176 = vector.shape_cast %175 : vector<1x8x8xf32> to vector<8x8xf32>
    %177 = vector.broadcast %174 : f32 to vector<8x8xf32>
    %178 = arith.mulf %177, %176 : vector<8x8xf32>
    %179 = arith.addf %173, %178 : vector<8x8xf32>
    %c1_66 = arith.constant 1 : index
    %c3_67 = arith.constant 3 : index
    %180 = memref.load %arg6[%c1_66, %c3_67] : memref<12x8xf32, #tpu.memory_space<smem>>
    %181 = vector.extract_strided_slice %15 {offsets = [3, 0, 0], sizes = [1, 8, 8], strides = [1, 1, 1]} : vector<8x8x8xf32> to vector<1x8x8xf32>
    %182 = vector.shape_cast %181 : vector<1x8x8xf32> to vector<8x8xf32>
    %183 = vector.broadcast %180 : f32 to vector<8x8xf32>
    %184 = arith.mulf %183, %182 : vector<8x8xf32>
    %185 = arith.addf %179, %184 : vector<8x8xf32>
    %c1_68 = arith.constant 1 : index
    %c4_69 = arith.constant 4 : index
    %186 = memref.load %arg6[%c1_68, %c4_69] : memref<12x8xf32, #tpu.memory_space<smem>>
    %187 = vector.extract_strided_slice %15 {offsets = [4, 0, 0], sizes = [1, 8, 8], strides = [1, 1, 1]} : vector<8x8x8xf32> to vector<1x8x8xf32>
    %188 = vector.shape_cast %187 : vector<1x8x8xf32> to vector<8x8xf32>
    %189 = vector.broadcast %186 : f32 to vector<8x8xf32>
    %190 = arith.mulf %189, %188 : vector<8x8xf32>
    %191 = arith.addf %185, %190 : vector<8x8xf32>
    %c1_70 = arith.constant 1 : index
    %c5_71 = arith.constant 5 : index
    %192 = memref.load %arg6[%c1_70, %c5_71] : memref<12x8xf32, #tpu.memory_space<smem>>
    %193 = vector.extract_strided_slice %15 {offsets = [5, 0, 0], sizes = [1, 8, 8], strides = [1, 1, 1]} : vector<8x8x8xf32> to vector<1x8x8xf32>
    %194 = vector.shape_cast %193 : vector<1x8x8xf32> to vector<8x8xf32>
    %195 = vector.broadcast %192 : f32 to vector<8x8xf32>
    %196 = arith.mulf %195, %194 : vector<8x8xf32>
    %197 = arith.addf %191, %196 : vector<8x8xf32>
    %c1_72 = arith.constant 1 : index
    %c6_73 = arith.constant 6 : index
    %198 = memref.load %arg6[%c1_72, %c6_73] : memref<12x8xf32, #tpu.memory_space<smem>>
    %199 = vector.extract_strided_slice %15 {offsets = [6, 0, 0], sizes = [1, 8, 8], strides = [1, 1, 1]} : vector<8x8x8xf32> to vector<1x8x8xf32>
    %200 = vector.shape_cast %199 : vector<1x8x8xf32> to vector<8x8xf32>
    %201 = vector.broadcast %198 : f32 to vector<8x8xf32>
    %202 = arith.mulf %201, %200 : vector<8x8xf32>
    %203 = arith.addf %197, %202 : vector<8x8xf32>
    %c1_74 = arith.constant 1 : index
    %c7_75 = arith.constant 7 : index
    %204 = memref.load %arg6[%c1_74, %c7_75] : memref<12x8xf32, #tpu.memory_space<smem>>
    %205 = vector.extract_strided_slice %15 {offsets = [7, 0, 0], sizes = [1, 8, 8], strides = [1, 1, 1]} : vector<8x8x8xf32> to vector<1x8x8xf32>
    %206 = vector.shape_cast %205 : vector<1x8x8xf32> to vector<8x8xf32>
    %207 = vector.broadcast %204 : f32 to vector<8x8xf32>
    %208 = arith.mulf %207, %206 : vector<8x8xf32>
    %209 = arith.addf %203, %208 : vector<8x8xf32>
    %210 = arith.addf %162, %209 : vector<8x8xf32>
    %cst_76 = arith.constant 0.577350259 : f32
    %211 = vector.broadcast %cst_76 : f32 to vector<8x8xf32>
    %212 = arith.mulf %210, %211 : vector<8x8xf32>
    %213 = arith.addf %212, %13 : vector<8x8xf32>
    %cst_77 = arith.constant dense<0xFF800000> : vector<8xf32>
    %214 = vector.multi_reduction <maximumf>, %213, %cst_77 [1] : vector<8x8xf32> to vector<8xf32>
    %215 = vector.shape_cast %214 : vector<8xf32> to vector<8x1xf32>
    %216 = vector.broadcast %215 : vector<8x1xf32> to vector<8x8xf32>
    %217 = arith.subf %213, %216 : vector<8x8xf32>
    %218 = math.exp %217 : vector<8x8xf32>
    %cst_78 = arith.constant dense<0.000000e+00> : vector<8xf32>
    %219 = vector.multi_reduction <add>, %218, %cst_78 [1] : vector<8x8xf32> to vector<8xf32>
    %220 = vector.shape_cast %219 : vector<8xf32> to vector<8x1xf32>
    %221 = tpu.reciprocal %220 {approx = true} : vector<8x1xf32> -> vector<8x1xf32>
    %222 = vector.broadcast %221 : vector<8x1xf32> to vector<8x8xf32>
    %223 = arith.mulf %218, %222 : vector<8x8xf32>
    %c0_79 = arith.constant 0 : index
    %c1_80 = arith.constant 1 : index
    %c0_81 = arith.constant 0 : index
    %c0_82 = arith.constant 0 : index
    %224 = vector.load %arg4[%c0_79, %c1_80, %c0_81, %c0_82] : memref<1x12x8x28xf32, #tpu.memory_space<vmem>>, vector<1x1x8x28xf32>
    %225 = vector.shape_cast %224 : vector<1x1x8x28xf32> to vector<8x28xf32>
    %cst_83 = arith.constant dense<0.000000e+00> : vector<8x28xf32>
    %226 = tpu.matmul %223, %225, %cst_83 {dimension_numbers = #tpu.dot_dimension_numbers<[1], [0], [0], [1], [0, 0, 1, 1], [], []>} : vector<8x8xf32>, vector<8x28xf32>, vector<8x28xf32> -> vector<8x28xf32>
    %227 = vector.extract_strided_slice %226 {offsets = [0, 0], sizes = [8, 16], strides = [1, 1]} : vector<8x28xf32> to vector<8x16xf32>
    %228 = vector.extract_strided_slice %226 {offsets = [0, 16], sizes = [8, 4], strides = [1, 1]} : vector<8x28xf32> to vector<8x4xf32>
    %229 = vector.broadcast %18 : vector<8x1xf32> to vector<8x4xf32>
    %230 = arith.subf %228, %229 : vector<8x4xf32>
    %231 = vector.extract_strided_slice %226 {offsets = [0, 20], sizes = [8, 4], strides = [1, 1]} : vector<8x28xf32> to vector<8x4xf32>
    %232 = vector.broadcast %19 : vector<8x1xf32> to vector<8x4xf32>
    %233 = arith.subf %231, %232 : vector<8x4xf32>
    %234 = vector.extract_strided_slice %226 {offsets = [0, 24], sizes = [8, 4], strides = [1, 1]} : vector<8x28xf32> to vector<8x4xf32>
    %235 = vector.broadcast %20 : vector<8x1xf32> to vector<8x4xf32>
    %236 = arith.subf %234, %235 : vector<8x4xf32>
    %237 = vector.shape_cast %223 : vector<8x8xf32> to vector<1x8x8xf32>
    %238 = vector.broadcast %237 : vector<1x8x8xf32> to vector<8x8x8xf32>
    %239 = arith.mulf %238, %15 : vector<8x8x8xf32>
    %cst_84 = arith.constant dense<0.000000e+00> : vector<8x8xf32>
    %240 = vector.multi_reduction <add>, %239, %cst_84 [2] : vector<8x8x8xf32> to vector<8x8xf32>
    %241 = tpu.transpose %240, [1, 0] : vector<8x8xf32> -> vector<8x8xf32>
    %242 = vector.extract_strided_slice %22 {offsets = [0, 0], sizes = [8, 1], strides = [1, 1]} : vector<8x9xf32> to vector<8x1xf32>
    %243 = vector.broadcast %242 : vector<8x1xf32> to vector<8x4xf32>
    %244 = arith.mulf %243, %230 : vector<8x4xf32>
    %245 = vector.extract_strided_slice %22 {offsets = [0, 3], sizes = [8, 1], strides = [1, 1]} : vector<8x9xf32> to vector<8x1xf32>
    %246 = vector.broadcast %245 : vector<8x1xf32> to vector<8x4xf32>
    %247 = arith.mulf %246, %233 : vector<8x4xf32>
    %248 = arith.addf %244, %247 : vector<8x4xf32>
    %249 = vector.extract_strided_slice %22 {offsets = [0, 6], sizes = [8, 1], strides = [1, 1]} : vector<8x9xf32> to vector<8x1xf32>
    %250 = vector.broadcast %249 : vector<8x1xf32> to vector<8x4xf32>
    %251 = arith.mulf %250, %236 : vector<8x4xf32>
    %252 = arith.addf %248, %251 : vector<8x4xf32>
    %253 = vector.extract_strided_slice %22 {offsets = [0, 1], sizes = [8, 1], strides = [1, 1]} : vector<8x9xf32> to vector<8x1xf32>
    %254 = vector.broadcast %253 : vector<8x1xf32> to vector<8x4xf32>
    %255 = arith.mulf %254, %230 : vector<8x4xf32>
    %256 = vector.extract_strided_slice %22 {offsets = [0, 4], sizes = [8, 1], strides = [1, 1]} : vector<8x9xf32> to vector<8x1xf32>
    %257 = vector.broadcast %256 : vector<8x1xf32> to vector<8x4xf32>
    %258 = arith.mulf %257, %233 : vector<8x4xf32>
    %259 = arith.addf %255, %258 : vector<8x4xf32>
    %260 = vector.extract_strided_slice %22 {offsets = [0, 7], sizes = [8, 1], strides = [1, 1]} : vector<8x9xf32> to vector<8x1xf32>
    %261 = vector.broadcast %260 : vector<8x1xf32> to vector<8x4xf32>
    %262 = arith.mulf %261, %236 : vector<8x4xf32>
    %263 = arith.addf %259, %262 : vector<8x4xf32>
    %264 = vector.extract_strided_slice %22 {offsets = [0, 2], sizes = [8, 1], strides = [1, 1]} : vector<8x9xf32> to vector<8x1xf32>
    %265 = vector.broadcast %264 : vector<8x1xf32> to vector<8x4xf32>
    %266 = arith.mulf %265, %230 : vector<8x4xf32>
    %267 = vector.extract_strided_slice %22 {offsets = [0, 5], sizes = [8, 1], strides = [1, 1]} : vector<8x9xf32> to vector<8x1xf32>
    %268 = vector.broadcast %267 : vector<8x1xf32> to vector<8x4xf32>
    %269 = arith.mulf %268, %233 : vector<8x4xf32>
    %270 = arith.addf %266, %269 : vector<8x4xf32>
    %271 = vector.extract_strided_slice %22 {offsets = [0, 8], sizes = [8, 1], strides = [1, 1]} : vector<8x9xf32> to vector<8x1xf32>
    %272 = vector.broadcast %271 : vector<8x1xf32> to vector<8x4xf32>
    %273 = arith.mulf %272, %236 : vector<8x4xf32>
    %274 = arith.addf %270, %273 : vector<8x4xf32>
    %275 = arith.mulf %252, %252 : vector<8x4xf32>
    %276 = arith.mulf %263, %263 : vector<8x4xf32>
    %277 = arith.addf %275, %276 : vector<8x4xf32>
    %278 = arith.mulf %274, %274 : vector<8x4xf32>
    %279 = arith.addf %277, %278 : vector<8x4xf32>
    %cst_85 = arith.constant 9.99999996E-13 : f32
    %280 = vector.broadcast %cst_85 : f32 to vector<8x4xf32>
    %281 = arith.addf %279, %280 : vector<8x4xf32>
    %282 = math.rsqrt %281 : vector<8x4xf32>
    %283 = arith.mulf %279, %282 : vector<8x4xf32>
    %284 = arith.mulf %252, %282 : vector<8x4xf32>
    %285 = arith.mulf %263, %282 : vector<8x4xf32>
    %286 = arith.mulf %274, %282 : vector<8x4xf32>
    %287 = tpu.concatenate %241, %227, %252, %263, %274, %283, %284, %285, %286 in 1 : vector<8x8xf32>, vector<8x16xf32>, vector<8x4xf32>, vector<8x4xf32>, vector<8x4xf32>, vector<8x4xf32>, vector<8x4xf32>, vector<8x4xf32>, vector<8x4xf32> -> vector<8x52xf32>
    %c1_86 = arith.constant 1 : index
    %c0_87 = arith.constant 0 : index
    %c0_88 = arith.constant 0 : index
    %288 = vector.load %arg12[%c1_86, %c0_87, %c0_88] : memref<12x52x32xf32, #tpu.memory_space<vmem>>, vector<1x52x32xf32>
    %289 = vector.shape_cast %288 : vector<1x52x32xf32> to vector<52x32xf32>
    %cst_89 = arith.constant dense<0.000000e+00> : vector<8x32xf32>
    %290 = tpu.matmul %287, %289, %cst_89 {dimension_numbers = #tpu.dot_dimension_numbers<[1], [0], [0], [1], [0, 0, 1, 1], [], []>} : vector<8x52xf32>, vector<52x32xf32>, vector<8x32xf32> -> vector<8x32xf32>
    %291 = arith.addf %157, %290 : vector<8x32xf32>
    %c0_90 = arith.constant 0 : index
    %c2_91 = arith.constant 2 : index
    %c0_92 = arith.constant 0 : index
    %c0_93 = arith.constant 0 : index
    %292 = vector.load %arg2[%c0_90, %c2_91, %c0_92, %c0_93] : memref<1x12x8x30xf32, #tpu.memory_space<vmem>>, vector<1x1x8x30xf32>
    %293 = vector.shape_cast %292 : vector<1x1x8x30xf32> to vector<8x30xf32>
    %c0_94 = arith.constant 0 : index
    %c2_95 = arith.constant 2 : index
    %c0_96 = arith.constant 0 : index
    %c0_97 = arith.constant 0 : index
    %294 = vector.load %arg3[%c0_94, %c2_95, %c0_96, %c0_97] : memref<1x12x30x8xf32, #tpu.memory_space<vmem>>, vector<1x1x30x8xf32>
    %295 = vector.shape_cast %294 : vector<1x1x30x8xf32> to vector<30x8xf32>
    %cst_98 = arith.constant dense<0.000000e+00> : vector<8x8xf32>
    %296 = tpu.matmul %293, %295, %cst_98 {dimension_numbers = #tpu.dot_dimension_numbers<[1], [0], [0], [1], [0, 0, 1, 1], [], []>} : vector<8x30xf32>, vector<30x8xf32>, vector<8x8xf32> -> vector<8x8xf32>
    %c2_99 = arith.constant 2 : index
    %c0_100 = arith.constant 0 : index
    %297 = memref.load %arg6[%c2_99, %c0_100] : memref<12x8xf32, #tpu.memory_space<smem>>
    %298 = vector.extract_strided_slice %15 {offsets = [0, 0, 0], sizes = [1, 8, 8], strides = [1, 1, 1]} : vector<8x8x8xf32> to vector<1x8x8xf32>
    %299 = vector.shape_cast %298 : vector<1x8x8xf32> to vector<8x8xf32>
    %300 = vector.broadcast %297 : f32 to vector<8x8xf32>
    %301 = arith.mulf %300, %299 : vector<8x8xf32>
    %c2_101 = arith.constant 2 : index
    %c1_102 = arith.constant 1 : index
    %302 = memref.load %arg6[%c2_101, %c1_102] : memref<12x8xf32, #tpu.memory_space<smem>>
    %303 = vector.extract_strided_slice %15 {offsets = [1, 0, 0], sizes = [1, 8, 8], strides = [1, 1, 1]} : vector<8x8x8xf32> to vector<1x8x8xf32>
    %304 = vector.shape_cast %303 : vector<1x8x8xf32> to vector<8x8xf32>
    %305 = vector.broadcast %302 : f32 to vector<8x8xf32>
    %306 = arith.mulf %305, %304 : vector<8x8xf32>
    %307 = arith.addf %301, %306 : vector<8x8xf32>
    %c2_103 = arith.constant 2 : index
    %c2_104 = arith.constant 2 : index
    %308 = memref.load %arg6[%c2_103, %c2_104] : memref<12x8xf32, #tpu.memory_space<smem>>
    %309 = vector.extract_strided_slice %15 {offsets = [2, 0, 0], sizes = [1, 8, 8], strides = [1, 1, 1]} : vector<8x8x8xf32> to vector<1x8x8xf32>
    %310 = vector.shape_cast %309 : vector<1x8x8xf32> to vector<8x8xf32>
    %311 = vector.broadcast %308 : f32 to vector<8x8xf32>
    %312 = arith.mulf %311, %310 : vector<8x8xf32>
    %313 = arith.addf %307, %312 : vector<8x8xf32>
    %c2_105 = arith.constant 2 : index
    %c3_106 = arith.constant 3 : index
    %314 = memref.load %arg6[%c2_105, %c3_106] : memref<12x8xf32, #tpu.memory_space<smem>>
    %315 = vector.extract_strided_slice %15 {offsets = [3, 0, 0], sizes = [1, 8, 8], strides = [1, 1, 1]} : vector<8x8x8xf32> to vector<1x8x8xf32>
    %316 = vector.shape_cast %315 : vector<1x8x8xf32> to vector<8x8xf32>
    %317 = vector.broadcast %314 : f32 to vector<8x8xf32>
    %318 = arith.mulf %317, %316 : vector<8x8xf32>
    %319 = arith.addf %313, %318 : vector<8x8xf32>
    %c2_107 = arith.constant 2 : index
    %c4_108 = arith.constant 4 : index
    %320 = memref.load %arg6[%c2_107, %c4_108] : memref<12x8xf32, #tpu.memory_space<smem>>
    %321 = vector.extract_strided_slice %15 {offsets = [4, 0, 0], sizes = [1, 8, 8], strides = [1, 1, 1]} : vector<8x8x8xf32> to vector<1x8x8xf32>
    %322 = vector.shape_cast %321 : vector<1x8x8xf32> to vector<8x8xf32>
    %323 = vector.broadcast %320 : f32 to vector<8x8xf32>
    %324 = arith.mulf %323, %322 : vector<8x8xf32>
    %325 = arith.addf %319, %324 : vector<8x8xf32>
    %c2_109 = arith.constant 2 : index
    %c5_110 = arith.constant 5 : index
    %326 = memref.load %arg6[%c2_109, %c5_110] : memref<12x8xf32, #tpu.memory_space<smem>>
    %327 = vector.extract_strided_slice %15 {offsets = [5, 0, 0], sizes = [1, 8, 8], strides = [1, 1, 1]} : vector<8x8x8xf32> to vector<1x8x8xf32>
    %328 = vector.shape_cast %327 : vector<1x8x8xf32> to vector<8x8xf32>
    %329 = vector.broadcast %326 : f32 to vector<8x8xf32>
    %330 = arith.mulf %329, %328 : vector<8x8xf32>
    %331 = arith.addf %325, %330 : vector<8x8xf32>
    %c2_111 = arith.constant 2 : index
    %c6_112 = arith.constant 6 : index
    %332 = memref.load %arg6[%c2_111, %c6_112] : memref<12x8xf32, #tpu.memory_space<smem>>
    %333 = vector.extract_strided_slice %15 {offsets = [6, 0, 0], sizes = [1, 8, 8], strides = [1, 1, 1]} : vector<8x8x8xf32> to vector<1x8x8xf32>
    %334 = vector.shape_cast %333 : vector<1x8x8xf32> to vector<8x8xf32>
    %335 = vector.broadcast %332 : f32 to vector<8x8xf32>
    %336 = arith.mulf %335, %334 : vector<8x8xf32>
    %337 = arith.addf %331, %336 : vector<8x8xf32>
    %c2_113 = arith.constant 2 : index
    %c7_114 = arith.constant 7 : index
    %338 = memref.load %arg6[%c2_113, %c7_114] : memref<12x8xf32, #tpu.memory_space<smem>>
    %339 = vector.extract_strided_slice %15 {offsets = [7, 0, 0], sizes = [1, 8, 8], strides = [1, 1, 1]} : vector<8x8x8xf32> to vector<1x8x8xf32>
    %340 = vector.shape_cast %339 : vector<1x8x8xf32> to vector<8x8xf32>
    %341 = vector.broadcast %338 : f32 to vector<8x8xf32>
    %342 = arith.mulf %341, %340 : vector<8x8xf32>
    %343 = arith.addf %337, %342 : vector<8x8xf32>
    %344 = arith.addf %296, %343 : vector<8x8xf32>
    %cst_115 = arith.constant 0.577350259 : f32
    %345 = vector.broadcast %cst_115 : f32 to vector<8x8xf32>
    %346 = arith.mulf %344, %345 : vector<8x8xf32>
    %347 = arith.addf %346, %13 : vector<8x8xf32>
    %cst_116 = arith.constant dense<0xFF800000> : vector<8xf32>
    %348 = vector.multi_reduction <maximumf>, %347, %cst_116 [1] : vector<8x8xf32> to vector<8xf32>
    %349 = vector.shape_cast %348 : vector<8xf32> to vector<8x1xf32>
    %350 = vector.broadcast %349 : vector<8x1xf32> to vector<8x8xf32>
    %351 = arith.subf %347, %350 : vector<8x8xf32>
    %352 = math.exp %351 : vector<8x8xf32>
    %cst_117 = arith.constant dense<0.000000e+00> : vector<8xf32>
    %353 = vector.multi_reduction <add>, %352, %cst_117 [1] : vector<8x8xf32> to vector<8xf32>
    %354 = vector.shape_cast %353 : vector<8xf32> to vector<8x1xf32>
    %355 = tpu.reciprocal %354 {approx = true} : vector<8x1xf32> -> vector<8x1xf32>
    %356 = vector.broadcast %355 : vector<8x1xf32> to vector<8x8xf32>
    %357 = arith.mulf %352, %356 : vector<8x8xf32>
    %c0_118 = arith.constant 0 : index
    %c2_119 = arith.constant 2 : index
    %c0_120 = arith.constant 0 : index
    %c0_121 = arith.constant 0 : index
    %358 = vector.load %arg4[%c0_118, %c2_119, %c0_120, %c0_121] : memref<1x12x8x28xf32, #tpu.memory_space<vmem>>, vector<1x1x8x28xf32>
    %359 = vector.shape_cast %358 : vector<1x1x8x28xf32> to vector<8x28xf32>
    %cst_122 = arith.constant dense<0.000000e+00> : vector<8x28xf32>
    %360 = tpu.matmul %357, %359, %cst_122 {dimension_numbers = #tpu.dot_dimension_numbers<[1], [0], [0], [1], [0, 0, 1, 1], [], []>} : vector<8x8xf32>, vector<8x28xf32>, vector<8x28xf32> -> vector<8x28xf32>
    %361 = vector.extract_strided_slice %360 {offsets = [0, 0], sizes = [8, 16], strides = [1, 1]} : vector<8x28xf32> to vector<8x16xf32>
    %362 = vector.extract_strided_slice %360 {offsets = [0, 16], sizes = [8, 4], strides = [1, 1]} : vector<8x28xf32> to vector<8x4xf32>
    %363 = vector.broadcast %18 : vector<8x1xf32> to vector<8x4xf32>
    %364 = arith.subf %362, %363 : vector<8x4xf32>
    %365 = vector.extract_strided_slice %360 {offsets = [0, 20], sizes = [8, 4], strides = [1, 1]} : vector<8x28xf32> to vector<8x4xf32>
    %366 = vector.broadcast %19 : vector<8x1xf32> to vector<8x4xf32>
    %367 = arith.subf %365, %366 : vector<8x4xf32>
    %368 = vector.extract_strided_slice %360 {offsets = [0, 24], sizes = [8, 4], strides = [1, 1]} : vector<8x28xf32> to vector<8x4xf32>
    %369 = vector.broadcast %20 : vector<8x1xf32> to vector<8x4xf32>
    %370 = arith.subf %368, %369 : vector<8x4xf32>
    %371 = vector.shape_cast %357 : vector<8x8xf32> to vector<1x8x8xf32>
    %372 = vector.broadcast %371 : vector<1x8x8xf32> to vector<8x8x8xf32>
    %373 = arith.mulf %372, %15 : vector<8x8x8xf32>
    %cst_123 = arith.constant dense<0.000000e+00> : vector<8x8xf32>
    %374 = vector.multi_reduction <add>, %373, %cst_123 [2] : vector<8x8x8xf32> to vector<8x8xf32>
    %375 = tpu.transpose %374, [1, 0] : vector<8x8xf32> -> vector<8x8xf32>
    %376 = vector.extract_strided_slice %22 {offsets = [0, 0], sizes = [8, 1], strides = [1, 1]} : vector<8x9xf32> to vector<8x1xf32>
    %377 = vector.broadcast %376 : vector<8x1xf32> to vector<8x4xf32>
    %378 = arith.mulf %377, %364 : vector<8x4xf32>
    %379 = vector.extract_strided_slice %22 {offsets = [0, 3], sizes = [8, 1], strides = [1, 1]} : vector<8x9xf32> to vector<8x1xf32>
    %380 = vector.broadcast %379 : vector<8x1xf32> to vector<8x4xf32>
    %381 = arith.mulf %380, %367 : vector<8x4xf32>
    %382 = arith.addf %378, %381 : vector<8x4xf32>
    %383 = vector.extract_strided_slice %22 {offsets = [0, 6], sizes = [8, 1], strides = [1, 1]} : vector<8x9xf32> to vector<8x1xf32>
    %384 = vector.broadcast %383 : vector<8x1xf32> to vector<8x4xf32>
    %385 = arith.mulf %384, %370 : vector<8x4xf32>
    %386 = arith.addf %382, %385 : vector<8x4xf32>
    %387 = vector.extract_strided_slice %22 {offsets = [0, 1], sizes = [8, 1], strides = [1, 1]} : vector<8x9xf32> to vector<8x1xf32>
    %388 = vector.broadcast %387 : vector<8x1xf32> to vector<8x4xf32>
    %389 = arith.mulf %388, %364 : vector<8x4xf32>
    %390 = vector.extract_strided_slice %22 {offsets = [0, 4], sizes = [8, 1], strides = [1, 1]} : vector<8x9xf32> to vector<8x1xf32>
    %391 = vector.broadcast %390 : vector<8x1xf32> to vector<8x4xf32>
    %392 = arith.mulf %391, %367 : vector<8x4xf32>
    %393 = arith.addf %389, %392 : vector<8x4xf32>
    %394 = vector.extract_strided_slice %22 {offsets = [0, 7], sizes = [8, 1], strides = [1, 1]} : vector<8x9xf32> to vector<8x1xf32>
    %395 = vector.broadcast %394 : vector<8x1xf32> to vector<8x4xf32>
    %396 = arith.mulf %395, %370 : vector<8x4xf32>
    %397 = arith.addf %393, %396 : vector<8x4xf32>
    %398 = vector.extract_strided_slice %22 {offsets = [0, 2], sizes = [8, 1], strides = [1, 1]} : vector<8x9xf32> to vector<8x1xf32>
    %399 = vector.broadcast %398 : vector<8x1xf32> to vector<8x4xf32>
    %400 = arith.mulf %399, %364 : vector<8x4xf32>
    %401 = vector.extract_strided_slice %22 {offsets = [0, 5], sizes = [8, 1], strides = [1, 1]} : vector<8x9xf32> to vector<8x1xf32>
    %402 = vector.broadcast %401 : vector<8x1xf32> to vector<8x4xf32>
    %403 = arith.mulf %402, %367 : vector<8x4xf32>
    %404 = arith.addf %400, %403 : vector<8x4xf32>
    %405 = vector.extract_strided_slice %22 {offsets = [0, 8], sizes = [8, 1], strides = [1, 1]} : vector<8x9xf32> to vector<8x1xf32>
    %406 = vector.broadcast %405 : vector<8x1xf32> to vector<8x4xf32>
    %407 = arith.mulf %406, %370 : vector<8x4xf32>
    %408 = arith.addf %404, %407 : vector<8x4xf32>
    %409 = arith.mulf %386, %386 : vector<8x4xf32>
    %410 = arith.mulf %397, %397 : vector<8x4xf32>
    %411 = arith.addf %409, %410 : vector<8x4xf32>
    %412 = arith.mulf %408, %408 : vector<8x4xf32>
    %413 = arith.addf %411, %412 : vector<8x4xf32>
    %cst_124 = arith.constant 9.99999996E-13 : f32
    %414 = vector.broadcast %cst_124 : f32 to vector<8x4xf32>
    %415 = arith.addf %413, %414 : vector<8x4xf32>
    %416 = math.rsqrt %415 : vector<8x4xf32>
    %417 = arith.mulf %413, %416 : vector<8x4xf32>
    %418 = arith.mulf %386, %416 : vector<8x4xf32>
    %419 = arith.mulf %397, %416 : vector<8x4xf32>
    %420 = arith.mulf %408, %416 : vector<8x4xf32>
    %421 = tpu.concatenate %375, %361, %386, %397, %408, %417, %418, %419, %420 in 1 : vector<8x8xf32>, vector<8x16xf32>, vector<8x4xf32>, vector<8x4xf32>, vector<8x4xf32>, vector<8x4xf32>, vector<8x4xf32>, vector<8x4xf32>, vector<8x4xf32> -> vector<8x52xf32>
    %c2_125 = arith.constant 2 : index
    %c0_126 = arith.constant 0 : index
    %c0_127 = arith.constant 0 : index
    %422 = vector.load %arg12[%c2_125, %c0_126, %c0_127] : memref<12x52x32xf32, #tpu.memory_space<vmem>>, vector<1x52x32xf32>
    %423 = vector.shape_cast %422 : vector<1x52x32xf32> to vector<52x32xf32>
    %cst_128 = arith.constant dense<0.000000e+00> : vector<8x32xf32>
    %424 = tpu.matmul %421, %423, %cst_128 {dimension_numbers = #tpu.dot_dimension_numbers<[1], [0], [0], [1], [0, 0, 1, 1], [], []>} : vector<8x52xf32>, vector<52x32xf32>, vector<8x32xf32> -> vector<8x32xf32>
    %425 = arith.addf %291, %424 : vector<8x32xf32>
    %c0_129 = arith.constant 0 : index
    %c3_130 = arith.constant 3 : index
    %c0_131 = arith.constant 0 : index
    %c0_132 = arith.constant 0 : index
    %426 = vector.load %arg2[%c0_129, %c3_130, %c0_131, %c0_132] : memref<1x12x8x30xf32, #tpu.memory_space<vmem>>, vector<1x1x8x30xf32>
    %427 = vector.shape_cast %426 : vector<1x1x8x30xf32> to vector<8x30xf32>
    %c0_133 = arith.constant 0 : index
    %c3_134 = arith.constant 3 : index
    %c0_135 = arith.constant 0 : index
    %c0_136 = arith.constant 0 : index
    %428 = vector.load %arg3[%c0_133, %c3_134, %c0_135, %c0_136] : memref<1x12x30x8xf32, #tpu.memory_space<vmem>>, vector<1x1x30x8xf32>
    %429 = vector.shape_cast %428 : vector<1x1x30x8xf32> to vector<30x8xf32>
    %cst_137 = arith.constant dense<0.000000e+00> : vector<8x8xf32>
    %430 = tpu.matmul %427, %429, %cst_137 {dimension_numbers = #tpu.dot_dimension_numbers<[1], [0], [0], [1], [0, 0, 1, 1], [], []>} : vector<8x30xf32>, vector<30x8xf32>, vector<8x8xf32> -> vector<8x8xf32>
    %c3_138 = arith.constant 3 : index
    %c0_139 = arith.constant 0 : index
    %431 = memref.load %arg6[%c3_138, %c0_139] : memref<12x8xf32, #tpu.memory_space<smem>>
    %432 = vector.extract_strided_slice %15 {offsets = [0, 0, 0], sizes = [1, 8, 8], strides = [1, 1, 1]} : vector<8x8x8xf32> to vector<1x8x8xf32>
    %433 = vector.shape_cast %432 : vector<1x8x8xf32> to vector<8x8xf32>
    %434 = vector.broadcast %431 : f32 to vector<8x8xf32>
    %435 = arith.mulf %434, %433 : vector<8x8xf32>
    %c3_140 = arith.constant 3 : index
    %c1_141 = arith.constant 1 : index
    %436 = memref.load %arg6[%c3_140, %c1_141] : memref<12x8xf32, #tpu.memory_space<smem>>
    %437 = vector.extract_strided_slice %15 {offsets = [1, 0, 0], sizes = [1, 8, 8], strides = [1, 1, 1]} : vector<8x8x8xf32> to vector<1x8x8xf32>
    %438 = vector.shape_cast %437 : vector<1x8x8xf32> to vector<8x8xf32>
    %439 = vector.broadcast %436 : f32 to vector<8x8xf32>
    %440 = arith.mulf %439, %438 : vector<8x8xf32>
    %441 = arith.addf %435, %440 : vector<8x8xf32>
    %c3_142 = arith.constant 3 : index
    %c2_143 = arith.constant 2 : index
    %442 = memref.load %arg6[%c3_142, %c2_143] : memref<12x8xf32, #tpu.memory_space<smem>>
    %443 = vector.extract_strided_slice %15 {offsets = [2, 0, 0], sizes = [1, 8, 8], strides = [1, 1, 1]} : vector<8x8x8xf32> to vector<1x8x8xf32>
    %444 = vector.shape_cast %443 : vector<1x8x8xf32> to vector<8x8xf32>
    %445 = vector.broadcast %442 : f32 to vector<8x8xf32>
    %446 = arith.mulf %445, %444 : vector<8x8xf32>
    %447 = arith.addf %441, %446 : vector<8x8xf32>
    %c3_144 = arith.constant 3 : index
    %c3_145 = arith.constant 3 : index
    %448 = memref.load %arg6[%c3_144, %c3_145] : memref<12x8xf32, #tpu.memory_space<smem>>
    %449 = vector.extract_strided_slice %15 {offsets = [3, 0, 0], sizes = [1, 8, 8], strides = [1, 1, 1]} : vector<8x8x8xf32> to vector<1x8x8xf32>
    %450 = vector.shape_cast %449 : vector<1x8x8xf32> to vector<8x8xf32>
    %451 = vector.broadcast %448 : f32 to vector<8x8xf32>
    %452 = arith.mulf %451, %450 : vector<8x8xf32>
    %453 = arith.addf %447, %452 : vector<8x8xf32>
    %c3_146 = arith.constant 3 : index
    %c4_147 = arith.constant 4 : index
    %454 = memref.load %arg6[%c3_146, %c4_147] : memref<12x8xf32, #tpu.memory_space<smem>>
    %455 = vector.extract_strided_slice %15 {offsets = [4, 0, 0], sizes = [1, 8, 8], strides = [1, 1, 1]} : vector<8x8x8xf32> to vector<1x8x8xf32>
    %456 = vector.shape_cast %455 : vector<1x8x8xf32> to vector<8x8xf32>
    %457 = vector.broadcast %454 : f32 to vector<8x8xf32>
    %458 = arith.mulf %457, %456 : vector<8x8xf32>
    %459 = arith.addf %453, %458 : vector<8x8xf32>
    %c3_148 = arith.constant 3 : index
    %c5_149 = arith.constant 5 : index
    %460 = memref.load %arg6[%c3_148, %c5_149] : memref<12x8xf32, #tpu.memory_space<smem>>
    %461 = vector.extract_strided_slice %15 {offsets = [5, 0, 0], sizes = [1, 8, 8], strides = [1, 1, 1]} : vector<8x8x8xf32> to vector<1x8x8xf32>
    %462 = vector.shape_cast %461 : vector<1x8x8xf32> to vector<8x8xf32>
    %463 = vector.broadcast %460 : f32 to vector<8x8xf32>
    %464 = arith.mulf %463, %462 : vector<8x8xf32>
    %465 = arith.addf %459, %464 : vector<8x8xf32>
    %c3_150 = arith.constant 3 : index
    %c6_151 = arith.constant 6 : index
    %466 = memref.load %arg6[%c3_150, %c6_151] : memref<12x8xf32, #tpu.memory_space<smem>>
    %467 = vector.extract_strided_slice %15 {offsets = [6, 0, 0], sizes = [1, 8, 8], strides = [1, 1, 1]} : vector<8x8x8xf32> to vector<1x8x8xf32>
    %468 = vector.shape_cast %467 : vector<1x8x8xf32> to vector<8x8xf32>
    %469 = vector.broadcast %466 : f32 to vector<8x8xf32>
    %470 = arith.mulf %469, %468 : vector<8x8xf32>
    %471 = arith.addf %465, %470 : vector<8x8xf32>
    %c3_152 = arith.constant 3 : index
    %c7_153 = arith.constant 7 : index
    %472 = memref.load %arg6[%c3_152, %c7_153] : memref<12x8xf32, #tpu.memory_space<smem>>
    %473 = vector.extract_strided_slice %15 {offsets = [7, 0, 0], sizes = [1, 8, 8], strides = [1, 1, 1]} : vector<8x8x8xf32> to vector<1x8x8xf32>
    %474 = vector.shape_cast %473 : vector<1x8x8xf32> to vector<8x8xf32>
    %475 = vector.broadcast %472 : f32 to vector<8x8xf32>
    %476 = arith.mulf %475, %474 : vector<8x8xf32>
    %477 = arith.addf %471, %476 : vector<8x8xf32>
    %478 = arith.addf %430, %477 : vector<8x8xf32>
    %cst_154 = arith.constant 0.577350259 : f32
    %479 = vector.broadcast %cst_154 : f32 to vector<8x8xf32>
    %480 = arith.mulf %478, %479 : vector<8x8xf32>
    %481 = arith.addf %480, %13 : vector<8x8xf32>
    %cst_155 = arith.constant dense<0xFF800000> : vector<8xf32>
    %482 = vector.multi_reduction <maximumf>, %481, %cst_155 [1] : vector<8x8xf32> to vector<8xf32>
    %483 = vector.shape_cast %482 : vector<8xf32> to vector<8x1xf32>
    %484 = vector.broadcast %483 : vector<8x1xf32> to vector<8x8xf32>
    %485 = arith.subf %481, %484 : vector<8x8xf32>
    %486 = math.exp %485 : vector<8x8xf32>
    %cst_156 = arith.constant dense<0.000000e+00> : vector<8xf32>
    %487 = vector.multi_reduction <add>, %486, %cst_156 [1] : vector<8x8xf32> to vector<8xf32>
    %488 = vector.shape_cast %487 : vector<8xf32> to vector<8x1xf32>
    %489 = tpu.reciprocal %488 {approx = true} : vector<8x1xf32> -> vector<8x1xf32>
    %490 = vector.broadcast %489 : vector<8x1xf32> to vector<8x8xf32>
    %491 = arith.mulf %486, %490 : vector<8x8xf32>
    %c0_157 = arith.constant 0 : index
    %c3_158 = arith.constant 3 : index
    %c0_159 = arith.constant 0 : index
    %c0_160 = arith.constant 0 : index
    %492 = vector.load %arg4[%c0_157, %c3_158, %c0_159, %c0_160] : memref<1x12x8x28xf32, #tpu.memory_space<vmem>>, vector<1x1x8x28xf32>
    %493 = vector.shape_cast %492 : vector<1x1x8x28xf32> to vector<8x28xf32>
    %cst_161 = arith.constant dense<0.000000e+00> : vector<8x28xf32>
    %494 = tpu.matmul %491, %493, %cst_161 {dimension_numbers = #tpu.dot_dimension_numbers<[1], [0], [0], [1], [0, 0, 1, 1], [], []>} : vector<8x8xf32>, vector<8x28xf32>, vector<8x28xf32> -> vector<8x28xf32>
    %495 = vector.extract_strided_slice %494 {offsets = [0, 0], sizes = [8, 16], strides = [1, 1]} : vector<8x28xf32> to vector<8x16xf32>
    %496 = vector.extract_strided_slice %494 {offsets = [0, 16], sizes = [8, 4], strides = [1, 1]} : vector<8x28xf32> to vector<8x4xf32>
    %497 = vector.broadcast %18 : vector<8x1xf32> to vector<8x4xf32>
    %498 = arith.subf %496, %497 : vector<8x4xf32>
    %499 = vector.extract_strided_slice %494 {offsets = [0, 20], sizes = [8, 4], strides = [1, 1]} : vector<8x28xf32> to vector<8x4xf32>
    %500 = vector.broadcast %19 : vector<8x1xf32> to vector<8x4xf32>
    %501 = arith.subf %499, %500 : vector<8x4xf32>
    %502 = vector.extract_strided_slice %494 {offsets = [0, 24], sizes = [8, 4], strides = [1, 1]} : vector<8x28xf32> to vector<8x4xf32>
    %503 = vector.broadcast %20 : vector<8x1xf32> to vector<8x4xf32>
    %504 = arith.subf %502, %503 : vector<8x4xf32>
    %505 = vector.shape_cast %491 : vector<8x8xf32> to vector<1x8x8xf32>
    %506 = vector.broadcast %505 : vector<1x8x8xf32> to vector<8x8x8xf32>
    %507 = arith.mulf %506, %15 : vector<8x8x8xf32>
    %cst_162 = arith.constant dense<0.000000e+00> : vector<8x8xf32>
    %508 = vector.multi_reduction <add>, %507, %cst_162 [2] : vector<8x8x8xf32> to vector<8x8xf32>
    %509 = tpu.transpose %508, [1, 0] : vector<8x8xf32> -> vector<8x8xf32>
    %510 = vector.extract_strided_slice %22 {offsets = [0, 0], sizes = [8, 1], strides = [1, 1]} : vector<8x9xf32> to vector<8x1xf32>
    %511 = vector.broadcast %510 : vector<8x1xf32> to vector<8x4xf32>
    %512 = arith.mulf %511, %498 : vector<8x4xf32>
    %513 = vector.extract_strided_slice %22 {offsets = [0, 3], sizes = [8, 1], strides = [1, 1]} : vector<8x9xf32> to vector<8x1xf32>
    %514 = vector.broadcast %513 : vector<8x1xf32> to vector<8x4xf32>
    %515 = arith.mulf %514, %501 : vector<8x4xf32>
    %516 = arith.addf %512, %515 : vector<8x4xf32>
    %517 = vector.extract_strided_slice %22 {offsets = [0, 6], sizes = [8, 1], strides = [1, 1]} : vector<8x9xf32> to vector<8x1xf32>
    %518 = vector.broadcast %517 : vector<8x1xf32> to vector<8x4xf32>
    %519 = arith.mulf %518, %504 : vector<8x4xf32>
    %520 = arith.addf %516, %519 : vector<8x4xf32>
    %521 = vector.extract_strided_slice %22 {offsets = [0, 1], sizes = [8, 1], strides = [1, 1]} : vector<8x9xf32> to vector<8x1xf32>
    %522 = vector.broadcast %521 : vector<8x1xf32> to vector<8x4xf32>
    %523 = arith.mulf %522, %498 : vector<8x4xf32>
    %524 = vector.extract_strided_slice %22 {offsets = [0, 4], sizes = [8, 1], strides = [1, 1]} : vector<8x9xf32> to vector<8x1xf32>
    %525 = vector.broadcast %524 : vector<8x1xf32> to vector<8x4xf32>
    %526 = arith.mulf %525, %501 : vector<8x4xf32>
    %527 = arith.addf %523, %526 : vector<8x4xf32>
    %528 = vector.extract_strided_slice %22 {offsets = [0, 7], sizes = [8, 1], strides = [1, 1]} : vector<8x9xf32> to vector<8x1xf32>
    %529 = vector.broadcast %528 : vector<8x1xf32> to vector<8x4xf32>
    %530 = arith.mulf %529, %504 : vector<8x4xf32>
    %531 = arith.addf %527, %530 : vector<8x4xf32>
    %532 = vector.extract_strided_slice %22 {offsets = [0, 2], sizes = [8, 1], strides = [1, 1]} : vector<8x9xf32> to vector<8x1xf32>
    %533 = vector.broadcast %532 : vector<8x1xf32> to vector<8x4xf32>
    %534 = arith.mulf %533, %498 : vector<8x4xf32>
    %535 = vector.extract_strided_slice %22 {offsets = [0, 5], sizes = [8, 1], strides = [1, 1]} : vector<8x9xf32> to vector<8x1xf32>
    %536 = vector.broadcast %535 : vector<8x1xf32> to vector<8x4xf32>
    %537 = arith.mulf %536, %501 : vector<8x4xf32>
    %538 = arith.addf %534, %537 : vector<8x4xf32>
    %539 = vector.extract_strided_slice %22 {offsets = [0, 8], sizes = [8, 1], strides = [1, 1]} : vector<8x9xf32> to vector<8x1xf32>
    %540 = vector.broadcast %539 : vector<8x1xf32> to vector<8x4xf32>
    %541 = arith.mulf %540, %504 : vector<8x4xf32>
    %542 = arith.addf %538, %541 : vector<8x4xf32>
    %543 = arith.mulf %520, %520 : vector<8x4xf32>
    %544 = arith.mulf %531, %531 : vector<8x4xf32>
    %545 = arith.addf %543, %544 : vector<8x4xf32>
    %546 = arith.mulf %542, %542 : vector<8x4xf32>
    %547 = arith.addf %545, %546 : vector<8x4xf32>
    %cst_163 = arith.constant 9.99999996E-13 : f32
    %548 = vector.broadcast %cst_163 : f32 to vector<8x4xf32>
    %549 = arith.addf %547, %548 : vector<8x4xf32>
    %550 = math.rsqrt %549 : vector<8x4xf32>
    %551 = arith.mulf %547, %550 : vector<8x4xf32>
    %552 = arith.mulf %520, %550 : vector<8x4xf32>
    %553 = arith.mulf %531, %550 : vector<8x4xf32>
    %554 = arith.mulf %542, %550 : vector<8x4xf32>
    %555 = tpu.concatenate %509, %495, %520, %531, %542, %551, %552, %553, %554 in 1 : vector<8x8xf32>, vector<8x16xf32>, vector<8x4xf32>, vector<8x4xf32>, vector<8x4xf32>, vector<8x4xf32>, vector<8x4xf32>, vector<8x4xf32>, vector<8x4xf32> -> vector<8x52xf32>
    %c3_164 = arith.constant 3 : index
    %c0_165 = arith.constant 0 : index
    %c0_166 = arith.constant 0 : index
    %556 = vector.load %arg12[%c3_164, %c0_165, %c0_166] : memref<12x52x32xf32, #tpu.memory_space<vmem>>, vector<1x52x32xf32>
    %557 = vector.shape_cast %556 : vector<1x52x32xf32> to vector<52x32xf32>
    %cst_167 = arith.constant dense<0.000000e+00> : vector<8x32xf32>
    %558 = tpu.matmul %555, %557, %cst_167 {dimension_numbers = #tpu.dot_dimension_numbers<[1], [0], [0], [1], [0, 0, 1, 1], [], []>} : vector<8x52xf32>, vector<52x32xf32>, vector<8x32xf32> -> vector<8x32xf32>
    %559 = arith.addf %425, %558 : vector<8x32xf32>
    %c0_168 = arith.constant 0 : index
    %c4_169 = arith.constant 4 : index
    %c0_170 = arith.constant 0 : index
    %c0_171 = arith.constant 0 : index
    %560 = vector.load %arg2[%c0_168, %c4_169, %c0_170, %c0_171] : memref<1x12x8x30xf32, #tpu.memory_space<vmem>>, vector<1x1x8x30xf32>
    %561 = vector.shape_cast %560 : vector<1x1x8x30xf32> to vector<8x30xf32>
    %c0_172 = arith.constant 0 : index
    %c4_173 = arith.constant 4 : index
    %c0_174 = arith.constant 0 : index
    %c0_175 = arith.constant 0 : index
    %562 = vector.load %arg3[%c0_172, %c4_173, %c0_174, %c0_175] : memref<1x12x30x8xf32, #tpu.memory_space<vmem>>, vector<1x1x30x8xf32>
    %563 = vector.shape_cast %562 : vector<1x1x30x8xf32> to vector<30x8xf32>
    %cst_176 = arith.constant dense<0.000000e+00> : vector<8x8xf32>
    %564 = tpu.matmul %561, %563, %cst_176 {dimension_numbers = #tpu.dot_dimension_numbers<[1], [0], [0], [1], [0, 0, 1, 1], [], []>} : vector<8x30xf32>, vector<30x8xf32>, vector<8x8xf32> -> vector<8x8xf32>
    %c4_177 = arith.constant 4 : index
    %c0_178 = arith.constant 0 : index
    %565 = memref.load %arg6[%c4_177, %c0_178] : memref<12x8xf32, #tpu.memory_space<smem>>
    %566 = vector.extract_strided_slice %15 {offsets = [0, 0, 0], sizes = [1, 8, 8], strides = [1, 1, 1]} : vector<8x8x8xf32> to vector<1x8x8xf32>
    %567 = vector.shape_cast %566 : vector<1x8x8xf32> to vector<8x8xf32>
    %568 = vector.broadcast %565 : f32 to vector<8x8xf32>
    %569 = arith.mulf %568, %567 : vector<8x8xf32>
    %c4_179 = arith.constant 4 : index
    %c1_180 = arith.constant 1 : index
    %570 = memref.load %arg6[%c4_179, %c1_180] : memref<12x8xf32, #tpu.memory_space<smem>>
    %571 = vector.extract_strided_slice %15 {offsets = [1, 0, 0], sizes = [1, 8, 8], strides = [1, 1, 1]} : vector<8x8x8xf32> to vector<1x8x8xf32>
    %572 = vector.shape_cast %571 : vector<1x8x8xf32> to vector<8x8xf32>
    %573 = vector.broadcast %570 : f32 to vector<8x8xf32>
    %574 = arith.mulf %573, %572 : vector<8x8xf32>
    %575 = arith.addf %569, %574 : vector<8x8xf32>
    %c4_181 = arith.constant 4 : index
    %c2_182 = arith.constant 2 : index
    %576 = memref.load %arg6[%c4_181, %c2_182] : memref<12x8xf32, #tpu.memory_space<smem>>
    %577 = vector.extract_strided_slice %15 {offsets = [2, 0, 0], sizes = [1, 8, 8], strides = [1, 1, 1]} : vector<8x8x8xf32> to vector<1x8x8xf32>
    %578 = vector.shape_cast %577 : vector<1x8x8xf32> to vector<8x8xf32>
    %579 = vector.broadcast %576 : f32 to vector<8x8xf32>
    %580 = arith.mulf %579, %578 : vector<8x8xf32>
    %581 = arith.addf %575, %580 : vector<8x8xf32>
    %c4_183 = arith.constant 4 : index
    %c3_184 = arith.constant 3 : index
    %582 = memref.load %arg6[%c4_183, %c3_184] : memref<12x8xf32, #tpu.memory_space<smem>>
    %583 = vector.extract_strided_slice %15 {offsets = [3, 0, 0], sizes = [1, 8, 8], strides = [1, 1, 1]} : vector<8x8x8xf32> to vector<1x8x8xf32>
    %584 = vector.shape_cast %583 : vector<1x8x8xf32> to vector<8x8xf32>
    %585 = vector.broadcast %582 : f32 to vector<8x8xf32>
    %586 = arith.mulf %585, %584 : vector<8x8xf32>
    %587 = arith.addf %581, %586 : vector<8x8xf32>
    %c4_185 = arith.constant 4 : index
    %c4_186 = arith.constant 4 : index
    %588 = memref.load %arg6[%c4_185, %c4_186] : memref<12x8xf32, #tpu.memory_space<smem>>
    %589 = vector.extract_strided_slice %15 {offsets = [4, 0, 0], sizes = [1, 8, 8], strides = [1, 1, 1]} : vector<8x8x8xf32> to vector<1x8x8xf32>
    %590 = vector.shape_cast %589 : vector<1x8x8xf32> to vector<8x8xf32>
    %591 = vector.broadcast %588 : f32 to vector<8x8xf32>
    %592 = arith.mulf %591, %590 : vector<8x8xf32>
    %593 = arith.addf %587, %592 : vector<8x8xf32>
    %c4_187 = arith.constant 4 : index
    %c5_188 = arith.constant 5 : index
    %594 = memref.load %arg6[%c4_187, %c5_188] : memref<12x8xf32, #tpu.memory_space<smem>>
    %595 = vector.extract_strided_slice %15 {offsets = [5, 0, 0], sizes = [1, 8, 8], strides = [1, 1, 1]} : vector<8x8x8xf32> to vector<1x8x8xf32>
    %596 = vector.shape_cast %595 : vector<1x8x8xf32> to vector<8x8xf32>
    %597 = vector.broadcast %594 : f32 to vector<8x8xf32>
    %598 = arith.mulf %597, %596 : vector<8x8xf32>
    %599 = arith.addf %593, %598 : vector<8x8xf32>
    %c4_189 = arith.constant 4 : index
    %c6_190 = arith.constant 6 : index
    %600 = memref.load %arg6[%c4_189, %c6_190] : memref<12x8xf32, #tpu.memory_space<smem>>
    %601 = vector.extract_strided_slice %15 {offsets = [6, 0, 0], sizes = [1, 8, 8], strides = [1, 1, 1]} : vector<8x8x8xf32> to vector<1x8x8xf32>
    %602 = vector.shape_cast %601 : vector<1x8x8xf32> to vector<8x8xf32>
    %603 = vector.broadcast %600 : f32 to vector<8x8xf32>
    %604 = arith.mulf %603, %602 : vector<8x8xf32>
    %605 = arith.addf %599, %604 : vector<8x8xf32>
    %c4_191 = arith.constant 4 : index
    %c7_192 = arith.constant 7 : index
    %606 = memref.load %arg6[%c4_191, %c7_192] : memref<12x8xf32, #tpu.memory_space<smem>>
    %607 = vector.extract_strided_slice %15 {offsets = [7, 0, 0], sizes = [1, 8, 8], strides = [1, 1, 1]} : vector<8x8x8xf32> to vector<1x8x8xf32>
    %608 = vector.shape_cast %607 : vector<1x8x8xf32> to vector<8x8xf32>
    %609 = vector.broadcast %606 : f32 to vector<8x8xf32>
    %610 = arith.mulf %609, %608 : vector<8x8xf32>
    %611 = arith.addf %605, %610 : vector<8x8xf32>
    %612 = arith.addf %564, %611 : vector<8x8xf32>
    %cst_193 = arith.constant 0.577350259 : f32
    %613 = vector.broadcast %cst_193 : f32 to vector<8x8xf32>
    %614 = arith.mulf %612, %613 : vector<8x8xf32>
    %615 = arith.addf %614, %13 : vector<8x8xf32>
    %cst_194 = arith.constant dense<0xFF800000> : vector<8xf32>
    %616 = vector.multi_reduction <maximumf>, %615, %cst_194 [1] : vector<8x8xf32> to vector<8xf32>
    %617 = vector.shape_cast %616 : vector<8xf32> to vector<8x1xf32>
    %618 = vector.broadcast %617 : vector<8x1xf32> to vector<8x8xf32>
    %619 = arith.subf %615, %618 : vector<8x8xf32>
    %620 = math.exp %619 : vector<8x8xf32>
    %cst_195 = arith.constant dense<0.000000e+00> : vector<8xf32>
    %621 = vector.multi_reduction <add>, %620, %cst_195 [1] : vector<8x8xf32> to vector<8xf32>
    %622 = vector.shape_cast %621 : vector<8xf32> to vector<8x1xf32>
    %623 = tpu.reciprocal %622 {approx = true} : vector<8x1xf32> -> vector<8x1xf32>
    %624 = vector.broadcast %623 : vector<8x1xf32> to vector<8x8xf32>
    %625 = arith.mulf %620, %624 : vector<8x8xf32>
    %c0_196 = arith.constant 0 : index
    %c4_197 = arith.constant 4 : index
    %c0_198 = arith.constant 0 : index
    %c0_199 = arith.constant 0 : index
    %626 = vector.load %arg4[%c0_196, %c4_197, %c0_198, %c0_199] : memref<1x12x8x28xf32, #tpu.memory_space<vmem>>, vector<1x1x8x28xf32>
    %627 = vector.shape_cast %626 : vector<1x1x8x28xf32> to vector<8x28xf32>
    %cst_200 = arith.constant dense<0.000000e+00> : vector<8x28xf32>
    %628 = tpu.matmul %625, %627, %cst_200 {dimension_numbers = #tpu.dot_dimension_numbers<[1], [0], [0], [1], [0, 0, 1, 1], [], []>} : vector<8x8xf32>, vector<8x28xf32>, vector<8x28xf32> -> vector<8x28xf32>
    %629 = vector.extract_strided_slice %628 {offsets = [0, 0], sizes = [8, 16], strides = [1, 1]} : vector<8x28xf32> to vector<8x16xf32>
    %630 = vector.extract_strided_slice %628 {offsets = [0, 16], sizes = [8, 4], strides = [1, 1]} : vector<8x28xf32> to vector<8x4xf32>
    %631 = vector.broadcast %18 : vector<8x1xf32> to vector<8x4xf32>
    %632 = arith.subf %630, %631 : vector<8x4xf32>
    %633 = vector.extract_strided_slice %628 {offsets = [0, 20], sizes = [8, 4], strides = [1, 1]} : vector<8x28xf32> to vector<8x4xf32>
    %634 = vector.broadcast %19 : vector<8x1xf32> to vector<8x4xf32>
    %635 = arith.subf %633, %634 : vector<8x4xf32>
    %636 = vector.extract_strided_slice %628 {offsets = [0, 24], sizes = [8, 4], strides = [1, 1]} : vector<8x28xf32> to vector<8x4xf32>
    %637 = vector.broadcast %20 : vector<8x1xf32> to vector<8x4xf32>
    %638 = arith.subf %636, %637 : vector<8x4xf32>
    %639 = vector.shape_cast %625 : vector<8x8xf32> to vector<1x8x8xf32>
    %640 = vector.broadcast %639 : vector<1x8x8xf32> to vector<8x8x8xf32>
    %641 = arith.mulf %640, %15 : vector<8x8x8xf32>
    %cst_201 = arith.constant dense<0.000000e+00> : vector<8x8xf32>
    %642 = vector.multi_reduction <add>, %641, %cst_201 [2] : vector<8x8x8xf32> to vector<8x8xf32>
    %643 = tpu.transpose %642, [1, 0] : vector<8x8xf32> -> vector<8x8xf32>
    %644 = vector.extract_strided_slice %22 {offsets = [0, 0], sizes = [8, 1], strides = [1, 1]} : vector<8x9xf32> to vector<8x1xf32>
    %645 = vector.broadcast %644 : vector<8x1xf32> to vector<8x4xf32>
    %646 = arith.mulf %645, %632 : vector<8x4xf32>
    %647 = vector.extract_strided_slice %22 {offsets = [0, 3], sizes = [8, 1], strides = [1, 1]} : vector<8x9xf32> to vector<8x1xf32>
    %648 = vector.broadcast %647 : vector<8x1xf32> to vector<8x4xf32>
    %649 = arith.mulf %648, %635 : vector<8x4xf32>
    %650 = arith.addf %646, %649 : vector<8x4xf32>
    %651 = vector.extract_strided_slice %22 {offsets = [0, 6], sizes = [8, 1], strides = [1, 1]} : vector<8x9xf32> to vector<8x1xf32>
    %652 = vector.broadcast %651 : vector<8x1xf32> to vector<8x4xf32>
    %653 = arith.mulf %652, %638 : vector<8x4xf32>
    %654 = arith.addf %650, %653 : vector<8x4xf32>
    %655 = vector.extract_strided_slice %22 {offsets = [0, 1], sizes = [8, 1], strides = [1, 1]} : vector<8x9xf32> to vector<8x1xf32>
    %656 = vector.broadcast %655 : vector<8x1xf32> to vector<8x4xf32>
    %657 = arith.mulf %656, %632 : vector<8x4xf32>
    %658 = vector.extract_strided_slice %22 {offsets = [0, 4], sizes = [8, 1], strides = [1, 1]} : vector<8x9xf32> to vector<8x1xf32>
    %659 = vector.broadcast %658 : vector<8x1xf32> to vector<8x4xf32>
    %660 = arith.mulf %659, %635 : vector<8x4xf32>
    %661 = arith.addf %657, %660 : vector<8x4xf32>
    %662 = vector.extract_strided_slice %22 {offsets = [0, 7], sizes = [8, 1], strides = [1, 1]} : vector<8x9xf32> to vector<8x1xf32>
    %663 = vector.broadcast %662 : vector<8x1xf32> to vector<8x4xf32>
    %664 = arith.mulf %663, %638 : vector<8x4xf32>
    %665 = arith.addf %661, %664 : vector<8x4xf32>
    %666 = vector.extract_strided_slice %22 {offsets = [0, 2], sizes = [8, 1], strides = [1, 1]} : vector<8x9xf32> to vector<8x1xf32>
    %667 = vector.broadcast %666 : vector<8x1xf32> to vector<8x4xf32>
    %668 = arith.mulf %667, %632 : vector<8x4xf32>
    %669 = vector.extract_strided_slice %22 {offsets = [0, 5], sizes = [8, 1], strides = [1, 1]} : vector<8x9xf32> to vector<8x1xf32>
    %670 = vector.broadcast %669 : vector<8x1xf32> to vector<8x4xf32>
    %671 = arith.mulf %670, %635 : vector<8x4xf32>
    %672 = arith.addf %668, %671 : vector<8x4xf32>
    %673 = vector.extract_strided_slice %22 {offsets = [0, 8], sizes = [8, 1], strides = [1, 1]} : vector<8x9xf32> to vector<8x1xf32>
    %674 = vector.broadcast %673 : vector<8x1xf32> to vector<8x4xf32>
    %675 = arith.mulf %674, %638 : vector<8x4xf32>
    %676 = arith.addf %672, %675 : vector<8x4xf32>
    %677 = arith.mulf %654, %654 : vector<8x4xf32>
    %678 = arith.mulf %665, %665 : vector<8x4xf32>
    %679 = arith.addf %677, %678 : vector<8x4xf32>
    %680 = arith.mulf %676, %676 : vector<8x4xf32>
    %681 = arith.addf %679, %680 : vector<8x4xf32>
    %cst_202 = arith.constant 9.99999996E-13 : f32
    %682 = vector.broadcast %cst_202 : f32 to vector<8x4xf32>
    %683 = arith.addf %681, %682 : vector<8x4xf32>
    %684 = math.rsqrt %683 : vector<8x4xf32>
    %685 = arith.mulf %681, %684 : vector<8x4xf32>
    %686 = arith.mulf %654, %684 : vector<8x4xf32>
    %687 = arith.mulf %665, %684 : vector<8x4xf32>
    %688 = arith.mulf %676, %684 : vector<8x4xf32>
    %689 = tpu.concatenate %643, %629, %654, %665, %676, %685, %686, %687, %688 in 1 : vector<8x8xf32>, vector<8x16xf32>, vector<8x4xf32>, vector<8x4xf32>, vector<8x4xf32>, vector<8x4xf32>, vector<8x4xf32>, vector<8x4xf32>, vector<8x4xf32> -> vector<8x52xf32>
    %c4_203 = arith.constant 4 : index
    %c0_204 = arith.constant 0 : index
    %c0_205 = arith.constant 0 : index
    %690 = vector.load %arg12[%c4_203, %c0_204, %c0_205] : memref<12x52x32xf32, #tpu.memory_space<vmem>>, vector<1x52x32xf32>
    %691 = vector.shape_cast %690 : vector<1x52x32xf32> to vector<52x32xf32>
    %cst_206 = arith.constant dense<0.000000e+00> : vector<8x32xf32>
    %692 = tpu.matmul %689, %691, %cst_206 {dimension_numbers = #tpu.dot_dimension_numbers<[1], [0], [0], [1], [0, 0, 1, 1], [], []>} : vector<8x52xf32>, vector<52x32xf32>, vector<8x32xf32> -> vector<8x32xf32>
    %693 = arith.addf %559, %692 : vector<8x32xf32>
    %c0_207 = arith.constant 0 : index
    %c5_208 = arith.constant 5 : index
    %c0_209 = arith.constant 0 : index
    %c0_210 = arith.constant 0 : index
    %694 = vector.load %arg2[%c0_207, %c5_208, %c0_209, %c0_210] : memref<1x12x8x30xf32, #tpu.memory_space<vmem>>, vector<1x1x8x30xf32>
    %695 = vector.shape_cast %694 : vector<1x1x8x30xf32> to vector<8x30xf32>
    %c0_211 = arith.constant 0 : index
    %c5_212 = arith.constant 5 : index
    %c0_213 = arith.constant 0 : index
    %c0_214 = arith.constant 0 : index
    %696 = vector.load %arg3[%c0_211, %c5_212, %c0_213, %c0_214] : memref<1x12x30x8xf32, #tpu.memory_space<vmem>>, vector<1x1x30x8xf32>
    %697 = vector.shape_cast %696 : vector<1x1x30x8xf32> to vector<30x8xf32>
    %cst_215 = arith.constant dense<0.000000e+00> : vector<8x8xf32>
    %698 = tpu.matmul %695, %697, %cst_215 {dimension_numbers = #tpu.dot_dimension_numbers<[1], [0], [0], [1], [0, 0, 1, 1], [], []>} : vector<8x30xf32>, vector<30x8xf32>, vector<8x8xf32> -> vector<8x8xf32>
    %c5_216 = arith.constant 5 : index
    %c0_217 = arith.constant 0 : index
    %699 = memref.load %arg6[%c5_216, %c0_217] : memref<12x8xf32, #tpu.memory_space<smem>>
    %700 = vector.extract_strided_slice %15 {offsets = [0, 0, 0], sizes = [1, 8, 8], strides = [1, 1, 1]} : vector<8x8x8xf32> to vector<1x8x8xf32>
    %701 = vector.shape_cast %700 : vector<1x8x8xf32> to vector<8x8xf32>
    %702 = vector.broadcast %699 : f32 to vector<8x8xf32>
    %703 = arith.mulf %702, %701 : vector<8x8xf32>
    %c5_218 = arith.constant 5 : index
    %c1_219 = arith.constant 1 : index
    %704 = memref.load %arg6[%c5_218, %c1_219] : memref<12x8xf32, #tpu.memory_space<smem>>
    %705 = vector.extract_strided_slice %15 {offsets = [1, 0, 0], sizes = [1, 8, 8], strides = [1, 1, 1]} : vector<8x8x8xf32> to vector<1x8x8xf32>
    %706 = vector.shape_cast %705 : vector<1x8x8xf32> to vector<8x8xf32>
    %707 = vector.broadcast %704 : f32 to vector<8x8xf32>
    %708 = arith.mulf %707, %706 : vector<8x8xf32>
    %709 = arith.addf %703, %708 : vector<8x8xf32>
    %c5_220 = arith.constant 5 : index
    %c2_221 = arith.constant 2 : index
    %710 = memref.load %arg6[%c5_220, %c2_221] : memref<12x8xf32, #tpu.memory_space<smem>>
    %711 = vector.extract_strided_slice %15 {offsets = [2, 0, 0], sizes = [1, 8, 8], strides = [1, 1, 1]} : vector<8x8x8xf32> to vector<1x8x8xf32>
    %712 = vector.shape_cast %711 : vector<1x8x8xf32> to vector<8x8xf32>
    %713 = vector.broadcast %710 : f32 to vector<8x8xf32>
    %714 = arith.mulf %713, %712 : vector<8x8xf32>
    %715 = arith.addf %709, %714 : vector<8x8xf32>
    %c5_222 = arith.constant 5 : index
    %c3_223 = arith.constant 3 : index
    %716 = memref.load %arg6[%c5_222, %c3_223] : memref<12x8xf32, #tpu.memory_space<smem>>
    %717 = vector.extract_strided_slice %15 {offsets = [3, 0, 0], sizes = [1, 8, 8], strides = [1, 1, 1]} : vector<8x8x8xf32> to vector<1x8x8xf32>
    %718 = vector.shape_cast %717 : vector<1x8x8xf32> to vector<8x8xf32>
    %719 = vector.broadcast %716 : f32 to vector<8x8xf32>
    %720 = arith.mulf %719, %718 : vector<8x8xf32>
    %721 = arith.addf %715, %720 : vector<8x8xf32>
    %c5_224 = arith.constant 5 : index
    %c4_225 = arith.constant 4 : index
    %722 = memref.load %arg6[%c5_224, %c4_225] : memref<12x8xf32, #tpu.memory_space<smem>>
    %723 = vector.extract_strided_slice %15 {offsets = [4, 0, 0], sizes = [1, 8, 8], strides = [1, 1, 1]} : vector<8x8x8xf32> to vector<1x8x8xf32>
    %724 = vector.shape_cast %723 : vector<1x8x8xf32> to vector<8x8xf32>
    %725 = vector.broadcast %722 : f32 to vector<8x8xf32>
    %726 = arith.mulf %725, %724 : vector<8x8xf32>
    %727 = arith.addf %721, %726 : vector<8x8xf32>
    %c5_226 = arith.constant 5 : index
    %c5_227 = arith.constant 5 : index
    %728 = memref.load %arg6[%c5_226, %c5_227] : memref<12x8xf32, #tpu.memory_space<smem>>
    %729 = vector.extract_strided_slice %15 {offsets = [5, 0, 0], sizes = [1, 8, 8], strides = [1, 1, 1]} : vector<8x8x8xf32> to vector<1x8x8xf32>
    %730 = vector.shape_cast %729 : vector<1x8x8xf32> to vector<8x8xf32>
    %731 = vector.broadcast %728 : f32 to vector<8x8xf32>
    %732 = arith.mulf %731, %730 : vector<8x8xf32>
    %733 = arith.addf %727, %732 : vector<8x8xf32>
    %c5_228 = arith.constant 5 : index
    %c6_229 = arith.constant 6 : index
    %734 = memref.load %arg6[%c5_228, %c6_229] : memref<12x8xf32, #tpu.memory_space<smem>>
    %735 = vector.extract_strided_slice %15 {offsets = [6, 0, 0], sizes = [1, 8, 8], strides = [1, 1, 1]} : vector<8x8x8xf32> to vector<1x8x8xf32>
    %736 = vector.shape_cast %735 : vector<1x8x8xf32> to vector<8x8xf32>
    %737 = vector.broadcast %734 : f32 to vector<8x8xf32>
    %738 = arith.mulf %737, %736 : vector<8x8xf32>
    %739 = arith.addf %733, %738 : vector<8x8xf32>
    %c5_230 = arith.constant 5 : index
    %c7_231 = arith.constant 7 : index
    %740 = memref.load %arg6[%c5_230, %c7_231] : memref<12x8xf32, #tpu.memory_space<smem>>
    %741 = vector.extract_strided_slice %15 {offsets = [7, 0, 0], sizes = [1, 8, 8], strides = [1, 1, 1]} : vector<8x8x8xf32> to vector<1x8x8xf32>
    %742 = vector.shape_cast %741 : vector<1x8x8xf32> to vector<8x8xf32>
    %743 = vector.broadcast %740 : f32 to vector<8x8xf32>
    %744 = arith.mulf %743, %742 : vector<8x8xf32>
    %745 = arith.addf %739, %744 : vector<8x8xf32>
    %746 = arith.addf %698, %745 : vector<8x8xf32>
    %cst_232 = arith.constant 0.577350259 : f32
    %747 = vector.broadcast %cst_232 : f32 to vector<8x8xf32>
    %748 = arith.mulf %746, %747 : vector<8x8xf32>
    %749 = arith.addf %748, %13 : vector<8x8xf32>
    %cst_233 = arith.constant dense<0xFF800000> : vector<8xf32>
    %750 = vector.multi_reduction <maximumf>, %749, %cst_233 [1] : vector<8x8xf32> to vector<8xf32>
    %751 = vector.shape_cast %750 : vector<8xf32> to vector<8x1xf32>
    %752 = vector.broadcast %751 : vector<8x1xf32> to vector<8x8xf32>
    %753 = arith.subf %749, %752 : vector<8x8xf32>
    %754 = math.exp %753 : vector<8x8xf32>
    %cst_234 = arith.constant dense<0.000000e+00> : vector<8xf32>
    %755 = vector.multi_reduction <add>, %754, %cst_234 [1] : vector<8x8xf32> to vector<8xf32>
    %756 = vector.shape_cast %755 : vector<8xf32> to vector<8x1xf32>
    %757 = tpu.reciprocal %756 {approx = true} : vector<8x1xf32> -> vector<8x1xf32>
    %758 = vector.broadcast %757 : vector<8x1xf32> to vector<8x8xf32>
    %759 = arith.mulf %754, %758 : vector<8x8xf32>
    %c0_235 = arith.constant 0 : index
    %c5_236 = arith.constant 5 : index
    %c0_237 = arith.constant 0 : index
    %c0_238 = arith.constant 0 : index
    %760 = vector.load %arg4[%c0_235, %c5_236, %c0_237, %c0_238] : memref<1x12x8x28xf32, #tpu.memory_space<vmem>>, vector<1x1x8x28xf32>
    %761 = vector.shape_cast %760 : vector<1x1x8x28xf32> to vector<8x28xf32>
    %cst_239 = arith.constant dense<0.000000e+00> : vector<8x28xf32>
    %762 = tpu.matmul %759, %761, %cst_239 {dimension_numbers = #tpu.dot_dimension_numbers<[1], [0], [0], [1], [0, 0, 1, 1], [], []>} : vector<8x8xf32>, vector<8x28xf32>, vector<8x28xf32> -> vector<8x28xf32>
    %763 = vector.extract_strided_slice %762 {offsets = [0, 0], sizes = [8, 16], strides = [1, 1]} : vector<8x28xf32> to vector<8x16xf32>
    %764 = vector.extract_strided_slice %762 {offsets = [0, 16], sizes = [8, 4], strides = [1, 1]} : vector<8x28xf32> to vector<8x4xf32>
    %765 = vector.broadcast %18 : vector<8x1xf32> to vector<8x4xf32>
    %766 = arith.subf %764, %765 : vector<8x4xf32>
    %767 = vector.extract_strided_slice %762 {offsets = [0, 20], sizes = [8, 4], strides = [1, 1]} : vector<8x28xf32> to vector<8x4xf32>
    %768 = vector.broadcast %19 : vector<8x1xf32> to vector<8x4xf32>
    %769 = arith.subf %767, %768 : vector<8x4xf32>
    %770 = vector.extract_strided_slice %762 {offsets = [0, 24], sizes = [8, 4], strides = [1, 1]} : vector<8x28xf32> to vector<8x4xf32>
    %771 = vector.broadcast %20 : vector<8x1xf32> to vector<8x4xf32>
    %772 = arith.subf %770, %771 : vector<8x4xf32>
    %773 = vector.shape_cast %759 : vector<8x8xf32> to vector<1x8x8xf32>
    %774 = vector.broadcast %773 : vector<1x8x8xf32> to vector<8x8x8xf32>
    %775 = arith.mulf %774, %15 : vector<8x8x8xf32>
    %cst_240 = arith.constant dense<0.000000e+00> : vector<8x8xf32>
    %776 = vector.multi_reduction <add>, %775, %cst_240 [2] : vector<8x8x8xf32> to vector<8x8xf32>
    %777 = tpu.transpose %776, [1, 0] : vector<8x8xf32> -> vector<8x8xf32>
    %778 = vector.extract_strided_slice %22 {offsets = [0, 0], sizes = [8, 1], strides = [1, 1]} : vector<8x9xf32> to vector<8x1xf32>
    %779 = vector.broadcast %778 : vector<8x1xf32> to vector<8x4xf32>
    %780 = arith.mulf %779, %766 : vector<8x4xf32>
    %781 = vector.extract_strided_slice %22 {offsets = [0, 3], sizes = [8, 1], strides = [1, 1]} : vector<8x9xf32> to vector<8x1xf32>
    %782 = vector.broadcast %781 : vector<8x1xf32> to vector<8x4xf32>
    %783 = arith.mulf %782, %769 : vector<8x4xf32>
    %784 = arith.addf %780, %783 : vector<8x4xf32>
    %785 = vector.extract_strided_slice %22 {offsets = [0, 6], sizes = [8, 1], strides = [1, 1]} : vector<8x9xf32> to vector<8x1xf32>
    %786 = vector.broadcast %785 : vector<8x1xf32> to vector<8x4xf32>
    %787 = arith.mulf %786, %772 : vector<8x4xf32>
    %788 = arith.addf %784, %787 : vector<8x4xf32>
    %789 = vector.extract_strided_slice %22 {offsets = [0, 1], sizes = [8, 1], strides = [1, 1]} : vector<8x9xf32> to vector<8x1xf32>
    %790 = vector.broadcast %789 : vector<8x1xf32> to vector<8x4xf32>
    %791 = arith.mulf %790, %766 : vector<8x4xf32>
    %792 = vector.extract_strided_slice %22 {offsets = [0, 4], sizes = [8, 1], strides = [1, 1]} : vector<8x9xf32> to vector<8x1xf32>
    %793 = vector.broadcast %792 : vector<8x1xf32> to vector<8x4xf32>
    %794 = arith.mulf %793, %769 : vector<8x4xf32>
    %795 = arith.addf %791, %794 : vector<8x4xf32>
    %796 = vector.extract_strided_slice %22 {offsets = [0, 7], sizes = [8, 1], strides = [1, 1]} : vector<8x9xf32> to vector<8x1xf32>
    %797 = vector.broadcast %796 : vector<8x1xf32> to vector<8x4xf32>
    %798 = arith.mulf %797, %772 : vector<8x4xf32>
    %799 = arith.addf %795, %798 : vector<8x4xf32>
    %800 = vector.extract_strided_slice %22 {offsets = [0, 2], sizes = [8, 1], strides = [1, 1]} : vector<8x9xf32> to vector<8x1xf32>
    %801 = vector.broadcast %800 : vector<8x1xf32> to vector<8x4xf32>
    %802 = arith.mulf %801, %766 : vector<8x4xf32>
    %803 = vector.extract_strided_slice %22 {offsets = [0, 5], sizes = [8, 1], strides = [1, 1]} : vector<8x9xf32> to vector<8x1xf32>
    %804 = vector.broadcast %803 : vector<8x1xf32> to vector<8x4xf32>
    %805 = arith.mulf %804, %769 : vector<8x4xf32>
    %806 = arith.addf %802, %805 : vector<8x4xf32>
    %807 = vector.extract_strided_slice %22 {offsets = [0, 8], sizes = [8, 1], strides = [1, 1]} : vector<8x9xf32> to vector<8x1xf32>
    %808 = vector.broadcast %807 : vector<8x1xf32> to vector<8x4xf32>
    %809 = arith.mulf %808, %772 : vector<8x4xf32>
    %810 = arith.addf %806, %809 : vector<8x4xf32>
    %811 = arith.mulf %788, %788 : vector<8x4xf32>
    %812 = arith.mulf %799, %799 : vector<8x4xf32>
    %813 = arith.addf %811, %812 : vector<8x4xf32>
    %814 = arith.mulf %810, %810 : vector<8x4xf32>
    %815 = arith.addf %813, %814 : vector<8x4xf32>
    %cst_241 = arith.constant 9.99999996E-13 : f32
    %816 = vector.broadcast %cst_241 : f32 to vector<8x4xf32>
    %817 = arith.addf %815, %816 : vector<8x4xf32>
    %818 = math.rsqrt %817 : vector<8x4xf32>
    %819 = arith.mulf %815, %818 : vector<8x4xf32>
    %820 = arith.mulf %788, %818 : vector<8x4xf32>
    %821 = arith.mulf %799, %818 : vector<8x4xf32>
    %822 = arith.mulf %810, %818 : vector<8x4xf32>
    %823 = tpu.concatenate %777, %763, %788, %799, %810, %819, %820, %821, %822 in 1 : vector<8x8xf32>, vector<8x16xf32>, vector<8x4xf32>, vector<8x4xf32>, vector<8x4xf32>, vector<8x4xf32>, vector<8x4xf32>, vector<8x4xf32>, vector<8x4xf32> -> vector<8x52xf32>
    %c5_242 = arith.constant 5 : index
    %c0_243 = arith.constant 0 : index
    %c0_244 = arith.constant 0 : index
    %824 = vector.load %arg12[%c5_242, %c0_243, %c0_244] : memref<12x52x32xf32, #tpu.memory_space<vmem>>, vector<1x52x32xf32>
    %825 = vector.shape_cast %824 : vector<1x52x32xf32> to vector<52x32xf32>
    %cst_245 = arith.constant dense<0.000000e+00> : vector<8x32xf32>
    %826 = tpu.matmul %823, %825, %cst_245 {dimension_numbers = #tpu.dot_dimension_numbers<[1], [0], [0], [1], [0, 0, 1, 1], [], []>} : vector<8x52xf32>, vector<52x32xf32>, vector<8x32xf32> -> vector<8x32xf32>
    %827 = arith.addf %693, %826 : vector<8x32xf32>
    %c0_246 = arith.constant 0 : index
    %c6_247 = arith.constant 6 : index
    %c0_248 = arith.constant 0 : index
    %c0_249 = arith.constant 0 : index
    %828 = vector.load %arg2[%c0_246, %c6_247, %c0_248, %c0_249] : memref<1x12x8x30xf32, #tpu.memory_space<vmem>>, vector<1x1x8x30xf32>
    %829 = vector.shape_cast %828 : vector<1x1x8x30xf32> to vector<8x30xf32>
    %c0_250 = arith.constant 0 : index
    %c6_251 = arith.constant 6 : index
    %c0_252 = arith.constant 0 : index
    %c0_253 = arith.constant 0 : index
    %830 = vector.load %arg3[%c0_250, %c6_251, %c0_252, %c0_253] : memref<1x12x30x8xf32, #tpu.memory_space<vmem>>, vector<1x1x30x8xf32>
    %831 = vector.shape_cast %830 : vector<1x1x30x8xf32> to vector<30x8xf32>
    %cst_254 = arith.constant dense<0.000000e+00> : vector<8x8xf32>
    %832 = tpu.matmul %829, %831, %cst_254 {dimension_numbers = #tpu.dot_dimension_numbers<[1], [0], [0], [1], [0, 0, 1, 1], [], []>} : vector<8x30xf32>, vector<30x8xf32>, vector<8x8xf32> -> vector<8x8xf32>
    %c6_255 = arith.constant 6 : index
    %c0_256 = arith.constant 0 : index
    %833 = memref.load %arg6[%c6_255, %c0_256] : memref<12x8xf32, #tpu.memory_space<smem>>
    %834 = vector.extract_strided_slice %15 {offsets = [0, 0, 0], sizes = [1, 8, 8], strides = [1, 1, 1]} : vector<8x8x8xf32> to vector<1x8x8xf32>
    %835 = vector.shape_cast %834 : vector<1x8x8xf32> to vector<8x8xf32>
    %836 = vector.broadcast %833 : f32 to vector<8x8xf32>
    %837 = arith.mulf %836, %835 : vector<8x8xf32>
    %c6_257 = arith.constant 6 : index
    %c1_258 = arith.constant 1 : index
    %838 = memref.load %arg6[%c6_257, %c1_258] : memref<12x8xf32, #tpu.memory_space<smem>>
    %839 = vector.extract_strided_slice %15 {offsets = [1, 0, 0], sizes = [1, 8, 8], strides = [1, 1, 1]} : vector<8x8x8xf32> to vector<1x8x8xf32>
    %840 = vector.shape_cast %839 : vector<1x8x8xf32> to vector<8x8xf32>
    %841 = vector.broadcast %838 : f32 to vector<8x8xf32>
    %842 = arith.mulf %841, %840 : vector<8x8xf32>
    %843 = arith.addf %837, %842 : vector<8x8xf32>
    %c6_259 = arith.constant 6 : index
    %c2_260 = arith.constant 2 : index
    %844 = memref.load %arg6[%c6_259, %c2_260] : memref<12x8xf32, #tpu.memory_space<smem>>
    %845 = vector.extract_strided_slice %15 {offsets = [2, 0, 0], sizes = [1, 8, 8], strides = [1, 1, 1]} : vector<8x8x8xf32> to vector<1x8x8xf32>
    %846 = vector.shape_cast %845 : vector<1x8x8xf32> to vector<8x8xf32>
    %847 = vector.broadcast %844 : f32 to vector<8x8xf32>
    %848 = arith.mulf %847, %846 : vector<8x8xf32>
    %849 = arith.addf %843, %848 : vector<8x8xf32>
    %c6_261 = arith.constant 6 : index
    %c3_262 = arith.constant 3 : index
    %850 = memref.load %arg6[%c6_261, %c3_262] : memref<12x8xf32, #tpu.memory_space<smem>>
    %851 = vector.extract_strided_slice %15 {offsets = [3, 0, 0], sizes = [1, 8, 8], strides = [1, 1, 1]} : vector<8x8x8xf32> to vector<1x8x8xf32>
    %852 = vector.shape_cast %851 : vector<1x8x8xf32> to vector<8x8xf32>
    %853 = vector.broadcast %850 : f32 to vector<8x8xf32>
    %854 = arith.mulf %853, %852 : vector<8x8xf32>
    %855 = arith.addf %849, %854 : vector<8x8xf32>
    %c6_263 = arith.constant 6 : index
    %c4_264 = arith.constant 4 : index
    %856 = memref.load %arg6[%c6_263, %c4_264] : memref<12x8xf32, #tpu.memory_space<smem>>
    %857 = vector.extract_strided_slice %15 {offsets = [4, 0, 0], sizes = [1, 8, 8], strides = [1, 1, 1]} : vector<8x8x8xf32> to vector<1x8x8xf32>
    %858 = vector.shape_cast %857 : vector<1x8x8xf32> to vector<8x8xf32>
    %859 = vector.broadcast %856 : f32 to vector<8x8xf32>
    %860 = arith.mulf %859, %858 : vector<8x8xf32>
    %861 = arith.addf %855, %860 : vector<8x8xf32>
    %c6_265 = arith.constant 6 : index
    %c5_266 = arith.constant 5 : index
    %862 = memref.load %arg6[%c6_265, %c5_266] : memref<12x8xf32, #tpu.memory_space<smem>>
    %863 = vector.extract_strided_slice %15 {offsets = [5, 0, 0], sizes = [1, 8, 8], strides = [1, 1, 1]} : vector<8x8x8xf32> to vector<1x8x8xf32>
    %864 = vector.shape_cast %863 : vector<1x8x8xf32> to vector<8x8xf32>
    %865 = vector.broadcast %862 : f32 to vector<8x8xf32>
    %866 = arith.mulf %865, %864 : vector<8x8xf32>
    %867 = arith.addf %861, %866 : vector<8x8xf32>
    %c6_267 = arith.constant 6 : index
    %c6_268 = arith.constant 6 : index
    %868 = memref.load %arg6[%c6_267, %c6_268] : memref<12x8xf32, #tpu.memory_space<smem>>
    %869 = vector.extract_strided_slice %15 {offsets = [6, 0, 0], sizes = [1, 8, 8], strides = [1, 1, 1]} : vector<8x8x8xf32> to vector<1x8x8xf32>
    %870 = vector.shape_cast %869 : vector<1x8x8xf32> to vector<8x8xf32>
    %871 = vector.broadcast %868 : f32 to vector<8x8xf32>
    %872 = arith.mulf %871, %870 : vector<8x8xf32>
    %873 = arith.addf %867, %872 : vector<8x8xf32>
    %c6_269 = arith.constant 6 : index
    %c7_270 = arith.constant 7 : index
    %874 = memref.load %arg6[%c6_269, %c7_270] : memref<12x8xf32, #tpu.memory_space<smem>>
    %875 = vector.extract_strided_slice %15 {offsets = [7, 0, 0], sizes = [1, 8, 8], strides = [1, 1, 1]} : vector<8x8x8xf32> to vector<1x8x8xf32>
    %876 = vector.shape_cast %875 : vector<1x8x8xf32> to vector<8x8xf32>
    %877 = vector.broadcast %874 : f32 to vector<8x8xf32>
    %878 = arith.mulf %877, %876 : vector<8x8xf32>
    %879 = arith.addf %873, %878 : vector<8x8xf32>
    %880 = arith.addf %832, %879 : vector<8x8xf32>
    %cst_271 = arith.constant 0.577350259 : f32
    %881 = vector.broadcast %cst_271 : f32 to vector<8x8xf32>
    %882 = arith.mulf %880, %881 : vector<8x8xf32>
    %883 = arith.addf %882, %13 : vector<8x8xf32>
    %cst_272 = arith.constant dense<0xFF800000> : vector<8xf32>
    %884 = vector.multi_reduction <maximumf>, %883, %cst_272 [1] : vector<8x8xf32> to vector<8xf32>
    %885 = vector.shape_cast %884 : vector<8xf32> to vector<8x1xf32>
    %886 = vector.broadcast %885 : vector<8x1xf32> to vector<8x8xf32>
    %887 = arith.subf %883, %886 : vector<8x8xf32>
    %888 = math.exp %887 : vector<8x8xf32>
    %cst_273 = arith.constant dense<0.000000e+00> : vector<8xf32>
    %889 = vector.multi_reduction <add>, %888, %cst_273 [1] : vector<8x8xf32> to vector<8xf32>
    %890 = vector.shape_cast %889 : vector<8xf32> to vector<8x1xf32>
    %891 = tpu.reciprocal %890 {approx = true} : vector<8x1xf32> -> vector<8x1xf32>
    %892 = vector.broadcast %891 : vector<8x1xf32> to vector<8x8xf32>
    %893 = arith.mulf %888, %892 : vector<8x8xf32>
    %c0_274 = arith.constant 0 : index
    %c6_275 = arith.constant 6 : index
    %c0_276 = arith.constant 0 : index
    %c0_277 = arith.constant 0 : index
    %894 = vector.load %arg4[%c0_274, %c6_275, %c0_276, %c0_277] : memref<1x12x8x28xf32, #tpu.memory_space<vmem>>, vector<1x1x8x28xf32>
    %895 = vector.shape_cast %894 : vector<1x1x8x28xf32> to vector<8x28xf32>
    %cst_278 = arith.constant dense<0.000000e+00> : vector<8x28xf32>
    %896 = tpu.matmul %893, %895, %cst_278 {dimension_numbers = #tpu.dot_dimension_numbers<[1], [0], [0], [1], [0, 0, 1, 1], [], []>} : vector<8x8xf32>, vector<8x28xf32>, vector<8x28xf32> -> vector<8x28xf32>
    %897 = vector.extract_strided_slice %896 {offsets = [0, 0], sizes = [8, 16], strides = [1, 1]} : vector<8x28xf32> to vector<8x16xf32>
    %898 = vector.extract_strided_slice %896 {offsets = [0, 16], sizes = [8, 4], strides = [1, 1]} : vector<8x28xf32> to vector<8x4xf32>
    %899 = vector.broadcast %18 : vector<8x1xf32> to vector<8x4xf32>
    %900 = arith.subf %898, %899 : vector<8x4xf32>
    %901 = vector.extract_strided_slice %896 {offsets = [0, 20], sizes = [8, 4], strides = [1, 1]} : vector<8x28xf32> to vector<8x4xf32>
    %902 = vector.broadcast %19 : vector<8x1xf32> to vector<8x4xf32>
    %903 = arith.subf %901, %902 : vector<8x4xf32>
    %904 = vector.extract_strided_slice %896 {offsets = [0, 24], sizes = [8, 4], strides = [1, 1]} : vector<8x28xf32> to vector<8x4xf32>
    %905 = vector.broadcast %20 : vector<8x1xf32> to vector<8x4xf32>
    %906 = arith.subf %904, %905 : vector<8x4xf32>
    %907 = vector.shape_cast %893 : vector<8x8xf32> to vector<1x8x8xf32>
    %908 = vector.broadcast %907 : vector<1x8x8xf32> to vector<8x8x8xf32>
    %909 = arith.mulf %908, %15 : vector<8x8x8xf32>
    %cst_279 = arith.constant dense<0.000000e+00> : vector<8x8xf32>
    %910 = vector.multi_reduction <add>, %909, %cst_279 [2] : vector<8x8x8xf32> to vector<8x8xf32>
    %911 = tpu.transpose %910, [1, 0] : vector<8x8xf32> -> vector<8x8xf32>
    %912 = vector.extract_strided_slice %22 {offsets = [0, 0], sizes = [8, 1], strides = [1, 1]} : vector<8x9xf32> to vector<8x1xf32>
    %913 = vector.broadcast %912 : vector<8x1xf32> to vector<8x4xf32>
    %914 = arith.mulf %913, %900 : vector<8x4xf32>
    %915 = vector.extract_strided_slice %22 {offsets = [0, 3], sizes = [8, 1], strides = [1, 1]} : vector<8x9xf32> to vector<8x1xf32>
    %916 = vector.broadcast %915 : vector<8x1xf32> to vector<8x4xf32>
    %917 = arith.mulf %916, %903 : vector<8x4xf32>
    %918 = arith.addf %914, %917 : vector<8x4xf32>
    %919 = vector.extract_strided_slice %22 {offsets = [0, 6], sizes = [8, 1], strides = [1, 1]} : vector<8x9xf32> to vector<8x1xf32>
    %920 = vector.broadcast %919 : vector<8x1xf32> to vector<8x4xf32>
    %921 = arith.mulf %920, %906 : vector<8x4xf32>
    %922 = arith.addf %918, %921 : vector<8x4xf32>
    %923 = vector.extract_strided_slice %22 {offsets = [0, 1], sizes = [8, 1], strides = [1, 1]} : vector<8x9xf32> to vector<8x1xf32>
    %924 = vector.broadcast %923 : vector<8x1xf32> to vector<8x4xf32>
    %925 = arith.mulf %924, %900 : vector<8x4xf32>
    %926 = vector.extract_strided_slice %22 {offsets = [0, 4], sizes = [8, 1], strides = [1, 1]} : vector<8x9xf32> to vector<8x1xf32>
    %927 = vector.broadcast %926 : vector<8x1xf32> to vector<8x4xf32>
    %928 = arith.mulf %927, %903 : vector<8x4xf32>
    %929 = arith.addf %925, %928 : vector<8x4xf32>
    %930 = vector.extract_strided_slice %22 {offsets = [0, 7], sizes = [8, 1], strides = [1, 1]} : vector<8x9xf32> to vector<8x1xf32>
    %931 = vector.broadcast %930 : vector<8x1xf32> to vector<8x4xf32>
    %932 = arith.mulf %931, %906 : vector<8x4xf32>
    %933 = arith.addf %929, %932 : vector<8x4xf32>
    %934 = vector.extract_strided_slice %22 {offsets = [0, 2], sizes = [8, 1], strides = [1, 1]} : vector<8x9xf32> to vector<8x1xf32>
    %935 = vector.broadcast %934 : vector<8x1xf32> to vector<8x4xf32>
    %936 = arith.mulf %935, %900 : vector<8x4xf32>
    %937 = vector.extract_strided_slice %22 {offsets = [0, 5], sizes = [8, 1], strides = [1, 1]} : vector<8x9xf32> to vector<8x1xf32>
    %938 = vector.broadcast %937 : vector<8x1xf32> to vector<8x4xf32>
    %939 = arith.mulf %938, %903 : vector<8x4xf32>
    %940 = arith.addf %936, %939 : vector<8x4xf32>
    %941 = vector.extract_strided_slice %22 {offsets = [0, 8], sizes = [8, 1], strides = [1, 1]} : vector<8x9xf32> to vector<8x1xf32>
    %942 = vector.broadcast %941 : vector<8x1xf32> to vector<8x4xf32>
    %943 = arith.mulf %942, %906 : vector<8x4xf32>
    %944 = arith.addf %940, %943 : vector<8x4xf32>
    %945 = arith.mulf %922, %922 : vector<8x4xf32>
    %946 = arith.mulf %933, %933 : vector<8x4xf32>
    %947 = arith.addf %945, %946 : vector<8x4xf32>
    %948 = arith.mulf %944, %944 : vector<8x4xf32>
    %949 = arith.addf %947, %948 : vector<8x4xf32>
    %cst_280 = arith.constant 9.99999996E-13 : f32
    %950 = vector.broadcast %cst_280 : f32 to vector<8x4xf32>
    %951 = arith.addf %949, %950 : vector<8x4xf32>
    %952 = math.rsqrt %951 : vector<8x4xf32>
    %953 = arith.mulf %949, %952 : vector<8x4xf32>
    %954 = arith.mulf %922, %952 : vector<8x4xf32>
    %955 = arith.mulf %933, %952 : vector<8x4xf32>
    %956 = arith.mulf %944, %952 : vector<8x4xf32>
    %957 = tpu.concatenate %911, %897, %922, %933, %944, %953, %954, %955, %956 in 1 : vector<8x8xf32>, vector<8x16xf32>, vector<8x4xf32>, vector<8x4xf32>, vector<8x4xf32>, vector<8x4xf32>, vector<8x4xf32>, vector<8x4xf32>, vector<8x4xf32> -> vector<8x52xf32>
    %c6_281 = arith.constant 6 : index
    %c0_282 = arith.constant 0 : index
    %c0_283 = arith.constant 0 : index
    %958 = vector.load %arg12[%c6_281, %c0_282, %c0_283] : memref<12x52x32xf32, #tpu.memory_space<vmem>>, vector<1x52x32xf32>
    %959 = vector.shape_cast %958 : vector<1x52x32xf32> to vector<52x32xf32>
    %cst_284 = arith.constant dense<0.000000e+00> : vector<8x32xf32>
    %960 = tpu.matmul %957, %959, %cst_284 {dimension_numbers = #tpu.dot_dimension_numbers<[1], [0], [0], [1], [0, 0, 1, 1], [], []>} : vector<8x52xf32>, vector<52x32xf32>, vector<8x32xf32> -> vector<8x32xf32>
    %961 = arith.addf %827, %960 : vector<8x32xf32>
    %c0_285 = arith.constant 0 : index
    %c7_286 = arith.constant 7 : index
    %c0_287 = arith.constant 0 : index
    %c0_288 = arith.constant 0 : index
    %962 = vector.load %arg2[%c0_285, %c7_286, %c0_287, %c0_288] : memref<1x12x8x30xf32, #tpu.memory_space<vmem>>, vector<1x1x8x30xf32>
    %963 = vector.shape_cast %962 : vector<1x1x8x30xf32> to vector<8x30xf32>
    %c0_289 = arith.constant 0 : index
    %c7_290 = arith.constant 7 : index
    %c0_291 = arith.constant 0 : index
    %c0_292 = arith.constant 0 : index
    %964 = vector.load %arg3[%c0_289, %c7_290, %c0_291, %c0_292] : memref<1x12x30x8xf32, #tpu.memory_space<vmem>>, vector<1x1x30x8xf32>
    %965 = vector.shape_cast %964 : vector<1x1x30x8xf32> to vector<30x8xf32>
    %cst_293 = arith.constant dense<0.000000e+00> : vector<8x8xf32>
    %966 = tpu.matmul %963, %965, %cst_293 {dimension_numbers = #tpu.dot_dimension_numbers<[1], [0], [0], [1], [0, 0, 1, 1], [], []>} : vector<8x30xf32>, vector<30x8xf32>, vector<8x8xf32> -> vector<8x8xf32>
    %c7_294 = arith.constant 7 : index
    %c0_295 = arith.constant 0 : index
    %967 = memref.load %arg6[%c7_294, %c0_295] : memref<12x8xf32, #tpu.memory_space<smem>>
    %968 = vector.extract_strided_slice %15 {offsets = [0, 0, 0], sizes = [1, 8, 8], strides = [1, 1, 1]} : vector<8x8x8xf32> to vector<1x8x8xf32>
    %969 = vector.shape_cast %968 : vector<1x8x8xf32> to vector<8x8xf32>
    %970 = vector.broadcast %967 : f32 to vector<8x8xf32>
    %971 = arith.mulf %970, %969 : vector<8x8xf32>
    %c7_296 = arith.constant 7 : index
    %c1_297 = arith.constant 1 : index
    %972 = memref.load %arg6[%c7_296, %c1_297] : memref<12x8xf32, #tpu.memory_space<smem>>
    %973 = vector.extract_strided_slice %15 {offsets = [1, 0, 0], sizes = [1, 8, 8], strides = [1, 1, 1]} : vector<8x8x8xf32> to vector<1x8x8xf32>
    %974 = vector.shape_cast %973 : vector<1x8x8xf32> to vector<8x8xf32>
    %975 = vector.broadcast %972 : f32 to vector<8x8xf32>
    %976 = arith.mulf %975, %974 : vector<8x8xf32>
    %977 = arith.addf %971, %976 : vector<8x8xf32>
    %c7_298 = arith.constant 7 : index
    %c2_299 = arith.constant 2 : index
    %978 = memref.load %arg6[%c7_298, %c2_299] : memref<12x8xf32, #tpu.memory_space<smem>>
    %979 = vector.extract_strided_slice %15 {offsets = [2, 0, 0], sizes = [1, 8, 8], strides = [1, 1, 1]} : vector<8x8x8xf32> to vector<1x8x8xf32>
    %980 = vector.shape_cast %979 : vector<1x8x8xf32> to vector<8x8xf32>
    %981 = vector.broadcast %978 : f32 to vector<8x8xf32>
    %982 = arith.mulf %981, %980 : vector<8x8xf32>
    %983 = arith.addf %977, %982 : vector<8x8xf32>
    %c7_300 = arith.constant 7 : index
    %c3_301 = arith.constant 3 : index
    %984 = memref.load %arg6[%c7_300, %c3_301] : memref<12x8xf32, #tpu.memory_space<smem>>
    %985 = vector.extract_strided_slice %15 {offsets = [3, 0, 0], sizes = [1, 8, 8], strides = [1, 1, 1]} : vector<8x8x8xf32> to vector<1x8x8xf32>
    %986 = vector.shape_cast %985 : vector<1x8x8xf32> to vector<8x8xf32>
    %987 = vector.broadcast %984 : f32 to vector<8x8xf32>
    %988 = arith.mulf %987, %986 : vector<8x8xf32>
    %989 = arith.addf %983, %988 : vector<8x8xf32>
    %c7_302 = arith.constant 7 : index
    %c4_303 = arith.constant 4 : index
    %990 = memref.load %arg6[%c7_302, %c4_303] : memref<12x8xf32, #tpu.memory_space<smem>>
    %991 = vector.extract_strided_slice %15 {offsets = [4, 0, 0], sizes = [1, 8, 8], strides = [1, 1, 1]} : vector<8x8x8xf32> to vector<1x8x8xf32>
    %992 = vector.shape_cast %991 : vector<1x8x8xf32> to vector<8x8xf32>
    %993 = vector.broadcast %990 : f32 to vector<8x8xf32>
    %994 = arith.mulf %993, %992 : vector<8x8xf32>
    %995 = arith.addf %989, %994 : vector<8x8xf32>
    %c7_304 = arith.constant 7 : index
    %c5_305 = arith.constant 5 : index
    %996 = memref.load %arg6[%c7_304, %c5_305] : memref<12x8xf32, #tpu.memory_space<smem>>
    %997 = vector.extract_strided_slice %15 {offsets = [5, 0, 0], sizes = [1, 8, 8], strides = [1, 1, 1]} : vector<8x8x8xf32> to vector<1x8x8xf32>
    %998 = vector.shape_cast %997 : vector<1x8x8xf32> to vector<8x8xf32>
    %999 = vector.broadcast %996 : f32 to vector<8x8xf32>
    %1000 = arith.mulf %999, %998 : vector<8x8xf32>
    %1001 = arith.addf %995, %1000 : vector<8x8xf32>
    %c7_306 = arith.constant 7 : index
    %c6_307 = arith.constant 6 : index
    %1002 = memref.load %arg6[%c7_306, %c6_307] : memref<12x8xf32, #tpu.memory_space<smem>>
    %1003 = vector.extract_strided_slice %15 {offsets = [6, 0, 0], sizes = [1, 8, 8], strides = [1, 1, 1]} : vector<8x8x8xf32> to vector<1x8x8xf32>
    %1004 = vector.shape_cast %1003 : vector<1x8x8xf32> to vector<8x8xf32>
    %1005 = vector.broadcast %1002 : f32 to vector<8x8xf32>
    %1006 = arith.mulf %1005, %1004 : vector<8x8xf32>
    %1007 = arith.addf %1001, %1006 : vector<8x8xf32>
    %c7_308 = arith.constant 7 : index
    %c7_309 = arith.constant 7 : index
    %1008 = memref.load %arg6[%c7_308, %c7_309] : memref<12x8xf32, #tpu.memory_space<smem>>
    %1009 = vector.extract_strided_slice %15 {offsets = [7, 0, 0], sizes = [1, 8, 8], strides = [1, 1, 1]} : vector<8x8x8xf32> to vector<1x8x8xf32>
    %1010 = vector.shape_cast %1009 : vector<1x8x8xf32> to vector<8x8xf32>
    %1011 = vector.broadcast %1008 : f32 to vector<8x8xf32>
    %1012 = arith.mulf %1011, %1010 : vector<8x8xf32>
    %1013 = arith.addf %1007, %1012 : vector<8x8xf32>
    %1014 = arith.addf %966, %1013 : vector<8x8xf32>
    %cst_310 = arith.constant 0.577350259 : f32
    %1015 = vector.broadcast %cst_310 : f32 to vector<8x8xf32>
    %1016 = arith.mulf %1014, %1015 : vector<8x8xf32>
    %1017 = arith.addf %1016, %13 : vector<8x8xf32>
    %cst_311 = arith.constant dense<0xFF800000> : vector<8xf32>
    %1018 = vector.multi_reduction <maximumf>, %1017, %cst_311 [1] : vector<8x8xf32> to vector<8xf32>
    %1019 = vector.shape_cast %1018 : vector<8xf32> to vector<8x1xf32>
    %1020 = vector.broadcast %1019 : vector<8x1xf32> to vector<8x8xf32>
    %1021 = arith.subf %1017, %1020 : vector<8x8xf32>
    %1022 = math.exp %1021 : vector<8x8xf32>
    %cst_312 = arith.constant dense<0.000000e+00> : vector<8xf32>
    %1023 = vector.multi_reduction <add>, %1022, %cst_312 [1] : vector<8x8xf32> to vector<8xf32>
    %1024 = vector.shape_cast %1023 : vector<8xf32> to vector<8x1xf32>
    %1025 = tpu.reciprocal %1024 {approx = true} : vector<8x1xf32> -> vector<8x1xf32>
    %1026 = vector.broadcast %1025 : vector<8x1xf32> to vector<8x8xf32>
    %1027 = arith.mulf %1022, %1026 : vector<8x8xf32>
    %c0_313 = arith.constant 0 : index
    %c7_314 = arith.constant 7 : index
    %c0_315 = arith.constant 0 : index
    %c0_316 = arith.constant 0 : index
    %1028 = vector.load %arg4[%c0_313, %c7_314, %c0_315, %c0_316] : memref<1x12x8x28xf32, #tpu.memory_space<vmem>>, vector<1x1x8x28xf32>
    %1029 = vector.shape_cast %1028 : vector<1x1x8x28xf32> to vector<8x28xf32>
    %cst_317 = arith.constant dense<0.000000e+00> : vector<8x28xf32>
    %1030 = tpu.matmul %1027, %1029, %cst_317 {dimension_numbers = #tpu.dot_dimension_numbers<[1], [0], [0], [1], [0, 0, 1, 1], [], []>} : vector<8x8xf32>, vector<8x28xf32>, vector<8x28xf32> -> vector<8x28xf32>
    %1031 = vector.extract_strided_slice %1030 {offsets = [0, 0], sizes = [8, 16], strides = [1, 1]} : vector<8x28xf32> to vector<8x16xf32>
    %1032 = vector.extract_strided_slice %1030 {offsets = [0, 16], sizes = [8, 4], strides = [1, 1]} : vector<8x28xf32> to vector<8x4xf32>
    %1033 = vector.broadcast %18 : vector<8x1xf32> to vector<8x4xf32>
    %1034 = arith.subf %1032, %1033 : vector<8x4xf32>
    %1035 = vector.extract_strided_slice %1030 {offsets = [0, 20], sizes = [8, 4], strides = [1, 1]} : vector<8x28xf32> to vector<8x4xf32>
    %1036 = vector.broadcast %19 : vector<8x1xf32> to vector<8x4xf32>
    %1037 = arith.subf %1035, %1036 : vector<8x4xf32>
    %1038 = vector.extract_strided_slice %1030 {offsets = [0, 24], sizes = [8, 4], strides = [1, 1]} : vector<8x28xf32> to vector<8x4xf32>
    %1039 = vector.broadcast %20 : vector<8x1xf32> to vector<8x4xf32>
    %1040 = arith.subf %1038, %1039 : vector<8x4xf32>
    %1041 = vector.shape_cast %1027 : vector<8x8xf32> to vector<1x8x8xf32>
    %1042 = vector.broadcast %1041 : vector<1x8x8xf32> to vector<8x8x8xf32>
    %1043 = arith.mulf %1042, %15 : vector<8x8x8xf32>
    %cst_318 = arith.constant dense<0.000000e+00> : vector<8x8xf32>
    %1044 = vector.multi_reduction <add>, %1043, %cst_318 [2] : vector<8x8x8xf32> to vector<8x8xf32>
    %1045 = tpu.transpose %1044, [1, 0] : vector<8x8xf32> -> vector<8x8xf32>
    %1046 = vector.extract_strided_slice %22 {offsets = [0, 0], sizes = [8, 1], strides = [1, 1]} : vector<8x9xf32> to vector<8x1xf32>
    %1047 = vector.broadcast %1046 : vector<8x1xf32> to vector<8x4xf32>
    %1048 = arith.mulf %1047, %1034 : vector<8x4xf32>
    %1049 = vector.extract_strided_slice %22 {offsets = [0, 3], sizes = [8, 1], strides = [1, 1]} : vector<8x9xf32> to vector<8x1xf32>
    %1050 = vector.broadcast %1049 : vector<8x1xf32> to vector<8x4xf32>
    %1051 = arith.mulf %1050, %1037 : vector<8x4xf32>
    %1052 = arith.addf %1048, %1051 : vector<8x4xf32>
    %1053 = vector.extract_strided_slice %22 {offsets = [0, 6], sizes = [8, 1], strides = [1, 1]} : vector<8x9xf32> to vector<8x1xf32>
    %1054 = vector.broadcast %1053 : vector<8x1xf32> to vector<8x4xf32>
    %1055 = arith.mulf %1054, %1040 : vector<8x4xf32>
    %1056 = arith.addf %1052, %1055 : vector<8x4xf32>
    %1057 = vector.extract_strided_slice %22 {offsets = [0, 1], sizes = [8, 1], strides = [1, 1]} : vector<8x9xf32> to vector<8x1xf32>
    %1058 = vector.broadcast %1057 : vector<8x1xf32> to vector<8x4xf32>
    %1059 = arith.mulf %1058, %1034 : vector<8x4xf32>
    %1060 = vector.extract_strided_slice %22 {offsets = [0, 4], sizes = [8, 1], strides = [1, 1]} : vector<8x9xf32> to vector<8x1xf32>
    %1061 = vector.broadcast %1060 : vector<8x1xf32> to vector<8x4xf32>
    %1062 = arith.mulf %1061, %1037 : vector<8x4xf32>
    %1063 = arith.addf %1059, %1062 : vector<8x4xf32>
    %1064 = vector.extract_strided_slice %22 {offsets = [0, 7], sizes = [8, 1], strides = [1, 1]} : vector<8x9xf32> to vector<8x1xf32>
    %1065 = vector.broadcast %1064 : vector<8x1xf32> to vector<8x4xf32>
    %1066 = arith.mulf %1065, %1040 : vector<8x4xf32>
    %1067 = arith.addf %1063, %1066 : vector<8x4xf32>
    %1068 = vector.extract_strided_slice %22 {offsets = [0, 2], sizes = [8, 1], strides = [1, 1]} : vector<8x9xf32> to vector<8x1xf32>
    %1069 = vector.broadcast %1068 : vector<8x1xf32> to vector<8x4xf32>
    %1070 = arith.mulf %1069, %1034 : vector<8x4xf32>
    %1071 = vector.extract_strided_slice %22 {offsets = [0, 5], sizes = [8, 1], strides = [1, 1]} : vector<8x9xf32> to vector<8x1xf32>
    %1072 = vector.broadcast %1071 : vector<8x1xf32> to vector<8x4xf32>
    %1073 = arith.mulf %1072, %1037 : vector<8x4xf32>
    %1074 = arith.addf %1070, %1073 : vector<8x4xf32>
    %1075 = vector.extract_strided_slice %22 {offsets = [0, 8], sizes = [8, 1], strides = [1, 1]} : vector<8x9xf32> to vector<8x1xf32>
    %1076 = vector.broadcast %1075 : vector<8x1xf32> to vector<8x4xf32>
    %1077 = arith.mulf %1076, %1040 : vector<8x4xf32>
    %1078 = arith.addf %1074, %1077 : vector<8x4xf32>
    %1079 = arith.mulf %1056, %1056 : vector<8x4xf32>
    %1080 = arith.mulf %1067, %1067 : vector<8x4xf32>
    %1081 = arith.addf %1079, %1080 : vector<8x4xf32>
    %1082 = arith.mulf %1078, %1078 : vector<8x4xf32>
    %1083 = arith.addf %1081, %1082 : vector<8x4xf32>
    %cst_319 = arith.constant 9.99999996E-13 : f32
    %1084 = vector.broadcast %cst_319 : f32 to vector<8x4xf32>
    %1085 = arith.addf %1083, %1084 : vector<8x4xf32>
    %1086 = math.rsqrt %1085 : vector<8x4xf32>
    %1087 = arith.mulf %1083, %1086 : vector<8x4xf32>
    %1088 = arith.mulf %1056, %1086 : vector<8x4xf32>
    %1089 = arith.mulf %1067, %1086 : vector<8x4xf32>
    %1090 = arith.mulf %1078, %1086 : vector<8x4xf32>
    %1091 = tpu.concatenate %1045, %1031, %1056, %1067, %1078, %1087, %1088, %1089, %1090 in 1 : vector<8x8xf32>, vector<8x16xf32>, vector<8x4xf32>, vector<8x4xf32>, vector<8x4xf32>, vector<8x4xf32>, vector<8x4xf32>, vector<8x4xf32>, vector<8x4xf32> -> vector<8x52xf32>
    %c7_320 = arith.constant 7 : index
    %c0_321 = arith.constant 0 : index
    %c0_322 = arith.constant 0 : index
    %1092 = vector.load %arg12[%c7_320, %c0_321, %c0_322] : memref<12x52x32xf32, #tpu.memory_space<vmem>>, vector<1x52x32xf32>
    %1093 = vector.shape_cast %1092 : vector<1x52x32xf32> to vector<52x32xf32>
    %cst_323 = arith.constant dense<0.000000e+00> : vector<8x32xf32>
    %1094 = tpu.matmul %1091, %1093, %cst_323 {dimension_numbers = #tpu.dot_dimension_numbers<[1], [0], [0], [1], [0, 0, 1, 1], [], []>} : vector<8x52xf32>, vector<52x32xf32>, vector<8x32xf32> -> vector<8x32xf32>
    %1095 = arith.addf %961, %1094 : vector<8x32xf32>
    %c0_324 = arith.constant 0 : index
    %c8 = arith.constant 8 : index
    %c0_325 = arith.constant 0 : index
    %c0_326 = arith.constant 0 : index
    %1096 = vector.load %arg2[%c0_324, %c8, %c0_325, %c0_326] : memref<1x12x8x30xf32, #tpu.memory_space<vmem>>, vector<1x1x8x30xf32>
    %1097 = vector.shape_cast %1096 : vector<1x1x8x30xf32> to vector<8x30xf32>
    %c0_327 = arith.constant 0 : index
    %c8_328 = arith.constant 8 : index
    %c0_329 = arith.constant 0 : index
    %c0_330 = arith.constant 0 : index
    %1098 = vector.load %arg3[%c0_327, %c8_328, %c0_329, %c0_330] : memref<1x12x30x8xf32, #tpu.memory_space<vmem>>, vector<1x1x30x8xf32>
    %1099 = vector.shape_cast %1098 : vector<1x1x30x8xf32> to vector<30x8xf32>
    %cst_331 = arith.constant dense<0.000000e+00> : vector<8x8xf32>
    %1100 = tpu.matmul %1097, %1099, %cst_331 {dimension_numbers = #tpu.dot_dimension_numbers<[1], [0], [0], [1], [0, 0, 1, 1], [], []>} : vector<8x30xf32>, vector<30x8xf32>, vector<8x8xf32> -> vector<8x8xf32>
    %c8_332 = arith.constant 8 : index
    %c0_333 = arith.constant 0 : index
    %1101 = memref.load %arg6[%c8_332, %c0_333] : memref<12x8xf32, #tpu.memory_space<smem>>
    %1102 = vector.extract_strided_slice %15 {offsets = [0, 0, 0], sizes = [1, 8, 8], strides = [1, 1, 1]} : vector<8x8x8xf32> to vector<1x8x8xf32>
    %1103 = vector.shape_cast %1102 : vector<1x8x8xf32> to vector<8x8xf32>
    %1104 = vector.broadcast %1101 : f32 to vector<8x8xf32>
    %1105 = arith.mulf %1104, %1103 : vector<8x8xf32>
    %c8_334 = arith.constant 8 : index
    %c1_335 = arith.constant 1 : index
    %1106 = memref.load %arg6[%c8_334, %c1_335] : memref<12x8xf32, #tpu.memory_space<smem>>
    %1107 = vector.extract_strided_slice %15 {offsets = [1, 0, 0], sizes = [1, 8, 8], strides = [1, 1, 1]} : vector<8x8x8xf32> to vector<1x8x8xf32>
    %1108 = vector.shape_cast %1107 : vector<1x8x8xf32> to vector<8x8xf32>
    %1109 = vector.broadcast %1106 : f32 to vector<8x8xf32>
    %1110 = arith.mulf %1109, %1108 : vector<8x8xf32>
    %1111 = arith.addf %1105, %1110 : vector<8x8xf32>
    %c8_336 = arith.constant 8 : index
    %c2_337 = arith.constant 2 : index
    %1112 = memref.load %arg6[%c8_336, %c2_337] : memref<12x8xf32, #tpu.memory_space<smem>>
    %1113 = vector.extract_strided_slice %15 {offsets = [2, 0, 0], sizes = [1, 8, 8], strides = [1, 1, 1]} : vector<8x8x8xf32> to vector<1x8x8xf32>
    %1114 = vector.shape_cast %1113 : vector<1x8x8xf32> to vector<8x8xf32>
    %1115 = vector.broadcast %1112 : f32 to vector<8x8xf32>
    %1116 = arith.mulf %1115, %1114 : vector<8x8xf32>
    %1117 = arith.addf %1111, %1116 : vector<8x8xf32>
    %c8_338 = arith.constant 8 : index
    %c3_339 = arith.constant 3 : index
    %1118 = memref.load %arg6[%c8_338, %c3_339] : memref<12x8xf32, #tpu.memory_space<smem>>
    %1119 = vector.extract_strided_slice %15 {offsets = [3, 0, 0], sizes = [1, 8, 8], strides = [1, 1, 1]} : vector<8x8x8xf32> to vector<1x8x8xf32>
    %1120 = vector.shape_cast %1119 : vector<1x8x8xf32> to vector<8x8xf32>
    %1121 = vector.broadcast %1118 : f32 to vector<8x8xf32>
    %1122 = arith.mulf %1121, %1120 : vector<8x8xf32>
    %1123 = arith.addf %1117, %1122 : vector<8x8xf32>
    %c8_340 = arith.constant 8 : index
    %c4_341 = arith.constant 4 : index
    %1124 = memref.load %arg6[%c8_340, %c4_341] : memref<12x8xf32, #tpu.memory_space<smem>>
    %1125 = vector.extract_strided_slice %15 {offsets = [4, 0, 0], sizes = [1, 8, 8], strides = [1, 1, 1]} : vector<8x8x8xf32> to vector<1x8x8xf32>
    %1126 = vector.shape_cast %1125 : vector<1x8x8xf32> to vector<8x8xf32>
    %1127 = vector.broadcast %1124 : f32 to vector<8x8xf32>
    %1128 = arith.mulf %1127, %1126 : vector<8x8xf32>
    %1129 = arith.addf %1123, %1128 : vector<8x8xf32>
    %c8_342 = arith.constant 8 : index
    %c5_343 = arith.constant 5 : index
    %1130 = memref.load %arg6[%c8_342, %c5_343] : memref<12x8xf32, #tpu.memory_space<smem>>
    %1131 = vector.extract_strided_slice %15 {offsets = [5, 0, 0], sizes = [1, 8, 8], strides = [1, 1, 1]} : vector<8x8x8xf32> to vector<1x8x8xf32>
    %1132 = vector.shape_cast %1131 : vector<1x8x8xf32> to vector<8x8xf32>
    %1133 = vector.broadcast %1130 : f32 to vector<8x8xf32>
    %1134 = arith.mulf %1133, %1132 : vector<8x8xf32>
    %1135 = arith.addf %1129, %1134 : vector<8x8xf32>
    %c8_344 = arith.constant 8 : index
    %c6_345 = arith.constant 6 : index
    %1136 = memref.load %arg6[%c8_344, %c6_345] : memref<12x8xf32, #tpu.memory_space<smem>>
    %1137 = vector.extract_strided_slice %15 {offsets = [6, 0, 0], sizes = [1, 8, 8], strides = [1, 1, 1]} : vector<8x8x8xf32> to vector<1x8x8xf32>
    %1138 = vector.shape_cast %1137 : vector<1x8x8xf32> to vector<8x8xf32>
    %1139 = vector.broadcast %1136 : f32 to vector<8x8xf32>
    %1140 = arith.mulf %1139, %1138 : vector<8x8xf32>
    %1141 = arith.addf %1135, %1140 : vector<8x8xf32>
    %c8_346 = arith.constant 8 : index
    %c7_347 = arith.constant 7 : index
    %1142 = memref.load %arg6[%c8_346, %c7_347] : memref<12x8xf32, #tpu.memory_space<smem>>
    %1143 = vector.extract_strided_slice %15 {offsets = [7, 0, 0], sizes = [1, 8, 8], strides = [1, 1, 1]} : vector<8x8x8xf32> to vector<1x8x8xf32>
    %1144 = vector.shape_cast %1143 : vector<1x8x8xf32> to vector<8x8xf32>
    %1145 = vector.broadcast %1142 : f32 to vector<8x8xf32>
    %1146 = arith.mulf %1145, %1144 : vector<8x8xf32>
    %1147 = arith.addf %1141, %1146 : vector<8x8xf32>
    %1148 = arith.addf %1100, %1147 : vector<8x8xf32>
    %cst_348 = arith.constant 0.577350259 : f32
    %1149 = vector.broadcast %cst_348 : f32 to vector<8x8xf32>
    %1150 = arith.mulf %1148, %1149 : vector<8x8xf32>
    %1151 = arith.addf %1150, %13 : vector<8x8xf32>
    %cst_349 = arith.constant dense<0xFF800000> : vector<8xf32>
    %1152 = vector.multi_reduction <maximumf>, %1151, %cst_349 [1] : vector<8x8xf32> to vector<8xf32>
    %1153 = vector.shape_cast %1152 : vector<8xf32> to vector<8x1xf32>
    %1154 = vector.broadcast %1153 : vector<8x1xf32> to vector<8x8xf32>
    %1155 = arith.subf %1151, %1154 : vector<8x8xf32>
    %1156 = math.exp %1155 : vector<8x8xf32>
    %cst_350 = arith.constant dense<0.000000e+00> : vector<8xf32>
    %1157 = vector.multi_reduction <add>, %1156, %cst_350 [1] : vector<8x8xf32> to vector<8xf32>
    %1158 = vector.shape_cast %1157 : vector<8xf32> to vector<8x1xf32>
    %1159 = tpu.reciprocal %1158 {approx = true} : vector<8x1xf32> -> vector<8x1xf32>
    %1160 = vector.broadcast %1159 : vector<8x1xf32> to vector<8x8xf32>
    %1161 = arith.mulf %1156, %1160 : vector<8x8xf32>
    %c0_351 = arith.constant 0 : index
    %c8_352 = arith.constant 8 : index
    %c0_353 = arith.constant 0 : index
    %c0_354 = arith.constant 0 : index
    %1162 = vector.load %arg4[%c0_351, %c8_352, %c0_353, %c0_354] : memref<1x12x8x28xf32, #tpu.memory_space<vmem>>, vector<1x1x8x28xf32>
    %1163 = vector.shape_cast %1162 : vector<1x1x8x28xf32> to vector<8x28xf32>
    %cst_355 = arith.constant dense<0.000000e+00> : vector<8x28xf32>
    %1164 = tpu.matmul %1161, %1163, %cst_355 {dimension_numbers = #tpu.dot_dimension_numbers<[1], [0], [0], [1], [0, 0, 1, 1], [], []>} : vector<8x8xf32>, vector<8x28xf32>, vector<8x28xf32> -> vector<8x28xf32>
    %1165 = vector.extract_strided_slice %1164 {offsets = [0, 0], sizes = [8, 16], strides = [1, 1]} : vector<8x28xf32> to vector<8x16xf32>
    %1166 = vector.extract_strided_slice %1164 {offsets = [0, 16], sizes = [8, 4], strides = [1, 1]} : vector<8x28xf32> to vector<8x4xf32>
    %1167 = vector.broadcast %18 : vector<8x1xf32> to vector<8x4xf32>
    %1168 = arith.subf %1166, %1167 : vector<8x4xf32>
    %1169 = vector.extract_strided_slice %1164 {offsets = [0, 20], sizes = [8, 4], strides = [1, 1]} : vector<8x28xf32> to vector<8x4xf32>
    %1170 = vector.broadcast %19 : vector<8x1xf32> to vector<8x4xf32>
    %1171 = arith.subf %1169, %1170 : vector<8x4xf32>
    %1172 = vector.extract_strided_slice %1164 {offsets = [0, 24], sizes = [8, 4], strides = [1, 1]} : vector<8x28xf32> to vector<8x4xf32>
    %1173 = vector.broadcast %20 : vector<8x1xf32> to vector<8x4xf32>
    %1174 = arith.subf %1172, %1173 : vector<8x4xf32>
    %1175 = vector.shape_cast %1161 : vector<8x8xf32> to vector<1x8x8xf32>
    %1176 = vector.broadcast %1175 : vector<1x8x8xf32> to vector<8x8x8xf32>
    %1177 = arith.mulf %1176, %15 : vector<8x8x8xf32>
    %cst_356 = arith.constant dense<0.000000e+00> : vector<8x8xf32>
    %1178 = vector.multi_reduction <add>, %1177, %cst_356 [2] : vector<8x8x8xf32> to vector<8x8xf32>
    %1179 = tpu.transpose %1178, [1, 0] : vector<8x8xf32> -> vector<8x8xf32>
    %1180 = vector.extract_strided_slice %22 {offsets = [0, 0], sizes = [8, 1], strides = [1, 1]} : vector<8x9xf32> to vector<8x1xf32>
    %1181 = vector.broadcast %1180 : vector<8x1xf32> to vector<8x4xf32>
    %1182 = arith.mulf %1181, %1168 : vector<8x4xf32>
    %1183 = vector.extract_strided_slice %22 {offsets = [0, 3], sizes = [8, 1], strides = [1, 1]} : vector<8x9xf32> to vector<8x1xf32>
    %1184 = vector.broadcast %1183 : vector<8x1xf32> to vector<8x4xf32>
    %1185 = arith.mulf %1184, %1171 : vector<8x4xf32>
    %1186 = arith.addf %1182, %1185 : vector<8x4xf32>
    %1187 = vector.extract_strided_slice %22 {offsets = [0, 6], sizes = [8, 1], strides = [1, 1]} : vector<8x9xf32> to vector<8x1xf32>
    %1188 = vector.broadcast %1187 : vector<8x1xf32> to vector<8x4xf32>
    %1189 = arith.mulf %1188, %1174 : vector<8x4xf32>
    %1190 = arith.addf %1186, %1189 : vector<8x4xf32>
    %1191 = vector.extract_strided_slice %22 {offsets = [0, 1], sizes = [8, 1], strides = [1, 1]} : vector<8x9xf32> to vector<8x1xf32>
    %1192 = vector.broadcast %1191 : vector<8x1xf32> to vector<8x4xf32>
    %1193 = arith.mulf %1192, %1168 : vector<8x4xf32>
    %1194 = vector.extract_strided_slice %22 {offsets = [0, 4], sizes = [8, 1], strides = [1, 1]} : vector<8x9xf32> to vector<8x1xf32>
    %1195 = vector.broadcast %1194 : vector<8x1xf32> to vector<8x4xf32>
    %1196 = arith.mulf %1195, %1171 : vector<8x4xf32>
    %1197 = arith.addf %1193, %1196 : vector<8x4xf32>
    %1198 = vector.extract_strided_slice %22 {offsets = [0, 7], sizes = [8, 1], strides = [1, 1]} : vector<8x9xf32> to vector<8x1xf32>
    %1199 = vector.broadcast %1198 : vector<8x1xf32> to vector<8x4xf32>
    %1200 = arith.mulf %1199, %1174 : vector<8x4xf32>
    %1201 = arith.addf %1197, %1200 : vector<8x4xf32>
    %1202 = vector.extract_strided_slice %22 {offsets = [0, 2], sizes = [8, 1], strides = [1, 1]} : vector<8x9xf32> to vector<8x1xf32>
    %1203 = vector.broadcast %1202 : vector<8x1xf32> to vector<8x4xf32>
    %1204 = arith.mulf %1203, %1168 : vector<8x4xf32>
    %1205 = vector.extract_strided_slice %22 {offsets = [0, 5], sizes = [8, 1], strides = [1, 1]} : vector<8x9xf32> to vector<8x1xf32>
    %1206 = vector.broadcast %1205 : vector<8x1xf32> to vector<8x4xf32>
    %1207 = arith.mulf %1206, %1171 : vector<8x4xf32>
    %1208 = arith.addf %1204, %1207 : vector<8x4xf32>
    %1209 = vector.extract_strided_slice %22 {offsets = [0, 8], sizes = [8, 1], strides = [1, 1]} : vector<8x9xf32> to vector<8x1xf32>
    %1210 = vector.broadcast %1209 : vector<8x1xf32> to vector<8x4xf32>
    %1211 = arith.mulf %1210, %1174 : vector<8x4xf32>
    %1212 = arith.addf %1208, %1211 : vector<8x4xf32>
    %1213 = arith.mulf %1190, %1190 : vector<8x4xf32>
    %1214 = arith.mulf %1201, %1201 : vector<8x4xf32>
    %1215 = arith.addf %1213, %1214 : vector<8x4xf32>
    %1216 = arith.mulf %1212, %1212 : vector<8x4xf32>
    %1217 = arith.addf %1215, %1216 : vector<8x4xf32>
    %cst_357 = arith.constant 9.99999996E-13 : f32
    %1218 = vector.broadcast %cst_357 : f32 to vector<8x4xf32>
    %1219 = arith.addf %1217, %1218 : vector<8x4xf32>
    %1220 = math.rsqrt %1219 : vector<8x4xf32>
    %1221 = arith.mulf %1217, %1220 : vector<8x4xf32>
    %1222 = arith.mulf %1190, %1220 : vector<8x4xf32>
    %1223 = arith.mulf %1201, %1220 : vector<8x4xf32>
    %1224 = arith.mulf %1212, %1220 : vector<8x4xf32>
    %1225 = tpu.concatenate %1179, %1165, %1190, %1201, %1212, %1221, %1222, %1223, %1224 in 1 : vector<8x8xf32>, vector<8x16xf32>, vector<8x4xf32>, vector<8x4xf32>, vector<8x4xf32>, vector<8x4xf32>, vector<8x4xf32>, vector<8x4xf32>, vector<8x4xf32> -> vector<8x52xf32>
    %c8_358 = arith.constant 8 : index
    %c0_359 = arith.constant 0 : index
    %c0_360 = arith.constant 0 : index
    %1226 = vector.load %arg12[%c8_358, %c0_359, %c0_360] : memref<12x52x32xf32, #tpu.memory_space<vmem>>, vector<1x52x32xf32>
    %1227 = vector.shape_cast %1226 : vector<1x52x32xf32> to vector<52x32xf32>
    %cst_361 = arith.constant dense<0.000000e+00> : vector<8x32xf32>
    %1228 = tpu.matmul %1225, %1227, %cst_361 {dimension_numbers = #tpu.dot_dimension_numbers<[1], [0], [0], [1], [0, 0, 1, 1], [], []>} : vector<8x52xf32>, vector<52x32xf32>, vector<8x32xf32> -> vector<8x32xf32>
    %1229 = arith.addf %1095, %1228 : vector<8x32xf32>
    %c0_362 = arith.constant 0 : index
    %c9 = arith.constant 9 : index
    %c0_363 = arith.constant 0 : index
    %c0_364 = arith.constant 0 : index
    %1230 = vector.load %arg2[%c0_362, %c9, %c0_363, %c0_364] : memref<1x12x8x30xf32, #tpu.memory_space<vmem>>, vector<1x1x8x30xf32>
    %1231 = vector.shape_cast %1230 : vector<1x1x8x30xf32> to vector<8x30xf32>
    %c0_365 = arith.constant 0 : index
    %c9_366 = arith.constant 9 : index
    %c0_367 = arith.constant 0 : index
    %c0_368 = arith.constant 0 : index
    %1232 = vector.load %arg3[%c0_365, %c9_366, %c0_367, %c0_368] : memref<1x12x30x8xf32, #tpu.memory_space<vmem>>, vector<1x1x30x8xf32>
    %1233 = vector.shape_cast %1232 : vector<1x1x30x8xf32> to vector<30x8xf32>
    %cst_369 = arith.constant dense<0.000000e+00> : vector<8x8xf32>
    %1234 = tpu.matmul %1231, %1233, %cst_369 {dimension_numbers = #tpu.dot_dimension_numbers<[1], [0], [0], [1], [0, 0, 1, 1], [], []>} : vector<8x30xf32>, vector<30x8xf32>, vector<8x8xf32> -> vector<8x8xf32>
    %c9_370 = arith.constant 9 : index
    %c0_371 = arith.constant 0 : index
    %1235 = memref.load %arg6[%c9_370, %c0_371] : memref<12x8xf32, #tpu.memory_space<smem>>
    %1236 = vector.extract_strided_slice %15 {offsets = [0, 0, 0], sizes = [1, 8, 8], strides = [1, 1, 1]} : vector<8x8x8xf32> to vector<1x8x8xf32>
    %1237 = vector.shape_cast %1236 : vector<1x8x8xf32> to vector<8x8xf32>
    %1238 = vector.broadcast %1235 : f32 to vector<8x8xf32>
    %1239 = arith.mulf %1238, %1237 : vector<8x8xf32>
    %c9_372 = arith.constant 9 : index
    %c1_373 = arith.constant 1 : index
    %1240 = memref.load %arg6[%c9_372, %c1_373] : memref<12x8xf32, #tpu.memory_space<smem>>
    %1241 = vector.extract_strided_slice %15 {offsets = [1, 0, 0], sizes = [1, 8, 8], strides = [1, 1, 1]} : vector<8x8x8xf32> to vector<1x8x8xf32>
    %1242 = vector.shape_cast %1241 : vector<1x8x8xf32> to vector<8x8xf32>
    %1243 = vector.broadcast %1240 : f32 to vector<8x8xf32>
    %1244 = arith.mulf %1243, %1242 : vector<8x8xf32>
    %1245 = arith.addf %1239, %1244 : vector<8x8xf32>
    %c9_374 = arith.constant 9 : index
    %c2_375 = arith.constant 2 : index
    %1246 = memref.load %arg6[%c9_374, %c2_375] : memref<12x8xf32, #tpu.memory_space<smem>>
    %1247 = vector.extract_strided_slice %15 {offsets = [2, 0, 0], sizes = [1, 8, 8], strides = [1, 1, 1]} : vector<8x8x8xf32> to vector<1x8x8xf32>
    %1248 = vector.shape_cast %1247 : vector<1x8x8xf32> to vector<8x8xf32>
    %1249 = vector.broadcast %1246 : f32 to vector<8x8xf32>
    %1250 = arith.mulf %1249, %1248 : vector<8x8xf32>
    %1251 = arith.addf %1245, %1250 : vector<8x8xf32>
    %c9_376 = arith.constant 9 : index
    %c3_377 = arith.constant 3 : index
    %1252 = memref.load %arg6[%c9_376, %c3_377] : memref<12x8xf32, #tpu.memory_space<smem>>
    %1253 = vector.extract_strided_slice %15 {offsets = [3, 0, 0], sizes = [1, 8, 8], strides = [1, 1, 1]} : vector<8x8x8xf32> to vector<1x8x8xf32>
    %1254 = vector.shape_cast %1253 : vector<1x8x8xf32> to vector<8x8xf32>
    %1255 = vector.broadcast %1252 : f32 to vector<8x8xf32>
    %1256 = arith.mulf %1255, %1254 : vector<8x8xf32>
    %1257 = arith.addf %1251, %1256 : vector<8x8xf32>
    %c9_378 = arith.constant 9 : index
    %c4_379 = arith.constant 4 : index
    %1258 = memref.load %arg6[%c9_378, %c4_379] : memref<12x8xf32, #tpu.memory_space<smem>>
    %1259 = vector.extract_strided_slice %15 {offsets = [4, 0, 0], sizes = [1, 8, 8], strides = [1, 1, 1]} : vector<8x8x8xf32> to vector<1x8x8xf32>
    %1260 = vector.shape_cast %1259 : vector<1x8x8xf32> to vector<8x8xf32>
    %1261 = vector.broadcast %1258 : f32 to vector<8x8xf32>
    %1262 = arith.mulf %1261, %1260 : vector<8x8xf32>
    %1263 = arith.addf %1257, %1262 : vector<8x8xf32>
    %c9_380 = arith.constant 9 : index
    %c5_381 = arith.constant 5 : index
    %1264 = memref.load %arg6[%c9_380, %c5_381] : memref<12x8xf32, #tpu.memory_space<smem>>
    %1265 = vector.extract_strided_slice %15 {offsets = [5, 0, 0], sizes = [1, 8, 8], strides = [1, 1, 1]} : vector<8x8x8xf32> to vector<1x8x8xf32>
    %1266 = vector.shape_cast %1265 : vector<1x8x8xf32> to vector<8x8xf32>
    %1267 = vector.broadcast %1264 : f32 to vector<8x8xf32>
    %1268 = arith.mulf %1267, %1266 : vector<8x8xf32>
    %1269 = arith.addf %1263, %1268 : vector<8x8xf32>
    %c9_382 = arith.constant 9 : index
    %c6_383 = arith.constant 6 : index
    %1270 = memref.load %arg6[%c9_382, %c6_383] : memref<12x8xf32, #tpu.memory_space<smem>>
    %1271 = vector.extract_strided_slice %15 {offsets = [6, 0, 0], sizes = [1, 8, 8], strides = [1, 1, 1]} : vector<8x8x8xf32> to vector<1x8x8xf32>
    %1272 = vector.shape_cast %1271 : vector<1x8x8xf32> to vector<8x8xf32>
    %1273 = vector.broadcast %1270 : f32 to vector<8x8xf32>
    %1274 = arith.mulf %1273, %1272 : vector<8x8xf32>
    %1275 = arith.addf %1269, %1274 : vector<8x8xf32>
    %c9_384 = arith.constant 9 : index
    %c7_385 = arith.constant 7 : index
    %1276 = memref.load %arg6[%c9_384, %c7_385] : memref<12x8xf32, #tpu.memory_space<smem>>
    %1277 = vector.extract_strided_slice %15 {offsets = [7, 0, 0], sizes = [1, 8, 8], strides = [1, 1, 1]} : vector<8x8x8xf32> to vector<1x8x8xf32>
    %1278 = vector.shape_cast %1277 : vector<1x8x8xf32> to vector<8x8xf32>
    %1279 = vector.broadcast %1276 : f32 to vector<8x8xf32>
    %1280 = arith.mulf %1279, %1278 : vector<8x8xf32>
    %1281 = arith.addf %1275, %1280 : vector<8x8xf32>
    %1282 = arith.addf %1234, %1281 : vector<8x8xf32>
    %cst_386 = arith.constant 0.577350259 : f32
    %1283 = vector.broadcast %cst_386 : f32 to vector<8x8xf32>
    %1284 = arith.mulf %1282, %1283 : vector<8x8xf32>
    %1285 = arith.addf %1284, %13 : vector<8x8xf32>
    %cst_387 = arith.constant dense<0xFF800000> : vector<8xf32>
    %1286 = vector.multi_reduction <maximumf>, %1285, %cst_387 [1] : vector<8x8xf32> to vector<8xf32>
    %1287 = vector.shape_cast %1286 : vector<8xf32> to vector<8x1xf32>
    %1288 = vector.broadcast %1287 : vector<8x1xf32> to vector<8x8xf32>
    %1289 = arith.subf %1285, %1288 : vector<8x8xf32>
    %1290 = math.exp %1289 : vector<8x8xf32>
    %cst_388 = arith.constant dense<0.000000e+00> : vector<8xf32>
    %1291 = vector.multi_reduction <add>, %1290, %cst_388 [1] : vector<8x8xf32> to vector<8xf32>
    %1292 = vector.shape_cast %1291 : vector<8xf32> to vector<8x1xf32>
    %1293 = tpu.reciprocal %1292 {approx = true} : vector<8x1xf32> -> vector<8x1xf32>
    %1294 = vector.broadcast %1293 : vector<8x1xf32> to vector<8x8xf32>
    %1295 = arith.mulf %1290, %1294 : vector<8x8xf32>
    %c0_389 = arith.constant 0 : index
    %c9_390 = arith.constant 9 : index
    %c0_391 = arith.constant 0 : index
    %c0_392 = arith.constant 0 : index
    %1296 = vector.load %arg4[%c0_389, %c9_390, %c0_391, %c0_392] : memref<1x12x8x28xf32, #tpu.memory_space<vmem>>, vector<1x1x8x28xf32>
    %1297 = vector.shape_cast %1296 : vector<1x1x8x28xf32> to vector<8x28xf32>
    %cst_393 = arith.constant dense<0.000000e+00> : vector<8x28xf32>
    %1298 = tpu.matmul %1295, %1297, %cst_393 {dimension_numbers = #tpu.dot_dimension_numbers<[1], [0], [0], [1], [0, 0, 1, 1], [], []>} : vector<8x8xf32>, vector<8x28xf32>, vector<8x28xf32> -> vector<8x28xf32>
    %1299 = vector.extract_strided_slice %1298 {offsets = [0, 0], sizes = [8, 16], strides = [1, 1]} : vector<8x28xf32> to vector<8x16xf32>
    %1300 = vector.extract_strided_slice %1298 {offsets = [0, 16], sizes = [8, 4], strides = [1, 1]} : vector<8x28xf32> to vector<8x4xf32>
    %1301 = vector.broadcast %18 : vector<8x1xf32> to vector<8x4xf32>
    %1302 = arith.subf %1300, %1301 : vector<8x4xf32>
    %1303 = vector.extract_strided_slice %1298 {offsets = [0, 20], sizes = [8, 4], strides = [1, 1]} : vector<8x28xf32> to vector<8x4xf32>
    %1304 = vector.broadcast %19 : vector<8x1xf32> to vector<8x4xf32>
    %1305 = arith.subf %1303, %1304 : vector<8x4xf32>
    %1306 = vector.extract_strided_slice %1298 {offsets = [0, 24], sizes = [8, 4], strides = [1, 1]} : vector<8x28xf32> to vector<8x4xf32>
    %1307 = vector.broadcast %20 : vector<8x1xf32> to vector<8x4xf32>
    %1308 = arith.subf %1306, %1307 : vector<8x4xf32>
    %1309 = vector.shape_cast %1295 : vector<8x8xf32> to vector<1x8x8xf32>
    %1310 = vector.broadcast %1309 : vector<1x8x8xf32> to vector<8x8x8xf32>
    %1311 = arith.mulf %1310, %15 : vector<8x8x8xf32>
    %cst_394 = arith.constant dense<0.000000e+00> : vector<8x8xf32>
    %1312 = vector.multi_reduction <add>, %1311, %cst_394 [2] : vector<8x8x8xf32> to vector<8x8xf32>
    %1313 = tpu.transpose %1312, [1, 0] : vector<8x8xf32> -> vector<8x8xf32>
    %1314 = vector.extract_strided_slice %22 {offsets = [0, 0], sizes = [8, 1], strides = [1, 1]} : vector<8x9xf32> to vector<8x1xf32>
    %1315 = vector.broadcast %1314 : vector<8x1xf32> to vector<8x4xf32>
    %1316 = arith.mulf %1315, %1302 : vector<8x4xf32>
    %1317 = vector.extract_strided_slice %22 {offsets = [0, 3], sizes = [8, 1], strides = [1, 1]} : vector<8x9xf32> to vector<8x1xf32>
    %1318 = vector.broadcast %1317 : vector<8x1xf32> to vector<8x4xf32>
    %1319 = arith.mulf %1318, %1305 : vector<8x4xf32>
    %1320 = arith.addf %1316, %1319 : vector<8x4xf32>
    %1321 = vector.extract_strided_slice %22 {offsets = [0, 6], sizes = [8, 1], strides = [1, 1]} : vector<8x9xf32> to vector<8x1xf32>
    %1322 = vector.broadcast %1321 : vector<8x1xf32> to vector<8x4xf32>
    %1323 = arith.mulf %1322, %1308 : vector<8x4xf32>
    %1324 = arith.addf %1320, %1323 : vector<8x4xf32>
    %1325 = vector.extract_strided_slice %22 {offsets = [0, 1], sizes = [8, 1], strides = [1, 1]} : vector<8x9xf32> to vector<8x1xf32>
    %1326 = vector.broadcast %1325 : vector<8x1xf32> to vector<8x4xf32>
    %1327 = arith.mulf %1326, %1302 : vector<8x4xf32>
    %1328 = vector.extract_strided_slice %22 {offsets = [0, 4], sizes = [8, 1], strides = [1, 1]} : vector<8x9xf32> to vector<8x1xf32>
    %1329 = vector.broadcast %1328 : vector<8x1xf32> to vector<8x4xf32>
    %1330 = arith.mulf %1329, %1305 : vector<8x4xf32>
    %1331 = arith.addf %1327, %1330 : vector<8x4xf32>
    %1332 = vector.extract_strided_slice %22 {offsets = [0, 7], sizes = [8, 1], strides = [1, 1]} : vector<8x9xf32> to vector<8x1xf32>
    %1333 = vector.broadcast %1332 : vector<8x1xf32> to vector<8x4xf32>
    %1334 = arith.mulf %1333, %1308 : vector<8x4xf32>
    %1335 = arith.addf %1331, %1334 : vector<8x4xf32>
    %1336 = vector.extract_strided_slice %22 {offsets = [0, 2], sizes = [8, 1], strides = [1, 1]} : vector<8x9xf32> to vector<8x1xf32>
    %1337 = vector.broadcast %1336 : vector<8x1xf32> to vector<8x4xf32>
    %1338 = arith.mulf %1337, %1302 : vector<8x4xf32>
    %1339 = vector.extract_strided_slice %22 {offsets = [0, 5], sizes = [8, 1], strides = [1, 1]} : vector<8x9xf32> to vector<8x1xf32>
    %1340 = vector.broadcast %1339 : vector<8x1xf32> to vector<8x4xf32>
    %1341 = arith.mulf %1340, %1305 : vector<8x4xf32>
    %1342 = arith.addf %1338, %1341 : vector<8x4xf32>
    %1343 = vector.extract_strided_slice %22 {offsets = [0, 8], sizes = [8, 1], strides = [1, 1]} : vector<8x9xf32> to vector<8x1xf32>
    %1344 = vector.broadcast %1343 : vector<8x1xf32> to vector<8x4xf32>
    %1345 = arith.mulf %1344, %1308 : vector<8x4xf32>
    %1346 = arith.addf %1342, %1345 : vector<8x4xf32>
    %1347 = arith.mulf %1324, %1324 : vector<8x4xf32>
    %1348 = arith.mulf %1335, %1335 : vector<8x4xf32>
    %1349 = arith.addf %1347, %1348 : vector<8x4xf32>
    %1350 = arith.mulf %1346, %1346 : vector<8x4xf32>
    %1351 = arith.addf %1349, %1350 : vector<8x4xf32>
    %cst_395 = arith.constant 9.99999996E-13 : f32
    %1352 = vector.broadcast %cst_395 : f32 to vector<8x4xf32>
    %1353 = arith.addf %1351, %1352 : vector<8x4xf32>
    %1354 = math.rsqrt %1353 : vector<8x4xf32>
    %1355 = arith.mulf %1351, %1354 : vector<8x4xf32>
    %1356 = arith.mulf %1324, %1354 : vector<8x4xf32>
    %1357 = arith.mulf %1335, %1354 : vector<8x4xf32>
    %1358 = arith.mulf %1346, %1354 : vector<8x4xf32>
    %1359 = tpu.concatenate %1313, %1299, %1324, %1335, %1346, %1355, %1356, %1357, %1358 in 1 : vector<8x8xf32>, vector<8x16xf32>, vector<8x4xf32>, vector<8x4xf32>, vector<8x4xf32>, vector<8x4xf32>, vector<8x4xf32>, vector<8x4xf32>, vector<8x4xf32> -> vector<8x52xf32>
    %c9_396 = arith.constant 9 : index
    %c0_397 = arith.constant 0 : index
    %c0_398 = arith.constant 0 : index
    %1360 = vector.load %arg12[%c9_396, %c0_397, %c0_398] : memref<12x52x32xf32, #tpu.memory_space<vmem>>, vector<1x52x32xf32>
    %1361 = vector.shape_cast %1360 : vector<1x52x32xf32> to vector<52x32xf32>
    %cst_399 = arith.constant dense<0.000000e+00> : vector<8x32xf32>
    %1362 = tpu.matmul %1359, %1361, %cst_399 {dimension_numbers = #tpu.dot_dimension_numbers<[1], [0], [0], [1], [0, 0, 1, 1], [], []>} : vector<8x52xf32>, vector<52x32xf32>, vector<8x32xf32> -> vector<8x32xf32>
    %1363 = arith.addf %1229, %1362 : vector<8x32xf32>
    %c0_400 = arith.constant 0 : index
    %c10 = arith.constant 10 : index
    %c0_401 = arith.constant 0 : index
    %c0_402 = arith.constant 0 : index
    %1364 = vector.load %arg2[%c0_400, %c10, %c0_401, %c0_402] : memref<1x12x8x30xf32, #tpu.memory_space<vmem>>, vector<1x1x8x30xf32>
    %1365 = vector.shape_cast %1364 : vector<1x1x8x30xf32> to vector<8x30xf32>
    %c0_403 = arith.constant 0 : index
    %c10_404 = arith.constant 10 : index
    %c0_405 = arith.constant 0 : index
    %c0_406 = arith.constant 0 : index
    %1366 = vector.load %arg3[%c0_403, %c10_404, %c0_405, %c0_406] : memref<1x12x30x8xf32, #tpu.memory_space<vmem>>, vector<1x1x30x8xf32>
    %1367 = vector.shape_cast %1366 : vector<1x1x30x8xf32> to vector<30x8xf32>
    %cst_407 = arith.constant dense<0.000000e+00> : vector<8x8xf32>
    %1368 = tpu.matmul %1365, %1367, %cst_407 {dimension_numbers = #tpu.dot_dimension_numbers<[1], [0], [0], [1], [0, 0, 1, 1], [], []>} : vector<8x30xf32>, vector<30x8xf32>, vector<8x8xf32> -> vector<8x8xf32>
    %c10_408 = arith.constant 10 : index
    %c0_409 = arith.constant 0 : index
    %1369 = memref.load %arg6[%c10_408, %c0_409] : memref<12x8xf32, #tpu.memory_space<smem>>
    %1370 = vector.extract_strided_slice %15 {offsets = [0, 0, 0], sizes = [1, 8, 8], strides = [1, 1, 1]} : vector<8x8x8xf32> to vector<1x8x8xf32>
    %1371 = vector.shape_cast %1370 : vector<1x8x8xf32> to vector<8x8xf32>
    %1372 = vector.broadcast %1369 : f32 to vector<8x8xf32>
    %1373 = arith.mulf %1372, %1371 : vector<8x8xf32>
    %c10_410 = arith.constant 10 : index
    %c1_411 = arith.constant 1 : index
    %1374 = memref.load %arg6[%c10_410, %c1_411] : memref<12x8xf32, #tpu.memory_space<smem>>
    %1375 = vector.extract_strided_slice %15 {offsets = [1, 0, 0], sizes = [1, 8, 8], strides = [1, 1, 1]} : vector<8x8x8xf32> to vector<1x8x8xf32>
    %1376 = vector.shape_cast %1375 : vector<1x8x8xf32> to vector<8x8xf32>
    %1377 = vector.broadcast %1374 : f32 to vector<8x8xf32>
    %1378 = arith.mulf %1377, %1376 : vector<8x8xf32>
    %1379 = arith.addf %1373, %1378 : vector<8x8xf32>
    %c10_412 = arith.constant 10 : index
    %c2_413 = arith.constant 2 : index
    %1380 = memref.load %arg6[%c10_412, %c2_413] : memref<12x8xf32, #tpu.memory_space<smem>>
    %1381 = vector.extract_strided_slice %15 {offsets = [2, 0, 0], sizes = [1, 8, 8], strides = [1, 1, 1]} : vector<8x8x8xf32> to vector<1x8x8xf32>
    %1382 = vector.shape_cast %1381 : vector<1x8x8xf32> to vector<8x8xf32>
    %1383 = vector.broadcast %1380 : f32 to vector<8x8xf32>
    %1384 = arith.mulf %1383, %1382 : vector<8x8xf32>
    %1385 = arith.addf %1379, %1384 : vector<8x8xf32>
    %c10_414 = arith.constant 10 : index
    %c3_415 = arith.constant 3 : index
    %1386 = memref.load %arg6[%c10_414, %c3_415] : memref<12x8xf32, #tpu.memory_space<smem>>
    %1387 = vector.extract_strided_slice %15 {offsets = [3, 0, 0], sizes = [1, 8, 8], strides = [1, 1, 1]} : vector<8x8x8xf32> to vector<1x8x8xf32>
    %1388 = vector.shape_cast %1387 : vector<1x8x8xf32> to vector<8x8xf32>
    %1389 = vector.broadcast %1386 : f32 to vector<8x8xf32>
    %1390 = arith.mulf %1389, %1388 : vector<8x8xf32>
    %1391 = arith.addf %1385, %1390 : vector<8x8xf32>
    %c10_416 = arith.constant 10 : index
    %c4_417 = arith.constant 4 : index
    %1392 = memref.load %arg6[%c10_416, %c4_417] : memref<12x8xf32, #tpu.memory_space<smem>>
    %1393 = vector.extract_strided_slice %15 {offsets = [4, 0, 0], sizes = [1, 8, 8], strides = [1, 1, 1]} : vector<8x8x8xf32> to vector<1x8x8xf32>
    %1394 = vector.shape_cast %1393 : vector<1x8x8xf32> to vector<8x8xf32>
    %1395 = vector.broadcast %1392 : f32 to vector<8x8xf32>
    %1396 = arith.mulf %1395, %1394 : vector<8x8xf32>
    %1397 = arith.addf %1391, %1396 : vector<8x8xf32>
    %c10_418 = arith.constant 10 : index
    %c5_419 = arith.constant 5 : index
    %1398 = memref.load %arg6[%c10_418, %c5_419] : memref<12x8xf32, #tpu.memory_space<smem>>
    %1399 = vector.extract_strided_slice %15 {offsets = [5, 0, 0], sizes = [1, 8, 8], strides = [1, 1, 1]} : vector<8x8x8xf32> to vector<1x8x8xf32>
    %1400 = vector.shape_cast %1399 : vector<1x8x8xf32> to vector<8x8xf32>
    %1401 = vector.broadcast %1398 : f32 to vector<8x8xf32>
    %1402 = arith.mulf %1401, %1400 : vector<8x8xf32>
    %1403 = arith.addf %1397, %1402 : vector<8x8xf32>
    %c10_420 = arith.constant 10 : index
    %c6_421 = arith.constant 6 : index
    %1404 = memref.load %arg6[%c10_420, %c6_421] : memref<12x8xf32, #tpu.memory_space<smem>>
    %1405 = vector.extract_strided_slice %15 {offsets = [6, 0, 0], sizes = [1, 8, 8], strides = [1, 1, 1]} : vector<8x8x8xf32> to vector<1x8x8xf32>
    %1406 = vector.shape_cast %1405 : vector<1x8x8xf32> to vector<8x8xf32>
    %1407 = vector.broadcast %1404 : f32 to vector<8x8xf32>
    %1408 = arith.mulf %1407, %1406 : vector<8x8xf32>
    %1409 = arith.addf %1403, %1408 : vector<8x8xf32>
    %c10_422 = arith.constant 10 : index
    %c7_423 = arith.constant 7 : index
    %1410 = memref.load %arg6[%c10_422, %c7_423] : memref<12x8xf32, #tpu.memory_space<smem>>
    %1411 = vector.extract_strided_slice %15 {offsets = [7, 0, 0], sizes = [1, 8, 8], strides = [1, 1, 1]} : vector<8x8x8xf32> to vector<1x8x8xf32>
    %1412 = vector.shape_cast %1411 : vector<1x8x8xf32> to vector<8x8xf32>
    %1413 = vector.broadcast %1410 : f32 to vector<8x8xf32>
    %1414 = arith.mulf %1413, %1412 : vector<8x8xf32>
    %1415 = arith.addf %1409, %1414 : vector<8x8xf32>
    %1416 = arith.addf %1368, %1415 : vector<8x8xf32>
    %cst_424 = arith.constant 0.577350259 : f32
    %1417 = vector.broadcast %cst_424 : f32 to vector<8x8xf32>
    %1418 = arith.mulf %1416, %1417 : vector<8x8xf32>
    %1419 = arith.addf %1418, %13 : vector<8x8xf32>
    %cst_425 = arith.constant dense<0xFF800000> : vector<8xf32>
    %1420 = vector.multi_reduction <maximumf>, %1419, %cst_425 [1] : vector<8x8xf32> to vector<8xf32>
    %1421 = vector.shape_cast %1420 : vector<8xf32> to vector<8x1xf32>
    %1422 = vector.broadcast %1421 : vector<8x1xf32> to vector<8x8xf32>
    %1423 = arith.subf %1419, %1422 : vector<8x8xf32>
    %1424 = math.exp %1423 : vector<8x8xf32>
    %cst_426 = arith.constant dense<0.000000e+00> : vector<8xf32>
    %1425 = vector.multi_reduction <add>, %1424, %cst_426 [1] : vector<8x8xf32> to vector<8xf32>
    %1426 = vector.shape_cast %1425 : vector<8xf32> to vector<8x1xf32>
    %1427 = tpu.reciprocal %1426 {approx = true} : vector<8x1xf32> -> vector<8x1xf32>
    %1428 = vector.broadcast %1427 : vector<8x1xf32> to vector<8x8xf32>
    %1429 = arith.mulf %1424, %1428 : vector<8x8xf32>
    %c0_427 = arith.constant 0 : index
    %c10_428 = arith.constant 10 : index
    %c0_429 = arith.constant 0 : index
    %c0_430 = arith.constant 0 : index
    %1430 = vector.load %arg4[%c0_427, %c10_428, %c0_429, %c0_430] : memref<1x12x8x28xf32, #tpu.memory_space<vmem>>, vector<1x1x8x28xf32>
    %1431 = vector.shape_cast %1430 : vector<1x1x8x28xf32> to vector<8x28xf32>
    %cst_431 = arith.constant dense<0.000000e+00> : vector<8x28xf32>
    %1432 = tpu.matmul %1429, %1431, %cst_431 {dimension_numbers = #tpu.dot_dimension_numbers<[1], [0], [0], [1], [0, 0, 1, 1], [], []>} : vector<8x8xf32>, vector<8x28xf32>, vector<8x28xf32> -> vector<8x28xf32>
    %1433 = vector.extract_strided_slice %1432 {offsets = [0, 0], sizes = [8, 16], strides = [1, 1]} : vector<8x28xf32> to vector<8x16xf32>
    %1434 = vector.extract_strided_slice %1432 {offsets = [0, 16], sizes = [8, 4], strides = [1, 1]} : vector<8x28xf32> to vector<8x4xf32>
    %1435 = vector.broadcast %18 : vector<8x1xf32> to vector<8x4xf32>
    %1436 = arith.subf %1434, %1435 : vector<8x4xf32>
    %1437 = vector.extract_strided_slice %1432 {offsets = [0, 20], sizes = [8, 4], strides = [1, 1]} : vector<8x28xf32> to vector<8x4xf32>
    %1438 = vector.broadcast %19 : vector<8x1xf32> to vector<8x4xf32>
    %1439 = arith.subf %1437, %1438 : vector<8x4xf32>
    %1440 = vector.extract_strided_slice %1432 {offsets = [0, 24], sizes = [8, 4], strides = [1, 1]} : vector<8x28xf32> to vector<8x4xf32>
    %1441 = vector.broadcast %20 : vector<8x1xf32> to vector<8x4xf32>
    %1442 = arith.subf %1440, %1441 : vector<8x4xf32>
    %1443 = vector.shape_cast %1429 : vector<8x8xf32> to vector<1x8x8xf32>
    %1444 = vector.broadcast %1443 : vector<1x8x8xf32> to vector<8x8x8xf32>
    %1445 = arith.mulf %1444, %15 : vector<8x8x8xf32>
    %cst_432 = arith.constant dense<0.000000e+00> : vector<8x8xf32>
    %1446 = vector.multi_reduction <add>, %1445, %cst_432 [2] : vector<8x8x8xf32> to vector<8x8xf32>
    %1447 = tpu.transpose %1446, [1, 0] : vector<8x8xf32> -> vector<8x8xf32>
    %1448 = vector.extract_strided_slice %22 {offsets = [0, 0], sizes = [8, 1], strides = [1, 1]} : vector<8x9xf32> to vector<8x1xf32>
    %1449 = vector.broadcast %1448 : vector<8x1xf32> to vector<8x4xf32>
    %1450 = arith.mulf %1449, %1436 : vector<8x4xf32>
    %1451 = vector.extract_strided_slice %22 {offsets = [0, 3], sizes = [8, 1], strides = [1, 1]} : vector<8x9xf32> to vector<8x1xf32>
    %1452 = vector.broadcast %1451 : vector<8x1xf32> to vector<8x4xf32>
    %1453 = arith.mulf %1452, %1439 : vector<8x4xf32>
    %1454 = arith.addf %1450, %1453 : vector<8x4xf32>
    %1455 = vector.extract_strided_slice %22 {offsets = [0, 6], sizes = [8, 1], strides = [1, 1]} : vector<8x9xf32> to vector<8x1xf32>
    %1456 = vector.broadcast %1455 : vector<8x1xf32> to vector<8x4xf32>
    %1457 = arith.mulf %1456, %1442 : vector<8x4xf32>
    %1458 = arith.addf %1454, %1457 : vector<8x4xf32>
    %1459 = vector.extract_strided_slice %22 {offsets = [0, 1], sizes = [8, 1], strides = [1, 1]} : vector<8x9xf32> to vector<8x1xf32>
    %1460 = vector.broadcast %1459 : vector<8x1xf32> to vector<8x4xf32>
    %1461 = arith.mulf %1460, %1436 : vector<8x4xf32>
    %1462 = vector.extract_strided_slice %22 {offsets = [0, 4], sizes = [8, 1], strides = [1, 1]} : vector<8x9xf32> to vector<8x1xf32>
    %1463 = vector.broadcast %1462 : vector<8x1xf32> to vector<8x4xf32>
    %1464 = arith.mulf %1463, %1439 : vector<8x4xf32>
    %1465 = arith.addf %1461, %1464 : vector<8x4xf32>
    %1466 = vector.extract_strided_slice %22 {offsets = [0, 7], sizes = [8, 1], strides = [1, 1]} : vector<8x9xf32> to vector<8x1xf32>
    %1467 = vector.broadcast %1466 : vector<8x1xf32> to vector<8x4xf32>
    %1468 = arith.mulf %1467, %1442 : vector<8x4xf32>
    %1469 = arith.addf %1465, %1468 : vector<8x4xf32>
    %1470 = vector.extract_strided_slice %22 {offsets = [0, 2], sizes = [8, 1], strides = [1, 1]} : vector<8x9xf32> to vector<8x1xf32>
    %1471 = vector.broadcast %1470 : vector<8x1xf32> to vector<8x4xf32>
    %1472 = arith.mulf %1471, %1436 : vector<8x4xf32>
    %1473 = vector.extract_strided_slice %22 {offsets = [0, 5], sizes = [8, 1], strides = [1, 1]} : vector<8x9xf32> to vector<8x1xf32>
    %1474 = vector.broadcast %1473 : vector<8x1xf32> to vector<8x4xf32>
    %1475 = arith.mulf %1474, %1439 : vector<8x4xf32>
    %1476 = arith.addf %1472, %1475 : vector<8x4xf32>
    %1477 = vector.extract_strided_slice %22 {offsets = [0, 8], sizes = [8, 1], strides = [1, 1]} : vector<8x9xf32> to vector<8x1xf32>
    %1478 = vector.broadcast %1477 : vector<8x1xf32> to vector<8x4xf32>
    %1479 = arith.mulf %1478, %1442 : vector<8x4xf32>
    %1480 = arith.addf %1476, %1479 : vector<8x4xf32>
    %1481 = arith.mulf %1458, %1458 : vector<8x4xf32>
    %1482 = arith.mulf %1469, %1469 : vector<8x4xf32>
    %1483 = arith.addf %1481, %1482 : vector<8x4xf32>
    %1484 = arith.mulf %1480, %1480 : vector<8x4xf32>
    %1485 = arith.addf %1483, %1484 : vector<8x4xf32>
    %cst_433 = arith.constant 9.99999996E-13 : f32
    %1486 = vector.broadcast %cst_433 : f32 to vector<8x4xf32>
    %1487 = arith.addf %1485, %1486 : vector<8x4xf32>
    %1488 = math.rsqrt %1487 : vector<8x4xf32>
    %1489 = arith.mulf %1485, %1488 : vector<8x4xf32>
    %1490 = arith.mulf %1458, %1488 : vector<8x4xf32>
    %1491 = arith.mulf %1469, %1488 : vector<8x4xf32>
    %1492 = arith.mulf %1480, %1488 : vector<8x4xf32>
    %1493 = tpu.concatenate %1447, %1433, %1458, %1469, %1480, %1489, %1490, %1491, %1492 in 1 : vector<8x8xf32>, vector<8x16xf32>, vector<8x4xf32>, vector<8x4xf32>, vector<8x4xf32>, vector<8x4xf32>, vector<8x4xf32>, vector<8x4xf32>, vector<8x4xf32> -> vector<8x52xf32>
    %c10_434 = arith.constant 10 : index
    %c0_435 = arith.constant 0 : index
    %c0_436 = arith.constant 0 : index
    %1494 = vector.load %arg12[%c10_434, %c0_435, %c0_436] : memref<12x52x32xf32, #tpu.memory_space<vmem>>, vector<1x52x32xf32>
    %1495 = vector.shape_cast %1494 : vector<1x52x32xf32> to vector<52x32xf32>
    %cst_437 = arith.constant dense<0.000000e+00> : vector<8x32xf32>
    %1496 = tpu.matmul %1493, %1495, %cst_437 {dimension_numbers = #tpu.dot_dimension_numbers<[1], [0], [0], [1], [0, 0, 1, 1], [], []>} : vector<8x52xf32>, vector<52x32xf32>, vector<8x32xf32> -> vector<8x32xf32>
    %1497 = arith.addf %1363, %1496 : vector<8x32xf32>
    %c0_438 = arith.constant 0 : index
    %c11 = arith.constant 11 : index
    %c0_439 = arith.constant 0 : index
    %c0_440 = arith.constant 0 : index
    %1498 = vector.load %arg2[%c0_438, %c11, %c0_439, %c0_440] : memref<1x12x8x30xf32, #tpu.memory_space<vmem>>, vector<1x1x8x30xf32>
    %1499 = vector.shape_cast %1498 : vector<1x1x8x30xf32> to vector<8x30xf32>
    %c0_441 = arith.constant 0 : index
    %c11_442 = arith.constant 11 : index
    %c0_443 = arith.constant 0 : index
    %c0_444 = arith.constant 0 : index
    %1500 = vector.load %arg3[%c0_441, %c11_442, %c0_443, %c0_444] : memref<1x12x30x8xf32, #tpu.memory_space<vmem>>, vector<1x1x30x8xf32>
    %1501 = vector.shape_cast %1500 : vector<1x1x30x8xf32> to vector<30x8xf32>
    %cst_445 = arith.constant dense<0.000000e+00> : vector<8x8xf32>
    %1502 = tpu.matmul %1499, %1501, %cst_445 {dimension_numbers = #tpu.dot_dimension_numbers<[1], [0], [0], [1], [0, 0, 1, 1], [], []>} : vector<8x30xf32>, vector<30x8xf32>, vector<8x8xf32> -> vector<8x8xf32>
    %c11_446 = arith.constant 11 : index
    %c0_447 = arith.constant 0 : index
    %1503 = memref.load %arg6[%c11_446, %c0_447] : memref<12x8xf32, #tpu.memory_space<smem>>
    %1504 = vector.extract_strided_slice %15 {offsets = [0, 0, 0], sizes = [1, 8, 8], strides = [1, 1, 1]} : vector<8x8x8xf32> to vector<1x8x8xf32>
    %1505 = vector.shape_cast %1504 : vector<1x8x8xf32> to vector<8x8xf32>
    %1506 = vector.broadcast %1503 : f32 to vector<8x8xf32>
    %1507 = arith.mulf %1506, %1505 : vector<8x8xf32>
    %c11_448 = arith.constant 11 : index
    %c1_449 = arith.constant 1 : index
    %1508 = memref.load %arg6[%c11_448, %c1_449] : memref<12x8xf32, #tpu.memory_space<smem>>
    %1509 = vector.extract_strided_slice %15 {offsets = [1, 0, 0], sizes = [1, 8, 8], strides = [1, 1, 1]} : vector<8x8x8xf32> to vector<1x8x8xf32>
    %1510 = vector.shape_cast %1509 : vector<1x8x8xf32> to vector<8x8xf32>
    %1511 = vector.broadcast %1508 : f32 to vector<8x8xf32>
    %1512 = arith.mulf %1511, %1510 : vector<8x8xf32>
    %1513 = arith.addf %1507, %1512 : vector<8x8xf32>
    %c11_450 = arith.constant 11 : index
    %c2_451 = arith.constant 2 : index
    %1514 = memref.load %arg6[%c11_450, %c2_451] : memref<12x8xf32, #tpu.memory_space<smem>>
    %1515 = vector.extract_strided_slice %15 {offsets = [2, 0, 0], sizes = [1, 8, 8], strides = [1, 1, 1]} : vector<8x8x8xf32> to vector<1x8x8xf32>
    %1516 = vector.shape_cast %1515 : vector<1x8x8xf32> to vector<8x8xf32>
    %1517 = vector.broadcast %1514 : f32 to vector<8x8xf32>
    %1518 = arith.mulf %1517, %1516 : vector<8x8xf32>
    %1519 = arith.addf %1513, %1518 : vector<8x8xf32>
    %c11_452 = arith.constant 11 : index
    %c3_453 = arith.constant 3 : index
    %1520 = memref.load %arg6[%c11_452, %c3_453] : memref<12x8xf32, #tpu.memory_space<smem>>
    %1521 = vector.extract_strided_slice %15 {offsets = [3, 0, 0], sizes = [1, 8, 8], strides = [1, 1, 1]} : vector<8x8x8xf32> to vector<1x8x8xf32>
    %1522 = vector.shape_cast %1521 : vector<1x8x8xf32> to vector<8x8xf32>
    %1523 = vector.broadcast %1520 : f32 to vector<8x8xf32>
    %1524 = arith.mulf %1523, %1522 : vector<8x8xf32>
    %1525 = arith.addf %1519, %1524 : vector<8x8xf32>
    %c11_454 = arith.constant 11 : index
    %c4_455 = arith.constant 4 : index
    %1526 = memref.load %arg6[%c11_454, %c4_455] : memref<12x8xf32, #tpu.memory_space<smem>>
    %1527 = vector.extract_strided_slice %15 {offsets = [4, 0, 0], sizes = [1, 8, 8], strides = [1, 1, 1]} : vector<8x8x8xf32> to vector<1x8x8xf32>
    %1528 = vector.shape_cast %1527 : vector<1x8x8xf32> to vector<8x8xf32>
    %1529 = vector.broadcast %1526 : f32 to vector<8x8xf32>
    %1530 = arith.mulf %1529, %1528 : vector<8x8xf32>
    %1531 = arith.addf %1525, %1530 : vector<8x8xf32>
    %c11_456 = arith.constant 11 : index
    %c5_457 = arith.constant 5 : index
    %1532 = memref.load %arg6[%c11_456, %c5_457] : memref<12x8xf32, #tpu.memory_space<smem>>
    %1533 = vector.extract_strided_slice %15 {offsets = [5, 0, 0], sizes = [1, 8, 8], strides = [1, 1, 1]} : vector<8x8x8xf32> to vector<1x8x8xf32>
    %1534 = vector.shape_cast %1533 : vector<1x8x8xf32> to vector<8x8xf32>
    %1535 = vector.broadcast %1532 : f32 to vector<8x8xf32>
    %1536 = arith.mulf %1535, %1534 : vector<8x8xf32>
    %1537 = arith.addf %1531, %1536 : vector<8x8xf32>
    %c11_458 = arith.constant 11 : index
    %c6_459 = arith.constant 6 : index
    %1538 = memref.load %arg6[%c11_458, %c6_459] : memref<12x8xf32, #tpu.memory_space<smem>>
    %1539 = vector.extract_strided_slice %15 {offsets = [6, 0, 0], sizes = [1, 8, 8], strides = [1, 1, 1]} : vector<8x8x8xf32> to vector<1x8x8xf32>
    %1540 = vector.shape_cast %1539 : vector<1x8x8xf32> to vector<8x8xf32>
    %1541 = vector.broadcast %1538 : f32 to vector<8x8xf32>
    %1542 = arith.mulf %1541, %1540 : vector<8x8xf32>
    %1543 = arith.addf %1537, %1542 : vector<8x8xf32>
    %c11_460 = arith.constant 11 : index
    %c7_461 = arith.constant 7 : index
    %1544 = memref.load %arg6[%c11_460, %c7_461] : memref<12x8xf32, #tpu.memory_space<smem>>
    %1545 = vector.extract_strided_slice %15 {offsets = [7, 0, 0], sizes = [1, 8, 8], strides = [1, 1, 1]} : vector<8x8x8xf32> to vector<1x8x8xf32>
    %1546 = vector.shape_cast %1545 : vector<1x8x8xf32> to vector<8x8xf32>
    %1547 = vector.broadcast %1544 : f32 to vector<8x8xf32>
    %1548 = arith.mulf %1547, %1546 : vector<8x8xf32>
    %1549 = arith.addf %1543, %1548 : vector<8x8xf32>
    %1550 = arith.addf %1502, %1549 : vector<8x8xf32>
    %cst_462 = arith.constant 0.577350259 : f32
    %1551 = vector.broadcast %cst_462 : f32 to vector<8x8xf32>
    %1552 = arith.mulf %1550, %1551 : vector<8x8xf32>
    %1553 = arith.addf %1552, %13 : vector<8x8xf32>
    %cst_463 = arith.constant dense<0xFF800000> : vector<8xf32>
    %1554 = vector.multi_reduction <maximumf>, %1553, %cst_463 [1] : vector<8x8xf32> to vector<8xf32>
    %1555 = vector.shape_cast %1554 : vector<8xf32> to vector<8x1xf32>
    %1556 = vector.broadcast %1555 : vector<8x1xf32> to vector<8x8xf32>
    %1557 = arith.subf %1553, %1556 : vector<8x8xf32>
    %1558 = math.exp %1557 : vector<8x8xf32>
    %cst_464 = arith.constant dense<0.000000e+00> : vector<8xf32>
    %1559 = vector.multi_reduction <add>, %1558, %cst_464 [1] : vector<8x8xf32> to vector<8xf32>
    %1560 = vector.shape_cast %1559 : vector<8xf32> to vector<8x1xf32>
    %1561 = tpu.reciprocal %1560 {approx = true} : vector<8x1xf32> -> vector<8x1xf32>
    %1562 = vector.broadcast %1561 : vector<8x1xf32> to vector<8x8xf32>
    %1563 = arith.mulf %1558, %1562 : vector<8x8xf32>
    %c0_465 = arith.constant 0 : index
    %c11_466 = arith.constant 11 : index
    %c0_467 = arith.constant 0 : index
    %c0_468 = arith.constant 0 : index
    %1564 = vector.load %arg4[%c0_465, %c11_466, %c0_467, %c0_468] : memref<1x12x8x28xf32, #tpu.memory_space<vmem>>, vector<1x1x8x28xf32>
    %1565 = vector.shape_cast %1564 : vector<1x1x8x28xf32> to vector<8x28xf32>
    %cst_469 = arith.constant dense<0.000000e+00> : vector<8x28xf32>
    %1566 = tpu.matmul %1563, %1565, %cst_469 {dimension_numbers = #tpu.dot_dimension_numbers<[1], [0], [0], [1], [0, 0, 1, 1], [], []>} : vector<8x8xf32>, vector<8x28xf32>, vector<8x28xf32> -> vector<8x28xf32>
    %1567 = vector.extract_strided_slice %1566 {offsets = [0, 0], sizes = [8, 16], strides = [1, 1]} : vector<8x28xf32> to vector<8x16xf32>
    %1568 = vector.extract_strided_slice %1566 {offsets = [0, 16], sizes = [8, 4], strides = [1, 1]} : vector<8x28xf32> to vector<8x4xf32>
    %1569 = vector.broadcast %18 : vector<8x1xf32> to vector<8x4xf32>
    %1570 = arith.subf %1568, %1569 : vector<8x4xf32>
    %1571 = vector.extract_strided_slice %1566 {offsets = [0, 20], sizes = [8, 4], strides = [1, 1]} : vector<8x28xf32> to vector<8x4xf32>
    %1572 = vector.broadcast %19 : vector<8x1xf32> to vector<8x4xf32>
    %1573 = arith.subf %1571, %1572 : vector<8x4xf32>
    %1574 = vector.extract_strided_slice %1566 {offsets = [0, 24], sizes = [8, 4], strides = [1, 1]} : vector<8x28xf32> to vector<8x4xf32>
    %1575 = vector.broadcast %20 : vector<8x1xf32> to vector<8x4xf32>
    %1576 = arith.subf %1574, %1575 : vector<8x4xf32>
    %1577 = vector.shape_cast %1563 : vector<8x8xf32> to vector<1x8x8xf32>
    %1578 = vector.broadcast %1577 : vector<1x8x8xf32> to vector<8x8x8xf32>
    %1579 = arith.mulf %1578, %15 : vector<8x8x8xf32>
    %cst_470 = arith.constant dense<0.000000e+00> : vector<8x8xf32>
    %1580 = vector.multi_reduction <add>, %1579, %cst_470 [2] : vector<8x8x8xf32> to vector<8x8xf32>
    %1581 = tpu.transpose %1580, [1, 0] : vector<8x8xf32> -> vector<8x8xf32>
    %1582 = vector.extract_strided_slice %22 {offsets = [0, 0], sizes = [8, 1], strides = [1, 1]} : vector<8x9xf32> to vector<8x1xf32>
    %1583 = vector.broadcast %1582 : vector<8x1xf32> to vector<8x4xf32>
    %1584 = arith.mulf %1583, %1570 : vector<8x4xf32>
    %1585 = vector.extract_strided_slice %22 {offsets = [0, 3], sizes = [8, 1], strides = [1, 1]} : vector<8x9xf32> to vector<8x1xf32>
    %1586 = vector.broadcast %1585 : vector<8x1xf32> to vector<8x4xf32>
    %1587 = arith.mulf %1586, %1573 : vector<8x4xf32>
    %1588 = arith.addf %1584, %1587 : vector<8x4xf32>
    %1589 = vector.extract_strided_slice %22 {offsets = [0, 6], sizes = [8, 1], strides = [1, 1]} : vector<8x9xf32> to vector<8x1xf32>
    %1590 = vector.broadcast %1589 : vector<8x1xf32> to vector<8x4xf32>
    %1591 = arith.mulf %1590, %1576 : vector<8x4xf32>
    %1592 = arith.addf %1588, %1591 : vector<8x4xf32>
    %1593 = vector.extract_strided_slice %22 {offsets = [0, 1], sizes = [8, 1], strides = [1, 1]} : vector<8x9xf32> to vector<8x1xf32>
    %1594 = vector.broadcast %1593 : vector<8x1xf32> to vector<8x4xf32>
    %1595 = arith.mulf %1594, %1570 : vector<8x4xf32>
    %1596 = vector.extract_strided_slice %22 {offsets = [0, 4], sizes = [8, 1], strides = [1, 1]} : vector<8x9xf32> to vector<8x1xf32>
    %1597 = vector.broadcast %1596 : vector<8x1xf32> to vector<8x4xf32>
    %1598 = arith.mulf %1597, %1573 : vector<8x4xf32>
    %1599 = arith.addf %1595, %1598 : vector<8x4xf32>
    %1600 = vector.extract_strided_slice %22 {offsets = [0, 7], sizes = [8, 1], strides = [1, 1]} : vector<8x9xf32> to vector<8x1xf32>
    %1601 = vector.broadcast %1600 : vector<8x1xf32> to vector<8x4xf32>
    %1602 = arith.mulf %1601, %1576 : vector<8x4xf32>
    %1603 = arith.addf %1599, %1602 : vector<8x4xf32>
    %1604 = vector.extract_strided_slice %22 {offsets = [0, 2], sizes = [8, 1], strides = [1, 1]} : vector<8x9xf32> to vector<8x1xf32>
    %1605 = vector.broadcast %1604 : vector<8x1xf32> to vector<8x4xf32>
    %1606 = arith.mulf %1605, %1570 : vector<8x4xf32>
    %1607 = vector.extract_strided_slice %22 {offsets = [0, 5], sizes = [8, 1], strides = [1, 1]} : vector<8x9xf32> to vector<8x1xf32>
    %1608 = vector.broadcast %1607 : vector<8x1xf32> to vector<8x4xf32>
    %1609 = arith.mulf %1608, %1573 : vector<8x4xf32>
    %1610 = arith.addf %1606, %1609 : vector<8x4xf32>
    %1611 = vector.extract_strided_slice %22 {offsets = [0, 8], sizes = [8, 1], strides = [1, 1]} : vector<8x9xf32> to vector<8x1xf32>
    %1612 = vector.broadcast %1611 : vector<8x1xf32> to vector<8x4xf32>
    %1613 = arith.mulf %1612, %1576 : vector<8x4xf32>
    %1614 = arith.addf %1610, %1613 : vector<8x4xf32>
    %1615 = arith.mulf %1592, %1592 : vector<8x4xf32>
    %1616 = arith.mulf %1603, %1603 : vector<8x4xf32>
    %1617 = arith.addf %1615, %1616 : vector<8x4xf32>
    %1618 = arith.mulf %1614, %1614 : vector<8x4xf32>
    %1619 = arith.addf %1617, %1618 : vector<8x4xf32>
    %cst_471 = arith.constant 9.99999996E-13 : f32
    %1620 = vector.broadcast %cst_471 : f32 to vector<8x4xf32>
    %1621 = arith.addf %1619, %1620 : vector<8x4xf32>
    %1622 = math.rsqrt %1621 : vector<8x4xf32>
    %1623 = arith.mulf %1619, %1622 : vector<8x4xf32>
    %1624 = arith.mulf %1592, %1622 : vector<8x4xf32>
    %1625 = arith.mulf %1603, %1622 : vector<8x4xf32>
    %1626 = arith.mulf %1614, %1622 : vector<8x4xf32>
    %1627 = tpu.concatenate %1581, %1567, %1592, %1603, %1614, %1623, %1624, %1625, %1626 in 1 : vector<8x8xf32>, vector<8x16xf32>, vector<8x4xf32>, vector<8x4xf32>, vector<8x4xf32>, vector<8x4xf32>, vector<8x4xf32>, vector<8x4xf32>, vector<8x4xf32> -> vector<8x52xf32>
    %c11_472 = arith.constant 11 : index
    %c0_473 = arith.constant 0 : index
    %c0_474 = arith.constant 0 : index
    %1628 = vector.load %arg12[%c11_472, %c0_473, %c0_474] : memref<12x52x32xf32, #tpu.memory_space<vmem>>, vector<1x52x32xf32>
    %1629 = vector.shape_cast %1628 : vector<1x52x32xf32> to vector<52x32xf32>
    %cst_475 = arith.constant dense<0.000000e+00> : vector<8x32xf32>
    %1630 = tpu.matmul %1627, %1629, %cst_475 {dimension_numbers = #tpu.dot_dimension_numbers<[1], [0], [0], [1], [0, 0, 1, 1], [], []>} : vector<8x52xf32>, vector<52x32xf32>, vector<8x32xf32> -> vector<8x32xf32>
    %1631 = arith.addf %1497, %1630 : vector<8x32xf32>
    %c0_476 = arith.constant 0 : index
    %c0_477 = arith.constant 0 : index
    %1632 = vector.load %arg13[%c0_476, %c0_477] : memref<9x32xf32, #tpu.memory_space<vmem>>, vector<1x32xf32>
    %c1_478 = arith.constant 1 : index
    %c0_479 = arith.constant 0 : index
    %1633 = vector.load %arg13[%c1_478, %c0_479] : memref<9x32xf32, #tpu.memory_space<vmem>>, vector<1x32xf32>
    %c2_480 = arith.constant 2 : index
    %c0_481 = arith.constant 0 : index
    %1634 = vector.load %arg13[%c2_480, %c0_481] : memref<9x32xf32, #tpu.memory_space<vmem>>, vector<1x32xf32>
    %c3_482 = arith.constant 3 : index
    %c0_483 = arith.constant 0 : index
    %1635 = vector.load %arg13[%c3_482, %c0_483] : memref<9x32xf32, #tpu.memory_space<vmem>>, vector<1x32xf32>
    %c4_484 = arith.constant 4 : index
    %c0_485 = arith.constant 0 : index
    %1636 = vector.load %arg13[%c4_484, %c0_485] : memref<9x32xf32, #tpu.memory_space<vmem>>, vector<1x32xf32>
    %c5_486 = arith.constant 5 : index
    %c0_487 = arith.constant 0 : index
    %1637 = vector.load %arg13[%c5_486, %c0_487] : memref<9x32xf32, #tpu.memory_space<vmem>>, vector<1x32xf32>
    %c6_488 = arith.constant 6 : index
    %c0_489 = arith.constant 0 : index
    %1638 = vector.load %arg13[%c6_488, %c0_489] : memref<9x32xf32, #tpu.memory_space<vmem>>, vector<1x32xf32>
    %c7_490 = arith.constant 7 : index
    %c0_491 = arith.constant 0 : index
    %1639 = vector.load %arg13[%c7_490, %c0_491] : memref<9x32xf32, #tpu.memory_space<vmem>>, vector<1x32xf32>
    %c8_492 = arith.constant 8 : index
    %c0_493 = arith.constant 0 : index
    %1640 = vector.load %arg13[%c8_492, %c0_493] : memref<9x32xf32, #tpu.memory_space<vmem>>, vector<1x32xf32>
    %1641 = vector.broadcast %1632 : vector<1x32xf32> to vector<8x32xf32>
    %1642 = arith.addf %1631, %1641 : vector<8x32xf32>
    %cst_494 = arith.constant 0.000000e+00 : f32
    %1643 = vector.shape_cast %5 : vector<8x1xi1> to vector<8x1xi1>
    %1644 = vector.broadcast %1643 : vector<8x1xi1> to vector<8x32xi1>
    %1645 = vector.broadcast %cst_494 : f32 to vector<8x32xf32>
    %1646 = arith.select %1644, %1642, %1645 : vector<8x32xi1>, vector<8x32xf32>
    %c0_495 = arith.constant 0 : index
    %c0_496 = arith.constant 0 : index
    %c0_497 = arith.constant 0 : index
    %1647 = vector.load %arg7[%c0_495, %c0_496, %c0_497] : memref<1x8x32xf32, #tpu.memory_space<vmem>>, vector<1x8x32xf32>
    %1648 = vector.shape_cast %1647 : vector<1x8x32xf32> to vector<8x32xf32>
    %1649 = arith.addf %1648, %1646 : vector<8x32xf32>
    %cst_498 = arith.constant dense<0.000000e+00> : vector<8xf32>
    %1650 = vector.multi_reduction <add>, %1649, %cst_498 [1] : vector<8x32xf32> to vector<8xf32>
    %1651 = vector.shape_cast %1650 : vector<8xf32> to vector<8x1xf32>
    %cst_499 = arith.constant 3.200000e+01 : f32
    %1652 = vector.broadcast %cst_499 : f32 to vector<8x1xf32>
    %1653 = arith.divf %1651, %1652 : vector<8x1xf32>
    %1654 = vector.broadcast %1653 : vector<8x1xf32> to vector<8x32xf32>
    %1655 = arith.subf %1649, %1654 : vector<8x32xf32>
    %1656 = arith.mulf %1655, %1655 : vector<8x32xf32>
    %cst_500 = arith.constant dense<0.000000e+00> : vector<8xf32>
    %1657 = vector.multi_reduction <add>, %1656, %cst_500 [1] : vector<8x32xf32> to vector<8xf32>
    %1658 = vector.shape_cast %1657 : vector<8xf32> to vector<8x1xf32>
    %cst_501 = arith.constant 3.200000e+01 : f32
    %1659 = vector.broadcast %cst_501 : f32 to vector<8x1xf32>
    %1660 = arith.divf %1658, %1659 : vector<8x1xf32>
    %1661 = vector.broadcast %1653 : vector<8x1xf32> to vector<8x32xf32>
    %1662 = arith.subf %1649, %1661 : vector<8x32xf32>
    %cst_502 = arith.constant 9.99999974E-6 : f32
    %1663 = vector.broadcast %cst_502 : f32 to vector<8x1xf32>
    %1664 = arith.addf %1660, %1663 : vector<8x1xf32>
    %1665 = math.rsqrt %1664 : vector<8x1xf32>
    %1666 = vector.broadcast %1665 : vector<8x1xf32> to vector<8x32xf32>
    %1667 = arith.mulf %1662, %1666 : vector<8x32xf32>
    %1668 = vector.broadcast %1633 : vector<1x32xf32> to vector<8x32xf32>
    %1669 = arith.mulf %1667, %1668 : vector<8x32xf32>
    %1670 = vector.broadcast %1634 : vector<1x32xf32> to vector<8x32xf32>
    %1671 = arith.addf %1669, %1670 : vector<8x32xf32>
    %c0_503 = arith.constant 0 : index
    %c0_504 = arith.constant 0 : index
    %1672 = vector.load %arg14[%c0_503, %c0_504] : memref<96x32xf32, #tpu.memory_space<vmem>>, vector<32x32xf32>
    %c32 = arith.constant 32 : index
    %c0_505 = arith.constant 0 : index
    %1673 = vector.load %arg14[%c32, %c0_505] : memref<96x32xf32, #tpu.memory_space<vmem>>, vector<32x32xf32>
    %c64 = arith.constant 64 : index
    %c0_506 = arith.constant 0 : index
    %1674 = vector.load %arg14[%c64, %c0_506] : memref<96x32xf32, #tpu.memory_space<vmem>>, vector<32x32xf32>
    %cst_507 = arith.constant dense<0.000000e+00> : vector<8x32xf32>
    %1675 = tpu.matmul %1671, %1672, %cst_507 {dimension_numbers = #tpu.dot_dimension_numbers<[1], [0], [0], [1], [0, 0, 1, 1], [], []>} : vector<8x32xf32>, vector<32x32xf32>, vector<8x32xf32> -> vector<8x32xf32>
    %1676 = vector.broadcast %1635 : vector<1x32xf32> to vector<8x32xf32>
    %1677 = arith.addf %1675, %1676 : vector<8x32xf32>
    %cst_508 = arith.constant 0.000000e+00 : f32
    %1678 = vector.broadcast %cst_508 : f32 to vector<8x32xf32>
    %1679 = arith.maximumf %1677, %1678 : vector<8x32xf32>
    %cst_509 = arith.constant dense<0.000000e+00> : vector<8x32xf32>
    %1680 = tpu.matmul %1679, %1673, %cst_509 {dimension_numbers = #tpu.dot_dimension_numbers<[1], [0], [0], [1], [0, 0, 1, 1], [], []>} : vector<8x32xf32>, vector<32x32xf32>, vector<8x32xf32> -> vector<8x32xf32>
    %1681 = vector.broadcast %1636 : vector<1x32xf32> to vector<8x32xf32>
    %1682 = arith.addf %1680, %1681 : vector<8x32xf32>
    %cst_510 = arith.constant 0.000000e+00 : f32
    %1683 = vector.broadcast %cst_510 : f32 to vector<8x32xf32>
    %1684 = arith.maximumf %1682, %1683 : vector<8x32xf32>
    %cst_511 = arith.constant dense<0.000000e+00> : vector<8x32xf32>
    %1685 = tpu.matmul %1684, %1674, %cst_511 {dimension_numbers = #tpu.dot_dimension_numbers<[1], [0], [0], [1], [0, 0, 1, 1], [], []>} : vector<8x32xf32>, vector<32x32xf32>, vector<8x32xf32> -> vector<8x32xf32>
    %1686 = vector.broadcast %1637 : vector<1x32xf32> to vector<8x32xf32>
    %1687 = arith.addf %1685, %1686 : vector<8x32xf32>
    %1688 = arith.addf %1671, %1687 : vector<8x32xf32>
    %cst_512 = arith.constant dense<0.000000e+00> : vector<8xf32>
    %1689 = vector.multi_reduction <add>, %1688, %cst_512 [1] : vector<8x32xf32> to vector<8xf32>
    %1690 = vector.shape_cast %1689 : vector<8xf32> to vector<8x1xf32>
    %cst_513 = arith.constant 3.200000e+01 : f32
    %1691 = vector.broadcast %cst_513 : f32 to vector<8x1xf32>
    %1692 = arith.divf %1690, %1691 : vector<8x1xf32>
    %1693 = vector.broadcast %1692 : vector<8x1xf32> to vector<8x32xf32>
    %1694 = arith.subf %1688, %1693 : vector<8x32xf32>
    %1695 = arith.mulf %1694, %1694 : vector<8x32xf32>
    %cst_514 = arith.constant dense<0.000000e+00> : vector<8xf32>
    %1696 = vector.multi_reduction <add>, %1695, %cst_514 [1] : vector<8x32xf32> to vector<8xf32>
    %1697 = vector.shape_cast %1696 : vector<8xf32> to vector<8x1xf32>
    %cst_515 = arith.constant 3.200000e+01 : f32
    %1698 = vector.broadcast %cst_515 : f32 to vector<8x1xf32>
    %1699 = arith.divf %1697, %1698 : vector<8x1xf32>
    %1700 = vector.broadcast %1692 : vector<8x1xf32> to vector<8x32xf32>
    %1701 = arith.subf %1688, %1700 : vector<8x32xf32>
    %cst_516 = arith.constant 9.99999974E-6 : f32
    %1702 = vector.broadcast %cst_516 : f32 to vector<8x1xf32>
    %1703 = arith.addf %1699, %1702 : vector<8x1xf32>
    %1704 = math.rsqrt %1703 : vector<8x1xf32>
    %1705 = vector.broadcast %1704 : vector<8x1xf32> to vector<8x32xf32>
    %1706 = arith.mulf %1701, %1705 : vector<8x32xf32>
    %1707 = vector.broadcast %1638 : vector<1x32xf32> to vector<8x32xf32>
    %1708 = arith.mulf %1706, %1707 : vector<8x32xf32>
    %1709 = vector.broadcast %1639 : vector<1x32xf32> to vector<8x32xf32>
    %1710 = arith.addf %1708, %1709 : vector<8x32xf32>
    %c0_517 = arith.constant 0 : index
    %c0_518 = arith.constant 0 : index
    %1711 = vector.load %arg15[%c0_517, %c0_518] : memref<32x32xf32, #tpu.memory_space<vmem>>, vector<32x32xf32>
    %cst_519 = arith.constant dense<0.000000e+00> : vector<8x32xf32>
    %1712 = tpu.matmul %1710, %1711, %cst_519 {dimension_numbers = #tpu.dot_dimension_numbers<[1], [0], [0], [1], [0, 0, 1, 1], [], []>} : vector<8x32xf32>, vector<32x32xf32>, vector<8x32xf32> -> vector<8x32xf32>
    %1713 = vector.broadcast %1640 : vector<1x32xf32> to vector<8x32xf32>
    %1714 = arith.addf %1712, %1713 : vector<8x32xf32>
    %1715 = tpu.concatenate %1710, %1714 in 1 : vector<8x32xf32>, vector<8x32xf32> -> vector<8x64xf32>
    %c0_520 = arith.constant 0 : index
    %c0_521 = arith.constant 0 : index
    %c0_522 = arith.constant 0 : index
    %1716 = vector.load %arg16[%c0_520, %c0_521, %c0_522] : memref<1x8x64xf32, #tpu.memory_space<vmem>>, vector<1x8x64xf32>
    %1717 = vector.shape_cast %1716 : vector<1x8x64xf32> to vector<8x64xf32>
    %1718 = vector.shape_cast %1715 : vector<8x64xf32> to vector<1x8x64xf32>
    tpu.vector_store %arg16[%c0_520, %c0_521, %c0_522], %1718 {strides = array<i32>} : memref<1x8x64xf32, #tpu.memory_space<vmem>>, vector<1x8x64xf32>,
    return
  }
  func.func @transform_0(%arg0: i32, %arg1: i32) -> (i32, i32, i32, i32) {
    %c0_i32 = arith.constant 0 : i32
    %c0_i32_0 = arith.constant 0 : i32
    %c0_i32_1 = arith.constant 0 : i32
    return %arg0, %c0_i32, %arg1, %c0_i32_0 : i32, i32, i32, i32
  }
  func.func @transform_1(%arg0: i32, %arg1: i32) -> (i32, i32, i32, i32) {
    %c0_i32 = arith.constant 0 : i32
    %c0_i32_0 = arith.constant 0 : i32
    %c0_i32_1 = arith.constant 0 : i32
    %c0_i32_2 = arith.constant 0 : i32
    return %arg0, %c0_i32, %c0_i32_0, %c0_i32_1 : i32, i32, i32, i32
  }
  func.func @transform_2(%arg0: i32, %arg1: i32) -> (i32, i32, i32, i32) {
    %c0_i32 = arith.constant 0 : i32
    %c0_i32_0 = arith.constant 0 : i32
    %c0_i32_1 = arith.constant 0 : i32
    %c0_i32_2 = arith.constant 0 : i32
    return %arg0, %c0_i32, %c0_i32_0, %c0_i32_1 : i32, i32, i32, i32
  }
  func.func @transform_3(%arg0: i32, %arg1: i32) -> (i32, i32, i32, i32) {
    %c0_i32 = arith.constant 0 : i32
    %c0_i32_0 = arith.constant 0 : i32
    %c0_i32_1 = arith.constant 0 : i32
    return %arg0, %c0_i32, %arg1, %c0_i32_0 : i32, i32, i32, i32
  }
  func.func @transform_4(%arg0: i32, %arg1: i32) -> (i32, i32) {
    %c0_i32 = arith.constant 0 : i32
    %c0_i32_0 = arith.constant 0 : i32
    %c0_i32_1 = arith.constant 0 : i32
    return %c0_i32, %c0_i32_0 : i32, i32
  }
  func.func @transform_5(%arg0: i32, %arg1: i32) -> (i32, i32, i32) {
    %c0_i32 = arith.constant 0 : i32
    %c0_i32_0 = arith.constant 0 : i32
    return %arg0, %arg1, %c0_i32 : i32, i32, i32
  }
  func.func @transform_6(%arg0: i32, %arg1: i32) -> (i32, i32, i32) {
    %c0_i32 = arith.constant 0 : i32
    %c0_i32_0 = arith.constant 0 : i32
    return %arg0, %arg1, %c0_i32 : i32, i32, i32
  }
  func.func @transform_7(%arg0: i32, %arg1: i32) -> (i32, i32, i32) {
    %c0_i32 = arith.constant 0 : i32
    %c0_i32_0 = arith.constant 0 : i32
    return %arg0, %arg1, %c0_i32 : i32, i32, i32
  }
  func.func @transform_8(%arg0: i32, %arg1: i32) -> (i32, i32, i32) {
    %c0_i32 = arith.constant 0 : i32
    %c0_i32_0 = arith.constant 0 : i32
    return %arg0, %arg1, %c0_i32 : i32, i32, i32
  }
  func.func @transform_9(%arg0: i32, %arg1: i32) -> (i32, i32, i32) {
    %c0_i32 = arith.constant 0 : i32
    %c0_i32_0 = arith.constant 0 : i32
    %c0_i32_1 = arith.constant 0 : i32
    return %arg0, %c0_i32, %c0_i32_0 : i32, i32, i32
  }
  func.func @transform_10(%arg0: i32, %arg1: i32) -> (i32, i32, i32) {
    %c0_i32 = arith.constant 0 : i32
    %c0_i32_0 = arith.constant 0 : i32
    %c0_i32_1 = arith.constant 0 : i32
    %c0_i32_2 = arith.constant 0 : i32
    return %c0_i32, %c0_i32_0, %c0_i32_1 : i32, i32, i32
  }
  func.func @transform_11(%arg0: i32, %arg1: i32) -> (i32, i32) {
    %c0_i32 = arith.constant 0 : i32
    %c0_i32_0 = arith.constant 0 : i32
    %c0_i32_1 = arith.constant 0 : i32
    return %c0_i32, %c0_i32_0 : i32, i32
  }
  func.func @transform_12(%arg0: i32, %arg1: i32) -> (i32, i32) {
    %c0_i32 = arith.constant 0 : i32
    %c0_i32_0 = arith.constant 0 : i32
    %c0_i32_1 = arith.constant 0 : i32
    return %c0_i32, %c0_i32_0 : i32, i32
  }
  func.func @transform_13(%arg0: i32, %arg1: i32) -> (i32, i32) {
    %c0_i32 = arith.constant 0 : i32
    %c0_i32_0 = arith.constant 0 : i32
    %c0_i32_1 = arith.constant 0 : i32
    return %c0_i32, %c0_i32_0 : i32, i32
  }
  func.func @transform_14(%arg0: i32, %arg1: i32) -> (i32, i32, i32) {
    %c0_i32 = arith.constant 0 : i32
    %c0_i32_0 = arith.constant 0 : i32
    return %arg0, %arg1, %c0_i32 : i32, i32, i32
  }
}

</mosaic_0001>

<llo_original>
// kernel: tpu_custom_call.1
$region0: #{tpu_custom_call.1}
  #allocation0 [shape = 'u32[]', space=smem, size = 0x4, offset = 0x4, fixed_abs, tag = 'smem constant byte address 0x4 - core index']
  #allocation1 [shape = 'u32[144,128]{1,0:T(1,128)}', space=vmem, size = 0x12000, scoped, tag = 'internal scratch']
  %s0 = inlined_call_operand.vmem [shape: f32[2,12,8,30], index: 0, kind: input, shape index: {}]
  %s1 = inlined_call_operand.vmem [shape: f32[2,12,30,8], index: 1, kind: input, shape index: {}]
  %s2 = inlined_call_operand.vmem [shape: f32[2,12,8,28], index: 2, kind: input, shape index: {}]
  %s3 = inlined_call_operand.vmem [shape: f32[2,8,8,8], index: 3, kind: input, shape index: {}]
  %s4 = inlined_call_operand.vmem [shape: f32[12,8], index: 4, kind: input, shape index: {}]
  %s5 = inlined_call_operand.vmem [shape: f32[2,8,32], index: 5, kind: input, shape index: {}]
  %s6 = inlined_call_operand.vmem [shape: f32[2,8,9], index: 6, kind: input, shape index: {}]
  %s7 = inlined_call_operand.vmem [shape: f32[2,8,3], index: 7, kind: input, shape index: {}]
  %s8 = inlined_call_operand.vmem [shape: f32[2,8,1], index: 8, kind: input, shape index: {}]
  %s9 = inlined_call_operand.vmem [shape: f32[2,1,8], index: 9, kind: input, shape index: {}]
  %s10 = inlined_call_operand.vmem [shape: f32[12,52,32], index: 10, kind: input, shape index: {}]
  %s11 = inlined_call_operand.vmem [shape: f32[9,32], index: 11, kind: input, shape index: {}]
  %s12 = inlined_call_operand.vmem [shape: f32[96,32], index: 12, kind: input, shape index: {}]
  %s13 = inlined_call_operand.vmem [shape: f32[32,32], index: 13, kind: input, shape index: {}]
  %s14 = inlined_call_operand.hbm [shape: f32[2,8,64], index: 14, kind: output, shape index: {}]
  %s15 = sld [smem:[#allocation0]]
  $region93: #{tpu_custom_call.1} parent=0
    _
  %s17 = ssub.s32 1, %s15
  %s18 = scalar_select 0, %s17, %s15
  $region1: #{tpu_custom_call.1} parent=0
    #allocation2 [shape = 'u8[8192]{0}', space=smem, size = 0x2000, scoped, tag = 'input window, operand 4, single buffered']
    #allocation3 [shape = 's32[2]{0}', space=sflag, size = 0x8, scoped, tag = 'scoped memory for tpu_custom_call.1']
    #allocation4 [shape = 's32[2]{0}', space=sflag, size = 0x8, scoped, tag = 'scoped memory for tpu_custom_call.1']
    #allocation5 [shape = 'u8[8192]{0}', space=vmem, size = 0x2000, scoped, tag = 'output window, operand 0']
    %19 = vsyncpa [#allocation4], 0
    %20 = vsyncpa [#allocation3], 0
    %s21 = scalar_lea.sflag [#allocation3], 1
    %22 = vsyncpa %s21, 0
    loop: start=0, step=1, limit=4
    $region2: #{tpu_custom_call.1} parent=1 // loop_pre_header
      _
    $region3: #{tpu_custom_call.1} parent=1 // loop_header
      %s24 = sphi 0, %s28
      %p25 = scmp.ge.s32.totalorder %s24, 4
      %s31 = sphi 0, %s43
      %s32 = sphi 0, %s39
      %s33 = sphi 0, %s31
      %s34 = sphi 0, %s32
      %s35 = sphi 0, %s33
      %s36 = sphi 0, %s34
      %s48 = sphi 0, %s50
      %s51 = sphi 0, %s48
      %s52 = sphi 0, %s51
      %s68 = sphi 0, %s52
      %s74 = sphi 0, %s76
      %s77 = sphi 0, %s74
      %s78 = sphi 0, %s77
      %s94 = sphi 0, %s78
      %s100 = sphi 0, %s102
      %s103 = sphi 0, %s100
      %s104 = sphi 0, %s103
      %s120 = sphi 0, %s104
      %s128 = sphi 0, %s130
      %s131 = sphi 0, %s128
      %s132 = sphi 0, %s131
      %s148 = sphi 0, %s132
      %s152 = sphi 0, %s152
      %s154 = sphi 0, %s152
      %s155 = sphi 0, %s154
      %s169 = sphi 0, %s155
      %s177 = sphi 0, %s179
      %s180 = sphi 0, %s177
      %s181 = sphi 0, %s180
      %s197 = sphi 0, %s181
      %s205 = sphi 0, %s207
      %s208 = sphi 0, %s205
      %s209 = sphi 0, %s208
      %s225 = sphi 0, %s209
      %s233 = sphi 0, %s235
      %s236 = sphi 0, %s233
      %s237 = sphi 0, %s236
      %s253 = sphi 0, %s237
      %s261 = sphi 0, %s263
      %s264 = sphi 0, %s261
      %s265 = sphi 0, %s264
      %s281 = sphi 0, %s265
      %s287 = sphi 0, %s289
      %s290 = sphi 0, %s287
      %s291 = sphi 0, %s290
      %s307 = sphi 0, %s291
      %s311 = sphi 0, %s311
      %s313 = sphi 0, %s311
      %s314 = sphi 0, %s313
      %s328 = sphi 0, %s314
      %s332 = sphi 0, %s332
      %s334 = sphi 0, %s332
      %s335 = sphi 0, %s334
      %s349 = sphi 0, %s335
      %s353 = sphi 0, %s353
      %s355 = sphi 0, %s353
      %s356 = sphi 0, %s355
      %s370 = sphi 0, %s356
      %s374 = sphi 0, %s374
      %s376 = sphi 0, %s374
      %s377 = sphi 0, %s376
      %s391 = sphi 0, %s377
      %s399 = sphi 0, %s401
      %s402 = sphi 0, %s399
      %s403 = sphi 0, %s402
      %s419 = sphi 0, %s403
    $region4: #{tpu_custom_call.1} parent=1 // loop_header_branch
      %27 = sbr.rel (%p25) target = $region8
    $region5: #{tpu_custom_call.1} parent=1 // loop_body
      %s29 = ssub.s32 %s24, 1
      %s30 = ssub.s32 %s24, 2
      %s37 = sadd.s32 1, %s32
      %p38 = scmp.ge.s32.totalorder %s37, 1
      %s39 = scalar_select %p38, 0, %s37
      %s40 = sadd.s32 1, %s31
      %s41 = scalar_select %p38, %s40, %s31
      %p42 = scmp.ge.s32.totalorder %s41, 2
      %s43 = scalar_select %p42, 0, %s41
      %s44 = ssub.s32 %s31, %s43
      %s45 = ssub.s32 %s32, %s39
      %s46 = sor.u32 %s44, %s45
      %p47 = scmp.eq.s32.totalorder %s46, 0
      %s49 = sadd.s32 %s48, 1
      %s50 = scalar_select %p47, %s48, %s49
      %p53 = pneg %p47
      %p54 = scmp.eq.s32.totalorder %s24, 1
      %p55 = por %p53, %p54
      %p56 = scmp.ne.s32.totalorder %s48, %s51
      %p57 = scmp.eq.s32.totalorder %s24, 0
      %p58 = por %p56, %p57
      %p59 = scmp.ne.s32.totalorder %s48, %s51
      %p60 = scmp.eq.s32.totalorder %s29, 1
      %p61 = por %p59, %p60
      %p62 = scmp.ne.s32.totalorder %s51, %s52
      %p63 = scmp.eq.s32.totalorder %s29, 0
      %p64 = por %p62, %p63
      %p65 = scmp.ne.s32.totalorder %s51, %s52
      %p66 = scmp.eq.s32.totalorder %s30, 1
      %p67 = por %p65, %p66
      %p69 = scmp.ne.s32.totalorder %s52, %s68
      %p70 = scmp.eq.s32.totalorder %s30, 0
      %p71 = por %p69, %p70
      %s72 = ssub.s32 %s31, %s43
      %p73 = scmp.eq.s32.totalorder %s72, 0
      %s75 = sadd.s32 %s74, 1
      %s76 = scalar_select %p73, %s74, %s75
      %p79 = pneg %p73
      %p80 = scmp.eq.s32.totalorder %s24, 1
      %p81 = por %p79, %p80
      %p82 = scmp.ne.s32.totalorder %s74, %s77
      %p83 = scmp.eq.s32.totalorder %s24, 0
      %p84 = por %p82, %p83
      %p85 = scmp.ne.s32.totalorder %s74, %s77
      %p86 = scmp.eq.s32.totalorder %s29, 1
      %p87 = por %p85, %p86
      %p88 = scmp.ne.s32.totalorder %s77, %s78
      %p89 = scmp.eq.s32.totalorder %s29, 0
      %p90 = por %p88, %p89
      %p91 = scmp.ne.s32.totalorder %s77, %s78
      %p92 = scmp.eq.s32.totalorder %s30, 1
      %p93 = por %p91, %p92
      %p95 = scmp.ne.s32.totalorder %s78, %s94
      %p96 = scmp.eq.s32.totalorder %s30, 0
      %p97 = por %p95, %p96
      %s98 = ssub.s32 %s31, %s43
      %p99 = scmp.eq.s32.totalorder %s98, 0
      %s101 = sadd.s32 %s100, 1
      %s102 = scalar_select %p99, %s100, %s101
      %p105 = pneg %p99
      %p106 = scmp.eq.s32.totalorder %s24, 1
      %p107 = por %p105, %p106
      %p108 = scmp.ne.s32.totalorder %s100, %s103
      %p109 = scmp.eq.s32.totalorder %s24, 0
      %p110 = por %p108, %p109
      %p111 = scmp.ne.s32.totalorder %s100, %s103
      %p112 = scmp.eq.s32.totalorder %s29, 1
      %p113 = por %p111, %p112
      %p114 = scmp.ne.s32.totalorder %s103, %s104
      %p115 = scmp.eq.s32.totalorder %s29, 0
      %p116 = por %p114, %p115
      %p117 = scmp.ne.s32.totalorder %s103, %s104
      %p118 = scmp.eq.s32.totalorder %s30, 1
      %p119 = por %p117, %p118
      %p121 = scmp.ne.s32.totalorder %s104, %s120
      %p122 = scmp.eq.s32.totalorder %s30, 0
      %p123 = por %p121, %p122
      %s124 = ssub.s32 %s31, %s43
      %s125 = ssub.s32 %s32, %s39
      %s126 = sor.u32 %s124, %s125
      %p127 = scmp.eq.s32.totalorder %s126, 0
      %s129 = sadd.s32 %s128, 1
      %s130 = scalar_select %p127, %s128, %s129
      %p133 = pneg %p127
      %p134 = scmp.eq.s32.totalorder %s24, 1
      %p135 = por %p133, %p134
      %p136 = scmp.ne.s32.totalorder %s128, %s131
      %p137 = scmp.eq.s32.totalorder %s24, 0
      %p138 = por %p136, %p137
      %p139 = scmp.ne.s32.totalorder %s128, %s131
      %p140 = scmp.eq.s32.totalorder %s29, 1
      %p141 = por %p139, %p140
      %p142 = scmp.ne.s32.totalorder %s131, %s132
      %p143 = scmp.eq.s32.totalorder %s29, 0
      %p144 = por %p142, %p143
      %p145 = scmp.ne.s32.totalorder %s131, %s132
      %p146 = scmp.eq.s32.totalorder %s30, 1
      %p147 = por %p145, %p146
      %p149 = scmp.ne.s32.totalorder %s132, %s148
      %p150 = scmp.eq.s32.totalorder %s30, 0
      %p151 = por %p149, %p150
      %s153 = sadd.s32 %s152, 1
      %p156 = scmp.eq.s32.totalorder %s24, 1
      %p157 = scmp.ne.s32.totalorder %s152, %s154
      %p158 = scmp.eq.s32.totalorder %s24, 0
      %p159 = por %p157, %p158
      %p160 = scmp.ne.s32.totalorder %s152, %s154
      %p161 = scmp.eq.s32.totalorder %s29, 1
      %p162 = por %p160, %p161
      %p163 = scmp.ne.s32.totalorder %s154, %s155
      %p164 = scmp.eq.s32.totalorder %s29, 0
      %p165 = por %p163, %p164
      %p166 = scmp.ne.s32.totalorder %s154, %s155
      %p167 = scmp.eq.s32.totalorder %s30, 1
      %p168 = por %p166, %p167
      %p170 = scmp.ne.s32.totalorder %s155, %s169
      %p171 = scmp.eq.s32.totalorder %s30, 0
      %p172 = por %p170, %p171
      %s173 = ssub.s32 %s31, %s43
      %s174 = ssub.s32 %s32, %s39
      %s175 = sor.u32 %s173, %s174
      %p176 = scmp.eq.s32.totalorder %s175, 0
      %s178 = sadd.s32 %s177, 1
      %s179 = scalar_select %p176, %s177, %s178
      %p182 = pneg %p176
      %p183 = scmp.eq.s32.totalorder %s24, 1
      %p184 = por %p182, %p183
      %p185 = scmp.ne.s32.totalorder %s177, %s180
      %p186 = scmp.eq.s32.totalorder %s24, 0
      %p187 = por %p185, %p186
      %p188 = scmp.ne.s32.totalorder %s177, %s180
      %p189 = scmp.eq.s32.totalorder %s29, 1
      %p190 = por %p188, %p189
      %p191 = scmp.ne.s32.totalorder %s180, %s181
      %p192 = scmp.eq.s32.totalorder %s29, 0
      %p193 = por %p191, %p192
      %p194 = scmp.ne.s32.totalorder %s180, %s181
      %p195 = scmp.eq.s32.totalorder %s30, 1
      %p196 = por %p194, %p195
      %p198 = scmp.ne.s32.totalorder %s181, %s197
      %p199 = scmp.eq.s32.totalorder %s30, 0
      %p200 = por %p198, %p199
      %s201 = ssub.s32 %s31, %s43
      %s202 = ssub.s32 %s32, %s39
      %s203 = sor.u32 %s201, %s202
      %p204 = scmp.eq.s32.totalorder %s203, 0
      %s206 = sadd.s32 %s205, 1
      %s207 = scalar_select %p204, %s205, %s206
      %p210 = pneg %p204
      %p211 = scmp.eq.s32.totalorder %s24, 1
      %p212 = por %p210, %p211
      %p213 = scmp.ne.s32.totalorder %s205, %s208
      %p214 = scmp.eq.s32.totalorder %s24, 0
      %p215 = por %p213, %p214
      %p216 = scmp.ne.s32.totalorder %s205, %s208
      %p217 = scmp.eq.s32.totalorder %s29, 1
      %p218 = por %p216, %p217
      %p219 = scmp.ne.s32.totalorder %s208, %s209
      %p220 = scmp.eq.s32.totalorder %s29, 0
      %p221 = por %p219, %p220
      %p222 = scmp.ne.s32.totalorder %s208, %s209
      %p223 = scmp.eq.s32.totalorder %s30, 1
      %p224 = por %p222, %p223
      %p226 = scmp.ne.s32.totalorder %s209, %s225
      %p227 = scmp.eq.s32.totalorder %s30, 0
      %p228 = por %p226, %p227
      %s229 = ssub.s32 %s31, %s43
      %s230 = ssub.s32 %s32, %s39
      %s231 = sor.u32 %s229, %s230
      %p232 = scmp.eq.s32.totalorder %s231, 0
      %s234 = sadd.s32 %s233, 1
      %s235 = scalar_select %p232, %s233, %s234
      %p238 = pneg %p232
      %p239 = scmp.eq.s32.totalorder %s24, 1
      %p240 = por %p238, %p239
      %p241 = scmp.ne.s32.totalorder %s233, %s236
      %p242 = scmp.eq.s32.totalorder %s24, 0
      %p243 = por %p241, %p242
      %p244 = scmp.ne.s32.totalorder %s233, %s236
      %p245 = scmp.eq.s32.totalorder %s29, 1
      %p246 = por %p244, %p245
      %p247 = scmp.ne.s32.totalorder %s236, %s237
      %p248 = scmp.eq.s32.totalorder %s29, 0
      %p249 = por %p247, %p248
      %p250 = scmp.ne.s32.totalorder %s236, %s237
      %p251 = scmp.eq.s32.totalorder %s30, 1
      %p252 = por %p250, %p251
      %p254 = scmp.ne.s32.totalorder %s237, %s253
      %p255 = scmp.eq.s32.totalorder %s30, 0
      %p256 = por %p254, %p255
      %s257 = ssub.s32 %s31, %s43
      %s258 = ssub.s32 %s32, %s39
      %s259 = sor.u32 %s257, %s258
      %p260 = scmp.eq.s32.totalorder %s259, 0
      %s262 = sadd.s32 %s261, 1
      %s263 = scalar_select %p260, %s261, %s262
      %p266 = pneg %p260
      %p267 = scmp.eq.s32.totalorder %s24, 1
      %p268 = por %p266, %p267
      %p269 = scmp.ne.s32.totalorder %s261, %s264
      %p270 = scmp.eq.s32.totalorder %s24, 0
      %p271 = por %p269, %p270
      %p272 = scmp.ne.s32.totalorder %s261, %s264
      %p273 = scmp.eq.s32.totalorder %s29, 1
      %p274 = por %p272, %p273
      %p275 = scmp.ne.s32.totalorder %s264, %s265
      %p276 = scmp.eq.s32.totalorder %s29, 0
      %p277 = por %p275, %p276
      %p278 = scmp.ne.s32.totalorder %s264, %s265
      %p279 = scmp.eq.s32.totalorder %s30, 1
      %p280 = por %p278, %p279
      %p282 = scmp.ne.s32.totalorder %s265, %s281
      %p283 = scmp.eq.s32.totalorder %s30, 0
      %p284 = por %p282, %p283
      %s285 = ssub.s32 %s31, %s43
      %p286 = scmp.eq.s32.totalorder %s285, 0
      %s288 = sadd.s32 %s287, 1
      %s289 = scalar_select %p286, %s287, %s288
      %p292 = pneg %p286
      %p293 = scmp.eq.s32.totalorder %s24, 1
      %p294 = por %p292, %p293
      %p295 = scmp.ne.s32.totalorder %s287, %s290
      %p296 = scmp.eq.s32.totalorder %s24, 0
      %p297 = por %p295, %p296
      %p298 = scmp.ne.s32.totalorder %s287, %s290
      %p299 = scmp.eq.s32.totalorder %s29, 1
      %p300 = por %p298, %p299
      %p301 = scmp.ne.s32.totalorder %s290, %s291
      %p302 = scmp.eq.s32.totalorder %s29, 0
      %p303 = por %p301, %p302
      %p304 = scmp.ne.s32.totalorder %s290, %s291
      %p305 = scmp.eq.s32.totalorder %s30, 1
      %p306 = por %p304, %p305
      %p308 = scmp.ne.s32.totalorder %s291, %s307
      %p309 = scmp.eq.s32.totalorder %s30, 0
      %p310 = por %p308, %p309
      %s312 = sadd.s32 %s311, 1
      %p315 = scmp.eq.s32.totalorder %s24, 1
      %p316 = scmp.ne.s32.totalorder %s311, %s313
      %p317 = scmp.eq.s32.totalorder %s24, 0
      %p318 = por %p316, %p317
      %p319 = scmp.ne.s32.totalorder %s311, %s313
      %p320 = scmp.eq.s32.totalorder %s29, 1
      %p321 = por %p319, %p320
      %p322 = scmp.ne.s32.totalorder %s313, %s314
      %p323 = scmp.eq.s32.totalorder %s29, 0
      %p324 = por %p322, %p323
      %p325 = scmp.ne.s32.totalorder %s313, %s314
      %p326 = scmp.eq.s32.totalorder %s30, 1
      %p327 = por %p325, %p326
      %p329 = scmp.ne.s32.totalorder %s314, %s328
      %p330 = scmp.eq.s32.totalorder %s30, 0
      %p331 = por %p329, %p330
      %s333 = sadd.s32 %s332, 1
      %p336 = scmp.eq.s32.totalorder %s24, 1
      %p337 = scmp.ne.s32.totalorder %s332, %s334
      %p338 = scmp.eq.s32.totalorder %s24, 0
      %p339 = por %p337, %p338
      %p340 = scmp.ne.s32.totalorder %s332, %s334
      %p341 = scmp.eq.s32.totalorder %s29, 1
      %p342 = por %p340, %p341
      %p343 = scmp.ne.s32.totalorder %s334, %s335
      %p344 = scmp.eq.s32.totalorder %s29, 0
      %p345 = por %p343, %p344
      %p346 = scmp.ne.s32.totalorder %s334, %s335
      %p347 = scmp.eq.s32.totalorder %s30, 1
      %p348 = por %p346, %p347
      %p350 = scmp.ne.s32.totalorder %s335, %s349
      %p351 = scmp.eq.s32.totalorder %s30, 0
      %p352 = por %p350, %p351
      %s354 = sadd.s32 %s353, 1
      %p357 = scmp.eq.s32.totalorder %s24, 1
      %p358 = scmp.ne.s32.totalorder %s353, %s355
      %p359 = scmp.eq.s32.totalorder %s24, 0
      %p360 = por %p358, %p359
      %p361 = scmp.ne.s32.totalorder %s353, %s355
      %p362 = scmp.eq.s32.totalorder %s29, 1
      %p363 = por %p361, %p362
      %p364 = scmp.ne.s32.totalorder %s355, %s356
      %p365 = scmp.eq.s32.totalorder %s29, 0
      %p366 = por %p364, %p365
      %p367 = scmp.ne.s32.totalorder %s355, %s356
      %p368 = scmp.eq.s32.totalorder %s30, 1
      %p369 = por %p367, %p368
      %p371 = scmp.ne.s32.totalorder %s356, %s370
      %p372 = scmp.eq.s32.totalorder %s30, 0
      %p373 = por %p371, %p372
      %s375 = sadd.s32 %s374, 1
      %p378 = scmp.eq.s32.totalorder %s24, 1
      %p379 = scmp.ne.s32.totalorder %s374, %s376
      %p380 = scmp.eq.s32.totalorder %s24, 0
      %p381 = por %p379, %p380
      %p382 = scmp.ne.s32.totalorder %s374, %s376
      %p383 = scmp.eq.s32.totalorder %s29, 1
      %p384 = por %p382, %p383
      %p385 = scmp.ne.s32.totalorder %s376, %s377
      %p386 = scmp.eq.s32.totalorder %s29, 0
      %p387 = por %p385, %p386
      %p388 = scmp.ne.s32.totalorder %s376, %s377
      %p389 = scmp.eq.s32.totalorder %s30, 1
      %p390 = por %p388, %p389
      %p392 = scmp.ne.s32.totalorder %s377, %s391
      %p393 = scmp.eq.s32.totalorder %s30, 0
      %p394 = por %p392, %p393
      %s395 = ssub.s32 %s31, %s43
      %s396 = ssub.s32 %s32, %s39
      %s397 = sor.u32 %s395, %s396
      %p398 = scmp.eq.s32.totalorder %s397, 0
      %s400 = sadd.s32 %s399, 1
      %s401 = scalar_select %p398, %s399, %s400
      %p404 = pneg %p398
      %p405 = scmp.eq.s32.totalorder %s24, 1
      %p406 = por %p404, %p405
      %p407 = scmp.ne.s32.totalorder %s399, %s402
      %p408 = scmp.eq.s32.totalorder %s24, 0
      %p409 = por %p407, %p408
      %p410 = scmp.ne.s32.totalorder %s399, %s402
      %p411 = scmp.eq.s32.totalorder %s29, 1
      %p412 = por %p410, %p411
      %p413 = scmp.ne.s32.totalorder %s402, %s403
      %p414 = scmp.eq.s32.totalorder %s29, 0
      %p415 = por %p413, %p414
      %p416 = scmp.ne.s32.totalorder %s402, %s403
      %p417 = scmp.eq.s32.totalorder %s30, 1
      %p418 = por %p416, %p417
      %p420 = scmp.ne.s32.totalorder %s403, %s419
      %p421 = scmp.eq.s32.totalorder %s30, 0
      %p422 = por %p420, %p421
      %p423 = scmp.le.s32.totalorder 1, %s24
      %p424 = scmp.lt.s32.totalorder %s24, 3
      %p425 = pnand %p423, %p424
      %p426 = pneg %p425
      // Predicated region
      $region9: #{tpu_custom_call.1} parent=5 // pred_check
        _
      $region10: #{tpu_custom_call.1} parent=5 // pred_check_branch
        %428 = sbr.rel (%p425) target = $region12
      $region11: #{tpu_custom_call.1} parent=5 // pred_region
        %s429 = ssub.s32 %s24, 1
        // Predicated region
        $region13: #{tpu_custom_call.1} parent=11 // pred_check
          %p430 = pneg %p165
        $region14: #{tpu_custom_call.1} parent=11 // pred_check_branch
          %432 = sbr.rel (%p430) target = $region16
        $region15: #{tpu_custom_call.1} parent=11 // pred_region
          %s434 = ssub.s32 256, 256
          %435 = vsyncadd [#allocation4], %s434
          %s436 = sshll.u32 %s4, 4
          %s437 = int_to_ptr.vmem [resolvable:$true] %s436
          %442 = dma.vmem_to_smem %s437, 256, [#allocation2], [#allocation4], 128, 128, 8
        $region16: #{tpu_custom_call.1} parent=11 // pred_fallthru
          _
        // Predicated region
        $region17: #{tpu_custom_call.1} parent=11 // pred_check
          %p443 = pneg %p324
        $region18: #{tpu_custom_call.1} parent=11 // pred_check_branch
          %445 = sbr.rel (%p443) target = $region20
        $region19: #{tpu_custom_call.1} parent=11 // pred_region
          _
        $region20: #{tpu_custom_call.1} parent=11 // pred_fallthru
          _
        // Predicated region
        $region21: #{tpu_custom_call.1} parent=11 // pred_check
          %p446 = pneg %p345
        $region22: #{tpu_custom_call.1} parent=11 // pred_check_branch
          %448 = sbr.rel (%p446) target = $region24
        $region23: #{tpu_custom_call.1} parent=11 // pred_region
          _
        $region24: #{tpu_custom_call.1} parent=11 // pred_fallthru
          _
        // Predicated region
        $region25: #{tpu_custom_call.1} parent=11 // pred_check
          %p449 = pneg %p366
        $region26: #{tpu_custom_call.1} parent=11 // pred_check_branch
          %451 = sbr.rel (%p449) target = $region28
        $region27: #{tpu_custom_call.1} parent=11 // pred_region
          _
        $region28: #{tpu_custom_call.1} parent=11 // pred_fallthru
          _
        // Predicated region
        $region29: #{tpu_custom_call.1} parent=11 // pred_check
          %p452 = pneg %p387
        $region30: #{tpu_custom_call.1} parent=11 // pred_check_branch
          %454 = sbr.rel (%p452) target = $region32
        $region31: #{tpu_custom_call.1} parent=11 // pred_region
          _
        $region32: #{tpu_custom_call.1} parent=11 // pred_fallthru
          _
      $region12: #{tpu_custom_call.1} parent=5 // pred_fallthru
        _
      %p455 = scmp.lt.s32.totalorder %s24, 2
      // Predicated region
      $region33: #{tpu_custom_call.1} parent=5 // pred_check
        %p456 = pneg %p455
      $region34: #{tpu_custom_call.1} parent=5 // pred_check_branch
        %458 = sbr.rel (%p456) target = $region36
      $region35: #{tpu_custom_call.1} parent=5 // pred_region
        // Predicated region
        $region37: #{tpu_custom_call.1} parent=35 // pred_check
          %p459 = pneg %p58
        $region38: #{tpu_custom_call.1} parent=35 // pred_check_branch
          %461 = sbr.rel (%p459) target = $region40
        $region39: #{tpu_custom_call.1} parent=35 // pred_region
          %p462 = scmp.lt.s32.totalorder %s31, 1
          %s463 = scalar_select %p462, %s31, 1
          %p464 = scmp.lt.s32.totalorder %s32, 0
          %s465 = scalar_select %p464, %s32, 0
          %s466 = smul.addr %s463, 12
          %s467 = sadd.s32 %s465, %s466
          %s468 = smul.addr %s467, 8
          %s469 = scalar_lea.vmem %s0, %s468
        $region40: #{tpu_custom_call.1} parent=35 // pred_fallthru
          _
        // Predicated region
        $region41: #{tpu_custom_call.1} parent=35 // pred_check
          %p470 = pneg %p84
        $region42: #{tpu_custom_call.1} parent=35 // pred_check_branch
          %472 = sbr.rel (%p470) target = $region44
        $region43: #{tpu_custom_call.1} parent=35 // pred_region
          %p473 = scmp.lt.s32.totalorder %s31, 1
          %s474 = scalar_select %p473, %s31, 1
          %s475 = smul.addr %s474, 48
          %s476 = smul.addr %s475, 8
          %s477 = scalar_lea.vmem %s1, %s476
        $region44: #{tpu_custom_call.1} parent=35 // pred_fallthru
          _
        // Predicated region
        $region45: #{tpu_custom_call.1} parent=35 // pred_check
          %p478 = pneg %p110
        $region46: #{tpu_custom_call.1} parent=35 // pred_check_branch
          %480 = sbr.rel (%p478) target = $region48
        $region47: #{tpu_custom_call.1} parent=35 // pred_region
          %p481 = scmp.lt.s32.totalorder %s31, 1
          %s482 = scalar_select %p481, %s31, 1
          %s483 = smul.addr %s482, 12
          %s484 = smul.addr %s483, 8
          %s485 = scalar_lea.vmem %s2, %s484
        $region48: #{tpu_custom_call.1} parent=35 // pred_fallthru
          _
        // Predicated region
        $region49: #{tpu_custom_call.1} parent=35 // pred_check
          %p486 = pneg %p138
        $region50: #{tpu_custom_call.1} parent=35 // pred_check_branch
          %488 = sbr.rel (%p486) target = $region52
        $region51: #{tpu_custom_call.1} parent=35 // pred_region
          %p489 = scmp.lt.s32.totalorder %s31, 1
          %s490 = scalar_select %p489, %s31, 1
          %p491 = scmp.lt.s32.totalorder %s32, 0
          %s492 = scalar_select %p491, %s32, 0
          %s493 = smul.addr %s490, 8
          %s494 = sadd.s32 %s492, %s493
          %s495 = smul.addr %s494, 8
          %s496 = scalar_lea.vmem %s3, %s495
        $region52: #{tpu_custom_call.1} parent=35 // pred_fallthru
          _
        // Predicated region
        $region53: #{tpu_custom_call.1} parent=35 // pred_check
          %p497 = pneg %p187
        $region54: #{tpu_custom_call.1} parent=35 // pred_check_branch
          %499 = sbr.rel (%p497) target = $region56
        $region55: #{tpu_custom_call.1} parent=35 // pred_region
          %p500 = scmp.lt.s32.totalorder %s31, 1
          %s501 = scalar_select %p500, %s31, 1
          %p502 = scmp.lt.s32.totalorder %s32, 0
          %s503 = scalar_select %p502, %s32, 0
          %s504 = sadd.s32 %s503, %s501
          %s505 = smul.addr %s504, 8
          %s506 = scalar_lea.vmem %s5, %s505
        $region56: #{tpu_custom_call.1} parent=35 // pred_fallthru
          _
        // Predicated region
        $region57: #{tpu_custom_call.1} parent=35 // pred_check
          %p507 = pneg %p215
        $region58: #{tpu_custom_call.1} parent=35 // pred_check_branch
          %509 = sbr.rel (%p507) target = $region60
        $region59: #{tpu_custom_call.1} parent=35 // pred_region
          %p510 = scmp.lt.s32.totalorder %s31, 1
          %s511 = scalar_select %p510, %s31, 1
          %p512 = scmp.lt.s32.totalorder %s32, 0
          %s513 = scalar_select %p512, %s32, 0
          %s514 = sadd.s32 %s513, %s511
          %s515 = smul.addr %s514, 8
          %s516 = scalar_lea.vmem %s6, %s515
        $region60: #{tpu_custom_call.1} parent=35 // pred_fallthru
          _
        // Predicated region
        $region61: #{tpu_custom_call.1} parent=35 // pred_check
          %p517 = pneg %p243
        $region62: #{tpu_custom_call.1} parent=35 // pred_check_branch
          %519 = sbr.rel (%p517) target = $region64
        $region63: #{tpu_custom_call.1} parent=35 // pred_region
          %p520 = scmp.lt.s32.totalorder %s31, 1
          %s521 = scalar_select %p520, %s31, 1
          %p522 = scmp.lt.s32.totalorder %s32, 0
          %s523 = scalar_select %p522, %s32, 0
          %s524 = sadd.s32 %s523, %s521
          %s525 = smul.addr %s524, 8
          %s526 = scalar_lea.vmem %s7, %s525
        $region64: #{tpu_custom_call.1} parent=35 // pred_fallthru
          _
        // Predicated region
        $region65: #{tpu_custom_call.1} parent=35 // pred_check
          %p527 = pneg %p271
        $region66: #{tpu_custom_call.1} parent=35 // pred_check_branch
          %529 = sbr.rel (%p527) target = $region68
        $region67: #{tpu_custom_call.1} parent=35 // pred_region
          %p530 = scmp.lt.s32.totalorder %s31, 1
          %s531 = scalar_select %p530, %s31, 1
          %p532 = scmp.lt.s32.totalorder %s32, 0
          %s533 = scalar_select %p532, %s32, 0
          %s534 = sadd.s32 %s533, %s531
          %s535 = smul.addr %s534, 8
          %s536 = scalar_lea.vmem %s8, %s535
        $region68: #{tpu_custom_call.1} parent=35 // pred_fallthru
          _
        // Predicated region
        $region69: #{tpu_custom_call.1} parent=35 // pred_check
          %p537 = pneg %p297
        $region70: #{tpu_custom_call.1} parent=35 // pred_check_branch
          %539 = sbr.rel (%p537) target = $region72
        $region71: #{tpu_custom_call.1} parent=35 // pred_region
          %p540 = scmp.lt.s32.totalorder %s31, 1
          %s541 = scalar_select %p540, %s31, 1
          %s542 = scalar_lea.vmem %s9, %s541
        $region72: #{tpu_custom_call.1} parent=35 // pred_fallthru
          _
      $region36: #{tpu_custom_call.1} parent=5 // pred_fallthru
        _
      %p543 = scmp.le.s32.totalorder 1, %s24
      %p544 = scmp.lt.s32.totalorder %s24, 3
      %p545 = pnand %p543, %p544
      %p546 = pneg %p545
      // Predicated region
      $region73: #{tpu_custom_call.1} parent=5 // pred_check
        _
      $region74: #{tpu_custom_call.1} parent=5 // pred_check_branch
        %548 = sbr.rel (%p545) target = $region76
      $region75: #{tpu_custom_call.1} parent=5 // pred_region
        %s549 = ssub.s32 %s24, 1
        // Predicated region
        $region77: #{tpu_custom_call.1} parent=75 // pred_check
          %p550 = pneg %p165
        $region78: #{tpu_custom_call.1} parent=75 // pred_check_branch
          %552 = sbr.rel (%p550) target = $region80
        $region79: #{tpu_custom_call.1} parent=75 // pred_region
          %553 = dma.done [#allocation4], 256
        $region80: #{tpu_custom_call.1} parent=75 // pred_fallthru
          _
        %554 = sfence
        %p555 = scmp.lt.s32.totalorder %s33, 1
        %s556 = scalar_select %p555, %s33, 1
        %p557 = scmp.lt.s32.totalorder %s34, 0
        %s558 = scalar_select %p557, %s34, 0
        %s559 = smul.addr %s556, 12
        %s560 = sadd.s32 %s558, %s559
        %s561 = smul.addr %s560, 8
        %s562 = scalar_lea.vmem %s0, %s561
        %p563 = pneg %p64
        %p564 = pneg %p61
        %p565 = scmp.lt.s32.totalorder %s33, 1
        %s566 = scalar_select %p565, %s33, 1
        %s567 = smul.addr %s566, 48
        %s568 = smul.addr %s567, 8
        %s569 = scalar_lea.vmem %s1, %s568
        %p570 = pneg %p90
        %p571 = pneg %p87
        %p572 = scmp.lt.s32.totalorder %s33, 1
        %s573 = scalar_select %p572, %s33, 1
        %s574 = smul.addr %s573, 12
        %s575 = smul.addr %s574, 8
        %s576 = scalar_lea.vmem %s2, %s575
        %p577 = pneg %p116
        %p578 = pneg %p113
        %p579 = scmp.lt.s32.totalorder %s33, 1
        %s580 = scalar_select %p579, %s33, 1
        %p581 = scmp.lt.s32.totalorder %s34, 0
        %s582 = scalar_select %p581, %s34, 0
        %s583 = smul.addr %s580, 8
        %s584 = sadd.s32 %s582, %s583
        %s585 = smul.addr %s584, 8
        %s586 = scalar_lea.vmem %s3, %s585
        %p587 = pneg %p144
        %p588 = pneg %p141
        %p589 = pneg %p165
        %p590 = pneg %p162
        %p591 = scmp.lt.s32.totalorder %s33, 1
        %s592 = scalar_select %p591, %s33, 1
        %p593 = scmp.lt.s32.totalorder %s34, 0
        %s594 = scalar_select %p593, %s34, 0
        %s595 = sadd.s32 %s594, %s592
        %s596 = smul.addr %s595, 8
        %s597 = scalar_lea.vmem %s5, %s596
        %p598 = pneg %p193
        %p599 = pneg %p190
        %p600 = scmp.lt.s32.totalorder %s33, 1
        %s601 = scalar_select %p600, %s33, 1
        %p602 = scmp.lt.s32.totalorder %s34, 0
        %s603 = scalar_select %p602, %s34, 0
        %s604 = sadd.s32 %s603, %s601
        %s605 = smul.addr %s604, 8
        %s606 = scalar_lea.vmem %s6, %s605
        %p607 = pneg %p221
        %p608 = pneg %p218
        %p609 = scmp.lt.s32.totalorder %s33, 1
        %s610 = scalar_select %p609, %s33, 1
        %p611 = scmp.lt.s32.totalorder %s34, 0
        %s612 = scalar_select %p611, %s34, 0
        %s613 = sadd.s32 %s612, %s610
        %s614 = smul.addr %s613, 8
        %s615 = scalar_lea.vmem %s7, %s614
        %p616 = pneg %p249
        %p617 = pneg %p246
        %p618 = scmp.lt.s32.totalorder %s33, 1
        %s619 = scalar_select %p618, %s33, 1
        %p620 = scmp.lt.s32.totalorder %s34, 0
        %s621 = scalar_select %p620, %s34, 0
        %s622 = sadd.s32 %s621, %s619
        %s623 = smul.addr %s622, 8
        %s624 = scalar_lea.vmem %s8, %s623
        %p625 = pneg %p277
        %p626 = pneg %p274
        %p627 = scmp.lt.s32.totalorder %s33, 1
        %s628 = scalar_select %p627, %s33, 1
        %s629 = scalar_lea.vmem %s9, %s628
        %p630 = pneg %p303
        %p631 = pneg %p300
        %p632 = pneg %p324
        %p633 = pneg %p321
        %p634 = pneg %p345
        %p635 = pneg %p342
        %p636 = pneg %p366
        %p637 = pneg %p363
        %p638 = pneg %p387
        %p639 = pneg %p384
        %p640 = pneg %p415
        %p641 = pneg %p412
        %s642 = sand.u32 %s402, 1
        %s643 = scalar_lea.sflag [#allocation3], %s642
        %s644 = sand.u32 %s402, 1
        %s645 = smul.addr %s644, 8
        %s646 = scalar_lea.vmem [#allocation5], %s645
        %p647 = scmp.lt.s32.totalorder %s33, 1
        %s648 = scalar_select %p647, %s33, 1
        %p649 = scmp.lt.s32.totalorder %s34, 0
        %s650 = scalar_select %p649, %s34, 0
        %s651 = smul.addr %s648, 12
        %s652 = sadd.s32 %s650, %s651
        %s653 = smul.addr %s652, 8
        %s654 = scalar_lea.vmem %s0, %s653
        %p655 = scmp.lt.s32.totalorder %s33, 1
        %s656 = scalar_select %p655, %s33, 1
        %s657 = smul.addr %s656, 48
        %s658 = smul.addr %s657, 8
        %s659 = scalar_lea.vmem %s1, %s658
        %p660 = scmp.lt.s32.totalorder %s33, 1
        %s661 = scalar_select %p660, %s33, 1
        %s662 = smul.addr %s661, 12
        %s663 = smul.addr %s662, 8
        %s664 = scalar_lea.vmem %s2, %s663
        %p665 = scmp.lt.s32.totalorder %s33, 1
        %s666 = scalar_select %p665, %s33, 1
        %p667 = scmp.lt.s32.totalorder %s34, 0
        %s668 = scalar_select %p667, %s34, 0
        %s669 = smul.addr %s666, 8
        %s670 = sadd.s32 %s668, %s669
        %s671 = smul.addr %s670, 8
        %s672 = scalar_lea.vmem %s3, %s671
        %p673 = scmp.lt.s32.totalorder %s33, 1
        %s674 = scalar_select %p673, %s33, 1
        %p675 = scmp.lt.s32.totalorder %s34, 0
        %s676 = scalar_select %p675, %s34, 0
        %s677 = sadd.s32 %s676, %s674
        %s678 = smul.addr %s677, 8
        %s679 = scalar_lea.vmem %s5, %s678
        %p680 = scmp.lt.s32.totalorder %s33, 1
        %s681 = scalar_select %p680, %s33, 1
        %p682 = scmp.lt.s32.totalorder %s34, 0
        %s683 = scalar_select %p682, %s34, 0
        %s684 = sadd.s32 %s683, %s681
        %s685 = smul.addr %s684, 8
        %s686 = scalar_lea.vmem %s6, %s685
        %p687 = scmp.lt.s32.totalorder %s33, 1
        %s688 = scalar_select %p687, %s33, 1
        %p689 = scmp.lt.s32.totalorder %s34, 0
        %s690 = scalar_select %p689, %s34, 0
        %s691 = sadd.s32 %s690, %s688
        %s692 = smul.addr %s691, 8
        %s693 = scalar_lea.vmem %s7, %s692
        %p694 = scmp.lt.s32.totalorder %s33, 1
        %s695 = scalar_select %p694, %s33, 1
        %p696 = scmp.lt.s32.totalorder %s34, 0
        %s697 = scalar_select %p696, %s34, 0
        %s698 = sadd.s32 %s697, %s695
        %s699 = smul.addr %s698, 8
        %s700 = scalar_lea.vmem %s8, %s699
        %p701 = scmp.lt.s32.totalorder %s33, 1
        %s702 = scalar_select %p701, %s33, 1
        %s703 = scalar_lea.vmem %s9, %s702
        %v704 = vld [vmem:[%s700] sm:$0xff]
        %v705 = vld [vmem:[%s703] sm:$0x1]
        %vm706 = vcmp.gt.f32.partialorder %v704, 0.5
        %708 = vset.pattern.permute.xlu0 0
        %709 = vperm.xlu0 %708, %v704
        %v710 = vpop.permute.xlu0 %709
        %v713 = vlaneseq
        %v714 = vshrl.u32 %v713, 7
        %v715 = vsub.s32 0, %v714
        %v716 = vrot.slane %v705, %v715
        %v718 = vmul.f32 %v710, %v716
        %vm719 = vcmp.gt.f32.partialorder %v718, 0.5
        %v720 = vsel %vm719, 0.0, -100000.0
        %v721 = vld [vmem:[%s672] sm:$0xff]
        %v722 = vld [vmem:[%s672 + $0x8] sm:$0xff]
        %v723 = vld [vmem:[%s672 + $0x10] sm:$0xff]
        %v724 = vld [vmem:[%s672 + $0x18] sm:$0xff]
        %v725 = vld [vmem:[%s672 + $0x20] sm:$0xff]
        %v726 = vld [vmem:[%s672 + $0x28] sm:$0xff]
        %v727 = vld [vmem:[%s672 + $0x30] sm:$0xff]
        %v728 = vld [vmem:[%s672 + $0x38] sm:$0xff]
        %v729 = vld [vmem:[%s693] sm:$0xff]
        %v730 = vld [vmem:[%s686] sm:$0xff]
        %v731 = vld [vmem:[%s654] sm:$0xff]
        %v732 = vld [vmem:[%s659] sm:$0xff]
        %v733 = vld [vmem:[%s659 + $0x8] sm:$0xff]
        %v734 = vld [vmem:[%s659 + $0x10] sm:$0xff]
        %v735 = vld [vmem:[%s659 + $0x18] sm:$0x3f]
        %s736 = sld [smem:[#allocation2]]
        %v737 = vstv %s736
        %v738 = vmul.f32 %v737, %v721
        %s739 = sld [smem:[#allocation2 + $0x1]]
        %v740 = vstv %s739
        %v741 = vmul.f32 %v740, %v722
        %v742 = vadd.f32 %v738, %v741
        %s743 = sld [smem:[#allocation2 + $0x2]]
        %v744 = vstv %s743
        %v745 = vmul.f32 %v744, %v723
        %v746 = vadd.f32 %v742, %v745
        %s747 = sld [smem:[#allocation2 + $0x3]]
        %v748 = vstv %s747
        %v749 = vmul.f32 %v748, %v724
        %v750 = vadd.f32 %v746, %v749
        %s751 = sld [smem:[#allocation2 + $0x4]]
        %v752 = vstv %s751
        %v753 = vmul.f32 %v752, %v725
        %v754 = vadd.f32 %v750, %v753
        %s755 = sld [smem:[#allocation2 + $0x5]]
        %v756 = vstv %s755
        %v757 = vmul.f32 %v756, %v726
        %v758 = vadd.f32 %v754, %v757
        %s759 = sld [smem:[#allocation2 + $0x6]]
        %v760 = vstv %s759
        %v761 = vmul.f32 %v760, %v727
        %v762 = vadd.f32 %v758, %v761
        %s763 = sld [smem:[#allocation2 + $0x7]]
        %v764 = vstv %s763
        %v765 = vmul.f32 %v764, %v728
        %v766 = vadd.f32 %v762, %v765
        %vm767 = vcmask 244736
        %v769 = vsel %vm767, %v731, 0
        %vm771 = vcmask 1045504
        %v773 = vsel %vm771, %v735, 0
        %775 = vmatprep.subr.mxu0 0.0
        %776 = vmatpush1.msra.mxu0 %v732
        %777 = vmatprep.subr.mxu0 0.0
        %778 = vmatpush1.msra.mxu0 %v733
        %779 = vmatprep.subr.mxu0 0.0
        %780 = vmatpush1.msra.mxu0 %v734
        %781 = vmatprep.subr.mxu0 0.0
        %782 = vmatpush1.msra.mxu0 %v773
        %783 = vmatprep.subr.mxu0 0.0
        %784 = vmatpush1.msra.mxu0 0.0
        %785 = vmatprep.subr.mxu0 0.0
        %786 = vmatpush1.msra.mxu0 0.0
        %787 = vmatprep.subr.mxu0 0.0
        %788 = vmatpush1.msra.mxu0 0.0
        %789 = vmatprep.subr.mxu0 0.0
        %790 = vmatpush1.msra.mxu0 0.0
        %791 = vmatprep.subr.mxu0 0.0
        %792 = vmatpush1.msra.mxu0 0.0
        %793 = vmatprep.subr.mxu0 0.0
        %794 = vmatpush1.msra.mxu0 0.0
        %795 = vmatprep.subr.mxu0 0.0
        %796 = vmatpush1.msra.mxu0 0.0
        %797 = vmatprep.subr.mxu0 0.0
        %798 = vmatpush1.msra.mxu0 0.0
        %799 = vmatprep.subr.mxu0 0.0
        %800 = vmatpush1.msra.mxu0 0.0
        %801 = vmatprep.subr.mxu0 0.0
        %802 = vmatpush1.msra.mxu0 0.0
        %803 = vmatprep.subr.mxu0 0.0
        %804 = vmatpush1.msra.mxu0 0.0
        %805 = vmatprep.subr.mxu0 0.0
        %806 = vmatpush1.msra.mxu0 0.0
        %807 = vmatprep.subr.mxu0 0.0
        %808 = vmatpush1.msra.mxu0 0.0
        %809 = vmatprep.subr.mxu0 0.0
        %810 = vmatpush1.msra.mxu0 0.0
        %811 = vmatprep.subr.mxu0 0.0
        %812 = vmatpush1.msra.mxu0 0.0
        %813 = vmatprep.subr.mxu0 0.0
        %814 = vmatpush1.msra.mxu0 0.0
        %815 = vmatprep.subr.mxu0 0.0
        %816 = vmatpush1.msra.mxu0 0.0
        %817 = vmatprep.subr.mxu0 0.0
        %818 = vmatpush1.msra.mxu0 0.0
        %819 = vmatprep.subr.mxu0 0.0
        %820 = vmatpush1.msra.mxu0 0.0
        %821 = vmatprep.subr.mxu0 0.0
        %822 = vmatpush1.msra.mxu0 0.0
        %823 = vmatprep.subr.mxu0 0.0
        %824 = vmatpush1.msra.mxu0 0.0
        %825 = vmatprep.subr.mxu0 0.0
        %826 = vmatpush1.msra.mxu0 0.0
        %827 = vmatprep.subr.mxu0 0.0
        %828 = vmatpush1.msra.mxu0 0.0
        %829 = vmatprep.subr.mxu0 0.0
        %830 = vmatpush1.msra.mxu0 0.0
        %831 = vmatprep.subr.mxu0 0.0
        %832 = vmatpush1.msra.mxu0 0.0
        %833 = vmatprep.subr.mxu0 0.0
        %834 = vmatpush1.msra.mxu0 0.0
        %835 = vmatprep.subr.mxu0 0.0
        %836 = vmatpush1.msra.mxu0 0.0
        %837 = vmatprep.subr.mxu0 0.0
        %838 = vmatpush1.msra.mxu0 0.0
        %839 = vmatprep.mubr.f32.mxu0 0.0
        %840 = vmatmul.mubr.f32.gmra.mrb[0].mxu0 %v769
        %v841 = vpop.f32.mrb[0].mxu0
        %v842 = vadd.f32 %v766, %v841
        %v843 = vpop.f32.mrb[0].mxu0
        %844 = vdwg.mxu0
        %v845 = vmul.f32 %v842, 0.57735026
        %v846 = vadd.f32 %v845, %v720
        %vm847 = vcmask 64512
        %v848 = vsel %vm847, %v846, -inf
        %849 = vmax.xlane.f32.xlu0 %v848
        %v850 = vpop.xlane.xlu0 %849
        %v851 = vsub.f32 %v846, %v850
        %v852 = vmul.f32 %v851, 1.442695
        %v853 = vpow.pop %v852
        %v854 = vsel %vm847, %v853, 0.0
        %855 = vadd.xlane.f32.xlu0 %v854
        %v856 = vpop.xlane.xlu0 %855
        %v857 = vrcp.pop %v856
        %v858 = vmul.f32 %v853, %v857
        %v859 = vld [vmem:[%s664] sm:$0xff]
        %v861 = vsel %vm847, %v858, 0
        %863 = vmatprep.subr.mxu0 0.0
        %864 = vmatpush1.msra.mxu0 %v859
        %865 = vmatprep.subr.mxu0 0.0
        %866 = vmatpush1.msra.mxu0 0.0
        %867 = vmatprep.subr.mxu0 0.0
        %868 = vmatpush1.msra.mxu0 0.0
        %869 = vmatprep.subr.mxu0 0.0
        %870 = vmatpush1.msra.mxu0 0.0
        %871 = vmatprep.subr.mxu0 0.0
        %872 = vmatpush1.msra.mxu0 0.0
        %873 = vmatprep.subr.mxu0 0.0
        %874 = vmatpush1.msra.mxu0 0.0
        %875 = vmatprep.subr.mxu0 0.0
        %876 = vmatpush1.msra.mxu0 0.0
        %877 = vmatprep.subr.mxu0 0.0
        %878 = vmatpush1.msra.mxu0 0.0
        %879 = vmatprep.subr.mxu0 0.0
        %880 = vmatpush1.msra.mxu0 0.0
        %881 = vmatprep.subr.mxu0 0.0
        %882 = vmatpush1.msra.mxu0 0.0
        %883 = vmatprep.subr.mxu0 0.0
        %884 = vmatpush1.msra.mxu0 0.0
        %885 = vmatprep.subr.mxu0 0.0
        %886 = vmatpush1.msra.mxu0 0.0
        %887 = vmatprep.subr.mxu0 0.0
        %888 = vmatpush1.msra.mxu0 0.0
        %889 = vmatprep.subr.mxu0 0.0
        %890 = vmatpush1.msra.mxu0 0.0
        %891 = vmatprep.subr.mxu0 0.0
        %892 = vmatpush1.msra.mxu0 0.0
        %893 = vmatprep.subr.mxu0 0.0
        %894 = vmatpush1.msra.mxu0 0.0
        %895 = vmatprep.subr.mxu0 0.0
        %896 = vmatpush1.msra.mxu0 0.0
        %897 = vmatprep.subr.mxu0 0.0
        %898 = vmatpush1.msra.mxu0 0.0
        %899 = vmatprep.subr.mxu0 0.0
        %900 = vmatpush1.msra.mxu0 0.0
        %901 = vmatprep.subr.mxu0 0.0
        %902 = vmatpush1.msra.mxu0 0.0
        %903 = vmatprep.subr.mxu0 0.0
        %904 = vmatpush1.msra.mxu0 0.0
        %905 = vmatprep.subr.mxu0 0.0
        %906 = vmatpush1.msra.mxu0 0.0
        %907 = vmatprep.subr.mxu0 0.0
        %908 = vmatpush1.msra.mxu0 0.0
        %909 = vmatprep.subr.mxu0 0.0
        %910 = vmatpush1.msra.mxu0 0.0
        %911 = vmatprep.subr.mxu0 0.0
        %912 = vmatpush1.msra.mxu0 0.0
        %913 = vmatprep.subr.mxu0 0.0
        %914 = vmatpush1.msra.mxu0 0.0
        %915 = vmatprep.subr.mxu0 0.0
        %916 = vmatpush1.msra.mxu0 0.0
        %917 = vmatprep.subr.mxu0 0.0
        %918 = vmatpush1.msra.mxu0 0.0
        %919 = vmatprep.subr.mxu0 0.0
        %920 = vmatpush1.msra.mxu0 0.0
        %921 = vmatprep.subr.mxu0 0.0
        %922 = vmatpush1.msra.mxu0 0.0
        %923 = vmatprep.subr.mxu0 0.0
        %924 = vmatpush1.msra.mxu0 0.0
        %925 = vmatprep.subr.mxu0 0.0
        %926 = vmatpush1.msra.mxu0 0.0
        %927 = vmatprep.mubr.f32.mxu0 0.0
        %928 = vmatmul.mubr.f32.gmra.mrb[0].mxu0 %v861
        %v929 = vpop.f32.mrb[0].mxu0
        %v930 = vadd.f32 0.0, %v929
        %v931 = vpop.f32.mrb[0].mxu0
        %932 = vdwg.mxu0
        %934 = vset.pattern.permute.xlu0 0
        %935 = vperm.xlu0 %934, %v729
        %v936 = vpop.permute.xlu0 %935
        %v938 = vsub.f32 %v930, %v936
        %939 = vset.pattern.permute.xlu0 1
        %940 = vperm.xlu0 %939, %v729
        %v941 = vpop.permute.xlu0 %940
        %v943 = vsub.f32 %v930, %v941
        %944 = vset.pattern.permute.xlu0 2
        %945 = vperm.xlu0 %944, %v729
        %v946 = vpop.permute.xlu0 %945
        %v948 = vsub.f32 %v930, %v946
        %v949 = vmul.f32 %v858, %v721
        %v950 = vmul.f32 %v858, %v722
        %v951 = vmul.f32 %v858, %v723
        %v952 = vmul.f32 %v858, %v724
        %v953 = vmul.f32 %v858, %v725
        %v954 = vmul.f32 %v858, %v726
        %v955 = vmul.f32 %v858, %v727
        %v956 = vmul.f32 %v858, %v728
        %v957 = vsel %vm847, %v949, 0.0
        %958 = vadd.xlane.f32.xlu0 %v957
        %v959 = vpop.xlane.xlu0 %958
        %v960 = vsel %vm847, %v950, 0.0
        %961 = vadd.xlane.f32.xlu0 %v960
        %v962 = vpop.xlane.xlu0 %961
        %v963 = vsel %vm847, %v951, 0.0
        %964 = vadd.xlane.f32.xlu0 %v963
        %v965 = vpop.xlane.xlu0 %964
        %v966 = vsel %vm847, %v952, 0.0
        %967 = vadd.xlane.f32.xlu0 %v966
        %v968 = vpop.xlane.xlu0 %967
        %v969 = vsel %vm847, %v953, 0.0
        %970 = vadd.xlane.f32.xlu0 %v969
        %v971 = vpop.xlane.xlu0 %970
        %v972 = vsel %vm847, %v954, 0.0
        %973 = vadd.xlane.f32.xlu0 %v972
        %v974 = vpop.xlane.xlu0 %973
        %v975 = vsel %vm847, %v955, 0.0
        %976 = vadd.xlane.f32.xlu0 %v975
        %v977 = vpop.xlane.xlu0 %976
        %v978 = vsel %vm847, %v956, 0.0
        %979 = vadd.xlane.f32.xlu0 %v978
        %v980 = vpop.xlane.xlu0 %979
        %v989 = vlaneseq
        %v990 = vand.u32 %v989, 127
        %v991 = vlaneseq
        %v992 = vshrl.u32 %v991, 7
        %v993 = vsub.s32 %v990, %v992
        %v994 = vrot.slane %v959, %v993
        %v995 = vlaneseq
        %v996 = vshrl.u32 %v995, 7
        %v997 = vsub.s32 %v990, %v996
        %v998 = vrot.slane %v962, %v997
        %v999 = vlaneseq
        %v1000 = vshrl.u32 %v999, 7
        %v1001 = vsub.s32 %v990, %v1000
        %v1002 = vrot.slane %v965, %v1001
        %v1003 = vlaneseq
        %v1004 = vshrl.u32 %v1003, 7
        %v1005 = vsub.s32 %v990, %v1004
        %v1006 = vrot.slane %v968, %v1005
        %v1007 = vlaneseq
        %v1008 = vshrl.u32 %v1007, 7
        %v1009 = vsub.s32 %v990, %v1008
        %v1010 = vrot.slane %v971, %v1009
        %v1011 = vlaneseq
        %v1012 = vshrl.u32 %v1011, 7
        %v1013 = vsub.s32 %v990, %v1012
        %v1014 = vrot.slane %v974, %v1013
        %v1015 = vlaneseq
        %v1016 = vshrl.u32 %v1015, 7
        %v1017 = vsub.s32 %v990, %v1016
        %v1018 = vrot.slane %v977, %v1017
        %v1019 = vlaneseq
        %v1020 = vshrl.u32 %v1019, 7
        %v1021 = vsub.s32 %v990, %v1020
        %v1022 = vrot.slane %v980, %v1021
        %vm1023 = vcmask 1041409
        %v1024 = vsel %vm1023, %v998, %v994
        %vm1025 = vcmask 1042434
        %v1026 = vsel %vm1025, %v1002, %v1024
        %vm1027 = vcmask 1043459
        %v1028 = vsel %vm1027, %v1006, %v1026
        %vm1029 = vcmask 1044484
        %v1030 = vsel %vm1029, %v1010, %v1028
        %vm1031 = vcmask 1045509
        %v1032 = vsel %vm1031, %v1014, %v1030
        %vm1033 = vcmask 1046534
        %v1034 = vsel %vm1033, %v1018, %v1032
        %vm1035 = vcmask 1047559
        %v1036 = vsel %vm1035, %v1022, %v1034
        %1038 = vxpose.xlu0.b32.start [1/16] %v1036, 128
        %1039 = vxpose.xlu0.b32.cont [2/16] 0.0, 128
        %1040 = vxpose.xlu0.b32.cont [3/16] 0.0, 128
        %1041 = vxpose.xlu0.b32.cont [4/16] 0.0, 128
        %1042 = vxpose.xlu0.b32.cont [5/16] 0.0, 128
        %1043 = vxpose.xlu0.b32.cont [6/16] 0.0, 128
        %1044 = vxpose.xlu0.b32.cont [7/16] 0.0, 128
        %1045 = vxpose.xlu0.b32.cont [8/16] 0.0, 128
        %1046 = vxpose.xlu0.b32.cont [9/16] 0.0, 128
        %1047 = vxpose.xlu0.b32.cont [10/16] 0.0, 128
        %1048 = vxpose.xlu0.b32.cont [11/16] 0.0, 128
        %1049 = vxpose.xlu0.b32.cont [12/16] 0.0, 128
        %1050 = vxpose.xlu0.b32.cont [13/16] 0.0, 128
        %1051 = vxpose.xlu0.b32.cont [14/16] 0.0, 128
        %1052 = vxpose.xlu0.b32.cont [15/16] 0.0, 128
        %1053 = vxpose.xlu0.b32.end [16/16] 0.0, 128
        %v1054 = vpop.trf.xlu0
        %v1055 = vpop.trf.xlu0
        %v1056 = vpop.trf.xlu0
        %v1057 = vpop.trf.xlu0
        %v1058 = vpop.trf.xlu0
        %v1059 = vpop.trf.xlu0
        %v1060 = vpop.trf.xlu0
        %v1061 = vpop.trf.xlu0
        %v1062 = vpop.trf.xlu0
        %v1063 = vpop.trf.xlu0
        %v1064 = vpop.trf.xlu0
        %v1065 = vpop.trf.xlu0
        %v1066 = vpop.trf.xlu0
        %v1067 = vpop.trf.xlu0
        %v1068 = vpop.trf.xlu0
        %v1069 = vpop.trf.xlu0
        %1071 = vset.pattern.permute.xlu0 0
        %1072 = vperm.xlu0 %1071, %v730
        %v1073 = vpop.permute.xlu0 %1072
        %v1075 = vmul.f32 %v1073, %v938
        %1076 = vset.pattern.permute.xlu0 3
        %1077 = vperm.xlu0 %1076, %v730
        %v1078 = vpop.permute.xlu0 %1077
        %v1080 = vmul.f32 %v1078, %v943
        %1082 = vrot.lane.b32.xlu0 %v1080, 124
        %v1083 = vpop.permute.xlu0 %1082
        %v1085 = vadd.f32 %v1075, %v1083
        %1086 = vset.pattern.permute.xlu0 6
        %1087 = vperm.xlu0 %1086, %v730
        %v1088 = vpop.permute.xlu0 %1087
        %v1090 = vmul.f32 %v1088, %v948
        %1092 = vrot.lane.b32.xlu0 %v1090, 120
        %v1093 = vpop.permute.xlu0 %1092
        %v1095 = vadd.f32 %v1085, %v1093
        %1096 = vset.pattern.permute.xlu0 1
        %1097 = vperm.xlu0 %1096, %v730
        %v1098 = vpop.permute.xlu0 %1097
        %v1100 = vmul.f32 %v1098, %v938
        %1101 = vset.pattern.permute.xlu0 4
        %1102 = vperm.xlu0 %1101, %v730
        %v1103 = vpop.permute.xlu0 %1102
        %v1105 = vmul.f32 %v1103, %v943
        %1107 = vrot.lane.b32.xlu0 %v1105, 124
        %v1108 = vpop.permute.xlu0 %1107
        %v1110 = vadd.f32 %v1100, %v1108
        %1111 = vset.pattern.permute.xlu0 7
        %1112 = vperm.xlu0 %1111, %v730
        %v1113 = vpop.permute.xlu0 %1112
        %v1115 = vmul.f32 %v1113, %v948
        %1117 = vrot.lane.b32.xlu0 %v1115, 120
        %v1118 = vpop.permute.xlu0 %1117
        %v1120 = vadd.f32 %v1110, %v1118
        %1121 = vset.pattern.permute.xlu0 2
        %1122 = vperm.xlu0 %1121, %v730
        %v1123 = vpop.permute.xlu0 %1122
        %v1125 = vmul.f32 %v1123, %v938
        %1126 = vset.pattern.permute.xlu0 5
        %1127 = vperm.xlu0 %1126, %v730
        %v1128 = vpop.permute.xlu0 %1127
        %v1130 = vmul.f32 %v1128, %v943
        %1132 = vrot.lane.b32.xlu0 %v1130, 124
        %v1133 = vpop.permute.xlu0 %1132
        %v1135 = vadd.f32 %v1125, %v1133
        %1136 = vset.pattern.permute.xlu0 8
        %1137 = vperm.xlu0 %1136, %v730
        %v1138 = vpop.permute.xlu0 %1137
        %v1140 = vmul.f32 %v1138, %v948
        %1142 = vrot.lane.b32.xlu0 %v1140, 120
        %v1143 = vpop.permute.xlu0 %1142
        %v1145 = vadd.f32 %v1135, %v1143
        %v1146 = vmul.f32 %v1095, %v1095
        %v1147 = vmul.f32 %v1120, %v1120
        %v1148 = vadd.f32 %v1146, %v1147
        %v1149 = vmul.f32 %v1145, %v1145
        %v1150 = vadd.f32 %v1148, %v1149
        %v1151 = vadd.f32 %v1150, 1e-12
        %v1152 = vrsqrt.pop %v1151
        %v1153 = vmul.f32 %v1150, %v1152
        %v1154 = vmul.f32 %v1095, %v1152
        %v1155 = vmul.f32 %v1120, %v1152
        %v1156 = vmul.f32 %v1145, %v1152
        %1158 = vrot.lane.b32.xlu0 %v930, 8
        %v1159 = vpop.permute.xlu0 %1158
        %1162 = vrot.lane.b32.xlu0 %v1095, 8
        %v1163 = vpop.permute.xlu0 %1162
        %1166 = vrot.lane.b32.xlu0 %v1120, 12
        %v1167 = vpop.permute.xlu0 %1166
        %1170 = vrot.lane.b32.xlu0 %v1145, 16
        %v1171 = vpop.permute.xlu0 %1170
        %1174 = vrot.lane.b32.xlu0 %v1153, 20
        %v1175 = vpop.permute.xlu0 %1174
        %1178 = vrot.lane.b32.xlu0 %v1154, 24
        %v1179 = vpop.permute.xlu0 %1178
        %1182 = vrot.lane.b32.xlu0 %v1155, 28
        %v1183 = vpop.permute.xlu0 %1182
        %1186 = vrot.lane.b32.xlu0 %v1156, 32
        %v1187 = vpop.permute.xlu0 %1186
        %v1189 = vsel %vm847, %v1054, %v1159
        %vm1190 = vcmask 195584
        %v1191 = vsel %vm1190, %v1189, %v1163
        %vm1192 = vcmask 228352
        %v1193 = vsel %vm1192, %v1191, %v1167
        %vm1194 = vcmask 261120
        %v1195 = vsel %vm1194, %v1193, %v1171
        %vm1196 = vcmask 293888
        %v1197 = vsel %vm1196, %v1195, %v1175
        %vm1198 = vcmask 326656
        %v1199 = vsel %vm1198, %v1197, %v1179
        %vm1200 = vcmask 359424
        %v1201 = vsel %vm1200, %v1199, %v1183
        %vm1202 = vcmask 392192
        %v1203 = vsel %vm1202, %v1201, %v1187
        %v1204 = vld [vmem:[%s10] sm:$0xff]
        %v1205 = vld [vmem:[%s10 + $0x8] sm:$0xff]
        %v1206 = vld [vmem:[%s10 + $0x10] sm:$0xff]
        %v1207 = vld [vmem:[%s10 + $0x18] sm:$0xff]
        %v1208 = vld [vmem:[%s10 + $0x20] sm:$0xff]
        %v1209 = vld [vmem:[%s10 + $0x28] sm:$0xff]
        %v1210 = vld [vmem:[%s10 + $0x30] sm:$0xf]
        %s1211 = scalar_lea.vmem %s654, 8
        %v1212 = vld [vmem:[%s1211] sm:$0xff]
        %s1213 = scalar_lea.vmem %s659, 32
        %v1214 = vld [vmem:[%s1213] sm:$0xff]
        %v1215 = vld [vmem:[%s1213 + $0x8] sm:$0xff]
        %v1216 = vld [vmem:[%s1213 + $0x10] sm:$0xff]
        %v1217 = vld [vmem:[%s1213 + $0x18] sm:$0x3f]
        %s1218 = sld [smem:[#allocation2 + $0x80]]
        %v1219 = vstv %s1218
        %v1220 = vmul.f32 %v1219, %v721
        %s1221 = sld [smem:[#allocation2 + $0x81]]
        %v1222 = vstv %s1221
        %v1223 = vmul.f32 %v1222, %v722
        %v1224 = vadd.f32 %v1220, %v1223
        %s1225 = sld [smem:[#allocation2 + $0x82]]
        %v1226 = vstv %s1225
        %v1227 = vmul.f32 %v1226, %v723
        %v1228 = vadd.f32 %v1224, %v1227
        %s1229 = sld [smem:[#allocation2 + $0x83]]
        %v1230 = vstv %s1229
        %v1231 = vmul.f32 %v1230, %v724
        %v1232 = vadd.f32 %v1228, %v1231
        %s1233 = sld [smem:[#allocation2 + $0x84]]
        %v1234 = vstv %s1233
        %v1235 = vmul.f32 %v1234, %v725
        %v1236 = vadd.f32 %v1232, %v1235
        %s1237 = sld [smem:[#allocation2 + $0x85]]
        %v1238 = vstv %s1237
        %v1239 = vmul.f32 %v1238, %v726
        %v1240 = vadd.f32 %v1236, %v1239
        %s1241 = sld [smem:[#allocation2 + $0x86]]
        %v1242 = vstv %s1241
        %v1243 = vmul.f32 %v1242, %v727
        %v1244 = vadd.f32 %v1240, %v1243
        %s1245 = sld [smem:[#allocation2 + $0x87]]
        %v1246 = vstv %s1245
        %v1247 = vmul.f32 %v1246, %v728
        %v1248 = vadd.f32 %v1244, %v1247
        %v1250 = vsel %vm767, %v1212, 0
        %v1253 = vsel %vm771, %v1217, 0
        %1255 = vmatprep.subr.mxu0 0.0
        %1256 = vmatpush1.msra.mxu0 %v1214
        %1257 = vmatprep.subr.mxu0 0.0
        %1258 = vmatpush1.msra.mxu0 %v1215
        %1259 = vmatprep.subr.mxu0 0.0
        %1260 = vmatpush1.msra.mxu0 %v1216
        %1261 = vmatprep.subr.mxu0 0.0
        %1262 = vmatpush1.msra.mxu0 %v1253
        %1263 = vmatprep.subr.mxu0 0.0
        %1264 = vmatpush1.msra.mxu0 0.0
        %1265 = vmatprep.subr.mxu0 0.0
        %1266 = vmatpush1.msra.mxu0 0.0
        %1267 = vmatprep.subr.mxu0 0.0
        %1268 = vmatpush1.msra.mxu0 0.0
        %1269 = vmatprep.subr.mxu0 0.0
        %1270 = vmatpush1.msra.mxu0 0.0
        %1271 = vmatprep.subr.mxu0 0.0
        %1272 = vmatpush1.msra.mxu0 0.0
        %1273 = vmatprep.subr.mxu0 0.0
        %1274 = vmatpush1.msra.mxu0 0.0
        %1275 = vmatprep.subr.mxu0 0.0
        %1276 = vmatpush1.msra.mxu0 0.0
        %1277 = vmatprep.subr.mxu0 0.0
        %1278 = vmatpush1.msra.mxu0 0.0
        %1279 = vmatprep.subr.mxu0 0.0
        %1280 = vmatpush1.msra.mxu0 0.0
        %1281 = vmatprep.subr.mxu0 0.0
        %1282 = vmatpush1.msra.mxu0 0.0
        %1283 = vmatprep.subr.mxu0 0.0
        %1284 = vmatpush1.msra.mxu0 0.0
        %1285 = vmatprep.subr.mxu0 0.0
        %1286 = vmatpush1.msra.mxu0 0.0
        %1287 = vmatprep.subr.mxu0 0.0
        %1288 = vmatpush1.msra.mxu0 0.0
        %1289 = vmatprep.subr.mxu0 0.0
        %1290 = vmatpush1.msra.mxu0 0.0
        %1291 = vmatprep.subr.mxu0 0.0
        %1292 = vmatpush1.msra.mxu0 0.0
        %1293 = vmatprep.subr.mxu0 0.0
        %1294 = vmatpush1.msra.mxu0 0.0
        %1295 = vmatprep.subr.mxu0 0.0
        %1296 = vmatpush1.msra.mxu0 0.0
        %1297 = vmatprep.subr.mxu0 0.0
        %1298 = vmatpush1.msra.mxu0 0.0
        %1299 = vmatprep.subr.mxu0 0.0
        %1300 = vmatpush1.msra.mxu0 0.0
        %1301 = vmatprep.subr.mxu0 0.0
        %1302 = vmatpush1.msra.mxu0 0.0
        %1303 = vmatprep.subr.mxu0 0.0
        %1304 = vmatpush1.msra.mxu0 0.0
        %1305 = vmatprep.subr.mxu0 0.0
        %1306 = vmatpush1.msra.mxu0 0.0
        %1307 = vmatprep.subr.mxu0 0.0
        %1308 = vmatpush1.msra.mxu0 0.0
        %1309 = vmatprep.subr.mxu0 0.0
        %1310 = vmatpush1.msra.mxu0 0.0
        %1311 = vmatprep.subr.mxu0 0.0
        %1312 = vmatpush1.msra.mxu0 0.0
        %1313 = vmatprep.subr.mxu0 0.0
        %1314 = vmatpush1.msra.mxu0 0.0
        %1315 = vmatprep.subr.mxu0 0.0
        %1316 = vmatpush1.msra.mxu0 0.0
        %1317 = vmatprep.subr.mxu0 0.0
        %1318 = vmatpush1.msra.mxu0 0.0
        %1319 = vmatprep.mubr.f32.mxu0 0.0
        %1320 = vmatmul.mubr.f32.gmra.mrb[0].mxu0 %v1250
        %v1321 = vpop.f32.mrb[0].mxu0
        %v1322 = vadd.f32 %v1248, %v1321
        %v1323 = vpop.f32.mrb[0].mxu0
        %1324 = vdwg.mxu0
        %v1325 = vmul.f32 %v1322, 0.57735026
        %v1326 = vadd.f32 %v1325, %v720
        %v1327 = vsel %vm847, %v1326, -inf
        %1328 = vmax.xlane.f32.xlu0 %v1327
        %v1329 = vpop.xlane.xlu0 %1328
        %v1330 = vsub.f32 %v1326, %v1329
        %v1331 = vmul.f32 %v1330, 1.442695
        %v1332 = vpow.pop %v1331
        %v1333 = vsel %vm847, %v1332, 0.0
        %1334 = vadd.xlane.f32.xlu0 %v1333
        %v1335 = vpop.xlane.xlu0 %1334
        %v1336 = vrcp.pop %v1335
        %v1337 = vmul.f32 %v1332, %v1336
        %s1338 = scalar_lea.vmem %s664, 8
        %v1339 = vld [vmem:[%s1338] sm:$0xff]
        %v1341 = vsel %vm847, %v1337, 0
        %1343 = vmatprep.subr.mxu0 0.0
        %1344 = vmatpush1.msra.mxu0 %v1339
        %1345 = vmatprep.subr.mxu0 0.0
        %1346 = vmatpush1.msra.mxu0 0.0
        %1347 = vmatprep.subr.mxu0 0.0
        %1348 = vmatpush1.msra.mxu0 0.0
        %1349 = vmatprep.subr.mxu0 0.0
        %1350 = vmatpush1.msra.mxu0 0.0
        %1351 = vmatprep.subr.mxu0 0.0
        %1352 = vmatpush1.msra.mxu0 0.0
        %1353 = vmatprep.subr.mxu0 0.0
        %1354 = vmatpush1.msra.mxu0 0.0
        %1355 = vmatprep.subr.mxu0 0.0
        %1356 = vmatpush1.msra.mxu0 0.0
        %1357 = vmatprep.subr.mxu0 0.0
        %1358 = vmatpush1.msra.mxu0 0.0
        %1359 = vmatprep.subr.mxu0 0.0
        %1360 = vmatpush1.msra.mxu0 0.0
        %1361 = vmatprep.subr.mxu0 0.0
        %1362 = vmatpush1.msra.mxu0 0.0
        %1363 = vmatprep.subr.mxu0 0.0
        %1364 = vmatpush1.msra.mxu0 0.0
        %1365 = vmatprep.subr.mxu0 0.0
        %1366 = vmatpush1.msra.mxu0 0.0
        %1367 = vmatprep.subr.mxu0 0.0
        %1368 = vmatpush1.msra.mxu0 0.0
        %1369 = vmatprep.subr.mxu0 0.0
        %1370 = vmatpush1.msra.mxu0 0.0
        %1371 = vmatprep.subr.mxu0 0.0
        %1372 = vmatpush1.msra.mxu0 0.0
        %1373 = vmatprep.subr.mxu0 0.0
        %1374 = vmatpush1.msra.mxu0 0.0
        %1375 = vmatprep.subr.mxu0 0.0
        %1376 = vmatpush1.msra.mxu0 0.0
        %1377 = vmatprep.subr.mxu0 0.0
        %1378 = vmatpush1.msra.mxu0 0.0
        %1379 = vmatprep.subr.mxu0 0.0
        %1380 = vmatpush1.msra.mxu0 0.0
        %1381 = vmatprep.subr.mxu0 0.0
        %1382 = vmatpush1.msra.mxu0 0.0
        %1383 = vmatprep.subr.mxu0 0.0
        %1384 = vmatpush1.msra.mxu0 0.0
        %1385 = vmatprep.subr.mxu0 0.0
        %1386 = vmatpush1.msra.mxu0 0.0
        %1387 = vmatprep.subr.mxu0 0.0
        %1388 = vmatpush1.msra.mxu0 0.0
        %1389 = vmatprep.subr.mxu0 0.0
        %1390 = vmatpush1.msra.mxu0 0.0
        %1391 = vmatprep.subr.mxu0 0.0
        %1392 = vmatpush1.msra.mxu0 0.0
        %1393 = vmatprep.subr.mxu0 0.0
        %1394 = vmatpush1.msra.mxu0 0.0
        %1395 = vmatprep.subr.mxu0 0.0
        %1396 = vmatpush1.msra.mxu0 0.0
        %1397 = vmatprep.subr.mxu0 0.0
        %1398 = vmatpush1.msra.mxu0 0.0
        %1399 = vmatprep.subr.mxu0 0.0
        %1400 = vmatpush1.msra.mxu0 0.0
        %1401 = vmatprep.subr.mxu0 0.0
        %1402 = vmatpush1.msra.mxu0 0.0
        %1403 = vmatprep.subr.mxu0 0.0
        %1404 = vmatpush1.msra.mxu0 0.0
        %1405 = vmatprep.subr.mxu0 0.0
        %1406 = vmatpush1.msra.mxu0 0.0
        %1407 = vmatprep.mubr.f32.mxu0 0.0
        %1408 = vmatmul.mubr.f32.gmra.mrb[0].mxu0 %v1341
        %v1409 = vpop.f32.mrb[0].mxu0
        %v1410 = vadd.f32 0.0, %v1409
        %v1411 = vpop.f32.mrb[0].mxu0
        %1412 = vdwg.mxu0
        %v1413 = vsub.f32 %v1410, %v936
        %v1414 = vsub.f32 %v1410, %v941
        %v1415 = vsub.f32 %v1410, %v946
        %v1416 = vmul.f32 %v1337, %v721
        %v1417 = vmul.f32 %v1337, %v722
        %v1418 = vmul.f32 %v1337, %v723
        %v1419 = vmul.f32 %v1337, %v724
        %v1420 = vmul.f32 %v1337, %v725
        %v1421 = vmul.f32 %v1337, %v726
        %v1422 = vmul.f32 %v1337, %v727
        %v1423 = vmul.f32 %v1337, %v728
        %v1424 = vsel %vm847, %v1416, 0.0
        %1425 = vadd.xlane.f32.xlu0 %v1424
        %v1426 = vpop.xlane.xlu0 %1425
        %v1427 = vsel %vm847, %v1417, 0.0
        %1428 = vadd.xlane.f32.xlu0 %v1427
        %v1429 = vpop.xlane.xlu0 %1428
        %v1430 = vsel %vm847, %v1418, 0.0
        %1431 = vadd.xlane.f32.xlu0 %v1430
        %v1432 = vpop.xlane.xlu0 %1431
        %v1433 = vsel %vm847, %v1419, 0.0
        %1434 = vadd.xlane.f32.xlu0 %v1433
        %v1435 = vpop.xlane.xlu0 %1434
        %v1436 = vsel %vm847, %v1420, 0.0
        %1437 = vadd.xlane.f32.xlu0 %v1436
        %v1438 = vpop.xlane.xlu0 %1437
        %v1439 = vsel %vm847, %v1421, 0.0
        %1440 = vadd.xlane.f32.xlu0 %v1439
        %v1441 = vpop.xlane.xlu0 %1440
        %v1442 = vsel %vm847, %v1422, 0.0
        %1443 = vadd.xlane.f32.xlu0 %v1442
        %v1444 = vpop.xlane.xlu0 %1443
        %v1445 = vsel %vm847, %v1423, 0.0
        %1446 = vadd.xlane.f32.xlu0 %v1445
        %v1447 = vpop.xlane.xlu0 %1446
        %v1456 = vlaneseq
        %v1457 = vshrl.u32 %v1456, 7
        %v1458 = vsub.s32 %v990, %v1457
        %v1459 = vrot.slane %v1426, %v1458
        %v1460 = vlaneseq
        %v1461 = vshrl.u32 %v1460, 7
        %v1462 = vsub.s32 %v990, %v1461
        %v1463 = vrot.slane %v1429, %v1462
        %v1464 = vlaneseq
        %v1465 = vshrl.u32 %v1464, 7
        %v1466 = vsub.s32 %v990, %v1465
        %v1467 = vrot.slane %v1432, %v1466
        %v1468 = vlaneseq
        %v1469 = vshrl.u32 %v1468, 7
        %v1470 = vsub.s32 %v990, %v1469
        %v1471 = vrot.slane %v1435, %v1470
        %v1472 = vlaneseq
        %v1473 = vshrl.u32 %v1472, 7
        %v1474 = vsub.s32 %v990, %v1473
        %v1475 = vrot.slane %v1438, %v1474
        %v1476 = vlaneseq
        %v1477 = vshrl.u32 %v1476, 7
        %v1478 = vsub.s32 %v990, %v1477
        %v1479 = vrot.slane %v1441, %v1478
        %v1480 = vlaneseq
        %v1481 = vshrl.u32 %v1480, 7
        %v1482 = vsub.s32 %v990, %v1481
        %v1483 = vrot.slane %v1444, %v1482
        %v1484 = vlaneseq
        %v1485 = vshrl.u32 %v1484, 7
        %v1486 = vsub.s32 %v990, %v1485
        %v1487 = vrot.slane %v1447, %v1486
        %v1488 = vsel %vm1023, %v1463, %v1459
        %v1489 = vsel %vm1025, %v1467, %v1488
        %v1490 = vsel %vm1027, %v1471, %v1489
        %v1491 = vsel %vm1029, %v1475, %v1490
        %v1492 = vsel %vm1031, %v1479, %v1491
        %v1493 = vsel %vm1033, %v1483, %v1492
        %v1494 = vsel %vm1035, %v1487, %v1493
        %1496 = vxpose.xlu0.b32.start [1/16] %v1494, 128
        %1497 = vxpose.xlu0.b32.cont [2/16] 0.0, 128
        %1498 = vxpose.xlu0.b32.cont [3/16] 0.0, 128
        %1499 = vxpose.xlu0.b32.cont [4/16] 0.0, 128
        %1500 = vxpose.xlu0.b32.cont [5/16] 0.0, 128
        %1501 = vxpose.xlu0.b32.cont [6/16] 0.0, 128
        %1502 = vxpose.xlu0.b32.cont [7/16] 0.0, 128
        %1503 = vxpose.xlu0.b32.cont [8/16] 0.0, 128
        %1504 = vxpose.xlu0.b32.cont [9/16] 0.0, 128
        %1505 = vxpose.xlu0.b32.cont [10/16] 0.0, 128
        %1506 = vxpose.xlu0.b32.cont [11/16] 0.0, 128
        %1507 = vxpose.xlu0.b32.cont [12/16] 0.0, 128
        %1508 = vxpose.xlu0.b32.cont [13/16] 0.0, 128
        %1509 = vxpose.xlu0.b32.cont [14/16] 0.0, 128
        %1510 = vxpose.xlu0.b32.cont [15/16] 0.0, 128
        %1511 = vxpose.xlu0.b32.end [16/16] 0.0, 128
        %v1512 = vpop.trf.xlu0
        %v1513 = vpop.trf.xlu0
        %v1514 = vpop.trf.xlu0
        %v1515 = vpop.trf.xlu0
        %v1516 = vpop.trf.xlu0
        %v1517 = vpop.trf.xlu0
        %v1518 = vpop.trf.xlu0
        %v1519 = vpop.trf.xlu0
        %v1520 = vpop.trf.xlu0
        %v1521 = vpop.trf.xlu0
        %v1522 = vpop.trf.xlu0
        %v1523 = vpop.trf.xlu0
        %v1524 = vpop.trf.xlu0
        %v1525 = vpop.trf.xlu0
        %v1526 = vpop.trf.xlu0
        %v1527 = vpop.trf.xlu0
        %v1528 = vmul.f32 %v1073, %v1413
        %v1529 = vmul.f32 %v1078, %v1414
        %1531 = vrot.lane.b32.xlu0 %v1529, 124
        %v1532 = vpop.permute.xlu0 %1531
        %v1534 = vadd.f32 %v1528, %v1532
        %v1535 = vmul.f32 %v1088, %v1415
        %1537 = vrot.lane.b32.xlu0 %v1535, 120
        %v1538 = vpop.permute.xlu0 %1537
        %v1540 = vadd.f32 %v1534, %v1538
        %v1541 = vmul.f32 %v1098, %v1413
        %v1542 = vmul.f32 %v1103, %v1414
        %1544 = vrot.lane.b32.xlu0 %v1542, 124
        %v1545 = vpop.permute.xlu0 %1544
        %v1547 = vadd.f32 %v1541, %v1545
        %v1548 = vmul.f32 %v1113, %v1415
        %1550 = vrot.lane.b32.xlu0 %v1548, 120
        %v1551 = vpop.permute.xlu0 %1550
        %v1553 = vadd.f32 %v1547, %v1551
        %v1554 = vmul.f32 %v1123, %v1413
        %v1555 = vmul.f32 %v1128, %v1414
        %1557 = vrot.lane.b32.xlu0 %v1555, 124
        %v1558 = vpop.permute.xlu0 %1557
        %v1560 = vadd.f32 %v1554, %v1558
        %v1561 = vmul.f32 %v1138, %v1415
        %1563 = vrot.lane.b32.xlu0 %v1561, 120
        %v1564 = vpop.permute.xlu0 %1563
        %v1566 = vadd.f32 %v1560, %v1564
        %v1567 = vmul.f32 %v1540, %v1540
        %v1568 = vmul.f32 %v1553, %v1553
        %v1569 = vadd.f32 %v1567, %v1568
        %v1570 = vmul.f32 %v1566, %v1566
        %v1571 = vadd.f32 %v1569, %v1570
        %v1572 = vadd.f32 %v1571, 1e-12
        %v1573 = vrsqrt.pop %v1572
        %v1574 = vmul.f32 %v1571, %v1573
        %v1575 = vmul.f32 %v1540, %v1573
        %v1576 = vmul.f32 %v1553, %v1573
        %v1577 = vmul.f32 %v1566, %v1573
        %1579 = vrot.lane.b32.xlu0 %v1410, 8
        %v1580 = vpop.permute.xlu0 %1579
        %1583 = vrot.lane.b32.xlu0 %v1540, 8
        %v1584 = vpop.permute.xlu0 %1583
        %1587 = vrot.lane.b32.xlu0 %v1553, 12
        %v1588 = vpop.permute.xlu0 %1587
        %1591 = vrot.lane.b32.xlu0 %v1566, 16
        %v1592 = vpop.permute.xlu0 %1591
        %1595 = vrot.lane.b32.xlu0 %v1574, 20
        %v1596 = vpop.permute.xlu0 %1595
        %1599 = vrot.lane.b32.xlu0 %v1575, 24
        %v1600 = vpop.permute.xlu0 %1599
        %1603 = vrot.lane.b32.xlu0 %v1576, 28
        %v1604 = vpop.permute.xlu0 %1603
        %1607 = vrot.lane.b32.xlu0 %v1577, 32
        %v1608 = vpop.permute.xlu0 %1607
        %v1610 = vsel %vm847, %v1512, %v1580
        %v1611 = vsel %vm1190, %v1610, %v1584
        %v1612 = vsel %vm1192, %v1611, %v1588
        %v1613 = vsel %vm1194, %v1612, %v1592
        %v1614 = vsel %vm1196, %v1613, %v1596
        %v1615 = vsel %vm1198, %v1614, %v1600
        %v1616 = vsel %vm1200, %v1615, %v1604
        %v1617 = vsel %vm1202, %v1616, %v1608
        %s1618 = scalar_lea.vmem %s10, 56
        %v1619 = vld [vmem:[%s1618] sm:$0xff]
        %v1620 = vld [vmem:[%s1618 + $0x8] sm:$0xff]
        %v1621 = vld [vmem:[%s1618 + $0x10] sm:$0xff]
        %v1622 = vld [vmem:[%s1618 + $0x18] sm:$0xff]
        %v1623 = vld [vmem:[%s1618 + $0x20] sm:$0xff]
        %v1624 = vld [vmem:[%s1618 + $0x28] sm:$0xff]
        %v1625 = vld [vmem:[%s1618 + $0x30] sm:$0xf]
        %vm1626 = vcmask 424960
        %v1628 = vsel %vm1626, %v1617, 0
        %vm1630 = vcmask 1043456
        %v1632 = vsel %vm1630, %v1625, 0
        %1634 = vmatprep.subr.mxu0 0.0
        %1635 = vmatpush1.msra.mxu0 %v1619
        %1636 = vmatprep.subr.mxu0 0.0
        %1637 = vmatpush1.msra.mxu0 %v1620
        %1638 = vmatprep.subr.mxu0 0.0
        %1639 = vmatpush1.msra.mxu0 %v1621
        %1640 = vmatprep.subr.mxu0 0.0
        %1641 = vmatpush1.msra.mxu0 %v1622
        %1642 = vmatprep.subr.mxu0 0.0
        %1643 = vmatpush1.msra.mxu0 %v1623
        %1644 = vmatprep.subr.mxu0 0.0
        %1645 = vmatpush1.msra.mxu0 %v1624
        %1646 = vmatprep.subr.mxu0 0.0
        %1647 = vmatpush1.msra.mxu0 %v1632
        %1648 = vmatprep.subr.mxu0 0.0
        %1649 = vmatpush1.msra.mxu0 0.0
        %1650 = vmatprep.subr.mxu0 0.0
        %1651 = vmatpush1.msra.mxu0 0.0
        %1652 = vmatprep.subr.mxu0 0.0
        %1653 = vmatpush1.msra.mxu0 0.0
        %1654 = vmatprep.subr.mxu0 0.0
        %1655 = vmatpush1.msra.mxu0 0.0
        %1656 = vmatprep.subr.mxu0 0.0
        %1657 = vmatpush1.msra.mxu0 0.0
        %1658 = vmatprep.subr.mxu0 0.0
        %1659 = vmatpush1.msra.mxu0 0.0
        %1660 = vmatprep.subr.mxu0 0.0
        %1661 = vmatpush1.msra.mxu0 0.0
        %1662 = vmatprep.subr.mxu0 0.0
        %1663 = vmatpush1.msra.mxu0 0.0
        %1664 = vmatprep.subr.mxu0 0.0
        %1665 = vmatpush1.msra.mxu0 0.0
        %1666 = vmatprep.subr.mxu0 0.0
        %1667 = vmatpush1.msra.mxu0 0.0
        %1668 = vmatprep.subr.mxu0 0.0
        %1669 = vmatpush1.msra.mxu0 0.0
        %1670 = vmatprep.subr.mxu0 0.0
        %1671 = vmatpush1.msra.mxu0 0.0
        %1672 = vmatprep.subr.mxu0 0.0
        %1673 = vmatpush1.msra.mxu0 0.0
        %1674 = vmatprep.subr.mxu0 0.0
        %1675 = vmatpush1.msra.mxu0 0.0
        %1676 = vmatprep.subr.mxu0 0.0
        %1677 = vmatpush1.msra.mxu0 0.0
        %1678 = vmatprep.subr.mxu0 0.0
        %1679 = vmatpush1.msra.mxu0 0.0
        %1680 = vmatprep.subr.mxu0 0.0
        %1681 = vmatpush1.msra.mxu0 0.0
        %1682 = vmatprep.subr.mxu0 0.0
        %1683 = vmatpush1.msra.mxu0 0.0
        %1684 = vmatprep.subr.mxu0 0.0
        %1685 = vmatpush1.msra.mxu0 0.0
        %1686 = vmatprep.subr.mxu0 0.0
        %1687 = vmatpush1.msra.mxu0 0.0
        %1688 = vmatprep.subr.mxu0 0.0
        %1689 = vmatpush1.msra.mxu0 0.0
        %1690 = vmatprep.subr.mxu0 0.0
        %1691 = vmatpush1.msra.mxu0 0.0
        %1692 = vmatprep.subr.mxu0 0.0
        %1693 = vmatpush1.msra.mxu0 0.0
        %1694 = vmatprep.subr.mxu0 0.0
        %1695 = vmatpush1.msra.mxu0 0.0
        %1696 = vmatprep.subr.mxu0 0.0
        %1697 = vmatpush1.msra.mxu0 0.0
        %1698 = vmatprep.mubr.f32.mxu0 0.0
        %1699 = vmatmul.mubr.f32.gmra.mrb[0].mxu0 %v1628
        %v1700 = vpop.f32.mrb[0].mxu0
        %v1701 = vadd.f32 0.0, %v1700
        %v1702 = vpop.f32.mrb[0].mxu0
        %1703 = vdwg.mxu0
        %v1705 = vsel %vm1626, %v1203, 0
        %v1708 = vsel %vm1630, %v1210, 0
        %1710 = vmatprep.subr.mxu0 0.0
        %1711 = vmatpush1.msra.mxu0 %v1204
        %1712 = vmatprep.subr.mxu0 0.0
        %1713 = vmatpush1.msra.mxu0 %v1205
        %1714 = vmatprep.subr.mxu0 0.0
        %1715 = vmatpush1.msra.mxu0 %v1206
        %1716 = vmatprep.subr.mxu0 0.0
        %1717 = vmatpush1.msra.mxu0 %v1207
        %1718 = vmatprep.subr.mxu0 0.0
        %1719 = vmatpush1.msra.mxu0 %v1208
        %1720 = vmatprep.subr.mxu0 0.0
        %1721 = vmatpush1.msra.mxu0 %v1209
        %1722 = vmatprep.subr.mxu0 0.0
        %1723 = vmatpush1.msra.mxu0 %v1708
        %1724 = vmatprep.subr.mxu0 0.0
        %1725 = vmatpush1.msra.mxu0 0.0
        %1726 = vmatprep.subr.mxu0 0.0
        %1727 = vmatpush1.msra.mxu0 0.0
        %1728 = vmatprep.subr.mxu0 0.0
        %1729 = vmatpush1.msra.mxu0 0.0
        %1730 = vmatprep.subr.mxu0 0.0
        %1731 = vmatpush1.msra.mxu0 0.0
        %1732 = vmatprep.subr.mxu0 0.0
        %1733 = vmatpush1.msra.mxu0 0.0
        %1734 = vmatprep.subr.mxu0 0.0
        %1735 = vmatpush1.msra.mxu0 0.0
        %1736 = vmatprep.subr.mxu0 0.0
        %1737 = vmatpush1.msra.mxu0 0.0
        %1738 = vmatprep.subr.mxu0 0.0
        %1739 = vmatpush1.msra.mxu0 0.0
        %1740 = vmatprep.subr.mxu0 0.0
        %1741 = vmatpush1.msra.mxu0 0.0
        %1742 = vmatprep.subr.mxu0 0.0
        %1743 = vmatpush1.msra.mxu0 0.0
        %1744 = vmatprep.subr.mxu0 0.0
        %1745 = vmatpush1.msra.mxu0 0.0
        %1746 = vmatprep.subr.mxu0 0.0
        %1747 = vmatpush1.msra.mxu0 0.0
        %1748 = vmatprep.subr.mxu0 0.0
        %1749 = vmatpush1.msra.mxu0 0.0
        %1750 = vmatprep.subr.mxu0 0.0
        %1751 = vmatpush1.msra.mxu0 0.0
        %1752 = vmatprep.subr.mxu0 0.0
        %1753 = vmatpush1.msra.mxu0 0.0
        %1754 = vmatprep.subr.mxu0 0.0
        %1755 = vmatpush1.msra.mxu0 0.0
        %1756 = vmatprep.subr.mxu0 0.0
        %1757 = vmatpush1.msra.mxu0 0.0
        %1758 = vmatprep.subr.mxu0 0.0
        %1759 = vmatpush1.msra.mxu0 0.0
        %1760 = vmatprep.subr.mxu0 0.0
        %1761 = vmatpush1.msra.mxu0 0.0
        %1762 = vmatprep.subr.mxu0 0.0
        %1763 = vmatpush1.msra.mxu0 0.0
        %1764 = vmatprep.subr.mxu0 0.0
        %1765 = vmatpush1.msra.mxu0 0.0
        %1766 = vmatprep.subr.mxu0 0.0
        %1767 = vmatpush1.msra.mxu0 0.0
        %1768 = vmatprep.subr.mxu0 0.0
        %1769 = vmatpush1.msra.mxu0 0.0
        %1770 = vmatprep.subr.mxu0 0.0
        %1771 = vmatpush1.msra.mxu0 0.0
        %1772 = vmatprep.subr.mxu0 0.0
        %1773 = vmatpush1.msra.mxu0 0.0
        %1774 = vmatprep.mubr.f32.mxu0 0.0
        %1775 = vmatmul.mubr.f32.gmra.mrb[0].mxu0 %v1705
        %v1776 = vpop.f32.mrb[0].mxu0
        %v1777 = vadd.f32 %v1701, %v1776
        %v1778 = vpop.f32.mrb[0].mxu0
        %1779 = vdwg.mxu0
        %s1780 = scalar_lea.vmem %s654, 16
        %v1781 = vld [vmem:[%s1780] sm:$0xff]
        %s1782 = scalar_lea.vmem %s659, 64
        %v1783 = vld [vmem:[%s1782] sm:$0xff]
        %v1784 = vld [vmem:[%s1782 + $0x8] sm:$0xff]
        %v1785 = vld [vmem:[%s1782 + $0x10] sm:$0xff]
        %v1786 = vld [vmem:[%s1782 + $0x18] sm:$0x3f]
        %s1787 = sld [smem:[#allocation2 + $0x100]]
        %v1788 = vstv %s1787
        %v1789 = vmul.f32 %v1788, %v721
        %s1790 = sld [smem:[#allocation2 + $0x101]]
        %v1791 = vstv %s1790
        %v1792 = vmul.f32 %v1791, %v722
        %v1793 = vadd.f32 %v1789, %v1792
        %s1794 = sld [smem:[#allocation2 + $0x102]]
        %v1795 = vstv %s1794
        %v1796 = vmul.f32 %v1795, %v723
        %v1797 = vadd.f32 %v1793, %v1796
        %s1798 = sld [smem:[#allocation2 + $0x103]]
        %v1799 = vstv %s1798
        %v1800 = vmul.f32 %v1799, %v724
        %v1801 = vadd.f32 %v1797, %v1800
        %s1802 = sld [smem:[#allocation2 + $0x104]]
        %v1803 = vstv %s1802
        %v1804 = vmul.f32 %v1803, %v725
        %v1805 = vadd.f32 %v1801, %v1804
        %s1806 = sld [smem:[#allocation2 + $0x105]]
        %v1807 = vstv %s1806
        %v1808 = vmul.f32 %v1807, %v726
        %v1809 = vadd.f32 %v1805, %v1808
        %s1810 = sld [smem:[#allocation2 + $0x106]]
        %v1811 = vstv %s1810
        %v1812 = vmul.f32 %v1811, %v727
        %v1813 = vadd.f32 %v1809, %v1812
        %s1814 = sld [smem:[#allocation2 + $0x107]]
        %v1815 = vstv %s1814
        %v1816 = vmul.f32 %v1815, %v728
        %v1817 = vadd.f32 %v1813, %v1816
        %v1819 = vsel %vm767, %v1781, 0
        %v1822 = vsel %vm771, %v1786, 0
        %1824 = vmatprep.subr.mxu0 0.0
        %1825 = vmatpush1.msra.mxu0 %v1783
        %1826 = vmatprep.subr.mxu0 0.0
        %1827 = vmatpush1.msra.mxu0 %v1784
        %1828 = vmatprep.subr.mxu0 0.0
        %1829 = vmatpush1.msra.mxu0 %v1785
        %1830 = vmatprep.subr.mxu0 0.0
        %1831 = vmatpush1.msra.mxu0 %v1822
        %1832 = vmatprep.subr.mxu0 0.0
        %1833 = vmatpush1.msra.mxu0 0.0
        %1834 = vmatprep.subr.mxu0 0.0
        %1835 = vmatpush1.msra.mxu0 0.0
        %1836 = vmatprep.subr.mxu0 0.0
        %1837 = vmatpush1.msra.mxu0 0.0
        %1838 = vmatprep.subr.mxu0 0.0
        %1839 = vmatpush1.msra.mxu0 0.0
        %1840 = vmatprep.subr.mxu0 0.0
        %1841 = vmatpush1.msra.mxu0 0.0
        %1842 = vmatprep.subr.mxu0 0.0
        %1843 = vmatpush1.msra.mxu0 0.0
        %1844 = vmatprep.subr.mxu0 0.0
        %1845 = vmatpush1.msra.mxu0 0.0
        %1846 = vmatprep.subr.mxu0 0.0
        %1847 = vmatpush1.msra.mxu0 0.0
        %1848 = vmatprep.subr.mxu0 0.0
        %1849 = vmatpush1.msra.mxu0 0.0
        %1850 = vmatprep.subr.mxu0 0.0
        %1851 = vmatpush1.msra.mxu0 0.0
        %1852 = vmatprep.subr.mxu0 0.0
        %1853 = vmatpush1.msra.mxu0 0.0
        %1854 = vmatprep.subr.mxu0 0.0
        %1855 = vmatpush1.msra.mxu0 0.0
        %1856 = vmatprep.subr.mxu0 0.0
        %1857 = vmatpush1.msra.mxu0 0.0
        %1858 = vmatprep.subr.mxu0 0.0
        %1859 = vmatpush1.msra.mxu0 0.0
        %1860 = vmatprep.subr.mxu0 0.0
        %1861 = vmatpush1.msra.mxu0 0.0
        %1862 = vmatprep.subr.mxu0 0.0
        %1863 = vmatpush1.msra.mxu0 0.0
        %1864 = vmatprep.subr.mxu0 0.0
        %1865 = vmatpush1.msra.mxu0 0.0
        %1866 = vmatprep.subr.mxu0 0.0
        %1867 = vmatpush1.msra.mxu0 0.0
        %1868 = vmatprep.subr.mxu0 0.0
        %1869 = vmatpush1.msra.mxu0 0.0
        %1870 = vmatprep.subr.mxu0 0.0
        %1871 = vmatpush1.msra.mxu0 0.0
        %1872 = vmatprep.subr.mxu0 0.0
        %1873 = vmatpush1.msra.mxu0 0.0
        %1874 = vmatprep.subr.mxu0 0.0
        %1875 = vmatpush1.msra.mxu0 0.0
        %1876 = vmatprep.subr.mxu0 0.0
        %1877 = vmatpush1.msra.mxu0 0.0
        %1878 = vmatprep.subr.mxu0 0.0
        %1879 = vmatpush1.msra.mxu0 0.0
        %1880 = vmatprep.subr.mxu0 0.0
        %1881 = vmatpush1.msra.mxu0 0.0
        %1882 = vmatprep.subr.mxu0 0.0
        %1883 = vmatpush1.msra.mxu0 0.0
        %1884 = vmatprep.subr.mxu0 0.0
        %1885 = vmatpush1.msra.mxu0 0.0
        %1886 = vmatprep.subr.mxu0 0.0
        %1887 = vmatpush1.msra.mxu0 0.0
        %1888 = vmatprep.mubr.f32.mxu0 0.0
        %1889 = vmatmul.mubr.f32.gmra.mrb[0].mxu0 %v1819
        %v1890 = vpop.f32.mrb[0].mxu0
        %v1891 = vadd.f32 %v1817, %v1890
        %v1892 = vpop.f32.mrb[0].mxu0
        %1893 = vdwg.mxu0
        %v1894 = vmul.f32 %v1891, 0.57735026
        %v1895 = vadd.f32 %v1894, %v720
        %v1896 = vsel %vm847, %v1895, -inf
        %1897 = vmax.xlane.f32.xlu0 %v1896
        %v1898 = vpop.xlane.xlu0 %1897
        %v1899 = vsub.f32 %v1895, %v1898
        %v1900 = vmul.f32 %v1899, 1.442695
        %v1901 = vpow.pop %v1900
        %v1902 = vsel %vm847, %v1901, 0.0
        %1903 = vadd.xlane.f32.xlu0 %v1902
        %v1904 = vpop.xlane.xlu0 %1903
        %v1905 = vrcp.pop %v1904
        %v1906 = vmul.f32 %v1901, %v1905
        %s1907 = scalar_lea.vmem %s664, 16
        %v1908 = vld [vmem:[%s1907] sm:$0xff]
        %v1910 = vsel %vm847, %v1906, 0
        %1912 = vmatprep.subr.mxu0 0.0
        %1913 = vmatpush1.msra.mxu0 %v1908
        %1914 = vmatprep.subr.mxu0 0.0
        %1915 = vmatpush1.msra.mxu0 0.0
        %1916 = vmatprep.subr.mxu0 0.0
        %1917 = vmatpush1.msra.mxu0 0.0
        %1918 = vmatprep.subr.mxu0 0.0
        %1919 = vmatpush1.msra.mxu0 0.0
        %1920 = vmatprep.subr.mxu0 0.0
        %1921 = vmatpush1.msra.mxu0 0.0
        %1922 = vmatprep.subr.mxu0 0.0
        %1923 = vmatpush1.msra.mxu0 0.0
        %1924 = vmatprep.subr.mxu0 0.0
        %1925 = vmatpush1.msra.mxu0 0.0
        %1926 = vmatprep.subr.mxu0 0.0
        %1927 = vmatpush1.msra.mxu0 0.0
        %1928 = vmatprep.subr.mxu0 0.0
        %1929 = vmatpush1.msra.mxu0 0.0
        %1930 = vmatprep.subr.mxu0 0.0
        %1931 = vmatpush1.msra.mxu0 0.0
        %1932 = vmatprep.subr.mxu0 0.0
        %1933 = vmatpush1.msra.mxu0 0.0
        %1934 = vmatprep.subr.mxu0 0.0
        %1935 = vmatpush1.msra.mxu0 0.0
        %1936 = vmatprep.subr.mxu0 0.0
        %1937 = vmatpush1.msra.mxu0 0.0
        %1938 = vmatprep.subr.mxu0 0.0
        %1939 = vmatpush1.msra.mxu0 0.0
        %1940 = vmatprep.subr.mxu0 0.0
        %1941 = vmatpush1.msra.mxu0 0.0
        %1942 = vmatprep.subr.mxu0 0.0
        %1943 = vmatpush1.msra.mxu0 0.0
        %1944 = vmatprep.subr.mxu0 0.0
        %1945 = vmatpush1.msra.mxu0 0.0
        %1946 = vmatprep.subr.mxu0 0.0
        %1947 = vmatpush1.msra.mxu0 0.0
        %1948 = vmatprep.subr.mxu0 0.0
        %1949 = vmatpush1.msra.mxu0 0.0
        %1950 = vmatprep.subr.mxu0 0.0
        %1951 = vmatpush1.msra.mxu0 0.0
        %1952 = vmatprep.subr.mxu0 0.0
        %1953 = vmatpush1.msra.mxu0 0.0
        %1954 = vmatprep.subr.mxu0 0.0
        %1955 = vmatpush1.msra.mxu0 0.0
        %1956 = vmatprep.subr.mxu0 0.0
        %1957 = vmatpush1.msra.mxu0 0.0
        %1958 = vmatprep.subr.mxu0 0.0
        %1959 = vmatpush1.msra.mxu0 0.0
        %1960 = vmatprep.subr.mxu0 0.0
        %1961 = vmatpush1.msra.mxu0 0.0
        %1962 = vmatprep.subr.mxu0 0.0
        %1963 = vmatpush1.msra.mxu0 0.0
        %1964 = vmatprep.subr.mxu0 0.0
        %1965 = vmatpush1.msra.mxu0 0.0
        %1966 = vmatprep.subr.mxu0 0.0
        %1967 = vmatpush1.msra.mxu0 0.0
        %1968 = vmatprep.subr.mxu0 0.0
        %1969 = vmatpush1.msra.mxu0 0.0
        %1970 = vmatprep.subr.mxu0 0.0
        %1971 = vmatpush1.msra.mxu0 0.0
        %1972 = vmatprep.subr.mxu0 0.0
        %1973 = vmatpush1.msra.mxu0 0.0
        %1974 = vmatprep.subr.mxu0 0.0
        %1975 = vmatpush1.msra.mxu0 0.0
        %1976 = vmatprep.mubr.f32.mxu0 0.0
        %1977 = vmatmul.mubr.f32.gmra.mrb[0].mxu0 %v1910
        %v1978 = vpop.f32.mrb[0].mxu0
        %v1979 = vadd.f32 0.0, %v1978
        %v1980 = vpop.f32.mrb[0].mxu0
        %1981 = vdwg.mxu0
        %v1982 = vsub.f32 %v1979, %v936
        %v1983 = vsub.f32 %v1979, %v941
        %v1984 = vsub.f32 %v1979, %v946
        %v1985 = vmul.f32 %v1906, %v721
        %v1986 = vmul.f32 %v1906, %v722
        %v1987 = vmul.f32 %v1906, %v723
        %v1988 = vmul.f32 %v1906, %v724
        %v1989 = vmul.f32 %v1906, %v725
        %v1990 = vmul.f32 %v1906, %v726
        %v1991 = vmul.f32 %v1906, %v727
        %v1992 = vmul.f32 %v1906, %v728
        %v1993 = vsel %vm847, %v1985, 0.0
        %1994 = vadd.xlane.f32.xlu0 %v1993
        %v1995 = vpop.xlane.xlu0 %1994
        %v1996 = vsel %vm847, %v1986, 0.0
        %1997 = vadd.xlane.f32.xlu0 %v1996
        %v1998 = vpop.xlane.xlu0 %1997
        %v1999 = vsel %vm847, %v1987, 0.0
        %2000 = vadd.xlane.f32.xlu0 %v1999
        %v2001 = vpop.xlane.xlu0 %2000
        %v2002 = vsel %vm847, %v1988, 0.0
        %2003 = vadd.xlane.f32.xlu0 %v2002
        %v2004 = vpop.xlane.xlu0 %2003
        %v2005 = vsel %vm847, %v1989, 0.0
        %2006 = vadd.xlane.f32.xlu0 %v2005
        %v2007 = vpop.xlane.xlu0 %2006
        %v2008 = vsel %vm847, %v1990, 0.0
        %2009 = vadd.xlane.f32.xlu0 %v2008
        %v2010 = vpop.xlane.xlu0 %2009
        %v2011 = vsel %vm847, %v1991, 0.0
        %2012 = vadd.xlane.f32.xlu0 %v2011
        %v2013 = vpop.xlane.xlu0 %2012
        %v2014 = vsel %vm847, %v1992, 0.0
        %2015 = vadd.xlane.f32.xlu0 %v2014
        %v2016 = vpop.xlane.xlu0 %2015
        %v2025 = vlaneseq
        %v2026 = vshrl.u32 %v2025, 7
        %v2027 = vsub.s32 %v990, %v2026
        %v2028 = vrot.slane %v1995, %v2027
        %v2029 = vlaneseq
        %v2030 = vshrl.u32 %v2029, 7
        %v2031 = vsub.s32 %v990, %v2030
        %v2032 = vrot.slane %v1998, %v2031
        %v2033 = vlaneseq
        %v2034 = vshrl.u32 %v2033, 7
        %v2035 = vsub.s32 %v990, %v2034
        %v2036 = vrot.slane %v2001, %v2035
        %v2037 = vlaneseq
        %v2038 = vshrl.u32 %v2037, 7
        %v2039 = vsub.s32 %v990, %v2038
        %v2040 = vrot.slane %v2004, %v2039
        %v2041 = vlaneseq
        %v2042 = vshrl.u32 %v2041, 7
        %v2043 = vsub.s32 %v990, %v2042
        %v2044 = vrot.slane %v2007, %v2043
        %v2045 = vlaneseq
        %v2046 = vshrl.u32 %v2045, 7
        %v2047 = vsub.s32 %v990, %v2046
        %v2048 = vrot.slane %v2010, %v2047
        %v2049 = vlaneseq
        %v2050 = vshrl.u32 %v2049, 7
        %v2051 = vsub.s32 %v990, %v2050
        %v2052 = vrot.slane %v2013, %v2051
        %v2053 = vlaneseq
        %v2054 = vshrl.u32 %v2053, 7
        %v2055 = vsub.s32 %v990, %v2054
        %v2056 = vrot.slane %v2016, %v2055
        %v2057 = vsel %vm1023, %v2032, %v2028
        %v2058 = vsel %vm1025, %v2036, %v2057
        %v2059 = vsel %vm1027, %v2040, %v2058
        %v2060 = vsel %vm1029, %v2044, %v2059
        %v2061 = vsel %vm1031, %v2048, %v2060
        %v2062 = vsel %vm1033, %v2052, %v2061
        %v2063 = vsel %vm1035, %v2056, %v2062
        %2065 = vxpose.xlu0.b32.start [1/16] %v2063, 128
        %2066 = vxpose.xlu0.b32.cont [2/16] 0.0, 128
        %2067 = vxpose.xlu0.b32.cont [3/16] 0.0, 128
        %2068 = vxpose.xlu0.b32.cont [4/16] 0.0, 128
        %2069 = vxpose.xlu0.b32.cont [5/16] 0.0, 128
        %2070 = vxpose.xlu0.b32.cont [6/16] 0.0, 128
        %2071 = vxpose.xlu0.b32.cont [7/16] 0.0, 128
        %2072 = vxpose.xlu0.b32.cont [8/16] 0.0, 128
        %2073 = vxpose.xlu0.b32.cont [9/16] 0.0, 128
        %2074 = vxpose.xlu0.b32.cont [10/16] 0.0, 128
        %2075 = vxpose.xlu0.b32.cont [11/16] 0.0, 128
        %2076 = vxpose.xlu0.b32.cont [12/16] 0.0, 128
        %2077 = vxpose.xlu0.b32.cont [13/16] 0.0, 128
        %2078 = vxpose.xlu0.b32.cont [14/16] 0.0, 128
        %2079 = vxpose.xlu0.b32.cont [15/16] 0.0, 128
        %2080 = vxpose.xlu0.b32.end [16/16] 0.0, 128
        %v2081 = vpop.trf.xlu0
        %v2082 = vpop.trf.xlu0
        %v2083 = vpop.trf.xlu0
        %v2084 = vpop.trf.xlu0
        %v2085 = vpop.trf.xlu0
        %v2086 = vpop.trf.xlu0
        %v2087 = vpop.trf.xlu0
        %v2088 = vpop.trf.xlu0
        %v2089 = vpop.trf.xlu0
        %v2090 = vpop.trf.xlu0
        %v2091 = vpop.trf.xlu0
        %v2092 = vpop.trf.xlu0
        %v2093 = vpop.trf.xlu0
        %v2094 = vpop.trf.xlu0
        %v2095 = vpop.trf.xlu0
        %v2096 = vpop.trf.xlu0
        %v2097 = vmul.f32 %v1073, %v1982
        %v2098 = vmul.f32 %v1078, %v1983
        %2100 = vrot.lane.b32.xlu0 %v2098, 124
        %v2101 = vpop.permute.xlu0 %2100
        %v2103 = vadd.f32 %v2097, %v2101
        %v2104 = vmul.f32 %v1088, %v1984
        %2106 = vrot.lane.b32.xlu0 %v2104, 120
        %v2107 = vpop.permute.xlu0 %2106
        %v2109 = vadd.f32 %v2103, %v2107
        %v2110 = vmul.f32 %v1098, %v1982
        %v2111 = vmul.f32 %v1103, %v1983
        %2113 = vrot.lane.b32.xlu0 %v2111, 124
        %v2114 = vpop.permute.xlu0 %2113
        %v2116 = vadd.f32 %v2110, %v2114
        %v2117 = vmul.f32 %v1113, %v1984
        %2119 = vrot.lane.b32.xlu0 %v2117, 120
        %v2120 = vpop.permute.xlu0 %2119
        %v2122 = vadd.f32 %v2116, %v2120
        %v2123 = vmul.f32 %v1123, %v1982
        %v2124 = vmul.f32 %v1128, %v1983
        %2126 = vrot.lane.b32.xlu0 %v2124, 124
        %v2127 = vpop.permute.xlu0 %2126
        %v2129 = vadd.f32 %v2123, %v2127
        %v2130 = vmul.f32 %v1138, %v1984
        %2132 = vrot.lane.b32.xlu0 %v2130, 120
        %v2133 = vpop.permute.xlu0 %2132
        %v2135 = vadd.f32 %v2129, %v2133
        %v2136 = vmul.f32 %v2109, %v2109
        %v2137 = vmul.f32 %v2122, %v2122
        %v2138 = vadd.f32 %v2136, %v2137
        %v2139 = vmul.f32 %v2135, %v2135
        %v2140 = vadd.f32 %v2138, %v2139
        %v2141 = vadd.f32 %v2140, 1e-12
        %v2142 = vrsqrt.pop %v2141
        %v2143 = vmul.f32 %v2140, %v2142
        %v2144 = vmul.f32 %v2109, %v2142
        %v2145 = vmul.f32 %v2122, %v2142
        %v2146 = vmul.f32 %v2135, %v2142
        %2148 = vrot.lane.b32.xlu0 %v1979, 8
        %v2149 = vpop.permute.xlu0 %2148
        %2152 = vrot.lane.b32.xlu0 %v2109, 8
        %v2153 = vpop.permute.xlu0 %2152
        %2156 = vrot.lane.b32.xlu0 %v2122, 12
        %v2157 = vpop.permute.xlu0 %2156
        %2160 = vrot.lane.b32.xlu0 %v2135, 16
        %v2161 = vpop.permute.xlu0 %2160
        %2164 = vrot.lane.b32.xlu0 %v2143, 20
        %v2165 = vpop.permute.xlu0 %2164
        %2168 = vrot.lane.b32.xlu0 %v2144, 24
        %v2169 = vpop.permute.xlu0 %2168
        %2172 = vrot.lane.b32.xlu0 %v2145, 28
        %v2173 = vpop.permute.xlu0 %2172
        %2176 = vrot.lane.b32.xlu0 %v2146, 32
        %v2177 = vpop.permute.xlu0 %2176
        %v2179 = vsel %vm847, %v2081, %v2149
        %v2180 = vsel %vm1190, %v2179, %v2153
        %v2181 = vsel %vm1192, %v2180, %v2157
        %v2182 = vsel %vm1194, %v2181, %v2161
        %v2183 = vsel %vm1196, %v2182, %v2165
        %v2184 = vsel %vm1198, %v2183, %v2169
        %v2185 = vsel %vm1200, %v2184, %v2173
        %v2186 = vsel %vm1202, %v2185, %v2177
        %s2187 = scalar_lea.vmem %s10, 112
        %v2188 = vld [vmem:[%s2187] sm:$0xff]
        %v2189 = vld [vmem:[%s2187 + $0x8] sm:$0xff]
        %v2190 = vld [vmem:[%s2187 + $0x10] sm:$0xff]
        %v2191 = vld [vmem:[%s2187 + $0x18] sm:$0xff]
        %v2192 = vld [vmem:[%s2187 + $0x20] sm:$0xff]
        %v2193 = vld [vmem:[%s2187 + $0x28] sm:$0xff]
        %v2194 = vld [vmem:[%s2187 + $0x30] sm:$0xf]
        %v2196 = vsel %vm1626, %v2186, 0
        %v2199 = vsel %vm1630, %v2194, 0
        %2201 = vmatprep.subr.mxu0 0.0
        %2202 = vmatpush1.msra.mxu0 %v2188
        %2203 = vmatprep.subr.mxu0 0.0
        %2204 = vmatpush1.msra.mxu0 %v2189
        %2205 = vmatprep.subr.mxu0 0.0
        %2206 = vmatpush1.msra.mxu0 %v2190
        %2207 = vmatprep.subr.mxu0 0.0
        %2208 = vmatpush1.msra.mxu0 %v2191
        %2209 = vmatprep.subr.mxu0 0.0
        %2210 = vmatpush1.msra.mxu0 %v2192
        %2211 = vmatprep.subr.mxu0 0.0
        %2212 = vmatpush1.msra.mxu0 %v2193
        %2213 = vmatprep.subr.mxu0 0.0
        %2214 = vmatpush1.msra.mxu0 %v2199
        %2215 = vmatprep.subr.mxu0 0.0
        %2216 = vmatpush1.msra.mxu0 0.0
        %2217 = vmatprep.subr.mxu0 0.0
        %2218 = vmatpush1.msra.mxu0 0.0
        %2219 = vmatprep.subr.mxu0 0.0
        %2220 = vmatpush1.msra.mxu0 0.0
        %2221 = vmatprep.subr.mxu0 0.0
        %2222 = vmatpush1.msra.mxu0 0.0
        %2223 = vmatprep.subr.mxu0 0.0
        %2224 = vmatpush1.msra.mxu0 0.0
        %2225 = vmatprep.subr.mxu0 0.0
        %2226 = vmatpush1.msra.mxu0 0.0
        %2227 = vmatprep.subr.mxu0 0.0
        %2228 = vmatpush1.msra.mxu0 0.0
        %2229 = vmatprep.subr.mxu0 0.0
        %2230 = vmatpush1.msra.mxu0 0.0
        %2231 = vmatprep.subr.mxu0 0.0
        %2232 = vmatpush1.msra.mxu0 0.0
        %2233 = vmatprep.subr.mxu0 0.0
        %2234 = vmatpush1.msra.mxu0 0.0
        %2235 = vmatprep.subr.mxu0 0.0
        %2236 = vmatpush1.msra.mxu0 0.0
        %2237 = vmatprep.subr.mxu0 0.0
        %2238 = vmatpush1.msra.mxu0 0.0
        %2239 = vmatprep.subr.mxu0 0.0
        %2240 = vmatpush1.msra.mxu0 0.0
        %2241 = vmatprep.subr.mxu0 0.0
        %2242 = vmatpush1.msra.mxu0 0.0
        %2243 = vmatprep.subr.mxu0 0.0
        %2244 = vmatpush1.msra.mxu0 0.0
        %2245 = vmatprep.subr.mxu0 0.0
        %2246 = vmatpush1.msra.mxu0 0.0
        %2247 = vmatprep.subr.mxu0 0.0
        %2248 = vmatpush1.msra.mxu0 0.0
        %2249 = vmatprep.subr.mxu0 0.0
        %2250 = vmatpush1.msra.mxu0 0.0
        %2251 = vmatprep.subr.mxu0 0.0
        %2252 = vmatpush1.msra.mxu0 0.0
        %2253 = vmatprep.subr.mxu0 0.0
        %2254 = vmatpush1.msra.mxu0 0.0
        %2255 = vmatprep.subr.mxu0 0.0
        %2256 = vmatpush1.msra.mxu0 0.0
        %2257 = vmatprep.subr.mxu0 0.0
        %2258 = vmatpush1.msra.mxu0 0.0
        %2259 = vmatprep.subr.mxu0 0.0
        %2260 = vmatpush1.msra.mxu0 0.0
        %2261 = vmatprep.subr.mxu0 0.0
        %2262 = vmatpush1.msra.mxu0 0.0
        %2263 = vmatprep.subr.mxu0 0.0
        %2264 = vmatpush1.msra.mxu0 0.0
        %2265 = vmatprep.mubr.f32.mxu0 0.0
        %2266 = vmatmul.mubr.f32.gmra.mrb[0].mxu0 %v2196
        %v2267 = vpop.f32.mrb[0].mxu0
        %v2268 = vadd.f32 0.0, %v2267
        %v2269 = vpop.f32.mrb[0].mxu0
        %2270 = vdwg.mxu0
        %v2271 = vadd.f32 %v1777, %v2268
        %s2272 = scalar_lea.vmem %s654, 24
        %v2273 = vld [vmem:[%s2272] sm:$0xff]
        %s2274 = scalar_lea.vmem %s659, 96
        %v2275 = vld [vmem:[%s2274] sm:$0xff]
        %v2276 = vld [vmem:[%s2274 + $0x8] sm:$0xff]
        %v2277 = vld [vmem:[%s2274 + $0x10] sm:$0xff]
        %v2278 = vld [vmem:[%s2274 + $0x18] sm:$0x3f]
        %s2279 = sld [smem:[#allocation2 + $0x180]]
        %v2280 = vstv %s2279
        %v2281 = vmul.f32 %v2280, %v721
        %s2282 = sld [smem:[#allocation2 + $0x181]]
        %v2283 = vstv %s2282
        %v2284 = vmul.f32 %v2283, %v722
        %v2285 = vadd.f32 %v2281, %v2284
        %s2286 = sld [smem:[#allocation2 + $0x182]]
        %v2287 = vstv %s2286
        %v2288 = vmul.f32 %v2287, %v723
        %v2289 = vadd.f32 %v2285, %v2288
        %s2290 = sld [smem:[#allocation2 + $0x183]]
        %v2291 = vstv %s2290
        %v2292 = vmul.f32 %v2291, %v724
        %v2293 = vadd.f32 %v2289, %v2292
        %s2294 = sld [smem:[#allocation2 + $0x184]]
        %v2295 = vstv %s2294
        %v2296 = vmul.f32 %v2295, %v725
        %v2297 = vadd.f32 %v2293, %v2296
        %s2298 = sld [smem:[#allocation2 + $0x185]]
        %v2299 = vstv %s2298
        %v2300 = vmul.f32 %v2299, %v726
        %v2301 = vadd.f32 %v2297, %v2300
        %s2302 = sld [smem:[#allocation2 + $0x186]]
        %v2303 = vstv %s2302
        %v2304 = vmul.f32 %v2303, %v727
        %v2305 = vadd.f32 %v2301, %v2304
        %s2306 = sld [smem:[#allocation2 + $0x187]]
        %v2307 = vstv %s2306
        %v2308 = vmul.f32 %v2307, %v728
        %v2309 = vadd.f32 %v2305, %v2308
        %v2311 = vsel %vm767, %v2273, 0
        %v2314 = vsel %vm771, %v2278, 0
        %2316 = vmatprep.subr.mxu0 0.0
        %2317 = vmatpush1.msra.mxu0 %v2275
        %2318 = vmatprep.subr.mxu0 0.0
        %2319 = vmatpush1.msra.mxu0 %v2276
        %2320 = vmatprep.subr.mxu0 0.0
        %2321 = vmatpush1.msra.mxu0 %v2277
        %2322 = vmatprep.subr.mxu0 0.0
        %2323 = vmatpush1.msra.mxu0 %v2314
        %2324 = vmatprep.subr.mxu0 0.0
        %2325 = vmatpush1.msra.mxu0 0.0
        %2326 = vmatprep.subr.mxu0 0.0
        %2327 = vmatpush1.msra.mxu0 0.0
        %2328 = vmatprep.subr.mxu0 0.0
        %2329 = vmatpush1.msra.mxu0 0.0
        %2330 = vmatprep.subr.mxu0 0.0
        %2331 = vmatpush1.msra.mxu0 0.0
        %2332 = vmatprep.subr.mxu0 0.0
        %2333 = vmatpush1.msra.mxu0 0.0
        %2334 = vmatprep.subr.mxu0 0.0
        %2335 = vmatpush1.msra.mxu0 0.0
        %2336 = vmatprep.subr.mxu0 0.0
        %2337 = vmatpush1.msra.mxu0 0.0
        %2338 = vmatprep.subr.mxu0 0.0
        %2339 = vmatpush1.msra.mxu0 0.0
        %2340 = vmatprep.subr.mxu0 0.0
        %2341 = vmatpush1.msra.mxu0 0.0
        %2342 = vmatprep.subr.mxu0 0.0
        %2343 = vmatpush1.msra.mxu0 0.0
        %2344 = vmatprep.subr.mxu0 0.0
        %2345 = vmatpush1.msra.mxu0 0.0
        %2346 = vmatprep.subr.mxu0 0.0
        %2347 = vmatpush1.msra.mxu0 0.0
        %2348 = vmatprep.subr.mxu0 0.0
        %2349 = vmatpush1.msra.mxu0 0.0
        %2350 = vmatprep.subr.mxu0 0.0
        %2351 = vmatpush1.msra.mxu0 0.0
        %2352 = vmatprep.subr.mxu0 0.0
        %2353 = vmatpush1.msra.mxu0 0.0
        %2354 = vmatprep.subr.mxu0 0.0
        %2355 = vmatpush1.msra.mxu0 0.0
        %2356 = vmatprep.subr.mxu0 0.0
        %2357 = vmatpush1.msra.mxu0 0.0
        %2358 = vmatprep.subr.mxu0 0.0
        %2359 = vmatpush1.msra.mxu0 0.0
        %2360 = vmatprep.subr.mxu0 0.0
        %2361 = vmatpush1.msra.mxu0 0.0
        %2362 = vmatprep.subr.mxu0 0.0
        %2363 = vmatpush1.msra.mxu0 0.0
        %2364 = vmatprep.subr.mxu0 0.0
        %2365 = vmatpush1.msra.mxu0 0.0
        %2366 = vmatprep.subr.mxu0 0.0
        %2367 = vmatpush1.msra.mxu0 0.0
        %2368 = vmatprep.subr.mxu0 0.0
        %2369 = vmatpush1.msra.mxu0 0.0
        %2370 = vmatprep.subr.mxu0 0.0
        %2371 = vmatpush1.msra.mxu0 0.0
        %2372 = vmatprep.subr.mxu0 0.0
        %2373 = vmatpush1.msra.mxu0 0.0
        %2374 = vmatprep.subr.mxu0 0.0
        %2375 = vmatpush1.msra.mxu0 0.0
        %2376 = vmatprep.subr.mxu0 0.0
        %2377 = vmatpush1.msra.mxu0 0.0
        %2378 = vmatprep.subr.mxu0 0.0
        %2379 = vmatpush1.msra.mxu0 0.0
        %2380 = vmatprep.mubr.f32.mxu0 0.0
        %2381 = vmatmul.mubr.f32.gmra.mrb[0].mxu0 %v2311
        %v2382 = vpop.f32.mrb[0].mxu0
        %v2383 = vadd.f32 %v2309, %v2382
        %v2384 = vpop.f32.mrb[0].mxu0
        %2385 = vdwg.mxu0
        %v2386 = vmul.f32 %v2383, 0.57735026
        %v2387 = vadd.f32 %v2386, %v720
        %v2388 = vsel %vm847, %v2387, -inf
        %2389 = vmax.xlane.f32.xlu0 %v2388
        %v2390 = vpop.xlane.xlu0 %2389
        %v2391 = vsub.f32 %v2387, %v2390
        %v2392 = vmul.f32 %v2391, 1.442695
        %v2393 = vpow.pop %v2392
        %v2394 = vsel %vm847, %v2393, 0.0
        %2395 = vadd.xlane.f32.xlu0 %v2394
        %v2396 = vpop.xlane.xlu0 %2395
        %v2397 = vrcp.pop %v2396
        %v2398 = vmul.f32 %v2393, %v2397
        %s2399 = scalar_lea.vmem %s664, 24
        %v2400 = vld [vmem:[%s2399] sm:$0xff]
        %v2402 = vsel %vm847, %v2398, 0
        %2404 = vmatprep.subr.mxu0 0.0
        %2405 = vmatpush1.msra.mxu0 %v2400
        %2406 = vmatprep.subr.mxu0 0.0
        %2407 = vmatpush1.msra.mxu0 0.0
        %2408 = vmatprep.subr.mxu0 0.0
        %2409 = vmatpush1.msra.mxu0 0.0
        %2410 = vmatprep.subr.mxu0 0.0
        %2411 = vmatpush1.msra.mxu0 0.0
        %2412 = vmatprep.subr.mxu0 0.0
        %2413 = vmatpush1.msra.mxu0 0.0
        %2414 = vmatprep.subr.mxu0 0.0
        %2415 = vmatpush1.msra.mxu0 0.0
        %2416 = vmatprep.subr.mxu0 0.0
        %2417 = vmatpush1.msra.mxu0 0.0
        %2418 = vmatprep.subr.mxu0 0.0
        %2419 = vmatpush1.msra.mxu0 0.0
        %2420 = vmatprep.subr.mxu0 0.0
        %2421 = vmatpush1.msra.mxu0 0.0
        %2422 = vmatprep.subr.mxu0 0.0
        %2423 = vmatpush1.msra.mxu0 0.0
        %2424 = vmatprep.subr.mxu0 0.0
        %2425 = vmatpush1.msra.mxu0 0.0
        %2426 = vmatprep.subr.mxu0 0.0
        %2427 = vmatpush1.msra.mxu0 0.0
        %2428 = vmatprep.subr.mxu0 0.0
        %2429 = vmatpush1.msra.mxu0 0.0
        %2430 = vmatprep.subr.mxu0 0.0
        %2431 = vmatpush1.msra.mxu0 0.0
        %2432 = vmatprep.subr.mxu0 0.0
        %2433 = vmatpush1.msra.mxu0 0.0
        %2434 = vmatprep.subr.mxu0 0.0
        %2435 = vmatpush1.msra.mxu0 0.0
        %2436 = vmatprep.subr.mxu0 0.0
        %2437 = vmatpush1.msra.mxu0 0.0
        %2438 = vmatprep.subr.mxu0 0.0
        %2439 = vmatpush1.msra.mxu0 0.0
        %2440 = vmatprep.subr.mxu0 0.0
        %2441 = vmatpush1.msra.mxu0 0.0
        %2442 = vmatprep.subr.mxu0 0.0
        %2443 = vmatpush1.msra.mxu0 0.0
        %2444 = vmatprep.subr.mxu0 0.0
        %2445 = vmatpush1.msra.mxu0 0.0
        %2446 = vmatprep.subr.mxu0 0.0
        %2447 = vmatpush1.msra.mxu0 0.0
        %2448 = vmatprep.subr.mxu0 0.0
        %2449 = vmatpush1.msra.mxu0 0.0
        %2450 = vmatprep.subr.mxu0 0.0
        %2451 = vmatpush1.msra.mxu0 0.0
        %2452 = vmatprep.subr.mxu0 0.0
        %2453 = vmatpush1.msra.mxu0 0.0
        %2454 = vmatprep.subr.mxu0 0.0
        %2455 = vmatpush1.msra.mxu0 0.0
        %2456 = vmatprep.subr.mxu0 0.0
        %2457 = vmatpush1.msra.mxu0 0.0
        %2458 = vmatprep.subr.mxu0 0.0
        %2459 = vmatpush1.msra.mxu0 0.0
        %2460 = vmatprep.subr.mxu0 0.0
        %2461 = vmatpush1.msra.mxu0 0.0
        %2462 = vmatprep.subr.mxu0 0.0
        %2463 = vmatpush1.msra.mxu0 0.0
        %2464 = vmatprep.subr.mxu0 0.0
        %2465 = vmatpush1.msra.mxu0 0.0
        %2466 = vmatprep.subr.mxu0 0.0
        %2467 = vmatpush1.msra.mxu0 0.0
        %2468 = vmatprep.mubr.f32.mxu0 0.0
        %2469 = vmatmul.mubr.f32.gmra.mrb[0].mxu0 %v2402
        %v2470 = vpop.f32.mrb[0].mxu0
        %v2471 = vadd.f32 0.0, %v2470
        %v2472 = vpop.f32.mrb[0].mxu0
        %2473 = vdwg.mxu0
        %v2474 = vsub.f32 %v2471, %v936
        %v2475 = vsub.f32 %v2471, %v941
        %v2476 = vsub.f32 %v2471, %v946
        %v2477 = vmul.f32 %v2398, %v721
        %v2478 = vmul.f32 %v2398, %v722
        %v2479 = vmul.f32 %v2398, %v723
        %v2480 = vmul.f32 %v2398, %v724
        %v2481 = vmul.f32 %v2398, %v725
        %v2482 = vmul.f32 %v2398, %v726
        %v2483 = vmul.f32 %v2398, %v727
        %v2484 = vmul.f32 %v2398, %v728
        %v2485 = vsel %vm847, %v2477, 0.0
        %2486 = vadd.xlane.f32.xlu0 %v2485
        %v2487 = vpop.xlane.xlu0 %2486
        %v2488 = vsel %vm847, %v2478, 0.0
        %2489 = vadd.xlane.f32.xlu0 %v2488
        %v2490 = vpop.xlane.xlu0 %2489
        %v2491 = vsel %vm847, %v2479, 0.0
        %2492 = vadd.xlane.f32.xlu0 %v2491
        %v2493 = vpop.xlane.xlu0 %2492
        %v2494 = vsel %vm847, %v2480, 0.0
        %2495 = vadd.xlane.f32.xlu0 %v2494
        %v2496 = vpop.xlane.xlu0 %2495
        %v2497 = vsel %vm847, %v2481, 0.0
        %2498 = vadd.xlane.f32.xlu0 %v2497
        %v2499 = vpop.xlane.xlu0 %2498
        %v2500 = vsel %vm847, %v2482, 0.0
        %2501 = vadd.xlane.f32.xlu0 %v2500
        %v2502 = vpop.xlane.xlu0 %2501
        %v2503 = vsel %vm847, %v2483, 0.0
        %2504 = vadd.xlane.f32.xlu0 %v2503
        %v2505 = vpop.xlane.xlu0 %2504
        %v2506 = vsel %vm847, %v2484, 0.0
        %2507 = vadd.xlane.f32.xlu0 %v2506
        %v2508 = vpop.xlane.xlu0 %2507
        %v2517 = vlaneseq
        %v2518 = vshrl.u32 %v2517, 7
        %v2519 = vsub.s32 %v990, %v2518
        %v2520 = vrot.slane %v2487, %v2519
        %v2521 = vlaneseq
        %v2522 = vshrl.u32 %v2521, 7
        %v2523 = vsub.s32 %v990, %v2522
        %v2524 = vrot.slane %v2490, %v2523
        %v2525 = vlaneseq
        %v2526 = vshrl.u32 %v2525, 7
        %v2527 = vsub.s32 %v990, %v2526
        %v2528 = vrot.slane %v2493, %v2527
        %v2529 = vlaneseq
        %v2530 = vshrl.u32 %v2529, 7
        %v2531 = vsub.s32 %v990, %v2530
        %v2532 = vrot.slane %v2496, %v2531
        %v2533 = vlaneseq
        %v2534 = vshrl.u32 %v2533, 7
        %v2535 = vsub.s32 %v990, %v2534
        %v2536 = vrot.slane %v2499, %v2535
        %v2537 = vlaneseq
        %v2538 = vshrl.u32 %v2537, 7
        %v2539 = vsub.s32 %v990, %v2538
        %v2540 = vrot.slane %v2502, %v2539
        %v2541 = vlaneseq
        %v2542 = vshrl.u32 %v2541, 7
        %v2543 = vsub.s32 %v990, %v2542
        %v2544 = vrot.slane %v2505, %v2543
        %v2545 = vlaneseq
        %v2546 = vshrl.u32 %v2545, 7
        %v2547 = vsub.s32 %v990, %v2546
        %v2548 = vrot.slane %v2508, %v2547
        %v2549 = vsel %vm1023, %v2524, %v2520
        %v2550 = vsel %vm1025, %v2528, %v2549
        %v2551 = vsel %vm1027, %v2532, %v2550
        %v2552 = vsel %vm1029, %v2536, %v2551
        %v2553 = vsel %vm1031, %v2540, %v2552
        %v2554 = vsel %vm1033, %v2544, %v2553
        %v2555 = vsel %vm1035, %v2548, %v2554
        %2557 = vxpose.xlu0.b32.start [1/16] %v2555, 128
        %2558 = vxpose.xlu0.b32.cont [2/16] 0.0, 128
        %2559 = vxpose.xlu0.b32.cont [3/16] 0.0, 128
        %2560 = vxpose.xlu0.b32.cont [4/16] 0.0, 128
        %2561 = vxpose.xlu0.b32.cont [5/16] 0.0, 128
        %2562 = vxpose.xlu0.b32.cont [6/16] 0.0, 128
        %2563 = vxpose.xlu0.b32.cont [7/16] 0.0, 128
        %2564 = vxpose.xlu0.b32.cont [8/16] 0.0, 128
        %2565 = vxpose.xlu0.b32.cont [9/16] 0.0, 128
        %2566 = vxpose.xlu0.b32.cont [10/16] 0.0, 128
        %2567 = vxpose.xlu0.b32.cont [11/16] 0.0, 128
        %2568 = vxpose.xlu0.b32.cont [12/16] 0.0, 128
        %2569 = vxpose.xlu0.b32.cont [13/16] 0.0, 128
        %2570 = vxpose.xlu0.b32.cont [14/16] 0.0, 128
        %2571 = vxpose.xlu0.b32.cont [15/16] 0.0, 128
        %2572 = vxpose.xlu0.b32.end [16/16] 0.0, 128
        %v2573 = vpop.trf.xlu0
        %v2574 = vpop.trf.xlu0
        %v2575 = vpop.trf.xlu0
        %v2576 = vpop.trf.xlu0
        %v2577 = vpop.trf.xlu0
        %v2578 = vpop.trf.xlu0
        %v2579 = vpop.trf.xlu0
        %v2580 = vpop.trf.xlu0
        %v2581 = vpop.trf.xlu0
        %v2582 = vpop.trf.xlu0
        %v2583 = vpop.trf.xlu0
        %v2584 = vpop.trf.xlu0
        %v2585 = vpop.trf.xlu0
        %v2586 = vpop.trf.xlu0
        %v2587 = vpop.trf.xlu0
        %v2588 = vpop.trf.xlu0
        %v2589 = vmul.f32 %v1073, %v2474
        %v2590 = vmul.f32 %v1078, %v2475
        %2592 = vrot.lane.b32.xlu0 %v2590, 124
        %v2593 = vpop.permute.xlu0 %2592
        %v2595 = vadd.f32 %v2589, %v2593
        %v2596 = vmul.f32 %v1088, %v2476
        %2598 = vrot.lane.b32.xlu0 %v2596, 120
        %v2599 = vpop.permute.xlu0 %2598
        %v2601 = vadd.f32 %v2595, %v2599
        %v2602 = vmul.f32 %v1098, %v2474
        %v2603 = vmul.f32 %v1103, %v2475
        %2605 = vrot.lane.b32.xlu0 %v2603, 124
        %v2606 = vpop.permute.xlu0 %2605
        %v2608 = vadd.f32 %v2602, %v2606
        %v2609 = vmul.f32 %v1113, %v2476
        %2611 = vrot.lane.b32.xlu0 %v2609, 120
        %v2612 = vpop.permute.xlu0 %2611
        %v2614 = vadd.f32 %v2608, %v2612
        %v2615 = vmul.f32 %v1123, %v2474
        %v2616 = vmul.f32 %v1128, %v2475
        %2618 = vrot.lane.b32.xlu0 %v2616, 124
        %v2619 = vpop.permute.xlu0 %2618
        %v2621 = vadd.f32 %v2615, %v2619
        %v2622 = vmul.f32 %v1138, %v2476
        %2624 = vrot.lane.b32.xlu0 %v2622, 120
        %v2625 = vpop.permute.xlu0 %2624
        %v2627 = vadd.f32 %v2621, %v2625
        %v2628 = vmul.f32 %v2601, %v2601
        %v2629 = vmul.f32 %v2614, %v2614
        %v2630 = vadd.f32 %v2628, %v2629
        %v2631 = vmul.f32 %v2627, %v2627
        %v2632 = vadd.f32 %v2630, %v2631
        %v2633 = vadd.f32 %v2632, 1e-12
        %v2634 = vrsqrt.pop %v2633
        %v2635 = vmul.f32 %v2632, %v2634
        %v2636 = vmul.f32 %v2601, %v2634
        %v2637 = vmul.f32 %v2614, %v2634
        %v2638 = vmul.f32 %v2627, %v2634
        %2640 = vrot.lane.b32.xlu0 %v2471, 8
        %v2641 = vpop.permute.xlu0 %2640
        %2644 = vrot.lane.b32.xlu0 %v2601, 8
        %v2645 = vpop.permute.xlu0 %2644
        %2648 = vrot.lane.b32.xlu0 %v2614, 12
        %v2649 = vpop.permute.xlu0 %2648
        %2652 = vrot.lane.b32.xlu0 %v2627, 16
        %v2653 = vpop.permute.xlu0 %2652
        %2656 = vrot.lane.b32.xlu0 %v2635, 20
        %v2657 = vpop.permute.xlu0 %2656
        %2660 = vrot.lane.b32.xlu0 %v2636, 24
        %v2661 = vpop.permute.xlu0 %2660
        %2664 = vrot.lane.b32.xlu0 %v2637, 28
        %v2665 = vpop.permute.xlu0 %2664
        %2668 = vrot.lane.b32.xlu0 %v2638, 32
        %v2669 = vpop.permute.xlu0 %2668
        %v2671 = vsel %vm847, %v2573, %v2641
        %v2672 = vsel %vm1190, %v2671, %v2645
        %v2673 = vsel %vm1192, %v2672, %v2649
        %v2674 = vsel %vm1194, %v2673, %v2653
        %v2675 = vsel %vm1196, %v2674, %v2657
        %v2676 = vsel %vm1198, %v2675, %v2661
        %v2677 = vsel %vm1200, %v2676, %v2665
        %v2678 = vsel %vm1202, %v2677, %v2669
        %s2679 = scalar_lea.vmem %s10, 168
        %v2680 = vld [vmem:[%s2679] sm:$0xff]
        %v2681 = vld [vmem:[%s2679 + $0x8] sm:$0xff]
        %v2682 = vld [vmem:[%s2679 + $0x10] sm:$0xff]
        %v2683 = vld [vmem:[%s2679 + $0x18] sm:$0xff]
        %v2684 = vld [vmem:[%s2679 + $0x20] sm:$0xff]
        %v2685 = vld [vmem:[%s2679 + $0x28] sm:$0xff]
        %v2686 = vld [vmem:[%s2679 + $0x30] sm:$0xf]
        %v2688 = vsel %vm1626, %v2678, 0
        %v2691 = vsel %vm1630, %v2686, 0
        %2693 = vmatprep.subr.mxu0 0.0
        %2694 = vmatpush1.msra.mxu0 %v2680
        %2695 = vmatprep.subr.mxu0 0.0
        %2696 = vmatpush1.msra.mxu0 %v2681
        %2697 = vmatprep.subr.mxu0 0.0
        %2698 = vmatpush1.msra.mxu0 %v2682
        %2699 = vmatprep.subr.mxu0 0.0
        %2700 = vmatpush1.msra.mxu0 %v2683
        %2701 = vmatprep.subr.mxu0 0.0
        %2702 = vmatpush1.msra.mxu0 %v2684
        %2703 = vmatprep.subr.mxu0 0.0
        %2704 = vmatpush1.msra.mxu0 %v2685
        %2705 = vmatprep.subr.mxu0 0.0
        %2706 = vmatpush1.msra.mxu0 %v2691
        %2707 = vmatprep.subr.mxu0 0.0
        %2708 = vmatpush1.msra.mxu0 0.0
        %2709 = vmatprep.subr.mxu0 0.0
        %2710 = vmatpush1.msra.mxu0 0.0
        %2711 = vmatprep.subr.mxu0 0.0
        %2712 = vmatpush1.msra.mxu0 0.0
        %2713 = vmatprep.subr.mxu0 0.0
        %2714 = vmatpush1.msra.mxu0 0.0
        %2715 = vmatprep.subr.mxu0 0.0
        %2716 = vmatpush1.msra.mxu0 0.0
        %2717 = vmatprep.subr.mxu0 0.0
        %2718 = vmatpush1.msra.mxu0 0.0
        %2719 = vmatprep.subr.mxu0 0.0
        %2720 = vmatpush1.msra.mxu0 0.0
        %2721 = vmatprep.subr.mxu0 0.0
        %2722 = vmatpush1.msra.mxu0 0.0
        %2723 = vmatprep.subr.mxu0 0.0
        %2724 = vmatpush1.msra.mxu0 0.0
        %2725 = vmatprep.subr.mxu0 0.0
        %2726 = vmatpush1.msra.mxu0 0.0
        %2727 = vmatprep.subr.mxu0 0.0
        %2728 = vmatpush1.msra.mxu0 0.0
        %2729 = vmatprep.subr.mxu0 0.0
        %2730 = vmatpush1.msra.mxu0 0.0
        %2731 = vmatprep.subr.mxu0 0.0
        %2732 = vmatpush1.msra.mxu0 0.0
        %2733 = vmatprep.subr.mxu0 0.0
        %2734 = vmatpush1.msra.mxu0 0.0
        %2735 = vmatprep.subr.mxu0 0.0
        %2736 = vmatpush1.msra.mxu0 0.0
        %2737 = vmatprep.subr.mxu0 0.0
        %2738 = vmatpush1.msra.mxu0 0.0
        %2739 = vmatprep.subr.mxu0 0.0
        %2740 = vmatpush1.msra.mxu0 0.0
        %2741 = vmatprep.subr.mxu0 0.0
        %2742 = vmatpush1.msra.mxu0 0.0
        %2743 = vmatprep.subr.mxu0 0.0
        %2744 = vmatpush1.msra.mxu0 0.0
        %2745 = vmatprep.subr.mxu0 0.0
        %2746 = vmatpush1.msra.mxu0 0.0
        %2747 = vmatprep.subr.mxu0 0.0
        %2748 = vmatpush1.msra.mxu0 0.0
        %2749 = vmatprep.subr.mxu0 0.0
        %2750 = vmatpush1.msra.mxu0 0.0
        %2751 = vmatprep.subr.mxu0 0.0
        %2752 = vmatpush1.msra.mxu0 0.0
        %2753 = vmatprep.subr.mxu0 0.0
        %2754 = vmatpush1.msra.mxu0 0.0
        %2755 = vmatprep.subr.mxu0 0.0
        %2756 = vmatpush1.msra.mxu0 0.0
        %2757 = vmatprep.mubr.f32.mxu0 0.0
        %2758 = vmatmul.mubr.f32.gmra.mrb[0].mxu0 %v2688
        %v2759 = vpop.f32.mrb[0].mxu0
        %v2760 = vadd.f32 0.0, %v2759
        %v2761 = vpop.f32.mrb[0].mxu0
        %2762 = vdwg.mxu0
        %v2763 = vadd.f32 %v2271, %v2760
        %s2764 = scalar_lea.vmem %s654, 32
        %v2765 = vld [vmem:[%s2764] sm:$0xff]
        %s2766 = scalar_lea.vmem %s659, 128
        %v2767 = vld [vmem:[%s2766] sm:$0xff]
        %v2768 = vld [vmem:[%s2766 + $0x8] sm:$0xff]
        %v2769 = vld [vmem:[%s2766 + $0x10] sm:$0xff]
        %v2770 = vld [vmem:[%s2766 + $0x18] sm:$0x3f]
        %s2771 = sld [smem:[#allocation2 + $0x200]]
        %v2772 = vstv %s2771
        %v2773 = vmul.f32 %v2772, %v721
        %s2774 = sld [smem:[#allocation2 + $0x201]]
        %v2775 = vstv %s2774
        %v2776 = vmul.f32 %v2775, %v722
        %v2777 = vadd.f32 %v2773, %v2776
        %s2778 = sld [smem:[#allocation2 + $0x202]]
        %v2779 = vstv %s2778
        %v2780 = vmul.f32 %v2779, %v723
        %v2781 = vadd.f32 %v2777, %v2780
        %s2782 = sld [smem:[#allocation2 + $0x203]]
        %v2783 = vstv %s2782
        %v2784 = vmul.f32 %v2783, %v724
        %v2785 = vadd.f32 %v2781, %v2784
        %s2786 = sld [smem:[#allocation2 + $0x204]]
        %v2787 = vstv %s2786
        %v2788 = vmul.f32 %v2787, %v725
        %v2789 = vadd.f32 %v2785, %v2788
        %s2790 = sld [smem:[#allocation2 + $0x205]]
        %v2791 = vstv %s2790
        %v2792 = vmul.f32 %v2791, %v726
        %v2793 = vadd.f32 %v2789, %v2792
        %s2794 = sld [smem:[#allocation2 + $0x206]]
        %v2795 = vstv %s2794
        %v2796 = vmul.f32 %v2795, %v727
        %v2797 = vadd.f32 %v2793, %v2796
        %s2798 = sld [smem:[#allocation2 + $0x207]]
        %v2799 = vstv %s2798
        %v2800 = vmul.f32 %v2799, %v728
        %v2801 = vadd.f32 %v2797, %v2800
        %v2803 = vsel %vm767, %v2765, 0
        %v2806 = vsel %vm771, %v2770, 0
        %2808 = vmatprep.subr.mxu0 0.0
        %2809 = vmatpush1.msra.mxu0 %v2767
        %2810 = vmatprep.subr.mxu0 0.0
        %2811 = vmatpush1.msra.mxu0 %v2768
        %2812 = vmatprep.subr.mxu0 0.0
        %2813 = vmatpush1.msra.mxu0 %v2769
        %2814 = vmatprep.subr.mxu0 0.0
        %2815 = vmatpush1.msra.mxu0 %v2806
        %2816 = vmatprep.subr.mxu0 0.0
        %2817 = vmatpush1.msra.mxu0 0.0
        %2818 = vmatprep.subr.mxu0 0.0
        %2819 = vmatpush1.msra.mxu0 0.0
        %2820 = vmatprep.subr.mxu0 0.0
        %2821 = vmatpush1.msra.mxu0 0.0
        %2822 = vmatprep.subr.mxu0 0.0
        %2823 = vmatpush1.msra.mxu0 0.0
        %2824 = vmatprep.subr.mxu0 0.0
        %2825 = vmatpush1.msra.mxu0 0.0
        %2826 = vmatprep.subr.mxu0 0.0
        %2827 = vmatpush1.msra.mxu0 0.0
        %2828 = vmatprep.subr.mxu0 0.0
        %2829 = vmatpush1.msra.mxu0 0.0
        %2830 = vmatprep.subr.mxu0 0.0
        %2831 = vmatpush1.msra.mxu0 0.0
        %2832 = vmatprep.subr.mxu0 0.0
        %2833 = vmatpush1.msra.mxu0 0.0
        %2834 = vmatprep.subr.mxu0 0.0
        %2835 = vmatpush1.msra.mxu0 0.0
        %2836 = vmatprep.subr.mxu0 0.0
        %2837 = vmatpush1.msra.mxu0 0.0
        %2838 = vmatprep.subr.mxu0 0.0
        %2839 = vmatpush1.msra.mxu0 0.0
        %2840 = vmatprep.subr.mxu0 0.0
        %2841 = vmatpush1.msra.mxu0 0.0
        %2842 = vmatprep.subr.mxu0 0.0
        %2843 = vmatpush1.msra.mxu0 0.0
        %2844 = vmatprep.subr.mxu0 0.0
        %2845 = vmatpush1.msra.mxu0 0.0
        %2846 = vmatprep.subr.mxu0 0.0
        %2847 = vmatpush1.msra.mxu0 0.0
        %2848 = vmatprep.subr.mxu0 0.0
        %2849 = vmatpush1.msra.mxu0 0.0
        %2850 = vmatprep.subr.mxu0 0.0
        %2851 = vmatpush1.msra.mxu0 0.0
        %2852 = vmatprep.subr.mxu0 0.0
        %2853 = vmatpush1.msra.mxu0 0.0
        %2854 = vmatprep.subr.mxu0 0.0
        %2855 = vmatpush1.msra.mxu0 0.0
        %2856 = vmatprep.subr.mxu0 0.0
        %2857 = vmatpush1.msra.mxu0 0.0
        %2858 = vmatprep.subr.mxu0 0.0
        %2859 = vmatpush1.msra.mxu0 0.0
        %2860 = vmatprep.subr.mxu0 0.0
        %2861 = vmatpush1.msra.mxu0 0.0
        %2862 = vmatprep.subr.mxu0 0.0
        %2863 = vmatpush1.msra.mxu0 0.0
        %2864 = vmatprep.subr.mxu0 0.0
        %2865 = vmatpush1.msra.mxu0 0.0
        %2866 = vmatprep.subr.mxu0 0.0
        %2867 = vmatpush1.msra.mxu0 0.0
        %2868 = vmatprep.subr.mxu0 0.0
        %2869 = vmatpush1.msra.mxu0 0.0
        %2870 = vmatprep.subr.mxu0 0.0
        %2871 = vmatpush1.msra.mxu0 0.0
        %2872 = vmatprep.mubr.f32.mxu0 0.0
        %2873 = vmatmul.mubr.f32.gmra.mrb[0].mxu0 %v2803
        %v2874 = vpop.f32.mrb[0].mxu0
        %v2875 = vadd.f32 %v2801, %v2874
        %v2876 = vpop.f32.mrb[0].mxu0
        %2877 = vdwg.mxu0
        %v2878 = vmul.f32 %v2875, 0.57735026
        %v2879 = vadd.f32 %v2878, %v720
        %v2880 = vsel %vm847, %v2879, -inf
        %2881 = vmax.xlane.f32.xlu0 %v2880
        %v2882 = vpop.xlane.xlu0 %2881
        %v2883 = vsub.f32 %v2879, %v2882
        %v2884 = vmul.f32 %v2883, 1.442695
        %v2885 = vpow.pop %v2884
        %v2886 = vsel %vm847, %v2885, 0.0
        %2887 = vadd.xlane.f32.xlu0 %v2886
        %v2888 = vpop.xlane.xlu0 %2887
        %v2889 = vrcp.pop %v2888
        %v2890 = vmul.f32 %v2885, %v2889
        %s2891 = scalar_lea.vmem %s664, 32
        %v2892 = vld [vmem:[%s2891] sm:$0xff]
        %v2894 = vsel %vm847, %v2890, 0
        %2896 = vmatprep.subr.mxu0 0.0
        %2897 = vmatpush1.msra.mxu0 %v2892
        %2898 = vmatprep.subr.mxu0 0.0
        %2899 = vmatpush1.msra.mxu0 0.0
        %2900 = vmatprep.subr.mxu0 0.0
        %2901 = vmatpush1.msra.mxu0 0.0
        %2902 = vmatprep.subr.mxu0 0.0
        %2903 = vmatpush1.msra.mxu0 0.0
        %2904 = vmatprep.subr.mxu0 0.0
        %2905 = vmatpush1.msra.mxu0 0.0
        %2906 = vmatprep.subr.mxu0 0.0
        %2907 = vmatpush1.msra.mxu0 0.0
        %2908 = vmatprep.subr.mxu0 0.0
        %2909 = vmatpush1.msra.mxu0 0.0
        %2910 = vmatprep.subr.mxu0 0.0
        %2911 = vmatpush1.msra.mxu0 0.0
        %2912 = vmatprep.subr.mxu0 0.0
        %2913 = vmatpush1.msra.mxu0 0.0
        %2914 = vmatprep.subr.mxu0 0.0
        %2915 = vmatpush1.msra.mxu0 0.0
        %2916 = vmatprep.subr.mxu0 0.0
        %2917 = vmatpush1.msra.mxu0 0.0
        %2918 = vmatprep.subr.mxu0 0.0
        %2919 = vmatpush1.msra.mxu0 0.0
        %2920 = vmatprep.subr.mxu0 0.0
        %2921 = vmatpush1.msra.mxu0 0.0
        %2922 = vmatprep.subr.mxu0 0.0
        %2923 = vmatpush1.msra.mxu0 0.0
        %2924 = vmatprep.subr.mxu0 0.0
        %2925 = vmatpush1.msra.mxu0 0.0
        %2926 = vmatprep.subr.mxu0 0.0
        %2927 = vmatpush1.msra.mxu0 0.0
        %2928 = vmatprep.subr.mxu0 0.0
        %2929 = vmatpush1.msra.mxu0 0.0
        %2930 = vmatprep.subr.mxu0 0.0
        %2931 = vmatpush1.msra.mxu0 0.0
        %2932 = vmatprep.subr.mxu0 0.0
        %2933 = vmatpush1.msra.mxu0 0.0
        %2934 = vmatprep.subr.mxu0 0.0
        %2935 = vmatpush1.msra.mxu0 0.0
        %2936 = vmatprep.subr.mxu0 0.0
        %2937 = vmatpush1.msra.mxu0 0.0
        %2938 = vmatprep.subr.mxu0 0.0
        %2939 = vmatpush1.msra.mxu0 0.0
        %2940 = vmatprep.subr.mxu0 0.0
        %2941 = vmatpush1.msra.mxu0 0.0
        %2942 = vmatprep.subr.mxu0 0.0
        %2943 = vmatpush1.msra.mxu0 0.0
        %2944 = vmatprep.subr.mxu0 0.0
        %2945 = vmatpush1.msra.mxu0 0.0
        %2946 = vmatprep.subr.mxu0 0.0
        %2947 = vmatpush1.msra.mxu0 0.0
        %2948 = vmatprep.subr.mxu0 0.0
        %2949 = vmatpush1.msra.mxu0 0.0
        %2950 = vmatprep.subr.mxu0 0.0
        %2951 = vmatpush1.msra.mxu0 0.0
        %2952 = vmatprep.subr.mxu0 0.0
        %2953 = vmatpush1.msra.mxu0 0.0
        %2954 = vmatprep.subr.mxu0 0.0
        %2955 = vmatpush1.msra.mxu0 0.0
        %2956 = vmatprep.subr.mxu0 0.0
        %2957 = vmatpush1.msra.mxu0 0.0
        %2958 = vmatprep.subr.mxu0 0.0
        %2959 = vmatpush1.msra.mxu0 0.0
        %2960 = vmatprep.mubr.f32.mxu0 0.0
        %2961 = vmatmul.mubr.f32.gmra.mrb[0].mxu0 %v2894
        %v2962 = vpop.f32.mrb[0].mxu0
        %v2963 = vadd.f32 0.0, %v2962
        %v2964 = vpop.f32.mrb[0].mxu0
        %2965 = vdwg.mxu0
        %v2966 = vsub.f32 %v2963, %v936
        %v2967 = vsub.f32 %v2963, %v941
        %v2968 = vsub.f32 %v2963, %v946
        %v2969 = vmul.f32 %v2890, %v721
        %v2970 = vmul.f32 %v2890, %v722
        %v2971 = vmul.f32 %v2890, %v723
        %v2972 = vmul.f32 %v2890, %v724
        %v2973 = vmul.f32 %v2890, %v725
        %v2974 = vmul.f32 %v2890, %v726
        %v2975 = vmul.f32 %v2890, %v727
        %v2976 = vmul.f32 %v2890, %v728
        %v2977 = vsel %vm847, %v2969, 0.0
        %2978 = vadd.xlane.f32.xlu0 %v2977
        %v2979 = vpop.xlane.xlu0 %2978
        %v2980 = vsel %vm847, %v2970, 0.0
        %2981 = vadd.xlane.f32.xlu0 %v2980
        %v2982 = vpop.xlane.xlu0 %2981
        %v2983 = vsel %vm847, %v2971, 0.0
        %2984 = vadd.xlane.f32.xlu0 %v2983
        %v2985 = vpop.xlane.xlu0 %2984
        %v2986 = vsel %vm847, %v2972, 0.0
        %2987 = vadd.xlane.f32.xlu0 %v2986
        %v2988 = vpop.xlane.xlu0 %2987
        %v2989 = vsel %vm847, %v2973, 0.0
        %2990 = vadd.xlane.f32.xlu0 %v2989
        %v2991 = vpop.xlane.xlu0 %2990
        %v2992 = vsel %vm847, %v2974, 0.0
        %2993 = vadd.xlane.f32.xlu0 %v2992
        %v2994 = vpop.xlane.xlu0 %2993
        %v2995 = vsel %vm847, %v2975, 0.0
        %2996 = vadd.xlane.f32.xlu0 %v2995
        %v2997 = vpop.xlane.xlu0 %2996
        %v2998 = vsel %vm847, %v2976, 0.0
        %2999 = vadd.xlane.f32.xlu0 %v2998
        %v3000 = vpop.xlane.xlu0 %2999
        %v3009 = vlaneseq
        %v3010 = vshrl.u32 %v3009, 7
        %v3011 = vsub.s32 %v990, %v3010
        %v3012 = vrot.slane %v2979, %v3011
        %v3013 = vlaneseq
        %v3014 = vshrl.u32 %v3013, 7
        %v3015 = vsub.s32 %v990, %v3014
        %v3016 = vrot.slane %v2982, %v3015
        %v3017 = vlaneseq
        %v3018 = vshrl.u32 %v3017, 7
        %v3019 = vsub.s32 %v990, %v3018
        %v3020 = vrot.slane %v2985, %v3019
        %v3021 = vlaneseq
        %v3022 = vshrl.u32 %v3021, 7
        %v3023 = vsub.s32 %v990, %v3022
        %v3024 = vrot.slane %v2988, %v3023
        %v3025 = vlaneseq
        %v3026 = vshrl.u32 %v3025, 7
        %v3027 = vsub.s32 %v990, %v3026
        %v3028 = vrot.slane %v2991, %v3027
        %v3029 = vlaneseq
        %v3030 = vshrl.u32 %v3029, 7
        %v3031 = vsub.s32 %v990, %v3030
        %v3032 = vrot.slane %v2994, %v3031
        %v3033 = vlaneseq
        %v3034 = vshrl.u32 %v3033, 7
        %v3035 = vsub.s32 %v990, %v3034
        %v3036 = vrot.slane %v2997, %v3035
        %v3037 = vlaneseq
        %v3038 = vshrl.u32 %v3037, 7
        %v3039 = vsub.s32 %v990, %v3038
        %v3040 = vrot.slane %v3000, %v3039
        %v3041 = vsel %vm1023, %v3016, %v3012
        %v3042 = vsel %vm1025, %v3020, %v3041
        %v3043 = vsel %vm1027, %v3024, %v3042
        %v3044 = vsel %vm1029, %v3028, %v3043
        %v3045 = vsel %vm1031, %v3032, %v3044
        %v3046 = vsel %vm1033, %v3036, %v3045
        %v3047 = vsel %vm1035, %v3040, %v3046
        %3049 = vxpose.xlu0.b32.start [1/16] %v3047, 128
        %3050 = vxpose.xlu0.b32.cont [2/16] 0.0, 128
        %3051 = vxpose.xlu0.b32.cont [3/16] 0.0, 128
        %3052 = vxpose.xlu0.b32.cont [4/16] 0.0, 128
        %3053 = vxpose.xlu0.b32.cont [5/16] 0.0, 128
        %3054 = vxpose.xlu0.b32.cont [6/16] 0.0, 128
        %3055 = vxpose.xlu0.b32.cont [7/16] 0.0, 128
        %3056 = vxpose.xlu0.b32.cont [8/16] 0.0, 128
        %3057 = vxpose.xlu0.b32.cont [9/16] 0.0, 128
        %3058 = vxpose.xlu0.b32.cont [10/16] 0.0, 128
        %3059 = vxpose.xlu0.b32.cont [11/16] 0.0, 128
        %3060 = vxpose.xlu0.b32.cont [12/16] 0.0, 128
        %3061 = vxpose.xlu0.b32.cont [13/16] 0.0, 128
        %3062 = vxpose.xlu0.b32.cont [14/16] 0.0, 128
        %3063 = vxpose.xlu0.b32.cont [15/16] 0.0, 128
        %3064 = vxpose.xlu0.b32.end [16/16] 0.0, 128
        %v3065 = vpop.trf.xlu0
        %v3066 = vpop.trf.xlu0
        %v3067 = vpop.trf.xlu0
        %v3068 = vpop.trf.xlu0
        %v3069 = vpop.trf.xlu0
        %v3070 = vpop.trf.xlu0
        %v3071 = vpop.trf.xlu0
        %v3072 = vpop.trf.xlu0
        %v3073 = vpop.trf.xlu0
        %v3074 = vpop.trf.xlu0
        %v3075 = vpop.trf.xlu0
        %v3076 = vpop.trf.xlu0
        %v3077 = vpop.trf.xlu0
        %v3078 = vpop.trf.xlu0
        %v3079 = vpop.trf.xlu0
        %v3080 = vpop.trf.xlu0
        %v3081 = vmul.f32 %v1073, %v2966
        %v3082 = vmul.f32 %v1078, %v2967
        %3084 = vrot.lane.b32.xlu0 %v3082, 124
        %v3085 = vpop.permute.xlu0 %3084
        %v3087 = vadd.f32 %v3081, %v3085
        %v3088 = vmul.f32 %v1088, %v2968
        %3090 = vrot.lane.b32.xlu0 %v3088, 120
        %v3091 = vpop.permute.xlu0 %3090
        %v3093 = vadd.f32 %v3087, %v3091
        %v3094 = vmul.f32 %v1098, %v2966
        %v3095 = vmul.f32 %v1103, %v2967
        %3097 = vrot.lane.b32.xlu0 %v3095, 124
        %v3098 = vpop.permute.xlu0 %3097
        %v3100 = vadd.f32 %v3094, %v3098
        %v3101 = vmul.f32 %v1113, %v2968
        %3103 = vrot.lane.b32.xlu0 %v3101, 120
        %v3104 = vpop.permute.xlu0 %3103
        %v3106 = vadd.f32 %v3100, %v3104
        %v3107 = vmul.f32 %v1123, %v2966
        %v3108 = vmul.f32 %v1128, %v2967
        %3110 = vrot.lane.b32.xlu0 %v3108, 124
        %v3111 = vpop.permute.xlu0 %3110
        %v3113 = vadd.f32 %v3107, %v3111
        %v3114 = vmul.f32 %v1138, %v2968
        %3116 = vrot.lane.b32.xlu0 %v3114, 120
        %v3117 = vpop.permute.xlu0 %3116
        %v3119 = vadd.f32 %v3113, %v3117
        %v3120 = vmul.f32 %v3093, %v3093
        %v3121 = vmul.f32 %v3106, %v3106
        %v3122 = vadd.f32 %v3120, %v3121
        %v3123 = vmul.f32 %v3119, %v3119
        %v3124 = vadd.f32 %v3122, %v3123
        %v3125 = vadd.f32 %v3124, 1e-12
        %v3126 = vrsqrt.pop %v3125
        %v3127 = vmul.f32 %v3124, %v3126
        %v3128 = vmul.f32 %v3093, %v3126
        %v3129 = vmul.f32 %v3106, %v3126
        %v3130 = vmul.f32 %v3119, %v3126
        %3132 = vrot.lane.b32.xlu0 %v2963, 8
        %v3133 = vpop.permute.xlu0 %3132
        %3136 = vrot.lane.b32.xlu0 %v3093, 8
        %v3137 = vpop.permute.xlu0 %3136
        %3140 = vrot.lane.b32.xlu0 %v3106, 12
        %v3141 = vpop.permute.xlu0 %3140
        %3144 = vrot.lane.b32.xlu0 %v3119, 16
        %v3145 = vpop.permute.xlu0 %3144
        %3148 = vrot.lane.b32.xlu0 %v3127, 20
        %v3149 = vpop.permute.xlu0 %3148
        %3152 = vrot.lane.b32.xlu0 %v3128, 24
        %v3153 = vpop.permute.xlu0 %3152
        %3156 = vrot.lane.b32.xlu0 %v3129, 28
        %v3157 = vpop.permute.xlu0 %3156
        %3160 = vrot.lane.b32.xlu0 %v3130, 32
        %v3161 = vpop.permute.xlu0 %3160
        %v3163 = vsel %vm847, %v3065, %v3133
        %v3164 = vsel %vm1190, %v3163, %v3137
        %v3165 = vsel %vm1192, %v3164, %v3141
        %v3166 = vsel %vm1194, %v3165, %v3145
        %v3167 = vsel %vm1196, %v3166, %v3149
        %v3168 = vsel %vm1198, %v3167, %v3153
        %v3169 = vsel %vm1200, %v3168, %v3157
        %v3170 = vsel %vm1202, %v3169, %v3161
        %s3171 = scalar_lea.vmem %s10, 224
        %v3172 = vld [vmem:[%s3171] sm:$0xff]
        %v3173 = vld [vmem:[%s3171 + $0x8] sm:$0xff]
        %v3174 = vld [vmem:[%s3171 + $0x10] sm:$0xff]
        %v3175 = vld [vmem:[%s3171 + $0x18] sm:$0xff]
        %v3176 = vld [vmem:[%s3171 + $0x20] sm:$0xff]
        %v3177 = vld [vmem:[%s3171 + $0x28] sm:$0xff]
        %v3178 = vld [vmem:[%s3171 + $0x30] sm:$0xf]
        %v3180 = vsel %vm1626, %v3170, 0
        %v3183 = vsel %vm1630, %v3178, 0
        %3185 = vmatprep.subr.mxu0 0.0
        %3186 = vmatpush1.msra.mxu0 %v3172
        %3187 = vmatprep.subr.mxu0 0.0
        %3188 = vmatpush1.msra.mxu0 %v3173
        %3189 = vmatprep.subr.mxu0 0.0
        %3190 = vmatpush1.msra.mxu0 %v3174
        %3191 = vmatprep.subr.mxu0 0.0
        %3192 = vmatpush1.msra.mxu0 %v3175
        %3193 = vmatprep.subr.mxu0 0.0
        %3194 = vmatpush1.msra.mxu0 %v3176
        %3195 = vmatprep.subr.mxu0 0.0
        %3196 = vmatpush1.msra.mxu0 %v3177
        %3197 = vmatprep.subr.mxu0 0.0
        %3198 = vmatpush1.msra.mxu0 %v3183
        %3199 = vmatprep.subr.mxu0 0.0
        %3200 = vmatpush1.msra.mxu0 0.0
        %3201 = vmatprep.subr.mxu0 0.0
        %3202 = vmatpush1.msra.mxu0 0.0
        %3203 = vmatprep.subr.mxu0 0.0
        %3204 = vmatpush1.msra.mxu0 0.0
        %3205 = vmatprep.subr.mxu0 0.0
        %3206 = vmatpush1.msra.mxu0 0.0
        %3207 = vmatprep.subr.mxu0 0.0
        %3208 = vmatpush1.msra.mxu0 0.0
        %3209 = vmatprep.subr.mxu0 0.0
        %3210 = vmatpush1.msra.mxu0 0.0
        %3211 = vmatprep.subr.mxu0 0.0
        %3212 = vmatpush1.msra.mxu0 0.0
        %3213 = vmatprep.subr.mxu0 0.0
        %3214 = vmatpush1.msra.mxu0 0.0
        %3215 = vmatprep.subr.mxu0 0.0
        %3216 = vmatpush1.msra.mxu0 0.0
        %3217 = vmatprep.subr.mxu0 0.0
        %3218 = vmatpush1.msra.mxu0 0.0
        %3219 = vmatprep.subr.mxu0 0.0
        %3220 = vmatpush1.msra.mxu0 0.0
        %3221 = vmatprep.subr.mxu0 0.0
        %3222 = vmatpush1.msra.mxu0 0.0
        %3223 = vmatprep.subr.mxu0 0.0
        %3224 = vmatpush1.msra.mxu0 0.0
        %3225 = vmatprep.subr.mxu0 0.0
        %3226 = vmatpush1.msra.mxu0 0.0
        %3227 = vmatprep.subr.mxu0 0.0
        %3228 = vmatpush1.msra.mxu0 0.0
        %3229 = vmatprep.subr.mxu0 0.0
        %3230 = vmatpush1.msra.mxu0 0.0
        %3231 = vmatprep.subr.mxu0 0.0
        %3232 = vmatpush1.msra.mxu0 0.0
        %3233 = vmatprep.subr.mxu0 0.0
        %3234 = vmatpush1.msra.mxu0 0.0
        %3235 = vmatprep.subr.mxu0 0.0
        %3236 = vmatpush1.msra.mxu0 0.0
        %3237 = vmatprep.subr.mxu0 0.0
        %3238 = vmatpush1.msra.mxu0 0.0
        %3239 = vmatprep.subr.mxu0 0.0
        %3240 = vmatpush1.msra.mxu0 0.0
        %3241 = vmatprep.subr.mxu0 0.0
        %3242 = vmatpush1.msra.mxu0 0.0
        %3243 = vmatprep.subr.mxu0 0.0
        %3244 = vmatpush1.msra.mxu0 0.0
        %3245 = vmatprep.subr.mxu0 0.0
        %3246 = vmatpush1.msra.mxu0 0.0
        %3247 = vmatprep.subr.mxu0 0.0
        %3248 = vmatpush1.msra.mxu0 0.0
        %3249 = vmatprep.mubr.f32.mxu0 0.0
        %3250 = vmatmul.mubr.f32.gmra.mrb[0].mxu0 %v3180
        %v3251 = vpop.f32.mrb[0].mxu0
        %v3252 = vadd.f32 0.0, %v3251
        %v3253 = vpop.f32.mrb[0].mxu0
        %3254 = vdwg.mxu0
        %v3255 = vadd.f32 %v2763, %v3252
        %s3256 = scalar_lea.vmem %s654, 40
        %v3257 = vld [vmem:[%s3256] sm:$0xff]
        %s3258 = scalar_lea.vmem %s659, 160
        %v3259 = vld [vmem:[%s3258] sm:$0xff]
        %v3260 = vld [vmem:[%s3258 + $0x8] sm:$0xff]
        %v3261 = vld [vmem:[%s3258 + $0x10] sm:$0xff]
        %v3262 = vld [vmem:[%s3258 + $0x18] sm:$0x3f]
        %s3263 = sld [smem:[#allocation2 + $0x280]]
        %v3264 = vstv %s3263
        %v3265 = vmul.f32 %v3264, %v721
        %s3266 = sld [smem:[#allocation2 + $0x281]]
        %v3267 = vstv %s3266
        %v3268 = vmul.f32 %v3267, %v722
        %v3269 = vadd.f32 %v3265, %v3268
        %s3270 = sld [smem:[#allocation2 + $0x282]]
        %v3271 = vstv %s3270
        %v3272 = vmul.f32 %v3271, %v723
        %v3273 = vadd.f32 %v3269, %v3272
        %s3274 = sld [smem:[#allocation2 + $0x283]]
        %v3275 = vstv %s3274
        %v3276 = vmul.f32 %v3275, %v724
        %v3277 = vadd.f32 %v3273, %v3276
        %s3278 = sld [smem:[#allocation2 + $0x284]]
        %v3279 = vstv %s3278
        %v3280 = vmul.f32 %v3279, %v725
        %v3281 = vadd.f32 %v3277, %v3280
        %s3282 = sld [smem:[#allocation2 + $0x285]]
        %v3283 = vstv %s3282
        %v3284 = vmul.f32 %v3283, %v726
        %v3285 = vadd.f32 %v3281, %v3284
        %s3286 = sld [smem:[#allocation2 + $0x286]]
        %v3287 = vstv %s3286
        %v3288 = vmul.f32 %v3287, %v727
        %v3289 = vadd.f32 %v3285, %v3288
        %s3290 = sld [smem:[#allocation2 + $0x287]]
        %v3291 = vstv %s3290
        %v3292 = vmul.f32 %v3291, %v728
        %v3293 = vadd.f32 %v3289, %v3292
        %v3295 = vsel %vm767, %v3257, 0
        %v3298 = vsel %vm771, %v3262, 0
        %3300 = vmatprep.subr.mxu0 0.0
        %3301 = vmatpush1.msra.mxu0 %v3259
        %3302 = vmatprep.subr.mxu0 0.0
        %3303 = vmatpush1.msra.mxu0 %v3260
        %3304 = vmatprep.subr.mxu0 0.0
        %3305 = vmatpush1.msra.mxu0 %v3261
        %3306 = vmatprep.subr.mxu0 0.0
        %3307 = vmatpush1.msra.mxu0 %v3298
        %3308 = vmatprep.subr.mxu0 0.0
        %3309 = vmatpush1.msra.mxu0 0.0
        %3310 = vmatprep.subr.mxu0 0.0
        %3311 = vmatpush1.msra.mxu0 0.0
        %3312 = vmatprep.subr.mxu0 0.0
        %3313 = vmatpush1.msra.mxu0 0.0
        %3314 = vmatprep.subr.mxu0 0.0
        %3315 = vmatpush1.msra.mxu0 0.0
        %3316 = vmatprep.subr.mxu0 0.0
        %3317 = vmatpush1.msra.mxu0 0.0
        %3318 = vmatprep.subr.mxu0 0.0
        %3319 = vmatpush1.msra.mxu0 0.0
        %3320 = vmatprep.subr.mxu0 0.0
        %3321 = vmatpush1.msra.mxu0 0.0
        %3322 = vmatprep.subr.mxu0 0.0
        %3323 = vmatpush1.msra.mxu0 0.0
        %3324 = vmatprep.subr.mxu0 0.0
        %3325 = vmatpush1.msra.mxu0 0.0
        %3326 = vmatprep.subr.mxu0 0.0
        %3327 = vmatpush1.msra.mxu0 0.0
        %3328 = vmatprep.subr.mxu0 0.0
        %3329 = vmatpush1.msra.mxu0 0.0
        %3330 = vmatprep.subr.mxu0 0.0
        %3331 = vmatpush1.msra.mxu0 0.0
        %3332 = vmatprep.subr.mxu0 0.0
        %3333 = vmatpush1.msra.mxu0 0.0
        %3334 = vmatprep.subr.mxu0 0.0
        %3335 = vmatpush1.msra.mxu0 0.0
        %3336 = vmatprep.subr.mxu0 0.0
        %3337 = vmatpush1.msra.mxu0 0.0
        %3338 = vmatprep.subr.mxu0 0.0
        %3339 = vmatpush1.msra.mxu0 0.0
        %3340 = vmatprep.subr.mxu0 0.0
        %3341 = vmatpush1.msra.mxu0 0.0
        %3342 = vmatprep.subr.mxu0 0.0
        %3343 = vmatpush1.msra.mxu0 0.0
        %3344 = vmatprep.subr.mxu0 0.0
        %3345 = vmatpush1.msra.mxu0 0.0
        %3346 = vmatprep.subr.mxu0 0.0
        %3347 = vmatpush1.msra.mxu0 0.0
        %3348 = vmatprep.subr.mxu0 0.0
        %3349 = vmatpush1.msra.mxu0 0.0
        %3350 = vmatprep.subr.mxu0 0.0
        %3351 = vmatpush1.msra.mxu0 0.0
        %3352 = vmatprep.subr.mxu0 0.0
        %3353 = vmatpush1.msra.mxu0 0.0
        %3354 = vmatprep.subr.mxu0 0.0
        %3355 = vmatpush1.msra.mxu0 0.0
        %3356 = vmatprep.subr.mxu0 0.0
        %3357 = vmatpush1.msra.mxu0 0.0
        %3358 = vmatprep.subr.mxu0 0.0
        %3359 = vmatpush1.msra.mxu0 0.0
        %3360 = vmatprep.subr.mxu0 0.0
        %3361 = vmatpush1.msra.mxu0 0.0
        %3362 = vmatprep.subr.mxu0 0.0
        %3363 = vmatpush1.msra.mxu0 0.0
        %3364 = vmatprep.mubr.f32.mxu0 0.0
        %3365 = vmatmul.mubr.f32.gmra.mrb[0].mxu0 %v3295
        %v3366 = vpop.f32.mrb[0].mxu0
        %v3367 = vadd.f32 %v3293, %v3366
        %v3368 = vpop.f32.mrb[0].mxu0
        %3369 = vdwg.mxu0
        %v3370 = vmul.f32 %v3367, 0.57735026
        %v3371 = vadd.f32 %v3370, %v720
        %v3372 = vsel %vm847, %v3371, -inf
        %3373 = vmax.xlane.f32.xlu0 %v3372
        %v3374 = vpop.xlane.xlu0 %3373
        %v3375 = vsub.f32 %v3371, %v3374
        %v3376 = vmul.f32 %v3375, 1.442695
        %v3377 = vpow.pop %v3376
        %v3378 = vsel %vm847, %v3377, 0.0
        %3379 = vadd.xlane.f32.xlu0 %v3378
        %v3380 = vpop.xlane.xlu0 %3379
        %v3381 = vrcp.pop %v3380
        %v3382 = vmul.f32 %v3377, %v3381
        %s3383 = scalar_lea.vmem %s664, 40
        %v3384 = vld [vmem:[%s3383] sm:$0xff]
        %v3386 = vsel %vm847, %v3382, 0
        %3388 = vmatprep.subr.mxu0 0.0
        %3389 = vmatpush1.msra.mxu0 %v3384
        %3390 = vmatprep.subr.mxu0 0.0
        %3391 = vmatpush1.msra.mxu0 0.0
        %3392 = vmatprep.subr.mxu0 0.0
        %3393 = vmatpush1.msra.mxu0 0.0
        %3394 = vmatprep.subr.mxu0 0.0
        %3395 = vmatpush1.msra.mxu0 0.0
        %3396 = vmatprep.subr.mxu0 0.0
        %3397 = vmatpush1.msra.mxu0 0.0
        %3398 = vmatprep.subr.mxu0 0.0
        %3399 = vmatpush1.msra.mxu0 0.0
        %3400 = vmatprep.subr.mxu0 0.0
        %3401 = vmatpush1.msra.mxu0 0.0
        %3402 = vmatprep.subr.mxu0 0.0
        %3403 = vmatpush1.msra.mxu0 0.0
        %3404 = vmatprep.subr.mxu0 0.0
        %3405 = vmatpush1.msra.mxu0 0.0
        %3406 = vmatprep.subr.mxu0 0.0
        %3407 = vmatpush1.msra.mxu0 0.0
        %3408 = vmatprep.subr.mxu0 0.0
        %3409 = vmatpush1.msra.mxu0 0.0
        %3410 = vmatprep.subr.mxu0 0.0
        %3411 = vmatpush1.msra.mxu0 0.0
        %3412 = vmatprep.subr.mxu0 0.0
        %3413 = vmatpush1.msra.mxu0 0.0
        %3414 = vmatprep.subr.mxu0 0.0
        %3415 = vmatpush1.msra.mxu0 0.0
        %3416 = vmatprep.subr.mxu0 0.0
        %3417 = vmatpush1.msra.mxu0 0.0
        %3418 = vmatprep.subr.mxu0 0.0
        %3419 = vmatpush1.msra.mxu0 0.0
        %3420 = vmatprep.subr.mxu0 0.0
        %3421 = vmatpush1.msra.mxu0 0.0
        %3422 = vmatprep.subr.mxu0 0.0
        %3423 = vmatpush1.msra.mxu0 0.0
        %3424 = vmatprep.subr.mxu0 0.0
        %3425 = vmatpush1.msra.mxu0 0.0
        %3426 = vmatprep.subr.mxu0 0.0
        %3427 = vmatpush1.msra.mxu0 0.0
        %3428 = vmatprep.subr.mxu0 0.0
        %3429 = vmatpush1.msra.mxu0 0.0
        %3430 = vmatprep.subr.mxu0 0.0
        %3431 = vmatpush1.msra.mxu0 0.0
        %3432 = vmatprep.subr.mxu0 0.0
        %3433 = vmatpush1.msra.mxu0 0.0
        %3434 = vmatprep.subr.mxu0 0.0
        %3435 = vmatpush1.msra.mxu0 0.0
        %3436 = vmatprep.subr.mxu0 0.0
        %3437 = vmatpush1.msra.mxu0 0.0
        %3438 = vmatprep.subr.mxu0 0.0
        %3439 = vmatpush1.msra.mxu0 0.0
        %3440 = vmatprep.subr.mxu0 0.0
        %3441 = vmatpush1.msra.mxu0 0.0
        %3442 = vmatprep.subr.mxu0 0.0
        %3443 = vmatpush1.msra.mxu0 0.0
        %3444 = vmatprep.subr.mxu0 0.0
        %3445 = vmatpush1.msra.mxu0 0.0
        %3446 = vmatprep.subr.mxu0 0.0
        %3447 = vmatpush1.msra.mxu0 0.0
        %3448 = vmatprep.subr.mxu0 0.0
        %3449 = vmatpush1.msra.mxu0 0.0
        %3450 = vmatprep.subr.mxu0 0.0
        %3451 = vmatpush1.msra.mxu0 0.0
        %3452 = vmatprep.mubr.f32.mxu0 0.0
        %3453 = vmatmul.mubr.f32.gmra.mrb[0].mxu0 %v3386
        %v3454 = vpop.f32.mrb[0].mxu0
        %v3455 = vadd.f32 0.0, %v3454
        %v3456 = vpop.f32.mrb[0].mxu0
        %3457 = vdwg.mxu0
        %v3458 = vsub.f32 %v3455, %v936
        %v3459 = vsub.f32 %v3455, %v941
        %v3460 = vsub.f32 %v3455, %v946
        %v3461 = vmul.f32 %v3382, %v721
        %v3462 = vmul.f32 %v3382, %v722
        %v3463 = vmul.f32 %v3382, %v723
        %v3464 = vmul.f32 %v3382, %v724
        %v3465 = vmul.f32 %v3382, %v725
        %v3466 = vmul.f32 %v3382, %v726
        %v3467 = vmul.f32 %v3382, %v727
        %v3468 = vmul.f32 %v3382, %v728
        %v3469 = vsel %vm847, %v3461, 0.0
        %3470 = vadd.xlane.f32.xlu0 %v3469
        %v3471 = vpop.xlane.xlu0 %3470
        %v3472 = vsel %vm847, %v3462, 0.0
        %3473 = vadd.xlane.f32.xlu0 %v3472
        %v3474 = vpop.xlane.xlu0 %3473
        %v3475 = vsel %vm847, %v3463, 0.0
        %3476 = vadd.xlane.f32.xlu0 %v3475
        %v3477 = vpop.xlane.xlu0 %3476
        %v3478 = vsel %vm847, %v3464, 0.0
        %3479 = vadd.xlane.f32.xlu0 %v3478
        %v3480 = vpop.xlane.xlu0 %3479
        %v3481 = vsel %vm847, %v3465, 0.0
        %3482 = vadd.xlane.f32.xlu0 %v3481
        %v3483 = vpop.xlane.xlu0 %3482
        %v3484 = vsel %vm847, %v3466, 0.0
        %3485 = vadd.xlane.f32.xlu0 %v3484
        %v3486 = vpop.xlane.xlu0 %3485
        %v3487 = vsel %vm847, %v3467, 0.0
        %3488 = vadd.xlane.f32.xlu0 %v3487
        %v3489 = vpop.xlane.xlu0 %3488
        %v3490 = vsel %vm847, %v3468, 0.0
        %3491 = vadd.xlane.f32.xlu0 %v3490
        %v3492 = vpop.xlane.xlu0 %3491
        %v3501 = vlaneseq
        %v3502 = vshrl.u32 %v3501, 7
        %v3503 = vsub.s32 %v990, %v3502
        %v3504 = vrot.slane %v3471, %v3503
        %v3505 = vlaneseq
        %v3506 = vshrl.u32 %v3505, 7
        %v3507 = vsub.s32 %v990, %v3506
        %v3508 = vrot.slane %v3474, %v3507
        %v3509 = vlaneseq
        %v3510 = vshrl.u32 %v3509, 7
        %v3511 = vsub.s32 %v990, %v3510
        %v3512 = vrot.slane %v3477, %v3511
        %v3513 = vlaneseq
        %v3514 = vshrl.u32 %v3513, 7
        %v3515 = vsub.s32 %v990, %v3514
        %v3516 = vrot.slane %v3480, %v3515
        %v3517 = vlaneseq
        %v3518 = vshrl.u32 %v3517, 7
        %v3519 = vsub.s32 %v990, %v3518
        %v3520 = vrot.slane %v3483, %v3519
        %v3521 = vlaneseq
        %v3522 = vshrl.u32 %v3521, 7
        %v3523 = vsub.s32 %v990, %v3522
        %v3524 = vrot.slane %v3486, %v3523
        %v3525 = vlaneseq
        %v3526 = vshrl.u32 %v3525, 7
        %v3527 = vsub.s32 %v990, %v3526
        %v3528 = vrot.slane %v3489, %v3527
        %v3529 = vlaneseq
        %v3530 = vshrl.u32 %v3529, 7
        %v3531 = vsub.s32 %v990, %v3530
        %v3532 = vrot.slane %v3492, %v3531
        %v3533 = vsel %vm1023, %v3508, %v3504
        %v3534 = vsel %vm1025, %v3512, %v3533
        %v3535 = vsel %vm1027, %v3516, %v3534
        %v3536 = vsel %vm1029, %v3520, %v3535
        %v3537 = vsel %vm1031, %v3524, %v3536
        %v3538 = vsel %vm1033, %v3528, %v3537
        %v3539 = vsel %vm1035, %v3532, %v3538
        %3541 = vxpose.xlu0.b32.start [1/16] %v3539, 128
        %3542 = vxpose.xlu0.b32.cont [2/16] 0.0, 128
        %3543 = vxpose.xlu0.b32.cont [3/16] 0.0, 128
        %3544 = vxpose.xlu0.b32.cont [4/16] 0.0, 128
        %3545 = vxpose.xlu0.b32.cont [5/16] 0.0, 128
        %3546 = vxpose.xlu0.b32.cont [6/16] 0.0, 128
        %3547 = vxpose.xlu0.b32.cont [7/16] 0.0, 128
        %3548 = vxpose.xlu0.b32.cont [8/16] 0.0, 128
        %3549 = vxpose.xlu0.b32.cont [9/16] 0.0, 128
        %3550 = vxpose.xlu0.b32.cont [10/16] 0.0, 128
        %3551 = vxpose.xlu0.b32.cont [11/16] 0.0, 128
        %3552 = vxpose.xlu0.b32.cont [12/16] 0.0, 128
        %3553 = vxpose.xlu0.b32.cont [13/16] 0.0, 128
        %3554 = vxpose.xlu0.b32.cont [14/16] 0.0, 128
        %3555 = vxpose.xlu0.b32.cont [15/16] 0.0, 128
        %3556 = vxpose.xlu0.b32.end [16/16] 0.0, 128
        %v3557 = vpop.trf.xlu0
        %v3558 = vpop.trf.xlu0
        %v3559 = vpop.trf.xlu0
        %v3560 = vpop.trf.xlu0
        %v3561 = vpop.trf.xlu0
        %v3562 = vpop.trf.xlu0
        %v3563 = vpop.trf.xlu0
        %v3564 = vpop.trf.xlu0
        %v3565 = vpop.trf.xlu0
        %v3566 = vpop.trf.xlu0
        %v3567 = vpop.trf.xlu0
        %v3568 = vpop.trf.xlu0
        %v3569 = vpop.trf.xlu0
        %v3570 = vpop.trf.xlu0
        %v3571 = vpop.trf.xlu0
        %v3572 = vpop.trf.xlu0
        %v3573 = vmul.f32 %v1073, %v3458
        %v3574 = vmul.f32 %v1078, %v3459
        %3576 = vrot.lane.b32.xlu0 %v3574, 124
        %v3577 = vpop.permute.xlu0 %3576
        %v3579 = vadd.f32 %v3573, %v3577
        %v3580 = vmul.f32 %v1088, %v3460
        %3582 = vrot.lane.b32.xlu0 %v3580, 120
        %v3583 = vpop.permute.xlu0 %3582
        %v3585 = vadd.f32 %v3579, %v3583
        %v3586 = vmul.f32 %v1098, %v3458
        %v3587 = vmul.f32 %v1103, %v3459
        %3589 = vrot.lane.b32.xlu0 %v3587, 124
        %v3590 = vpop.permute.xlu0 %3589
        %v3592 = vadd.f32 %v3586, %v3590
        %v3593 = vmul.f32 %v1113, %v3460
        %3595 = vrot.lane.b32.xlu0 %v3593, 120
        %v3596 = vpop.permute.xlu0 %3595
        %v3598 = vadd.f32 %v3592, %v3596
        %v3599 = vmul.f32 %v1123, %v3458
        %v3600 = vmul.f32 %v1128, %v3459
        %3602 = vrot.lane.b32.xlu0 %v3600, 124
        %v3603 = vpop.permute.xlu0 %3602
        %v3605 = vadd.f32 %v3599, %v3603
        %v3606 = vmul.f32 %v1138, %v3460
        %3608 = vrot.lane.b32.xlu0 %v3606, 120
        %v3609 = vpop.permute.xlu0 %3608
        %v3611 = vadd.f32 %v3605, %v3609
        %v3612 = vmul.f32 %v3585, %v3585
        %v3613 = vmul.f32 %v3598, %v3598
        %v3614 = vadd.f32 %v3612, %v3613
        %v3615 = vmul.f32 %v3611, %v3611
        %v3616 = vadd.f32 %v3614, %v3615
        %v3617 = vadd.f32 %v3616, 1e-12
        %v3618 = vrsqrt.pop %v3617
        %v3619 = vmul.f32 %v3616, %v3618
        %v3620 = vmul.f32 %v3585, %v3618
        %v3621 = vmul.f32 %v3598, %v3618
        %v3622 = vmul.f32 %v3611, %v3618
        %3624 = vrot.lane.b32.xlu0 %v3455, 8
        %v3625 = vpop.permute.xlu0 %3624
        %3628 = vrot.lane.b32.xlu0 %v3585, 8
        %v3629 = vpop.permute.xlu0 %3628
        %3632 = vrot.lane.b32.xlu0 %v3598, 12
        %v3633 = vpop.permute.xlu0 %3632
        %3636 = vrot.lane.b32.xlu0 %v3611, 16
        %v3637 = vpop.permute.xlu0 %3636
        %3640 = vrot.lane.b32.xlu0 %v3619, 20
        %v3641 = vpop.permute.xlu0 %3640
        %3644 = vrot.lane.b32.xlu0 %v3620, 24
        %v3645 = vpop.permute.xlu0 %3644
        %3648 = vrot.lane.b32.xlu0 %v3621, 28
        %v3649 = vpop.permute.xlu0 %3648
        %3652 = vrot.lane.b32.xlu0 %v3622, 32
        %v3653 = vpop.permute.xlu0 %3652
        %v3655 = vsel %vm847, %v3557, %v3625
        %v3656 = vsel %vm1190, %v3655, %v3629
        %v3657 = vsel %vm1192, %v3656, %v3633
        %v3658 = vsel %vm1194, %v3657, %v3637
        %v3659 = vsel %vm1196, %v3658, %v3641
        %v3660 = vsel %vm1198, %v3659, %v3645
        %v3661 = vsel %vm1200, %v3660, %v3649
        %v3662 = vsel %vm1202, %v3661, %v3653
        %s3663 = scalar_lea.vmem %s10, 280
        %v3664 = vld [vmem:[%s3663] sm:$0xff]
        %v3665 = vld [vmem:[%s3663 + $0x8] sm:$0xff]
        %v3666 = vld [vmem:[%s3663 + $0x10] sm:$0xff]
        %v3667 = vld [vmem:[%s3663 + $0x18] sm:$0xff]
        %v3668 = vld [vmem:[%s3663 + $0x20] sm:$0xff]
        %v3669 = vld [vmem:[%s3663 + $0x28] sm:$0xff]
        %v3670 = vld [vmem:[%s3663 + $0x30] sm:$0xf]
        %v3672 = vsel %vm1626, %v3662, 0
        %v3675 = vsel %vm1630, %v3670, 0
        %3677 = vmatprep.subr.mxu0 0.0
        %3678 = vmatpush1.msra.mxu0 %v3664
        %3679 = vmatprep.subr.mxu0 0.0
        %3680 = vmatpush1.msra.mxu0 %v3665
        %3681 = vmatprep.subr.mxu0 0.0
        %3682 = vmatpush1.msra.mxu0 %v3666
        %3683 = vmatprep.subr.mxu0 0.0
        %3684 = vmatpush1.msra.mxu0 %v3667
        %3685 = vmatprep.subr.mxu0 0.0
        %3686 = vmatpush1.msra.mxu0 %v3668
        %3687 = vmatprep.subr.mxu0 0.0
        %3688 = vmatpush1.msra.mxu0 %v3669
        %3689 = vmatprep.subr.mxu0 0.0
        %3690 = vmatpush1.msra.mxu0 %v3675
        %3691 = vmatprep.subr.mxu0 0.0
        %3692 = vmatpush1.msra.mxu0 0.0
        %3693 = vmatprep.subr.mxu0 0.0
        %3694 = vmatpush1.msra.mxu0 0.0
        %3695 = vmatprep.subr.mxu0 0.0
        %3696 = vmatpush1.msra.mxu0 0.0
        %3697 = vmatprep.subr.mxu0 0.0
        %3698 = vmatpush1.msra.mxu0 0.0
        %3699 = vmatprep.subr.mxu0 0.0
        %3700 = vmatpush1.msra.mxu0 0.0
        %3701 = vmatprep.subr.mxu0 0.0
        %3702 = vmatpush1.msra.mxu0 0.0
        %3703 = vmatprep.subr.mxu0 0.0
        %3704 = vmatpush1.msra.mxu0 0.0
        %3705 = vmatprep.subr.mxu0 0.0
        %3706 = vmatpush1.msra.mxu0 0.0
        %3707 = vmatprep.subr.mxu0 0.0
        %3708 = vmatpush1.msra.mxu0 0.0
        %3709 = vmatprep.subr.mxu0 0.0
        %3710 = vmatpush1.msra.mxu0 0.0
        %3711 = vmatprep.subr.mxu0 0.0
        %3712 = vmatpush1.msra.mxu0 0.0
        %3713 = vmatprep.subr.mxu0 0.0
        %3714 = vmatpush1.msra.mxu0 0.0
        %3715 = vmatprep.subr.mxu0 0.0
        %3716 = vmatpush1.msra.mxu0 0.0
        %3717 = vmatprep.subr.mxu0 0.0
        %3718 = vmatpush1.msra.mxu0 0.0
        %3719 = vmatprep.subr.mxu0 0.0
        %3720 = vmatpush1.msra.mxu0 0.0
        %3721 = vmatprep.subr.mxu0 0.0
        %3722 = vmatpush1.msra.mxu0 0.0
        %3723 = vmatprep.subr.mxu0 0.0
        %3724 = vmatpush1.msra.mxu0 0.0
        %3725 = vmatprep.subr.mxu0 0.0
        %3726 = vmatpush1.msra.mxu0 0.0
        %3727 = vmatprep.subr.mxu0 0.0
        %3728 = vmatpush1.msra.mxu0 0.0
        %3729 = vmatprep.subr.mxu0 0.0
        %3730 = vmatpush1.msra.mxu0 0.0
        %3731 = vmatprep.subr.mxu0 0.0
        %3732 = vmatpush1.msra.mxu0 0.0
        %3733 = vmatprep.subr.mxu0 0.0
        %3734 = vmatpush1.msra.mxu0 0.0
        %3735 = vmatprep.subr.mxu0 0.0
        %3736 = vmatpush1.msra.mxu0 0.0
        %3737 = vmatprep.subr.mxu0 0.0
        %3738 = vmatpush1.msra.mxu0 0.0
        %3739 = vmatprep.subr.mxu0 0.0
        %3740 = vmatpush1.msra.mxu0 0.0
        %3741 = vmatprep.mubr.f32.mxu0 0.0
        %3742 = vmatmul.mubr.f32.gmra.mrb[0].mxu0 %v3672
        %v3743 = vpop.f32.mrb[0].mxu0
        %v3744 = vadd.f32 0.0, %v3743
        %v3745 = vpop.f32.mrb[0].mxu0
        %3746 = vdwg.mxu0
        %v3747 = vadd.f32 %v3255, %v3744
        %s3748 = scalar_lea.vmem %s654, 48
        %v3749 = vld [vmem:[%s3748] sm:$0xff]
        %s3750 = scalar_lea.vmem %s659, 192
        %v3751 = vld [vmem:[%s3750] sm:$0xff]
        %v3752 = vld [vmem:[%s3750 + $0x8] sm:$0xff]
        %v3753 = vld [vmem:[%s3750 + $0x10] sm:$0xff]
        %v3754 = vld [vmem:[%s3750 + $0x18] sm:$0x3f]
        %s3755 = sld [smem:[#allocation2 + $0x300]]
        %v3756 = vstv %s3755
        %v3757 = vmul.f32 %v3756, %v721
        %s3758 = sld [smem:[#allocation2 + $0x301]]
        %v3759 = vstv %s3758
        %v3760 = vmul.f32 %v3759, %v722
        %v3761 = vadd.f32 %v3757, %v3760
        %s3762 = sld [smem:[#allocation2 + $0x302]]
        %v3763 = vstv %s3762
        %v3764 = vmul.f32 %v3763, %v723
        %v3765 = vadd.f32 %v3761, %v3764
        %s3766 = sld [smem:[#allocation2 + $0x303]]
        %v3767 = vstv %s3766
        %v3768 = vmul.f32 %v3767, %v724
        %v3769 = vadd.f32 %v3765, %v3768
        %s3770 = sld [smem:[#allocation2 + $0x304]]
        %v3771 = vstv %s3770
        %v3772 = vmul.f32 %v3771, %v725
        %v3773 = vadd.f32 %v3769, %v3772
        %s3774 = sld [smem:[#allocation2 + $0x305]]
        %v3775 = vstv %s3774
        %v3776 = vmul.f32 %v3775, %v726
        %v3777 = vadd.f32 %v3773, %v3776
        %s3778 = sld [smem:[#allocation2 + $0x306]]
        %v3779 = vstv %s3778
        %v3780 = vmul.f32 %v3779, %v727
        %v3781 = vadd.f32 %v3777, %v3780
        %s3782 = sld [smem:[#allocation2 + $0x307]]
        %v3783 = vstv %s3782
        %v3784 = vmul.f32 %v3783, %v728
        %v3785 = vadd.f32 %v3781, %v3784
        %v3787 = vsel %vm767, %v3749, 0
        %v3790 = vsel %vm771, %v3754, 0
        %3792 = vmatprep.subr.mxu0 0.0
        %3793 = vmatpush1.msra.mxu0 %v3751
        %3794 = vmatprep.subr.mxu0 0.0
        %3795 = vmatpush1.msra.mxu0 %v3752
        %3796 = vmatprep.subr.mxu0 0.0
        %3797 = vmatpush1.msra.mxu0 %v3753
        %3798 = vmatprep.subr.mxu0 0.0
        %3799 = vmatpush1.msra.mxu0 %v3790
        %3800 = vmatprep.subr.mxu0 0.0
        %3801 = vmatpush1.msra.mxu0 0.0
        %3802 = vmatprep.subr.mxu0 0.0
        %3803 = vmatpush1.msra.mxu0 0.0
        %3804 = vmatprep.subr.mxu0 0.0
        %3805 = vmatpush1.msra.mxu0 0.0
        %3806 = vmatprep.subr.mxu0 0.0
        %3807 = vmatpush1.msra.mxu0 0.0
        %3808 = vmatprep.subr.mxu0 0.0
        %3809 = vmatpush1.msra.mxu0 0.0
        %3810 = vmatprep.subr.mxu0 0.0
        %3811 = vmatpush1.msra.mxu0 0.0
        %3812 = vmatprep.subr.mxu0 0.0
        %3813 = vmatpush1.msra.mxu0 0.0
        %3814 = vmatprep.subr.mxu0 0.0
        %3815 = vmatpush1.msra.mxu0 0.0
        %3816 = vmatprep.subr.mxu0 0.0
        %3817 = vmatpush1.msra.mxu0 0.0
        %3818 = vmatprep.subr.mxu0 0.0
        %3819 = vmatpush1.msra.mxu0 0.0
        %3820 = vmatprep.subr.mxu0 0.0
        %3821 = vmatpush1.msra.mxu0 0.0
        %3822 = vmatprep.subr.mxu0 0.0
        %3823 = vmatpush1.msra.mxu0 0.0
        %3824 = vmatprep.subr.mxu0 0.0
        %3825 = vmatpush1.msra.mxu0 0.0
        %3826 = vmatprep.subr.mxu0 0.0
        %3827 = vmatpush1.msra.mxu0 0.0
        %3828 = vmatprep.subr.mxu0 0.0
        %3829 = vmatpush1.msra.mxu0 0.0
        %3830 = vmatprep.subr.mxu0 0.0
        %3831 = vmatpush1.msra.mxu0 0.0
        %3832 = vmatprep.subr.mxu0 0.0
        %3833 = vmatpush1.msra.mxu0 0.0
        %3834 = vmatprep.subr.mxu0 0.0
        %3835 = vmatpush1.msra.mxu0 0.0
        %3836 = vmatprep.subr.mxu0 0.0
        %3837 = vmatpush1.msra.mxu0 0.0
        %3838 = vmatprep.subr.mxu0 0.0
        %3839 = vmatpush1.msra.mxu0 0.0
        %3840 = vmatprep.subr.mxu0 0.0
        %3841 = vmatpush1.msra.mxu0 0.0
        %3842 = vmatprep.subr.mxu0 0.0
        %3843 = vmatpush1.msra.mxu0 0.0
        %3844 = vmatprep.subr.mxu0 0.0
        %3845 = vmatpush1.msra.mxu0 0.0
        %3846 = vmatprep.subr.mxu0 0.0
        %3847 = vmatpush1.msra.mxu0 0.0
        %3848 = vmatprep.subr.mxu0 0.0
        %3849 = vmatpush1.msra.mxu0 0.0
        %3850 = vmatprep.subr.mxu0 0.0
        %3851 = vmatpush1.msra.mxu0 0.0
        %3852 = vmatprep.subr.mxu0 0.0
        %3853 = vmatpush1.msra.mxu0 0.0
        %3854 = vmatprep.subr.mxu0 0.0
        %3855 = vmatpush1.msra.mxu0 0.0
        %3856 = vmatprep.mubr.f32.mxu0 0.0
        %3857 = vmatmul.mubr.f32.gmra.mrb[0].mxu0 %v3787
        %v3858 = vpop.f32.mrb[0].mxu0
        %v3859 = vadd.f32 %v3785, %v3858
        %v3860 = vpop.f32.mrb[0].mxu0
        %3861 = vdwg.mxu0
        %v3862 = vmul.f32 %v3859, 0.57735026
        %v3863 = vadd.f32 %v3862, %v720
        %v3864 = vsel %vm847, %v3863, -inf
        %3865 = vmax.xlane.f32.xlu0 %v3864
        %v3866 = vpop.xlane.xlu0 %3865
        %v3867 = vsub.f32 %v3863, %v3866
        %v3868 = vmul.f32 %v3867, 1.442695
        %v3869 = vpow.pop %v3868
        %v3870 = vsel %vm847, %v3869, 0.0
        %3871 = vadd.xlane.f32.xlu0 %v3870
        %v3872 = vpop.xlane.xlu0 %3871
        %v3873 = vrcp.pop %v3872
        %v3874 = vmul.f32 %v3869, %v3873
        %s3875 = scalar_lea.vmem %s664, 48
        %v3876 = vld [vmem:[%s3875] sm:$0xff]
        %v3878 = vsel %vm847, %v3874, 0
        %3880 = vmatprep.subr.mxu0 0.0
        %3881 = vmatpush1.msra.mxu0 %v3876
        %3882 = vmatprep.subr.mxu0 0.0
        %3883 = vmatpush1.msra.mxu0 0.0
        %3884 = vmatprep.subr.mxu0 0.0
        %3885 = vmatpush1.msra.mxu0 0.0
        %3886 = vmatprep.subr.mxu0 0.0
        %3887 = vmatpush1.msra.mxu0 0.0
        %3888 = vmatprep.subr.mxu0 0.0
        %3889 = vmatpush1.msra.mxu0 0.0
        %3890 = vmatprep.subr.mxu0 0.0
        %3891 = vmatpush1.msra.mxu0 0.0
        %3892 = vmatprep.subr.mxu0 0.0
        %3893 = vmatpush1.msra.mxu0 0.0
        %3894 = vmatprep.subr.mxu0 0.0
        %3895 = vmatpush1.msra.mxu0 0.0
        %3896 = vmatprep.subr.mxu0 0.0
        %3897 = vmatpush1.msra.mxu0 0.0
        %3898 = vmatprep.subr.mxu0 0.0
        %3899 = vmatpush1.msra.mxu0 0.0
        %3900 = vmatprep.subr.mxu0 0.0
        %3901 = vmatpush1.msra.mxu0 0.0
        %3902 = vmatprep.subr.mxu0 0.0
        %3903 = vmatpush1.msra.mxu0 0.0
        %3904 = vmatprep.subr.mxu0 0.0
        %3905 = vmatpush1.msra.mxu0 0.0
        %3906 = vmatprep.subr.mxu0 0.0
        %3907 = vmatpush1.msra.mxu0 0.0
        %3908 = vmatprep.subr.mxu0 0.0
        %3909 = vmatpush1.msra.mxu0 0.0
        %3910 = vmatprep.subr.mxu0 0.0
        %3911 = vmatpush1.msra.mxu0 0.0
        %3912 = vmatprep.subr.mxu0 0.0
        %3913 = vmatpush1.msra.mxu0 0.0
        %3914 = vmatprep.subr.mxu0 0.0
        %3915 = vmatpush1.msra.mxu0 0.0
        %3916 = vmatprep.subr.mxu0 0.0
        %3917 = vmatpush1.msra.mxu0 0.0
        %3918 = vmatprep.subr.mxu0 0.0
        %3919 = vmatpush1.msra.mxu0 0.0
        %3920 = vmatprep.subr.mxu0 0.0
        %3921 = vmatpush1.msra.mxu0 0.0
        %3922 = vmatprep.subr.mxu0 0.0
        %3923 = vmatpush1.msra.mxu0 0.0
        %3924 = vmatprep.subr.mxu0 0.0
        %3925 = vmatpush1.msra.mxu0 0.0
        %3926 = vmatprep.subr.mxu0 0.0
        %3927 = vmatpush1.msra.mxu0 0.0
        %3928 = vmatprep.subr.mxu0 0.0
        %3929 = vmatpush1.msra.mxu0 0.0
        %3930 = vmatprep.subr.mxu0 0.0
        %3931 = vmatpush1.msra.mxu0 0.0
        %3932 = vmatprep.subr.mxu0 0.0
        %3933 = vmatpush1.msra.mxu0 0.0
        %3934 = vmatprep.subr.mxu0 0.0
        %3935 = vmatpush1.msra.mxu0 0.0
        %3936 = vmatprep.subr.mxu0 0.0
        %3937 = vmatpush1.msra.mxu0 0.0
        %3938 = vmatprep.subr.mxu0 0.0
        %3939 = vmatpush1.msra.mxu0 0.0
        %3940 = vmatprep.subr.mxu0 0.0
        %3941 = vmatpush1.msra.mxu0 0.0
        %3942 = vmatprep.subr.mxu0 0.0
        %3943 = vmatpush1.msra.mxu0 0.0
        %3944 = vmatprep.mubr.f32.mxu0 0.0
        %3945 = vmatmul.mubr.f32.gmra.mrb[0].mxu0 %v3878
        %v3946 = vpop.f32.mrb[0].mxu0
        %v3947 = vadd.f32 0.0, %v3946
        %v3948 = vpop.f32.mrb[0].mxu0
        %3949 = vdwg.mxu0
        %v3950 = vsub.f32 %v3947, %v936
        %v3951 = vsub.f32 %v3947, %v941
        %v3952 = vsub.f32 %v3947, %v946
        %v3953 = vmul.f32 %v3874, %v721
        %v3954 = vmul.f32 %v3874, %v722
        %v3955 = vmul.f32 %v3874, %v723
        %v3956 = vmul.f32 %v3874, %v724
        %v3957 = vmul.f32 %v3874, %v725
        %v3958 = vmul.f32 %v3874, %v726
        %v3959 = vmul.f32 %v3874, %v727
        %v3960 = vmul.f32 %v3874, %v728
        %v3961 = vsel %vm847, %v3953, 0.0
        %3962 = vadd.xlane.f32.xlu0 %v3961
        %v3963 = vpop.xlane.xlu0 %3962
        %v3964 = vsel %vm847, %v3954, 0.0
        %3965 = vadd.xlane.f32.xlu0 %v3964
        %v3966 = vpop.xlane.xlu0 %3965
        %v3967 = vsel %vm847, %v3955, 0.0
        %3968 = vadd.xlane.f32.xlu0 %v3967
        %v3969 = vpop.xlane.xlu0 %3968
        %v3970 = vsel %vm847, %v3956, 0.0
        %3971 = vadd.xlane.f32.xlu0 %v3970
        %v3972 = vpop.xlane.xlu0 %3971
        %v3973 = vsel %vm847, %v3957, 0.0
        %3974 = vadd.xlane.f32.xlu0 %v3973
        %v3975 = vpop.xlane.xlu0 %3974
        %v3976 = vsel %vm847, %v3958, 0.0
        %3977 = vadd.xlane.f32.xlu0 %v3976
        %v3978 = vpop.xlane.xlu0 %3977
        %v3979 = vsel %vm847, %v3959, 0.0
        %3980 = vadd.xlane.f32.xlu0 %v3979
        %v3981 = vpop.xlane.xlu0 %3980
        %v3982 = vsel %vm847, %v3960, 0.0
        %3983 = vadd.xlane.f32.xlu0 %v3982
        %v3984 = vpop.xlane.xlu0 %3983
        %v3993 = vlaneseq
        %v3994 = vshrl.u32 %v3993, 7
        %v3995 = vsub.s32 %v990, %v3994
        %v3996 = vrot.slane %v3963, %v3995
        %v3997 = vlaneseq
        %v3998 = vshrl.u32 %v3997, 7
        %v3999 = vsub.s32 %v990, %v3998
        %v4000 = vrot.slane %v3966, %v3999
        %v4001 = vlaneseq
        %v4002 = vshrl.u32 %v4001, 7
        %v4003 = vsub.s32 %v990, %v4002
        %v4004 = vrot.slane %v3969, %v4003
        %v4005 = vlaneseq
        %v4006 = vshrl.u32 %v4005, 7
        %v4007 = vsub.s32 %v990, %v4006
        %v4008 = vrot.slane %v3972, %v4007
        %v4009 = vlaneseq
        %v4010 = vshrl.u32 %v4009, 7
        %v4011 = vsub.s32 %v990, %v4010
        %v4012 = vrot.slane %v3975, %v4011
        %v4013 = vlaneseq
        %v4014 = vshrl.u32 %v4013, 7
        %v4015 = vsub.s32 %v990, %v4014
        %v4016 = vrot.slane %v3978, %v4015
        %v4017 = vlaneseq
        %v4018 = vshrl.u32 %v4017, 7
        %v4019 = vsub.s32 %v990, %v4018
        %v4020 = vrot.slane %v3981, %v4019
        %v4021 = vlaneseq
        %v4022 = vshrl.u32 %v4021, 7
        %v4023 = vsub.s32 %v990, %v4022
        %v4024 = vrot.slane %v3984, %v4023
        %v4025 = vsel %vm1023, %v4000, %v3996
        %v4026 = vsel %vm1025, %v4004, %v4025
        %v4027 = vsel %vm1027, %v4008, %v4026
        %v4028 = vsel %vm1029, %v4012, %v4027
        %v4029 = vsel %vm1031, %v4016, %v4028
        %v4030 = vsel %vm1033, %v4020, %v4029
        %v4031 = vsel %vm1035, %v4024, %v4030
        %4033 = vxpose.xlu0.b32.start [1/16] %v4031, 128
        %4034 = vxpose.xlu0.b32.cont [2/16] 0.0, 128
        %4035 = vxpose.xlu0.b32.cont [3/16] 0.0, 128
        %4036 = vxpose.xlu0.b32.cont [4/16] 0.0, 128
        %4037 = vxpose.xlu0.b32.cont [5/16] 0.0, 128
        %4038 = vxpose.xlu0.b32.cont [6/16] 0.0, 128
        %4039 = vxpose.xlu0.b32.cont [7/16] 0.0, 128
        %4040 = vxpose.xlu0.b32.cont [8/16] 0.0, 128
        %4041 = vxpose.xlu0.b32.cont [9/16] 0.0, 128
        %4042 = vxpose.xlu0.b32.cont [10/16] 0.0, 128
        %4043 = vxpose.xlu0.b32.cont [11/16] 0.0, 128
        %4044 = vxpose.xlu0.b32.cont [12/16] 0.0, 128
        %4045 = vxpose.xlu0.b32.cont [13/16] 0.0, 128
        %4046 = vxpose.xlu0.b32.cont [14/16] 0.0, 128
        %4047 = vxpose.xlu0.b32.cont [15/16] 0.0, 128
        %4048 = vxpose.xlu0.b32.end [16/16] 0.0, 128
        %v4049 = vpop.trf.xlu0
        %v4050 = vpop.trf.xlu0
        %v4051 = vpop.trf.xlu0
        %v4052 = vpop.trf.xlu0
        %v4053 = vpop.trf.xlu0
        %v4054 = vpop.trf.xlu0
        %v4055 = vpop.trf.xlu0
        %v4056 = vpop.trf.xlu0
        %v4057 = vpop.trf.xlu0
        %v4058 = vpop.trf.xlu0
        %v4059 = vpop.trf.xlu0
        %v4060 = vpop.trf.xlu0
        %v4061 = vpop.trf.xlu0
        %v4062 = vpop.trf.xlu0
        %v4063 = vpop.trf.xlu0
        %v4064 = vpop.trf.xlu0
        %v4065 = vmul.f32 %v1073, %v3950
        %v4066 = vmul.f32 %v1078, %v3951
        %4068 = vrot.lane.b32.xlu0 %v4066, 124
        %v4069 = vpop.permute.xlu0 %4068
        %v4071 = vadd.f32 %v4065, %v4069
        %v4072 = vmul.f32 %v1088, %v3952
        %4074 = vrot.lane.b32.xlu0 %v4072, 120
        %v4075 = vpop.permute.xlu0 %4074
        %v4077 = vadd.f32 %v4071, %v4075
        %v4078 = vmul.f32 %v1098, %v3950
        %v4079 = vmul.f32 %v1103, %v3951
        %4081 = vrot.lane.b32.xlu0 %v4079, 124
        %v4082 = vpop.permute.xlu0 %4081
        %v4084 = vadd.f32 %v4078, %v4082
        %v4085 = vmul.f32 %v1113, %v3952
        %4087 = vrot.lane.b32.xlu0 %v4085, 120
        %v4088 = vpop.permute.xlu0 %4087
        %v4090 = vadd.f32 %v4084, %v4088
        %v4091 = vmul.f32 %v1123, %v3950
        %v4092 = vmul.f32 %v1128, %v3951
        %4094 = vrot.lane.b32.xlu0 %v4092, 124
        %v4095 = vpop.permute.xlu0 %4094
        %v4097 = vadd.f32 %v4091, %v4095
        %v4098 = vmul.f32 %v1138, %v3952
        %4100 = vrot.lane.b32.xlu0 %v4098, 120
        %v4101 = vpop.permute.xlu0 %4100
        %v4103 = vadd.f32 %v4097, %v4101
        %v4104 = vmul.f32 %v4077, %v4077
        %v4105 = vmul.f32 %v4090, %v4090
        %v4106 = vadd.f32 %v4104, %v4105
        %v4107 = vmul.f32 %v4103, %v4103
        %v4108 = vadd.f32 %v4106, %v4107
        %v4109 = vadd.f32 %v4108, 1e-12
        %v4110 = vrsqrt.pop %v4109
        %v4111 = vmul.f32 %v4108, %v4110
        %v4112 = vmul.f32 %v4077, %v4110
        %v4113 = vmul.f32 %v4090, %v4110
        %v4114 = vmul.f32 %v4103, %v4110
        %4116 = vrot.lane.b32.xlu0 %v3947, 8
        %v4117 = vpop.permute.xlu0 %4116
        %4120 = vrot.lane.b32.xlu0 %v4077, 8
        %v4121 = vpop.permute.xlu0 %4120
        %4124 = vrot.lane.b32.xlu0 %v4090, 12
        %v4125 = vpop.permute.xlu0 %4124
        %4128 = vrot.lane.b32.xlu0 %v4103, 16
        %v4129 = vpop.permute.xlu0 %4128
        %4132 = vrot.lane.b32.xlu0 %v4111, 20
        %v4133 = vpop.permute.xlu0 %4132
        %4136 = vrot.lane.b32.xlu0 %v4112, 24
        %v4137 = vpop.permute.xlu0 %4136
        %4140 = vrot.lane.b32.xlu0 %v4113, 28
        %v4141 = vpop.permute.xlu0 %4140
        %4144 = vrot.lane.b32.xlu0 %v4114, 32
        %v4145 = vpop.permute.xlu0 %4144
        %v4147 = vsel %vm847, %v4049, %v4117
        %v4148 = vsel %vm1190, %v4147, %v4121
        %v4149 = vsel %vm1192, %v4148, %v4125
        %v4150 = vsel %vm1194, %v4149, %v4129
        %v4151 = vsel %vm1196, %v4150, %v4133
        %v4152 = vsel %vm1198, %v4151, %v4137
        %v4153 = vsel %vm1200, %v4152, %v4141
        %v4154 = vsel %vm1202, %v4153, %v4145
        %s4155 = scalar_lea.vmem %s10, 336
        %v4156 = vld [vmem:[%s4155] sm:$0xff]
        %v4157 = vld [vmem:[%s4155 + $0x8] sm:$0xff]
        %v4158 = vld [vmem:[%s4155 + $0x10] sm:$0xff]
        %v4159 = vld [vmem:[%s4155 + $0x18] sm:$0xff]
        %v4160 = vld [vmem:[%s4155 + $0x20] sm:$0xff]
        %v4161 = vld [vmem:[%s4155 + $0x28] sm:$0xff]
        %v4162 = vld [vmem:[%s4155 + $0x30] sm:$0xf]
        %v4164 = vsel %vm1626, %v4154, 0
        %v4167 = vsel %vm1630, %v4162, 0
        %4169 = vmatprep.subr.mxu0 0.0
        %4170 = vmatpush1.msra.mxu0 %v4156
        %4171 = vmatprep.subr.mxu0 0.0
        %4172 = vmatpush1.msra.mxu0 %v4157
        %4173 = vmatprep.subr.mxu0 0.0
        %4174 = vmatpush1.msra.mxu0 %v4158
        %4175 = vmatprep.subr.mxu0 0.0
        %4176 = vmatpush1.msra.mxu0 %v4159
        %4177 = vmatprep.subr.mxu0 0.0
        %4178 = vmatpush1.msra.mxu0 %v4160
        %4179 = vmatprep.subr.mxu0 0.0
        %4180 = vmatpush1.msra.mxu0 %v4161
        %4181 = vmatprep.subr.mxu0 0.0
        %4182 = vmatpush1.msra.mxu0 %v4167
        %4183 = vmatprep.subr.mxu0 0.0
        %4184 = vmatpush1.msra.mxu0 0.0
        %4185 = vmatprep.subr.mxu0 0.0
        %4186 = vmatpush1.msra.mxu0 0.0
        %4187 = vmatprep.subr.mxu0 0.0
        %4188 = vmatpush1.msra.mxu0 0.0
        %4189 = vmatprep.subr.mxu0 0.0
        %4190 = vmatpush1.msra.mxu0 0.0
        %4191 = vmatprep.subr.mxu0 0.0
        %4192 = vmatpush1.msra.mxu0 0.0
        %4193 = vmatprep.subr.mxu0 0.0
        %4194 = vmatpush1.msra.mxu0 0.0
        %4195 = vmatprep.subr.mxu0 0.0
        %4196 = vmatpush1.msra.mxu0 0.0
        %4197 = vmatprep.subr.mxu0 0.0
        %4198 = vmatpush1.msra.mxu0 0.0
        %4199 = vmatprep.subr.mxu0 0.0
        %4200 = vmatpush1.msra.mxu0 0.0
        %4201 = vmatprep.subr.mxu0 0.0
        %4202 = vmatpush1.msra.mxu0 0.0
        %4203 = vmatprep.subr.mxu0 0.0
        %4204 = vmatpush1.msra.mxu0 0.0
        %4205 = vmatprep.subr.mxu0 0.0
        %4206 = vmatpush1.msra.mxu0 0.0
        %4207 = vmatprep.subr.mxu0 0.0
        %4208 = vmatpush1.msra.mxu0 0.0
        %4209 = vmatprep.subr.mxu0 0.0
        %4210 = vmatpush1.msra.mxu0 0.0
        %4211 = vmatprep.subr.mxu0 0.0
        %4212 = vmatpush1.msra.mxu0 0.0
        %4213 = vmatprep.subr.mxu0 0.0
        %4214 = vmatpush1.msra.mxu0 0.0
        %4215 = vmatprep.subr.mxu0 0.0
        %4216 = vmatpush1.msra.mxu0 0.0
        %4217 = vmatprep.subr.mxu0 0.0
        %4218 = vmatpush1.msra.mxu0 0.0
        %4219 = vmatprep.subr.mxu0 0.0
        %4220 = vmatpush1.msra.mxu0 0.0
        %4221 = vmatprep.subr.mxu0 0.0
        %4222 = vmatpush1.msra.mxu0 0.0
        %4223 = vmatprep.subr.mxu0 0.0
        %4224 = vmatpush1.msra.mxu0 0.0
        %4225 = vmatprep.subr.mxu0 0.0
        %4226 = vmatpush1.msra.mxu0 0.0
        %4227 = vmatprep.subr.mxu0 0.0
        %4228 = vmatpush1.msra.mxu0 0.0
        %4229 = vmatprep.subr.mxu0 0.0
        %4230 = vmatpush1.msra.mxu0 0.0
        %4231 = vmatprep.subr.mxu0 0.0
        %4232 = vmatpush1.msra.mxu0 0.0
        %4233 = vmatprep.mubr.f32.mxu0 0.0
        %4234 = vmatmul.mubr.f32.gmra.mrb[0].mxu0 %v4164
        %v4235 = vpop.f32.mrb[0].mxu0
        %v4236 = vadd.f32 0.0, %v4235
        %v4237 = vpop.f32.mrb[0].mxu0
        %4238 = vdwg.mxu0
        %v4239 = vadd.f32 %v3747, %v4236
        %s4240 = scalar_lea.vmem %s654, 56
        %v4241 = vld [vmem:[%s4240] sm:$0xff]
        %s4242 = scalar_lea.vmem %s659, 224
        %v4243 = vld [vmem:[%s4242] sm:$0xff]
        %v4244 = vld [vmem:[%s4242 + $0x8] sm:$0xff]
        %v4245 = vld [vmem:[%s4242 + $0x10] sm:$0xff]
        %v4246 = vld [vmem:[%s4242 + $0x18] sm:$0x3f]
        %s4247 = sld [smem:[#allocation2 + $0x380]]
        %v4248 = vstv %s4247
        %v4249 = vmul.f32 %v4248, %v721
        %s4250 = sld [smem:[#allocation2 + $0x381]]
        %v4251 = vstv %s4250
        %v4252 = vmul.f32 %v4251, %v722
        %v4253 = vadd.f32 %v4249, %v4252
        %s4254 = sld [smem:[#allocation2 + $0x382]]
        %v4255 = vstv %s4254
        %v4256 = vmul.f32 %v4255, %v723
        %v4257 = vadd.f32 %v4253, %v4256
        %s4258 = sld [smem:[#allocation2 + $0x383]]
        %v4259 = vstv %s4258
        %v4260 = vmul.f32 %v4259, %v724
        %v4261 = vadd.f32 %v4257, %v4260
        %s4262 = sld [smem:[#allocation2 + $0x384]]
        %v4263 = vstv %s4262
        %v4264 = vmul.f32 %v4263, %v725
        %v4265 = vadd.f32 %v4261, %v4264
        %s4266 = sld [smem:[#allocation2 + $0x385]]
        %v4267 = vstv %s4266
        %v4268 = vmul.f32 %v4267, %v726
        %v4269 = vadd.f32 %v4265, %v4268
        %s4270 = sld [smem:[#allocation2 + $0x386]]
        %v4271 = vstv %s4270
        %v4272 = vmul.f32 %v4271, %v727
        %v4273 = vadd.f32 %v4269, %v4272
        %s4274 = sld [smem:[#allocation2 + $0x387]]
        %v4275 = vstv %s4274
        %v4276 = vmul.f32 %v4275, %v728
        %v4277 = vadd.f32 %v4273, %v4276
        %v4279 = vsel %vm767, %v4241, 0
        %v4282 = vsel %vm771, %v4246, 0
        %4284 = vmatprep.subr.mxu0 0.0
        %4285 = vmatpush1.msra.mxu0 %v4243
        %4286 = vmatprep.subr.mxu0 0.0
        %4287 = vmatpush1.msra.mxu0 %v4244
        %4288 = vmatprep.subr.mxu0 0.0
        %4289 = vmatpush1.msra.mxu0 %v4245
        %4290 = vmatprep.subr.mxu0 0.0
        %4291 = vmatpush1.msra.mxu0 %v4282
        %4292 = vmatprep.subr.mxu0 0.0
        %4293 = vmatpush1.msra.mxu0 0.0
        %4294 = vmatprep.subr.mxu0 0.0
        %4295 = vmatpush1.msra.mxu0 0.0
        %4296 = vmatprep.subr.mxu0 0.0
        %4297 = vmatpush1.msra.mxu0 0.0
        %4298 = vmatprep.subr.mxu0 0.0
        %4299 = vmatpush1.msra.mxu0 0.0
        %4300 = vmatprep.subr.mxu0 0.0
        %4301 = vmatpush1.msra.mxu0 0.0
        %4302 = vmatprep.subr.mxu0 0.0
        %4303 = vmatpush1.msra.mxu0 0.0
        %4304 = vmatprep.subr.mxu0 0.0
        %4305 = vmatpush1.msra.mxu0 0.0
        %4306 = vmatprep.subr.mxu0 0.0
        %4307 = vmatpush1.msra.mxu0 0.0
        %4308 = vmatprep.subr.mxu0 0.0
        %4309 = vmatpush1.msra.mxu0 0.0
        %4310 = vmatprep.subr.mxu0 0.0
        %4311 = vmatpush1.msra.mxu0 0.0
        %4312 = vmatprep.subr.mxu0 0.0
        %4313 = vmatpush1.msra.mxu0 0.0
        %4314 = vmatprep.subr.mxu0 0.0
        %4315 = vmatpush1.msra.mxu0 0.0
        %4316 = vmatprep.subr.mxu0 0.0
        %4317 = vmatpush1.msra.mxu0 0.0
        %4318 = vmatprep.subr.mxu0 0.0
        %4319 = vmatpush1.msra.mxu0 0.0
        %4320 = vmatprep.subr.mxu0 0.0
        %4321 = vmatpush1.msra.mxu0 0.0
        %4322 = vmatprep.subr.mxu0 0.0
        %4323 = vmatpush1.msra.mxu0 0.0
        %4324 = vmatprep.subr.mxu0 0.0
        %4325 = vmatpush1.msra.mxu0 0.0
        %4326 = vmatprep.subr.mxu0 0.0
        %4327 = vmatpush1.msra.mxu0 0.0
        %4328 = vmatprep.subr.mxu0 0.0
        %4329 = vmatpush1.msra.mxu0 0.0
        %4330 = vmatprep.subr.mxu0 0.0
        %4331 = vmatpush1.msra.mxu0 0.0
        %4332 = vmatprep.subr.mxu0 0.0
        %4333 = vmatpush1.msra.mxu0 0.0
        %4334 = vmatprep.subr.mxu0 0.0
        %4335 = vmatpush1.msra.mxu0 0.0
        %4336 = vmatprep.subr.mxu0 0.0
        %4337 = vmatpush1.msra.mxu0 0.0
        %4338 = vmatprep.subr.mxu0 0.0
        %4339 = vmatpush1.msra.mxu0 0.0
        %4340 = vmatprep.subr.mxu0 0.0
        %4341 = vmatpush1.msra.mxu0 0.0
        %4342 = vmatprep.subr.mxu0 0.0
        %4343 = vmatpush1.msra.mxu0 0.0
        %4344 = vmatprep.subr.mxu0 0.0
        %4345 = vmatpush1.msra.mxu0 0.0
        %4346 = vmatprep.subr.mxu0 0.0
        %4347 = vmatpush1.msra.mxu0 0.0
        %4348 = vmatprep.mubr.f32.mxu0 0.0
        %4349 = vmatmul.mubr.f32.gmra.mrb[0].mxu0 %v4279
        %v4350 = vpop.f32.mrb[0].mxu0
        %v4351 = vadd.f32 %v4277, %v4350
        %v4352 = vpop.f32.mrb[0].mxu0
        %4353 = vdwg.mxu0
        %v4354 = vmul.f32 %v4351, 0.57735026
        %v4355 = vadd.f32 %v4354, %v720
        %v4356 = vsel %vm847, %v4355, -inf
        %4357 = vmax.xlane.f32.xlu0 %v4356
        %v4358 = vpop.xlane.xlu0 %4357
        %v4359 = vsub.f32 %v4355, %v4358
        %v4360 = vmul.f32 %v4359, 1.442695
        %v4361 = vpow.pop %v4360
        %v4362 = vsel %vm847, %v4361, 0.0
        %4363 = vadd.xlane.f32.xlu0 %v4362
        %v4364 = vpop.xlane.xlu0 %4363
        %v4365 = vrcp.pop %v4364
        %v4366 = vmul.f32 %v4361, %v4365
        %s4367 = scalar_lea.vmem %s664, 56
        %v4368 = vld [vmem:[%s4367] sm:$0xff]
        %v4370 = vsel %vm847, %v4366, 0
        %4372 = vmatprep.subr.mxu0 0.0
        %4373 = vmatpush1.msra.mxu0 %v4368
        %4374 = vmatprep.subr.mxu0 0.0
        %4375 = vmatpush1.msra.mxu0 0.0
        %4376 = vmatprep.subr.mxu0 0.0
        %4377 = vmatpush1.msra.mxu0 0.0
        %4378 = vmatprep.subr.mxu0 0.0
        %4379 = vmatpush1.msra.mxu0 0.0
        %4380 = vmatprep.subr.mxu0 0.0
        %4381 = vmatpush1.msra.mxu0 0.0
        %4382 = vmatprep.subr.mxu0 0.0
        %4383 = vmatpush1.msra.mxu0 0.0
        %4384 = vmatprep.subr.mxu0 0.0
        %4385 = vmatpush1.msra.mxu0 0.0
        %4386 = vmatprep.subr.mxu0 0.0
        %4387 = vmatpush1.msra.mxu0 0.0
        %4388 = vmatprep.subr.mxu0 0.0
        %4389 = vmatpush1.msra.mxu0 0.0
        %4390 = vmatprep.subr.mxu0 0.0
        %4391 = vmatpush1.msra.mxu0 0.0
        %4392 = vmatprep.subr.mxu0 0.0
        %4393 = vmatpush1.msra.mxu0 0.0
        %4394 = vmatprep.subr.mxu0 0.0
        %4395 = vmatpush1.msra.mxu0 0.0
        %4396 = vmatprep.subr.mxu0 0.0
        %4397 = vmatpush1.msra.mxu0 0.0
        %4398 = vmatprep.subr.mxu0 0.0
        %4399 = vmatpush1.msra.mxu0 0.0
        %4400 = vmatprep.subr.mxu0 0.0
        %4401 = vmatpush1.msra.mxu0 0.0
        %4402 = vmatprep.subr.mxu0 0.0
        %4403 = vmatpush1.msra.mxu0 0.0
        %4404 = vmatprep.subr.mxu0 0.0
        %4405 = vmatpush1.msra.mxu0 0.0
        %4406 = vmatprep.subr.mxu0 0.0
        %4407 = vmatpush1.msra.mxu0 0.0
        %4408 = vmatprep.subr.mxu0 0.0
        %4409 = vmatpush1.msra.mxu0 0.0
        %4410 = vmatprep.subr.mxu0 0.0
        %4411 = vmatpush1.msra.mxu0 0.0
        %4412 = vmatprep.subr.mxu0 0.0
        %4413 = vmatpush1.msra.mxu0 0.0
        %4414 = vmatprep.subr.mxu0 0.0
        %4415 = vmatpush1.msra.mxu0 0.0
        %4416 = vmatprep.subr.mxu0 0.0
        %4417 = vmatpush1.msra.mxu0 0.0
        %4418 = vmatprep.subr.mxu0 0.0
        %4419 = vmatpush1.msra.mxu0 0.0
        %4420 = vmatprep.subr.mxu0 0.0
        %4421 = vmatpush1.msra.mxu0 0.0
        %4422 = vmatprep.subr.mxu0 0.0
        %4423 = vmatpush1.msra.mxu0 0.0
        %4424 = vmatprep.subr.mxu0 0.0
        %4425 = vmatpush1.msra.mxu0 0.0
        %4426 = vmatprep.subr.mxu0 0.0
        %4427 = vmatpush1.msra.mxu0 0.0
        %4428 = vmatprep.subr.mxu0 0.0
        %4429 = vmatpush1.msra.mxu0 0.0
        %4430 = vmatprep.subr.mxu0 0.0
        %4431 = vmatpush1.msra.mxu0 0.0
        %4432 = vmatprep.subr.mxu0 0.0
        %4433 = vmatpush1.msra.mxu0 0.0
        %4434 = vmatprep.subr.mxu0 0.0
        %4435 = vmatpush1.msra.mxu0 0.0
        %4436 = vmatprep.mubr.f32.mxu0 0.0
        %4437 = vmatmul.mubr.f32.gmra.mrb[0].mxu0 %v4370
        %v4438 = vpop.f32.mrb[0].mxu0
        %v4439 = vadd.f32 0.0, %v4438
        %v4440 = vpop.f32.mrb[0].mxu0
        %4441 = vdwg.mxu0
        %v4442 = vsub.f32 %v4439, %v936
        %v4443 = vsub.f32 %v4439, %v941
        %v4444 = vsub.f32 %v4439, %v946
        %v4445 = vmul.f32 %v4366, %v721
        %v4446 = vmul.f32 %v4366, %v722
        %v4447 = vmul.f32 %v4366, %v723
        %v4448 = vmul.f32 %v4366, %v724
        %v4449 = vmul.f32 %v4366, %v725
        %v4450 = vmul.f32 %v4366, %v726
        %v4451 = vmul.f32 %v4366, %v727
        %v4452 = vmul.f32 %v4366, %v728
        %v4453 = vsel %vm847, %v4445, 0.0
        %4454 = vadd.xlane.f32.xlu0 %v4453
        %v4455 = vpop.xlane.xlu0 %4454
        %v4456 = vsel %vm847, %v4446, 0.0
        %4457 = vadd.xlane.f32.xlu0 %v4456
        %v4458 = vpop.xlane.xlu0 %4457
        %v4459 = vsel %vm847, %v4447, 0.0
        %4460 = vadd.xlane.f32.xlu0 %v4459
        %v4461 = vpop.xlane.xlu0 %4460
        %v4462 = vsel %vm847, %v4448, 0.0
        %4463 = vadd.xlane.f32.xlu0 %v4462
        %v4464 = vpop.xlane.xlu0 %4463
        %v4465 = vsel %vm847, %v4449, 0.0
        %4466 = vadd.xlane.f32.xlu0 %v4465
        %v4467 = vpop.xlane.xlu0 %4466
        %v4468 = vsel %vm847, %v4450, 0.0
        %4469 = vadd.xlane.f32.xlu0 %v4468
        %v4470 = vpop.xlane.xlu0 %4469
        %v4471 = vsel %vm847, %v4451, 0.0
        %4472 = vadd.xlane.f32.xlu0 %v4471
        %v4473 = vpop.xlane.xlu0 %4472
        %v4474 = vsel %vm847, %v4452, 0.0
        %4475 = vadd.xlane.f32.xlu0 %v4474
        %v4476 = vpop.xlane.xlu0 %4475
        %v4485 = vlaneseq
        %v4486 = vshrl.u32 %v4485, 7
        %v4487 = vsub.s32 %v990, %v4486
        %v4488 = vrot.slane %v4455, %v4487
        %v4489 = vlaneseq
        %v4490 = vshrl.u32 %v4489, 7
        %v4491 = vsub.s32 %v990, %v4490
        %v4492 = vrot.slane %v4458, %v4491
        %v4493 = vlaneseq
        %v4494 = vshrl.u32 %v4493, 7
        %v4495 = vsub.s32 %v990, %v4494
        %v4496 = vrot.slane %v4461, %v4495
        %v4497 = vlaneseq
        %v4498 = vshrl.u32 %v4497, 7
        %v4499 = vsub.s32 %v990, %v4498
        %v4500 = vrot.slane %v4464, %v4499
        %v4501 = vlaneseq
        %v4502 = vshrl.u32 %v4501, 7
        %v4503 = vsub.s32 %v990, %v4502
        %v4504 = vrot.slane %v4467, %v4503
        %v4505 = vlaneseq
        %v4506 = vshrl.u32 %v4505, 7
        %v4507 = vsub.s32 %v990, %v4506
        %v4508 = vrot.slane %v4470, %v4507
        %v4509 = vlaneseq
        %v4510 = vshrl.u32 %v4509, 7
        %v4511 = vsub.s32 %v990, %v4510
        %v4512 = vrot.slane %v4473, %v4511
        %v4513 = vlaneseq
        %v4514 = vshrl.u32 %v4513, 7
        %v4515 = vsub.s32 %v990, %v4514
        %v4516 = vrot.slane %v4476, %v4515
        %v4517 = vsel %vm1023, %v4492, %v4488
        %v4518 = vsel %vm1025, %v4496, %v4517
        %v4519 = vsel %vm1027, %v4500, %v4518
        %v4520 = vsel %vm1029, %v4504, %v4519
        %v4521 = vsel %vm1031, %v4508, %v4520
        %v4522 = vsel %vm1033, %v4512, %v4521
        %v4523 = vsel %vm1035, %v4516, %v4522
        %4525 = vxpose.xlu0.b32.start [1/16] %v4523, 128
        %4526 = vxpose.xlu0.b32.cont [2/16] 0.0, 128
        %4527 = vxpose.xlu0.b32.cont [3/16] 0.0, 128
        %4528 = vxpose.xlu0.b32.cont [4/16] 0.0, 128
        %4529 = vxpose.xlu0.b32.cont [5/16] 0.0, 128
        %4530 = vxpose.xlu0.b32.cont [6/16] 0.0, 128
        %4531 = vxpose.xlu0.b32.cont [7/16] 0.0, 128
        %4532 = vxpose.xlu0.b32.cont [8/16] 0.0, 128
        %4533 = vxpose.xlu0.b32.cont [9/16] 0.0, 128
        %4534 = vxpose.xlu0.b32.cont [10/16] 0.0, 128
        %4535 = vxpose.xlu0.b32.cont [11/16] 0.0, 128
        %4536 = vxpose.xlu0.b32.cont [12/16] 0.0, 128
        %4537 = vxpose.xlu0.b32.cont [13/16] 0.0, 128
        %4538 = vxpose.xlu0.b32.cont [14/16] 0.0, 128
        %4539 = vxpose.xlu0.b32.cont [15/16] 0.0, 128
        %4540 = vxpose.xlu0.b32.end [16/16] 0.0, 128
        %v4541 = vpop.trf.xlu0
        %v4542 = vpop.trf.xlu0
        %v4543 = vpop.trf.xlu0
        %v4544 = vpop.trf.xlu0
        %v4545 = vpop.trf.xlu0
        %v4546 = vpop.trf.xlu0
        %v4547 = vpop.trf.xlu0
        %v4548 = vpop.trf.xlu0
        %v4549 = vpop.trf.xlu0
        %v4550 = vpop.trf.xlu0
        %v4551 = vpop.trf.xlu0
        %v4552 = vpop.trf.xlu0
        %v4553 = vpop.trf.xlu0
        %v4554 = vpop.trf.xlu0
        %v4555 = vpop.trf.xlu0
        %v4556 = vpop.trf.xlu0
        %v4557 = vmul.f32 %v1073, %v4442
        %v4558 = vmul.f32 %v1078, %v4443
        %4560 = vrot.lane.b32.xlu0 %v4558, 124
        %v4561 = vpop.permute.xlu0 %4560
        %v4563 = vadd.f32 %v4557, %v4561
        %v4564 = vmul.f32 %v1088, %v4444
        %4566 = vrot.lane.b32.xlu0 %v4564, 120
        %v4567 = vpop.permute.xlu0 %4566
        %v4569 = vadd.f32 %v4563, %v4567
        %v4570 = vmul.f32 %v1098, %v4442
        %v4571 = vmul.f32 %v1103, %v4443
        %4573 = vrot.lane.b32.xlu0 %v4571, 124
        %v4574 = vpop.permute.xlu0 %4573
        %v4576 = vadd.f32 %v4570, %v4574
        %v4577 = vmul.f32 %v1113, %v4444
        %4579 = vrot.lane.b32.xlu0 %v4577, 120
        %v4580 = vpop.permute.xlu0 %4579
        %v4582 = vadd.f32 %v4576, %v4580
        %v4583 = vmul.f32 %v1123, %v4442
        %v4584 = vmul.f32 %v1128, %v4443
        %4586 = vrot.lane.b32.xlu0 %v4584, 124
        %v4587 = vpop.permute.xlu0 %4586
        %v4589 = vadd.f32 %v4583, %v4587
        %v4590 = vmul.f32 %v1138, %v4444
        %4592 = vrot.lane.b32.xlu0 %v4590, 120
        %v4593 = vpop.permute.xlu0 %4592
        %v4595 = vadd.f32 %v4589, %v4593
        %v4596 = vmul.f32 %v4569, %v4569
        %v4597 = vmul.f32 %v4582, %v4582
        %v4598 = vadd.f32 %v4596, %v4597
        %v4599 = vmul.f32 %v4595, %v4595
        %v4600 = vadd.f32 %v4598, %v4599
        %v4601 = vadd.f32 %v4600, 1e-12
        %v4602 = vrsqrt.pop %v4601
        %v4603 = vmul.f32 %v4600, %v4602
        %v4604 = vmul.f32 %v4569, %v4602
        %v4605 = vmul.f32 %v4582, %v4602
        %v4606 = vmul.f32 %v4595, %v4602
        %4608 = vrot.lane.b32.xlu0 %v4439, 8
        %v4609 = vpop.permute.xlu0 %4608
        %4612 = vrot.lane.b32.xlu0 %v4569, 8
        %v4613 = vpop.permute.xlu0 %4612
        %4616 = vrot.lane.b32.xlu0 %v4582, 12
        %v4617 = vpop.permute.xlu0 %4616
        %4620 = vrot.lane.b32.xlu0 %v4595, 16
        %v4621 = vpop.permute.xlu0 %4620
        %4624 = vrot.lane.b32.xlu0 %v4603, 20
        %v4625 = vpop.permute.xlu0 %4624
        %4628 = vrot.lane.b32.xlu0 %v4604, 24
        %v4629 = vpop.permute.xlu0 %4628
        %4632 = vrot.lane.b32.xlu0 %v4605, 28
        %v4633 = vpop.permute.xlu0 %4632
        %4636 = vrot.lane.b32.xlu0 %v4606, 32
        %v4637 = vpop.permute.xlu0 %4636
        %v4639 = vsel %vm847, %v4541, %v4609
        %v4640 = vsel %vm1190, %v4639, %v4613
        %v4641 = vsel %vm1192, %v4640, %v4617
        %v4642 = vsel %vm1194, %v4641, %v4621
        %v4643 = vsel %vm1196, %v4642, %v4625
        %v4644 = vsel %vm1198, %v4643, %v4629
        %v4645 = vsel %vm1200, %v4644, %v4633
        %v4646 = vsel %vm1202, %v4645, %v4637
        %s4647 = scalar_lea.vmem %s10, 392
        %v4648 = vld [vmem:[%s4647] sm:$0xff]
        %v4649 = vld [vmem:[%s4647 + $0x8] sm:$0xff]
        %v4650 = vld [vmem:[%s4647 + $0x10] sm:$0xff]
        %v4651 = vld [vmem:[%s4647 + $0x18] sm:$0xff]
        %v4652 = vld [vmem:[%s4647 + $0x20] sm:$0xff]
        %v4653 = vld [vmem:[%s4647 + $0x28] sm:$0xff]
        %v4654 = vld [vmem:[%s4647 + $0x30] sm:$0xf]
        %v4656 = vsel %vm1626, %v4646, 0
        %v4659 = vsel %vm1630, %v4654, 0
        %4661 = vmatprep.subr.mxu0 0.0
        %4662 = vmatpush1.msra.mxu0 %v4648
        %4663 = vmatprep.subr.mxu0 0.0
        %4664 = vmatpush1.msra.mxu0 %v4649
        %4665 = vmatprep.subr.mxu0 0.0
        %4666 = vmatpush1.msra.mxu0 %v4650
        %4667 = vmatprep.subr.mxu0 0.0
        %4668 = vmatpush1.msra.mxu0 %v4651
        %4669 = vmatprep.subr.mxu0 0.0
        %4670 = vmatpush1.msra.mxu0 %v4652
        %4671 = vmatprep.subr.mxu0 0.0
        %4672 = vmatpush1.msra.mxu0 %v4653
        %4673 = vmatprep.subr.mxu0 0.0
        %4674 = vmatpush1.msra.mxu0 %v4659
        %4675 = vmatprep.subr.mxu0 0.0
        %4676 = vmatpush1.msra.mxu0 0.0
        %4677 = vmatprep.subr.mxu0 0.0
        %4678 = vmatpush1.msra.mxu0 0.0
        %4679 = vmatprep.subr.mxu0 0.0
        %4680 = vmatpush1.msra.mxu0 0.0
        %4681 = vmatprep.subr.mxu0 0.0
        %4682 = vmatpush1.msra.mxu0 0.0
        %4683 = vmatprep.subr.mxu0 0.0
        %4684 = vmatpush1.msra.mxu0 0.0
        %4685 = vmatprep.subr.mxu0 0.0
        %4686 = vmatpush1.msra.mxu0 0.0
        %4687 = vmatprep.subr.mxu0 0.0
        %4688 = vmatpush1.msra.mxu0 0.0
        %4689 = vmatprep.subr.mxu0 0.0
        %4690 = vmatpush1.msra.mxu0 0.0
        %4691 = vmatprep.subr.mxu0 0.0
        %4692 = vmatpush1.msra.mxu0 0.0
        %4693 = vmatprep.subr.mxu0 0.0
        %4694 = vmatpush1.msra.mxu0 0.0
        %4695 = vmatprep.subr.mxu0 0.0
        %4696 = vmatpush1.msra.mxu0 0.0
        %4697 = vmatprep.subr.mxu0 0.0
        %4698 = vmatpush1.msra.mxu0 0.0
        %4699 = vmatprep.subr.mxu0 0.0
        %4700 = vmatpush1.msra.mxu0 0.0
        %4701 = vmatprep.subr.mxu0 0.0
        %4702 = vmatpush1.msra.mxu0 0.0
        %4703 = vmatprep.subr.mxu0 0.0
        %4704 = vmatpush1.msra.mxu0 0.0
        %4705 = vmatprep.subr.mxu0 0.0
        %4706 = vmatpush1.msra.mxu0 0.0
        %4707 = vmatprep.subr.mxu0 0.0
        %4708 = vmatpush1.msra.mxu0 0.0
        %4709 = vmatprep.subr.mxu0 0.0
        %4710 = vmatpush1.msra.mxu0 0.0
        %4711 = vmatprep.subr.mxu0 0.0
        %4712 = vmatpush1.msra.mxu0 0.0
        %4713 = vmatprep.subr.mxu0 0.0
        %4714 = vmatpush1.msra.mxu0 0.0
        %4715 = vmatprep.subr.mxu0 0.0
        %4716 = vmatpush1.msra.mxu0 0.0
        %4717 = vmatprep.subr.mxu0 0.0
        %4718 = vmatpush1.msra.mxu0 0.0
        %4719 = vmatprep.subr.mxu0 0.0
        %4720 = vmatpush1.msra.mxu0 0.0
        %4721 = vmatprep.subr.mxu0 0.0
        %4722 = vmatpush1.msra.mxu0 0.0
        %4723 = vmatprep.subr.mxu0 0.0
        %4724 = vmatpush1.msra.mxu0 0.0
        %4725 = vmatprep.mubr.f32.mxu0 0.0
        %4726 = vmatmul.mubr.f32.gmra.mrb[0].mxu0 %v4656
        %v4727 = vpop.f32.mrb[0].mxu0
        %v4728 = vadd.f32 0.0, %v4727
        %v4729 = vpop.f32.mrb[0].mxu0
        %4730 = vdwg.mxu0
        %v4731 = vadd.f32 %v4239, %v4728
        %s4732 = scalar_lea.vmem %s654, 64
        %v4733 = vld [vmem:[%s4732] sm:$0xff]
        %s4734 = scalar_lea.vmem %s659, 256
        %v4735 = vld [vmem:[%s4734] sm:$0xff]
        %v4736 = vld [vmem:[%s4734 + $0x8] sm:$0xff]
        %v4737 = vld [vmem:[%s4734 + $0x10] sm:$0xff]
        %v4738 = vld [vmem:[%s4734 + $0x18] sm:$0x3f]
        %s4739 = sld [smem:[#allocation2 + $0x400]]
        %v4740 = vstv %s4739
        %v4741 = vmul.f32 %v4740, %v721
        %s4742 = sld [smem:[#allocation2 + $0x401]]
        %v4743 = vstv %s4742
        %v4744 = vmul.f32 %v4743, %v722
        %v4745 = vadd.f32 %v4741, %v4744
        %s4746 = sld [smem:[#allocation2 + $0x402]]
        %v4747 = vstv %s4746
        %v4748 = vmul.f32 %v4747, %v723
        %v4749 = vadd.f32 %v4745, %v4748
        %s4750 = sld [smem:[#allocation2 + $0x403]]
        %v4751 = vstv %s4750
        %v4752 = vmul.f32 %v4751, %v724
        %v4753 = vadd.f32 %v4749, %v4752
        %s4754 = sld [smem:[#allocation2 + $0x404]]
        %v4755 = vstv %s4754
        %v4756 = vmul.f32 %v4755, %v725
        %v4757 = vadd.f32 %v4753, %v4756
        %s4758 = sld [smem:[#allocation2 + $0x405]]
        %v4759 = vstv %s4758
        %v4760 = vmul.f32 %v4759, %v726
        %v4761 = vadd.f32 %v4757, %v4760
        %s4762 = sld [smem:[#allocation2 + $0x406]]
        %v4763 = vstv %s4762
        %v4764 = vmul.f32 %v4763, %v727
        %v4765 = vadd.f32 %v4761, %v4764
        %s4766 = sld [smem:[#allocation2 + $0x407]]
        %v4767 = vstv %s4766
        %v4768 = vmul.f32 %v4767, %v728
        %v4769 = vadd.f32 %v4765, %v4768
        %v4771 = vsel %vm767, %v4733, 0
        %v4774 = vsel %vm771, %v4738, 0
        %4776 = vmatprep.subr.mxu0 0.0
        %4777 = vmatpush1.msra.mxu0 %v4735
        %4778 = vmatprep.subr.mxu0 0.0
        %4779 = vmatpush1.msra.mxu0 %v4736
        %4780 = vmatprep.subr.mxu0 0.0
        %4781 = vmatpush1.msra.mxu0 %v4737
        %4782 = vmatprep.subr.mxu0 0.0
        %4783 = vmatpush1.msra.mxu0 %v4774
        %4784 = vmatprep.subr.mxu0 0.0
        %4785 = vmatpush1.msra.mxu0 0.0
        %4786 = vmatprep.subr.mxu0 0.0
        %4787 = vmatpush1.msra.mxu0 0.0
        %4788 = vmatprep.subr.mxu0 0.0
        %4789 = vmatpush1.msra.mxu0 0.0
        %4790 = vmatprep.subr.mxu0 0.0
        %4791 = vmatpush1.msra.mxu0 0.0
        %4792 = vmatprep.subr.mxu0 0.0
        %4793 = vmatpush1.msra.mxu0 0.0
        %4794 = vmatprep.subr.mxu0 0.0
        %4795 = vmatpush1.msra.mxu0 0.0
        %4796 = vmatprep.subr.mxu0 0.0
        %4797 = vmatpush1.msra.mxu0 0.0
        %4798 = vmatprep.subr.mxu0 0.0
        %4799 = vmatpush1.msra.mxu0 0.0
        %4800 = vmatprep.subr.mxu0 0.0
        %4801 = vmatpush1.msra.mxu0 0.0
        %4802 = vmatprep.subr.mxu0 0.0
        %4803 = vmatpush1.msra.mxu0 0.0
        %4804 = vmatprep.subr.mxu0 0.0
        %4805 = vmatpush1.msra.mxu0 0.0
        %4806 = vmatprep.subr.mxu0 0.0
        %4807 = vmatpush1.msra.mxu0 0.0
        %4808 = vmatprep.subr.mxu0 0.0
        %4809 = vmatpush1.msra.mxu0 0.0
        %4810 = vmatprep.subr.mxu0 0.0
        %4811 = vmatpush1.msra.mxu0 0.0
        %4812 = vmatprep.subr.mxu0 0.0
        %4813 = vmatpush1.msra.mxu0 0.0
        %4814 = vmatprep.subr.mxu0 0.0
        %4815 = vmatpush1.msra.mxu0 0.0
        %4816 = vmatprep.subr.mxu0 0.0
        %4817 = vmatpush1.msra.mxu0 0.0
        %4818 = vmatprep.subr.mxu0 0.0
        %4819 = vmatpush1.msra.mxu0 0.0
        %4820 = vmatprep.subr.mxu0 0.0
        %4821 = vmatpush1.msra.mxu0 0.0
        %4822 = vmatprep.subr.mxu0 0.0
        %4823 = vmatpush1.msra.mxu0 0.0
        %4824 = vmatprep.subr.mxu0 0.0
        %4825 = vmatpush1.msra.mxu0 0.0
        %4826 = vmatprep.subr.mxu0 0.0
        %4827 = vmatpush1.msra.mxu0 0.0
        %4828 = vmatprep.subr.mxu0 0.0
        %4829 = vmatpush1.msra.mxu0 0.0
        %4830 = vmatprep.subr.mxu0 0.0
        %4831 = vmatpush1.msra.mxu0 0.0
        %4832 = vmatprep.subr.mxu0 0.0
        %4833 = vmatpush1.msra.mxu0 0.0
        %4834 = vmatprep.subr.mxu0 0.0
        %4835 = vmatpush1.msra.mxu0 0.0
        %4836 = vmatprep.subr.mxu0 0.0
        %4837 = vmatpush1.msra.mxu0 0.0
        %4838 = vmatprep.subr.mxu0 0.0
        %4839 = vmatpush1.msra.mxu0 0.0
        %4840 = vmatprep.mubr.f32.mxu0 0.0
        %4841 = vmatmul.mubr.f32.gmra.mrb[0].mxu0 %v4771
        %v4842 = vpop.f32.mrb[0].mxu0
        %v4843 = vadd.f32 %v4769, %v4842
        %v4844 = vpop.f32.mrb[0].mxu0
        %4845 = vdwg.mxu0
        %v4846 = vmul.f32 %v4843, 0.57735026
        %v4847 = vadd.f32 %v4846, %v720
        %v4848 = vsel %vm847, %v4847, -inf
        %4849 = vmax.xlane.f32.xlu0 %v4848
        %v4850 = vpop.xlane.xlu0 %4849
        %v4851 = vsub.f32 %v4847, %v4850
        %v4852 = vmul.f32 %v4851, 1.442695
        %v4853 = vpow.pop %v4852
        %v4854 = vsel %vm847, %v4853, 0.0
        %4855 = vadd.xlane.f32.xlu0 %v4854
        %v4856 = vpop.xlane.xlu0 %4855
        %v4857 = vrcp.pop %v4856
        %v4858 = vmul.f32 %v4853, %v4857
        %s4859 = scalar_lea.vmem %s664, 64
        %v4860 = vld [vmem:[%s4859] sm:$0xff]
        %v4862 = vsel %vm847, %v4858, 0
        %4864 = vmatprep.subr.mxu0 0.0
        %4865 = vmatpush1.msra.mxu0 %v4860
        %4866 = vmatprep.subr.mxu0 0.0
        %4867 = vmatpush1.msra.mxu0 0.0
        %4868 = vmatprep.subr.mxu0 0.0
        %4869 = vmatpush1.msra.mxu0 0.0
        %4870 = vmatprep.subr.mxu0 0.0
        %4871 = vmatpush1.msra.mxu0 0.0
        %4872 = vmatprep.subr.mxu0 0.0
        %4873 = vmatpush1.msra.mxu0 0.0
        %4874 = vmatprep.subr.mxu0 0.0
        %4875 = vmatpush1.msra.mxu0 0.0
        %4876 = vmatprep.subr.mxu0 0.0
        %4877 = vmatpush1.msra.mxu0 0.0
        %4878 = vmatprep.subr.mxu0 0.0
        %4879 = vmatpush1.msra.mxu0 0.0
        %4880 = vmatprep.subr.mxu0 0.0
        %4881 = vmatpush1.msra.mxu0 0.0
        %4882 = vmatprep.subr.mxu0 0.0
        %4883 = vmatpush1.msra.mxu0 0.0
        %4884 = vmatprep.subr.mxu0 0.0
        %4885 = vmatpush1.msra.mxu0 0.0
        %4886 = vmatprep.subr.mxu0 0.0
        %4887 = vmatpush1.msra.mxu0 0.0
        %4888 = vmatprep.subr.mxu0 0.0
        %4889 = vmatpush1.msra.mxu0 0.0
        %4890 = vmatprep.subr.mxu0 0.0
        %4891 = vmatpush1.msra.mxu0 0.0
        %4892 = vmatprep.subr.mxu0 0.0
        %4893 = vmatpush1.msra.mxu0 0.0
        %4894 = vmatprep.subr.mxu0 0.0
        %4895 = vmatpush1.msra.mxu0 0.0
        %4896 = vmatprep.subr.mxu0 0.0
        %4897 = vmatpush1.msra.mxu0 0.0
        %4898 = vmatprep.subr.mxu0 0.0
        %4899 = vmatpush1.msra.mxu0 0.0
        %4900 = vmatprep.subr.mxu0 0.0
        %4901 = vmatpush1.msra.mxu0 0.0
        %4902 = vmatprep.subr.mxu0 0.0
        %4903 = vmatpush1.msra.mxu0 0.0
        %4904 = vmatprep.subr.mxu0 0.0
        %4905 = vmatpush1.msra.mxu0 0.0
        %4906 = vmatprep.subr.mxu0 0.0
        %4907 = vmatpush1.msra.mxu0 0.0
        %4908 = vmatprep.subr.mxu0 0.0
        %4909 = vmatpush1.msra.mxu0 0.0
        %4910 = vmatprep.subr.mxu0 0.0
        %4911 = vmatpush1.msra.mxu0 0.0
        %4912 = vmatprep.subr.mxu0 0.0
        %4913 = vmatpush1.msra.mxu0 0.0
        %4914 = vmatprep.subr.mxu0 0.0
        %4915 = vmatpush1.msra.mxu0 0.0
        %4916 = vmatprep.subr.mxu0 0.0
        %4917 = vmatpush1.msra.mxu0 0.0
        %4918 = vmatprep.subr.mxu0 0.0
        %4919 = vmatpush1.msra.mxu0 0.0
        %4920 = vmatprep.subr.mxu0 0.0
        %4921 = vmatpush1.msra.mxu0 0.0
        %4922 = vmatprep.subr.mxu0 0.0
        %4923 = vmatpush1.msra.mxu0 0.0
        %4924 = vmatprep.subr.mxu0 0.0
        %4925 = vmatpush1.msra.mxu0 0.0
        %4926 = vmatprep.subr.mxu0 0.0
        %4927 = vmatpush1.msra.mxu0 0.0
        %4928 = vmatprep.mubr.f32.mxu0 0.0
        %4929 = vmatmul.mubr.f32.gmra.mrb[0].mxu0 %v4862
        %v4930 = vpop.f32.mrb[0].mxu0
        %v4931 = vadd.f32 0.0, %v4930
        %v4932 = vpop.f32.mrb[0].mxu0
        %4933 = vdwg.mxu0
        %v4934 = vsub.f32 %v4931, %v936
        %v4935 = vsub.f32 %v4931, %v941
        %v4936 = vsub.f32 %v4931, %v946
        %v4937 = vmul.f32 %v4858, %v721
        %v4938 = vmul.f32 %v4858, %v722
        %v4939 = vmul.f32 %v4858, %v723
        %v4940 = vmul.f32 %v4858, %v724
        %v4941 = vmul.f32 %v4858, %v725
        %v4942 = vmul.f32 %v4858, %v726
        %v4943 = vmul.f32 %v4858, %v727
        %v4944 = vmul.f32 %v4858, %v728
        %v4945 = vsel %vm847, %v4937, 0.0
        %4946 = vadd.xlane.f32.xlu0 %v4945
        %v4947 = vpop.xlane.xlu0 %4946
        %v4948 = vsel %vm847, %v4938, 0.0
        %4949 = vadd.xlane.f32.xlu0 %v4948
        %v4950 = vpop.xlane.xlu0 %4949
        %v4951 = vsel %vm847, %v4939, 0.0
        %4952 = vadd.xlane.f32.xlu0 %v4951
        %v4953 = vpop.xlane.xlu0 %4952
        %v4954 = vsel %vm847, %v4940, 0.0
        %4955 = vadd.xlane.f32.xlu0 %v4954
        %v4956 = vpop.xlane.xlu0 %4955
        %v4957 = vsel %vm847, %v4941, 0.0
        %4958 = vadd.xlane.f32.xlu0 %v4957
        %v4959 = vpop.xlane.xlu0 %4958
        %v4960 = vsel %vm847, %v4942, 0.0
        %4961 = vadd.xlane.f32.xlu0 %v4960
        %v4962 = vpop.xlane.xlu0 %4961
        %v4963 = vsel %vm847, %v4943, 0.0
        %4964 = vadd.xlane.f32.xlu0 %v4963
        %v4965 = vpop.xlane.xlu0 %4964
        %v4966 = vsel %vm847, %v4944, 0.0
        %4967 = vadd.xlane.f32.xlu0 %v4966
        %v4968 = vpop.xlane.xlu0 %4967
        %v4977 = vlaneseq
        %v4978 = vshrl.u32 %v4977, 7
        %v4979 = vsub.s32 %v990, %v4978
        %v4980 = vrot.slane %v4947, %v4979
        %v4981 = vlaneseq
        %v4982 = vshrl.u32 %v4981, 7
        %v4983 = vsub.s32 %v990, %v4982
        %v4984 = vrot.slane %v4950, %v4983
        %v4985 = vlaneseq
        %v4986 = vshrl.u32 %v4985, 7
        %v4987 = vsub.s32 %v990, %v4986
        %v4988 = vrot.slane %v4953, %v4987
        %v4989 = vlaneseq
        %v4990 = vshrl.u32 %v4989, 7
        %v4991 = vsub.s32 %v990, %v4990
        %v4992 = vrot.slane %v4956, %v4991
        %v4993 = vlaneseq
        %v4994 = vshrl.u32 %v4993, 7
        %v4995 = vsub.s32 %v990, %v4994
        %v4996 = vrot.slane %v4959, %v4995
        %v4997 = vlaneseq
        %v4998 = vshrl.u32 %v4997, 7
        %v4999 = vsub.s32 %v990, %v4998
        %v5000 = vrot.slane %v4962, %v4999
        %v5001 = vlaneseq
        %v5002 = vshrl.u32 %v5001, 7
        %v5003 = vsub.s32 %v990, %v5002
        %v5004 = vrot.slane %v4965, %v5003
        %v5005 = vlaneseq
        %v5006 = vshrl.u32 %v5005, 7
        %v5007 = vsub.s32 %v990, %v5006
        %v5008 = vrot.slane %v4968, %v5007
        %v5009 = vsel %vm1023, %v4984, %v4980
        %v5010 = vsel %vm1025, %v4988, %v5009
        %v5011 = vsel %vm1027, %v4992, %v5010
        %v5012 = vsel %vm1029, %v4996, %v5011
        %v5013 = vsel %vm1031, %v5000, %v5012
        %v5014 = vsel %vm1033, %v5004, %v5013
        %v5015 = vsel %vm1035, %v5008, %v5014
        %5017 = vxpose.xlu0.b32.start [1/16] %v5015, 128
        %5018 = vxpose.xlu0.b32.cont [2/16] 0.0, 128
        %5019 = vxpose.xlu0.b32.cont [3/16] 0.0, 128
        %5020 = vxpose.xlu0.b32.cont [4/16] 0.0, 128
        %5021 = vxpose.xlu0.b32.cont [5/16] 0.0, 128
        %5022 = vxpose.xlu0.b32.cont [6/16] 0.0, 128
        %5023 = vxpose.xlu0.b32.cont [7/16] 0.0, 128
        %5024 = vxpose.xlu0.b32.cont [8/16] 0.0, 128
        %5025 = vxpose.xlu0.b32.cont [9/16] 0.0, 128
        %5026 = vxpose.xlu0.b32.cont [10/16] 0.0, 128
        %5027 = vxpose.xlu0.b32.cont [11/16] 0.0, 128
        %5028 = vxpose.xlu0.b32.cont [12/16] 0.0, 128
        %5029 = vxpose.xlu0.b32.cont [13/16] 0.0, 128
        %5030 = vxpose.xlu0.b32.cont [14/16] 0.0, 128
        %5031 = vxpose.xlu0.b32.cont [15/16] 0.0, 128
        %5032 = vxpose.xlu0.b32.end [16/16] 0.0, 128
        %v5033 = vpop.trf.xlu0
        %v5034 = vpop.trf.xlu0
        %v5035 = vpop.trf.xlu0
        %v5036 = vpop.trf.xlu0
        %v5037 = vpop.trf.xlu0
        %v5038 = vpop.trf.xlu0
        %v5039 = vpop.trf.xlu0
        %v5040 = vpop.trf.xlu0
        %v5041 = vpop.trf.xlu0
        %v5042 = vpop.trf.xlu0
        %v5043 = vpop.trf.xlu0
        %v5044 = vpop.trf.xlu0
        %v5045 = vpop.trf.xlu0
        %v5046 = vpop.trf.xlu0
        %v5047 = vpop.trf.xlu0
        %v5048 = vpop.trf.xlu0
        %v5049 = vmul.f32 %v1073, %v4934
        %v5050 = vmul.f32 %v1078, %v4935
        %5052 = vrot.lane.b32.xlu0 %v5050, 124
        %v5053 = vpop.permute.xlu0 %5052
        %v5055 = vadd.f32 %v5049, %v5053
        %v5056 = vmul.f32 %v1088, %v4936
        %5058 = vrot.lane.b32.xlu0 %v5056, 120
        %v5059 = vpop.permute.xlu0 %5058
        %v5061 = vadd.f32 %v5055, %v5059
        %v5062 = vmul.f32 %v1098, %v4934
        %v5063 = vmul.f32 %v1103, %v4935
        %5065 = vrot.lane.b32.xlu0 %v5063, 124
        %v5066 = vpop.permute.xlu0 %5065
        %v5068 = vadd.f32 %v5062, %v5066
        %v5069 = vmul.f32 %v1113, %v4936
        %5071 = vrot.lane.b32.xlu0 %v5069, 120
        %v5072 = vpop.permute.xlu0 %5071
        %v5074 = vadd.f32 %v5068, %v5072
        %v5075 = vmul.f32 %v1123, %v4934
        %v5076 = vmul.f32 %v1128, %v4935
        %5078 = vrot.lane.b32.xlu0 %v5076, 124
        %v5079 = vpop.permute.xlu0 %5078
        %v5081 = vadd.f32 %v5075, %v5079
        %v5082 = vmul.f32 %v1138, %v4936
        %5084 = vrot.lane.b32.xlu0 %v5082, 120
        %v5085 = vpop.permute.xlu0 %5084
        %v5087 = vadd.f32 %v5081, %v5085
        %v5088 = vmul.f32 %v5061, %v5061
        %v5089 = vmul.f32 %v5074, %v5074
        %v5090 = vadd.f32 %v5088, %v5089
        %v5091 = vmul.f32 %v5087, %v5087
        %v5092 = vadd.f32 %v5090, %v5091
        %v5093 = vadd.f32 %v5092, 1e-12
        %v5094 = vrsqrt.pop %v5093
        %v5095 = vmul.f32 %v5092, %v5094
        %v5096 = vmul.f32 %v5061, %v5094
        %v5097 = vmul.f32 %v5074, %v5094
        %v5098 = vmul.f32 %v5087, %v5094
        %5100 = vrot.lane.b32.xlu0 %v4931, 8
        %v5101 = vpop.permute.xlu0 %5100
        %5104 = vrot.lane.b32.xlu0 %v5061, 8
        %v5105 = vpop.permute.xlu0 %5104
        %5108 = vrot.lane.b32.xlu0 %v5074, 12
        %v5109 = vpop.permute.xlu0 %5108
        %5112 = vrot.lane.b32.xlu0 %v5087, 16
        %v5113 = vpop.permute.xlu0 %5112
        %5116 = vrot.lane.b32.xlu0 %v5095, 20
        %v5117 = vpop.permute.xlu0 %5116
        %5120 = vrot.lane.b32.xlu0 %v5096, 24
        %v5121 = vpop.permute.xlu0 %5120
        %5124 = vrot.lane.b32.xlu0 %v5097, 28
        %v5125 = vpop.permute.xlu0 %5124
        %5128 = vrot.lane.b32.xlu0 %v5098, 32
        %v5129 = vpop.permute.xlu0 %5128
        %v5131 = vsel %vm847, %v5033, %v5101
        %v5132 = vsel %vm1190, %v5131, %v5105
        %v5133 = vsel %vm1192, %v5132, %v5109
        %v5134 = vsel %vm1194, %v5133, %v5113
        %v5135 = vsel %vm1196, %v5134, %v5117
        %v5136 = vsel %vm1198, %v5135, %v5121
        %v5137 = vsel %vm1200, %v5136, %v5125
        %v5138 = vsel %vm1202, %v5137, %v5129
        %s5139 = scalar_lea.vmem %s10, 448
        %v5140 = vld [vmem:[%s5139] sm:$0xff]
        %v5141 = vld [vmem:[%s5139 + $0x8] sm:$0xff]
        %v5142 = vld [vmem:[%s5139 + $0x10] sm:$0xff]
        %v5143 = vld [vmem:[%s5139 + $0x18] sm:$0xff]
        %v5144 = vld [vmem:[%s5139 + $0x20] sm:$0xff]
        %v5145 = vld [vmem:[%s5139 + $0x28] sm:$0xff]
        %v5146 = vld [vmem:[%s5139 + $0x30] sm:$0xf]
        %v5148 = vsel %vm1626, %v5138, 0
        %v5151 = vsel %vm1630, %v5146, 0
        %5153 = vmatprep.subr.mxu0 0.0
        %5154 = vmatpush1.msra.mxu0 %v5140
        %5155 = vmatprep.subr.mxu0 0.0
        %5156 = vmatpush1.msra.mxu0 %v5141
        %5157 = vmatprep.subr.mxu0 0.0
        %5158 = vmatpush1.msra.mxu0 %v5142
        %5159 = vmatprep.subr.mxu0 0.0
        %5160 = vmatpush1.msra.mxu0 %v5143
        %5161 = vmatprep.subr.mxu0 0.0
        %5162 = vmatpush1.msra.mxu0 %v5144
        %5163 = vmatprep.subr.mxu0 0.0
        %5164 = vmatpush1.msra.mxu0 %v5145
        %5165 = vmatprep.subr.mxu0 0.0
        %5166 = vmatpush1.msra.mxu0 %v5151
        %5167 = vmatprep.subr.mxu0 0.0
        %5168 = vmatpush1.msra.mxu0 0.0
        %5169 = vmatprep.subr.mxu0 0.0
        %5170 = vmatpush1.msra.mxu0 0.0
        %5171 = vmatprep.subr.mxu0 0.0
        %5172 = vmatpush1.msra.mxu0 0.0
        %5173 = vmatprep.subr.mxu0 0.0
        %5174 = vmatpush1.msra.mxu0 0.0
        %5175 = vmatprep.subr.mxu0 0.0
        %5176 = vmatpush1.msra.mxu0 0.0
        %5177 = vmatprep.subr.mxu0 0.0
        %5178 = vmatpush1.msra.mxu0 0.0
        %5179 = vmatprep.subr.mxu0 0.0
        %5180 = vmatpush1.msra.mxu0 0.0
        %5181 = vmatprep.subr.mxu0 0.0
        %5182 = vmatpush1.msra.mxu0 0.0
        %5183 = vmatprep.subr.mxu0 0.0
        %5184 = vmatpush1.msra.mxu0 0.0
        %5185 = vmatprep.subr.mxu0 0.0
        %5186 = vmatpush1.msra.mxu0 0.0
        %5187 = vmatprep.subr.mxu0 0.0
        %5188 = vmatpush1.msra.mxu0 0.0
        %5189 = vmatprep.subr.mxu0 0.0
        %5190 = vmatpush1.msra.mxu0 0.0
        %5191 = vmatprep.subr.mxu0 0.0
        %5192 = vmatpush1.msra.mxu0 0.0
        %5193 = vmatprep.subr.mxu0 0.0
        %5194 = vmatpush1.msra.mxu0 0.0
        %5195 = vmatprep.subr.mxu0 0.0
        %5196 = vmatpush1.msra.mxu0 0.0
        %5197 = vmatprep.subr.mxu0 0.0
        %5198 = vmatpush1.msra.mxu0 0.0
        %5199 = vmatprep.subr.mxu0 0.0
        %5200 = vmatpush1.msra.mxu0 0.0
        %5201 = vmatprep.subr.mxu0 0.0
        %5202 = vmatpush1.msra.mxu0 0.0
        %5203 = vmatprep.subr.mxu0 0.0
        %5204 = vmatpush1.msra.mxu0 0.0
        %5205 = vmatprep.subr.mxu0 0.0
        %5206 = vmatpush1.msra.mxu0 0.0
        %5207 = vmatprep.subr.mxu0 0.0
        %5208 = vmatpush1.msra.mxu0 0.0
        %5209 = vmatprep.subr.mxu0 0.0
        %5210 = vmatpush1.msra.mxu0 0.0
        %5211 = vmatprep.subr.mxu0 0.0
        %5212 = vmatpush1.msra.mxu0 0.0
        %5213 = vmatprep.subr.mxu0 0.0
        %5214 = vmatpush1.msra.mxu0 0.0
        %5215 = vmatprep.subr.mxu0 0.0
        %5216 = vmatpush1.msra.mxu0 0.0
        %5217 = vmatprep.mubr.f32.mxu0 0.0
        %5218 = vmatmul.mubr.f32.gmra.mrb[0].mxu0 %v5148
        %v5219 = vpop.f32.mrb[0].mxu0
        %v5220 = vadd.f32 0.0, %v5219
        %v5221 = vpop.f32.mrb[0].mxu0
        %5222 = vdwg.mxu0
        %v5223 = vadd.f32 %v4731, %v5220
        %s5224 = scalar_lea.vmem %s654, 72
        %v5225 = vld [vmem:[%s5224] sm:$0xff]
        %s5226 = scalar_lea.vmem %s659, 288
        %v5227 = vld [vmem:[%s5226] sm:$0xff]
        %v5228 = vld [vmem:[%s5226 + $0x8] sm:$0xff]
        %v5229 = vld [vmem:[%s5226 + $0x10] sm:$0xff]
        %v5230 = vld [vmem:[%s5226 + $0x18] sm:$0x3f]
        %s5231 = sld [smem:[#allocation2 + $0x480]]
        %v5232 = vstv %s5231
        %v5233 = vmul.f32 %v5232, %v721
        %s5234 = sld [smem:[#allocation2 + $0x481]]
        %v5235 = vstv %s5234
        %v5236 = vmul.f32 %v5235, %v722
        %v5237 = vadd.f32 %v5233, %v5236
        %s5238 = sld [smem:[#allocation2 + $0x482]]
        %v5239 = vstv %s5238
        %v5240 = vmul.f32 %v5239, %v723
        %v5241 = vadd.f32 %v5237, %v5240
        %s5242 = sld [smem:[#allocation2 + $0x483]]
        %v5243 = vstv %s5242
        %v5244 = vmul.f32 %v5243, %v724
        %v5245 = vadd.f32 %v5241, %v5244
        %s5246 = sld [smem:[#allocation2 + $0x484]]
        %v5247 = vstv %s5246
        %v5248 = vmul.f32 %v5247, %v725
        %v5249 = vadd.f32 %v5245, %v5248
        %s5250 = sld [smem:[#allocation2 + $0x485]]
        %v5251 = vstv %s5250
        %v5252 = vmul.f32 %v5251, %v726
        %v5253 = vadd.f32 %v5249, %v5252
        %s5254 = sld [smem:[#allocation2 + $0x486]]
        %v5255 = vstv %s5254
        %v5256 = vmul.f32 %v5255, %v727
        %v5257 = vadd.f32 %v5253, %v5256
        %s5258 = sld [smem:[#allocation2 + $0x487]]
        %v5259 = vstv %s5258
        %v5260 = vmul.f32 %v5259, %v728
        %v5261 = vadd.f32 %v5257, %v5260
        %v5263 = vsel %vm767, %v5225, 0
        %v5266 = vsel %vm771, %v5230, 0
        %5268 = vmatprep.subr.mxu0 0.0
        %5269 = vmatpush1.msra.mxu0 %v5227
        %5270 = vmatprep.subr.mxu0 0.0
        %5271 = vmatpush1.msra.mxu0 %v5228
        %5272 = vmatprep.subr.mxu0 0.0
        %5273 = vmatpush1.msra.mxu0 %v5229
        %5274 = vmatprep.subr.mxu0 0.0
        %5275 = vmatpush1.msra.mxu0 %v5266
        %5276 = vmatprep.subr.mxu0 0.0
        %5277 = vmatpush1.msra.mxu0 0.0
        %5278 = vmatprep.subr.mxu0 0.0
        %5279 = vmatpush1.msra.mxu0 0.0
        %5280 = vmatprep.subr.mxu0 0.0
        %5281 = vmatpush1.msra.mxu0 0.0
        %5282 = vmatprep.subr.mxu0 0.0
        %5283 = vmatpush1.msra.mxu0 0.0
        %5284 = vmatprep.subr.mxu0 0.0
        %5285 = vmatpush1.msra.mxu0 0.0
        %5286 = vmatprep.subr.mxu0 0.0
        %5287 = vmatpush1.msra.mxu0 0.0
        %5288 = vmatprep.subr.mxu0 0.0
        %5289 = vmatpush1.msra.mxu0 0.0
        %5290 = vmatprep.subr.mxu0 0.0
        %5291 = vmatpush1.msra.mxu0 0.0
        %5292 = vmatprep.subr.mxu0 0.0
        %5293 = vmatpush1.msra.mxu0 0.0
        %5294 = vmatprep.subr.mxu0 0.0
        %5295 = vmatpush1.msra.mxu0 0.0
        %5296 = vmatprep.subr.mxu0 0.0
        %5297 = vmatpush1.msra.mxu0 0.0
        %5298 = vmatprep.subr.mxu0 0.0
        %5299 = vmatpush1.msra.mxu0 0.0
        %5300 = vmatprep.subr.mxu0 0.0
        %5301 = vmatpush1.msra.mxu0 0.0
        %5302 = vmatprep.subr.mxu0 0.0
        %5303 = vmatpush1.msra.mxu0 0.0
        %5304 = vmatprep.subr.mxu0 0.0
        %5305 = vmatpush1.msra.mxu0 0.0
        %5306 = vmatprep.subr.mxu0 0.0
        %5307 = vmatpush1.msra.mxu0 0.0
        %5308 = vmatprep.subr.mxu0 0.0
        %5309 = vmatpush1.msra.mxu0 0.0
        %5310 = vmatprep.subr.mxu0 0.0
        %5311 = vmatpush1.msra.mxu0 0.0
        %5312 = vmatprep.subr.mxu0 0.0
        %5313 = vmatpush1.msra.mxu0 0.0
        %5314 = vmatprep.subr.mxu0 0.0
        %5315 = vmatpush1.msra.mxu0 0.0
        %5316 = vmatprep.subr.mxu0 0.0
        %5317 = vmatpush1.msra.mxu0 0.0
        %5318 = vmatprep.subr.mxu0 0.0
        %5319 = vmatpush1.msra.mxu0 0.0
        %5320 = vmatprep.subr.mxu0 0.0
        %5321 = vmatpush1.msra.mxu0 0.0
        %5322 = vmatprep.subr.mxu0 0.0
        %5323 = vmatpush1.msra.mxu0 0.0
        %5324 = vmatprep.subr.mxu0 0.0
        %5325 = vmatpush1.msra.mxu0 0.0
        %5326 = vmatprep.subr.mxu0 0.0
        %5327 = vmatpush1.msra.mxu0 0.0
        %5328 = vmatprep.subr.mxu0 0.0
        %5329 = vmatpush1.msra.mxu0 0.0
        %5330 = vmatprep.subr.mxu0 0.0
        %5331 = vmatpush1.msra.mxu0 0.0
        %5332 = vmatprep.mubr.f32.mxu0 0.0
        %5333 = vmatmul.mubr.f32.gmra.mrb[0].mxu0 %v5263
        %v5334 = vpop.f32.mrb[0].mxu0
        %v5335 = vadd.f32 %v5261, %v5334
        %v5336 = vpop.f32.mrb[0].mxu0
        %5337 = vdwg.mxu0
        %v5338 = vmul.f32 %v5335, 0.57735026
        %v5339 = vadd.f32 %v5338, %v720
        %v5340 = vsel %vm847, %v5339, -inf
        %5341 = vmax.xlane.f32.xlu0 %v5340
        %v5342 = vpop.xlane.xlu0 %5341
        %v5343 = vsub.f32 %v5339, %v5342
        %v5344 = vmul.f32 %v5343, 1.442695
        %v5345 = vpow.pop %v5344
        %v5346 = vsel %vm847, %v5345, 0.0
        %5347 = vadd.xlane.f32.xlu0 %v5346
        %v5348 = vpop.xlane.xlu0 %5347
        %v5349 = vrcp.pop %v5348
        %v5350 = vmul.f32 %v5345, %v5349
        %s5351 = scalar_lea.vmem %s664, 72
        %v5352 = vld [vmem:[%s5351] sm:$0xff]
        %v5354 = vsel %vm847, %v5350, 0
        %5356 = vmatprep.subr.mxu0 0.0
        %5357 = vmatpush1.msra.mxu0 %v5352
        %5358 = vmatprep.subr.mxu0 0.0
        %5359 = vmatpush1.msra.mxu0 0.0
        %5360 = vmatprep.subr.mxu0 0.0
        %5361 = vmatpush1.msra.mxu0 0.0
        %5362 = vmatprep.subr.mxu0 0.0
        %5363 = vmatpush1.msra.mxu0 0.0
        %5364 = vmatprep.subr.mxu0 0.0
        %5365 = vmatpush1.msra.mxu0 0.0
        %5366 = vmatprep.subr.mxu0 0.0
        %5367 = vmatpush1.msra.mxu0 0.0
        %5368 = vmatprep.subr.mxu0 0.0
        %5369 = vmatpush1.msra.mxu0 0.0
        %5370 = vmatprep.subr.mxu0 0.0
        %5371 = vmatpush1.msra.mxu0 0.0
        %5372 = vmatprep.subr.mxu0 0.0
        %5373 = vmatpush1.msra.mxu0 0.0
        %5374 = vmatprep.subr.mxu0 0.0
        %5375 = vmatpush1.msra.mxu0 0.0
        %5376 = vmatprep.subr.mxu0 0.0
        %5377 = vmatpush1.msra.mxu0 0.0
        %5378 = vmatprep.subr.mxu0 0.0
        %5379 = vmatpush1.msra.mxu0 0.0
        %5380 = vmatprep.subr.mxu0 0.0
        %5381 = vmatpush1.msra.mxu0 0.0
        %5382 = vmatprep.subr.mxu0 0.0
        %5383 = vmatpush1.msra.mxu0 0.0
        %5384 = vmatprep.subr.mxu0 0.0
        %5385 = vmatpush1.msra.mxu0 0.0
        %5386 = vmatprep.subr.mxu0 0.0
        %5387 = vmatpush1.msra.mxu0 0.0
        %5388 = vmatprep.subr.mxu0 0.0
        %5389 = vmatpush1.msra.mxu0 0.0
        %5390 = vmatprep.subr.mxu0 0.0
        %5391 = vmatpush1.msra.mxu0 0.0
        %5392 = vmatprep.subr.mxu0 0.0
        %5393 = vmatpush1.msra.mxu0 0.0
        %5394 = vmatprep.subr.mxu0 0.0
        %5395 = vmatpush1.msra.mxu0 0.0
        %5396 = vmatprep.subr.mxu0 0.0
        %5397 = vmatpush1.msra.mxu0 0.0
        %5398 = vmatprep.subr.mxu0 0.0
        %5399 = vmatpush1.msra.mxu0 0.0
        %5400 = vmatprep.subr.mxu0 0.0
        %5401 = vmatpush1.msra.mxu0 0.0
        %5402 = vmatprep.subr.mxu0 0.0
        %5403 = vmatpush1.msra.mxu0 0.0
        %5404 = vmatprep.subr.mxu0 0.0
        %5405 = vmatpush1.msra.mxu0 0.0
        %5406 = vmatprep.subr.mxu0 0.0
        %5407 = vmatpush1.msra.mxu0 0.0
        %5408 = vmatprep.subr.mxu0 0.0
        %5409 = vmatpush1.msra.mxu0 0.0
        %5410 = vmatprep.subr.mxu0 0.0
        %5411 = vmatpush1.msra.mxu0 0.0
        %5412 = vmatprep.subr.mxu0 0.0
        %5413 = vmatpush1.msra.mxu0 0.0
        %5414 = vmatprep.subr.mxu0 0.0
        %5415 = vmatpush1.msra.mxu0 0.0
        %5416 = vmatprep.subr.mxu0 0.0
        %5417 = vmatpush1.msra.mxu0 0.0
        %5418 = vmatprep.subr.mxu0 0.0
        %5419 = vmatpush1.msra.mxu0 0.0
        %5420 = vmatprep.mubr.f32.mxu0 0.0
        %5421 = vmatmul.mubr.f32.gmra.mrb[0].mxu0 %v5354
        %v5422 = vpop.f32.mrb[0].mxu0
        %v5423 = vadd.f32 0.0, %v5422
        %v5424 = vpop.f32.mrb[0].mxu0
        %5425 = vdwg.mxu0
        %v5426 = vsub.f32 %v5423, %v936
        %v5427 = vsub.f32 %v5423, %v941
        %v5428 = vsub.f32 %v5423, %v946
        %v5429 = vmul.f32 %v5350, %v721
        %v5430 = vmul.f32 %v5350, %v722
        %v5431 = vmul.f32 %v5350, %v723
        %v5432 = vmul.f32 %v5350, %v724
        %v5433 = vmul.f32 %v5350, %v725
        %v5434 = vmul.f32 %v5350, %v726
        %v5435 = vmul.f32 %v5350, %v727
        %v5436 = vmul.f32 %v5350, %v728
        %v5437 = vsel %vm847, %v5429, 0.0
        %5438 = vadd.xlane.f32.xlu0 %v5437
        %v5439 = vpop.xlane.xlu0 %5438
        %v5440 = vsel %vm847, %v5430, 0.0
        %5441 = vadd.xlane.f32.xlu0 %v5440
        %v5442 = vpop.xlane.xlu0 %5441
        %v5443 = vsel %vm847, %v5431, 0.0
        %5444 = vadd.xlane.f32.xlu0 %v5443
        %v5445 = vpop.xlane.xlu0 %5444
        %v5446 = vsel %vm847, %v5432, 0.0
        %5447 = vadd.xlane.f32.xlu0 %v5446
        %v5448 = vpop.xlane.xlu0 %5447
        %v5449 = vsel %vm847, %v5433, 0.0
        %5450 = vadd.xlane.f32.xlu0 %v5449
        %v5451 = vpop.xlane.xlu0 %5450
        %v5452 = vsel %vm847, %v5434, 0.0
        %5453 = vadd.xlane.f32.xlu0 %v5452
        %v5454 = vpop.xlane.xlu0 %5453
        %v5455 = vsel %vm847, %v5435, 0.0
        %5456 = vadd.xlane.f32.xlu0 %v5455
        %v5457 = vpop.xlane.xlu0 %5456
        %v5458 = vsel %vm847, %v5436, 0.0
        %5459 = vadd.xlane.f32.xlu0 %v5458
        %v5460 = vpop.xlane.xlu0 %5459
        %v5469 = vlaneseq
        %v5470 = vshrl.u32 %v5469, 7
        %v5471 = vsub.s32 %v990, %v5470
        %v5472 = vrot.slane %v5439, %v5471
        %v5473 = vlaneseq
        %v5474 = vshrl.u32 %v5473, 7
        %v5475 = vsub.s32 %v990, %v5474
        %v5476 = vrot.slane %v5442, %v5475
        %v5477 = vlaneseq
        %v5478 = vshrl.u32 %v5477, 7
        %v5479 = vsub.s32 %v990, %v5478
        %v5480 = vrot.slane %v5445, %v5479
        %v5481 = vlaneseq
        %v5482 = vshrl.u32 %v5481, 7
        %v5483 = vsub.s32 %v990, %v5482
        %v5484 = vrot.slane %v5448, %v5483
        %v5485 = vlaneseq
        %v5486 = vshrl.u32 %v5485, 7
        %v5487 = vsub.s32 %v990, %v5486
        %v5488 = vrot.slane %v5451, %v5487
        %v5489 = vlaneseq
        %v5490 = vshrl.u32 %v5489, 7
        %v5491 = vsub.s32 %v990, %v5490
        %v5492 = vrot.slane %v5454, %v5491
        %v5493 = vlaneseq
        %v5494 = vshrl.u32 %v5493, 7
        %v5495 = vsub.s32 %v990, %v5494
        %v5496 = vrot.slane %v5457, %v5495
        %v5497 = vlaneseq
        %v5498 = vshrl.u32 %v5497, 7
        %v5499 = vsub.s32 %v990, %v5498
        %v5500 = vrot.slane %v5460, %v5499
        %v5501 = vsel %vm1023, %v5476, %v5472
        %v5502 = vsel %vm1025, %v5480, %v5501
        %v5503 = vsel %vm1027, %v5484, %v5502
        %v5504 = vsel %vm1029, %v5488, %v5503
        %v5505 = vsel %vm1031, %v5492, %v5504
        %v5506 = vsel %vm1033, %v5496, %v5505
        %v5507 = vsel %vm1035, %v5500, %v5506
        %5509 = vxpose.xlu0.b32.start [1/16] %v5507, 128
        %5510 = vxpose.xlu0.b32.cont [2/16] 0.0, 128
        %5511 = vxpose.xlu0.b32.cont [3/16] 0.0, 128
        %5512 = vxpose.xlu0.b32.cont [4/16] 0.0, 128
        %5513 = vxpose.xlu0.b32.cont [5/16] 0.0, 128
        %5514 = vxpose.xlu0.b32.cont [6/16] 0.0, 128
        %5515 = vxpose.xlu0.b32.cont [7/16] 0.0, 128
        %5516 = vxpose.xlu0.b32.cont [8/16] 0.0, 128
        %5517 = vxpose.xlu0.b32.cont [9/16] 0.0, 128
        %5518 = vxpose.xlu0.b32.cont [10/16] 0.0, 128
        %5519 = vxpose.xlu0.b32.cont [11/16] 0.0, 128
        %5520 = vxpose.xlu0.b32.cont [12/16] 0.0, 128
        %5521 = vxpose.xlu0.b32.cont [13/16] 0.0, 128
        %5522 = vxpose.xlu0.b32.cont [14/16] 0.0, 128
        %5523 = vxpose.xlu0.b32.cont [15/16] 0.0, 128
        %5524 = vxpose.xlu0.b32.end [16/16] 0.0, 128
        %v5525 = vpop.trf.xlu0
        %v5526 = vpop.trf.xlu0
        %v5527 = vpop.trf.xlu0
        %v5528 = vpop.trf.xlu0
        %v5529 = vpop.trf.xlu0
        %v5530 = vpop.trf.xlu0
        %v5531 = vpop.trf.xlu0
        %v5532 = vpop.trf.xlu0
        %v5533 = vpop.trf.xlu0
        %v5534 = vpop.trf.xlu0
        %v5535 = vpop.trf.xlu0
        %v5536 = vpop.trf.xlu0
        %v5537 = vpop.trf.xlu0
        %v5538 = vpop.trf.xlu0
        %v5539 = vpop.trf.xlu0
        %v5540 = vpop.trf.xlu0
        %v5541 = vmul.f32 %v1073, %v5426
        %v5542 = vmul.f32 %v1078, %v5427
        %5544 = vrot.lane.b32.xlu0 %v5542, 124
        %v5545 = vpop.permute.xlu0 %5544
        %v5547 = vadd.f32 %v5541, %v5545
        %v5548 = vmul.f32 %v1088, %v5428
        %5550 = vrot.lane.b32.xlu0 %v5548, 120
        %v5551 = vpop.permute.xlu0 %5550
        %v5553 = vadd.f32 %v5547, %v5551
        %v5554 = vmul.f32 %v1098, %v5426
        %v5555 = vmul.f32 %v1103, %v5427
        %5557 = vrot.lane.b32.xlu0 %v5555, 124
        %v5558 = vpop.permute.xlu0 %5557
        %v5560 = vadd.f32 %v5554, %v5558
        %v5561 = vmul.f32 %v1113, %v5428
        %5563 = vrot.lane.b32.xlu0 %v5561, 120
        %v5564 = vpop.permute.xlu0 %5563
        %v5566 = vadd.f32 %v5560, %v5564
        %v5567 = vmul.f32 %v1123, %v5426
        %v5568 = vmul.f32 %v1128, %v5427
        %5570 = vrot.lane.b32.xlu0 %v5568, 124
        %v5571 = vpop.permute.xlu0 %5570
        %v5573 = vadd.f32 %v5567, %v5571
        %v5574 = vmul.f32 %v1138, %v5428
        %5576 = vrot.lane.b32.xlu0 %v5574, 120
        %v5577 = vpop.permute.xlu0 %5576
        %v5579 = vadd.f32 %v5573, %v5577
        %v5580 = vmul.f32 %v5553, %v5553
        %v5581 = vmul.f32 %v5566, %v5566
        %v5582 = vadd.f32 %v5580, %v5581
        %v5583 = vmul.f32 %v5579, %v5579
        %v5584 = vadd.f32 %v5582, %v5583
        %v5585 = vadd.f32 %v5584, 1e-12
        %v5586 = vrsqrt.pop %v5585
        %v5587 = vmul.f32 %v5584, %v5586
        %v5588 = vmul.f32 %v5553, %v5586
        %v5589 = vmul.f32 %v5566, %v5586
        %v5590 = vmul.f32 %v5579, %v5586
        %5592 = vrot.lane.b32.xlu0 %v5423, 8
        %v5593 = vpop.permute.xlu0 %5592
        %5596 = vrot.lane.b32.xlu0 %v5553, 8
        %v5597 = vpop.permute.xlu0 %5596
        %5600 = vrot.lane.b32.xlu0 %v5566, 12
        %v5601 = vpop.permute.xlu0 %5600
        %5604 = vrot.lane.b32.xlu0 %v5579, 16
        %v5605 = vpop.permute.xlu0 %5604
        %5608 = vrot.lane.b32.xlu0 %v5587, 20
        %v5609 = vpop.permute.xlu0 %5608
        %5612 = vrot.lane.b32.xlu0 %v5588, 24
        %v5613 = vpop.permute.xlu0 %5612
        %5616 = vrot.lane.b32.xlu0 %v5589, 28
        %v5617 = vpop.permute.xlu0 %5616
        %5620 = vrot.lane.b32.xlu0 %v5590, 32
        %v5621 = vpop.permute.xlu0 %5620
        %v5623 = vsel %vm847, %v5525, %v5593
        %v5624 = vsel %vm1190, %v5623, %v5597
        %v5625 = vsel %vm1192, %v5624, %v5601
        %v5626 = vsel %vm1194, %v5625, %v5605
        %v5627 = vsel %vm1196, %v5626, %v5609
        %v5628 = vsel %vm1198, %v5627, %v5613
        %v5629 = vsel %vm1200, %v5628, %v5617
        %v5630 = vsel %vm1202, %v5629, %v5621
        %s5631 = scalar_lea.vmem %s10, 504
        %v5632 = vld [vmem:[%s5631] sm:$0xff]
        %v5633 = vld [vmem:[%s5631 + $0x8] sm:$0xff]
        %v5634 = vld [vmem:[%s5631 + $0x10] sm:$0xff]
        %v5635 = vld [vmem:[%s5631 + $0x18] sm:$0xff]
        %v5636 = vld [vmem:[%s5631 + $0x20] sm:$0xff]
        %v5637 = vld [vmem:[%s5631 + $0x28] sm:$0xff]
        %v5638 = vld [vmem:[%s5631 + $0x30] sm:$0xf]
        %v5640 = vsel %vm1626, %v5630, 0
        %v5643 = vsel %vm1630, %v5638, 0
        %5645 = vmatprep.subr.mxu0 0.0
        %5646 = vmatpush1.msra.mxu0 %v5632
        %5647 = vmatprep.subr.mxu0 0.0
        %5648 = vmatpush1.msra.mxu0 %v5633
        %5649 = vmatprep.subr.mxu0 0.0
        %5650 = vmatpush1.msra.mxu0 %v5634
        %5651 = vmatprep.subr.mxu0 0.0
        %5652 = vmatpush1.msra.mxu0 %v5635
        %5653 = vmatprep.subr.mxu0 0.0
        %5654 = vmatpush1.msra.mxu0 %v5636
        %5655 = vmatprep.subr.mxu0 0.0
        %5656 = vmatpush1.msra.mxu0 %v5637
        %5657 = vmatprep.subr.mxu0 0.0
        %5658 = vmatpush1.msra.mxu0 %v5643
        %5659 = vmatprep.subr.mxu0 0.0
        %5660 = vmatpush1.msra.mxu0 0.0
        %5661 = vmatprep.subr.mxu0 0.0
        %5662 = vmatpush1.msra.mxu0 0.0
        %5663 = vmatprep.subr.mxu0 0.0
        %5664 = vmatpush1.msra.mxu0 0.0
        %5665 = vmatprep.subr.mxu0 0.0
        %5666 = vmatpush1.msra.mxu0 0.0
        %5667 = vmatprep.subr.mxu0 0.0
        %5668 = vmatpush1.msra.mxu0 0.0
        %5669 = vmatprep.subr.mxu0 0.0
        %5670 = vmatpush1.msra.mxu0 0.0
        %5671 = vmatprep.subr.mxu0 0.0
        %5672 = vmatpush1.msra.mxu0 0.0
        %5673 = vmatprep.subr.mxu0 0.0
        %5674 = vmatpush1.msra.mxu0 0.0
        %5675 = vmatprep.subr.mxu0 0.0
        %5676 = vmatpush1.msra.mxu0 0.0
        %5677 = vmatprep.subr.mxu0 0.0
        %5678 = vmatpush1.msra.mxu0 0.0
        %5679 = vmatprep.subr.mxu0 0.0
        %5680 = vmatpush1.msra.mxu0 0.0
        %5681 = vmatprep.subr.mxu0 0.0
        %5682 = vmatpush1.msra.mxu0 0.0
        %5683 = vmatprep.subr.mxu0 0.0
        %5684 = vmatpush1.msra.mxu0 0.0
        %5685 = vmatprep.subr.mxu0 0.0
        %5686 = vmatpush1.msra.mxu0 0.0
        %5687 = vmatprep.subr.mxu0 0.0
        %5688 = vmatpush1.msra.mxu0 0.0
        %5689 = vmatprep.subr.mxu0 0.0
        %5690 = vmatpush1.msra.mxu0 0.0
        %5691 = vmatprep.subr.mxu0 0.0
        %5692 = vmatpush1.msra.mxu0 0.0
        %5693 = vmatprep.subr.mxu0 0.0
        %5694 = vmatpush1.msra.mxu0 0.0
        %5695 = vmatprep.subr.mxu0 0.0
        %5696 = vmatpush1.msra.mxu0 0.0
        %5697 = vmatprep.subr.mxu0 0.0
        %5698 = vmatpush1.msra.mxu0 0.0
        %5699 = vmatprep.subr.mxu0 0.0
        %5700 = vmatpush1.msra.mxu0 0.0
        %5701 = vmatprep.subr.mxu0 0.0
        %5702 = vmatpush1.msra.mxu0 0.0
        %5703 = vmatprep.subr.mxu0 0.0
        %5704 = vmatpush1.msra.mxu0 0.0
        %5705 = vmatprep.subr.mxu0 0.0
        %5706 = vmatpush1.msra.mxu0 0.0
        %5707 = vmatprep.subr.mxu0 0.0
        %5708 = vmatpush1.msra.mxu0 0.0
        %5709 = vmatprep.mubr.f32.mxu0 0.0
        %5710 = vmatmul.mubr.f32.gmra.mrb[0].mxu0 %v5640
        %v5711 = vpop.f32.mrb[0].mxu0
        %v5712 = vadd.f32 0.0, %v5711
        %v5713 = vpop.f32.mrb[0].mxu0
        %5714 = vdwg.mxu0
        %v5715 = vadd.f32 %v5223, %v5712
        %s5716 = scalar_lea.vmem %s654, 80
        %v5717 = vld [vmem:[%s5716] sm:$0xff]
        %s5718 = scalar_lea.vmem %s659, 320
        %v5719 = vld [vmem:[%s5718] sm:$0xff]
        %v5720 = vld [vmem:[%s5718 + $0x8] sm:$0xff]
        %v5721 = vld [vmem:[%s5718 + $0x10] sm:$0xff]
        %v5722 = vld [vmem:[%s5718 + $0x18] sm:$0x3f]
        %s5723 = sld [smem:[#allocation2 + $0x500]]
        %v5724 = vstv %s5723
        %v5725 = vmul.f32 %v5724, %v721
        %s5726 = sld [smem:[#allocation2 + $0x501]]
        %v5727 = vstv %s5726
        %v5728 = vmul.f32 %v5727, %v722
        %v5729 = vadd.f32 %v5725, %v5728
        %s5730 = sld [smem:[#allocation2 + $0x502]]
        %v5731 = vstv %s5730
        %v5732 = vmul.f32 %v5731, %v723
        %v5733 = vadd.f32 %v5729, %v5732
        %s5734 = sld [smem:[#allocation2 + $0x503]]
        %v5735 = vstv %s5734
        %v5736 = vmul.f32 %v5735, %v724
        %v5737 = vadd.f32 %v5733, %v5736
        %s5738 = sld [smem:[#allocation2 + $0x504]]
        %v5739 = vstv %s5738
        %v5740 = vmul.f32 %v5739, %v725
        %v5741 = vadd.f32 %v5737, %v5740
        %s5742 = sld [smem:[#allocation2 + $0x505]]
        %v5743 = vstv %s5742
        %v5744 = vmul.f32 %v5743, %v726
        %v5745 = vadd.f32 %v5741, %v5744
        %s5746 = sld [smem:[#allocation2 + $0x506]]
        %v5747 = vstv %s5746
        %v5748 = vmul.f32 %v5747, %v727
        %v5749 = vadd.f32 %v5745, %v5748
        %s5750 = sld [smem:[#allocation2 + $0x507]]
        %v5751 = vstv %s5750
        %v5752 = vmul.f32 %v5751, %v728
        %v5753 = vadd.f32 %v5749, %v5752
        %v5755 = vsel %vm767, %v5717, 0
        %v5758 = vsel %vm771, %v5722, 0
        %5760 = vmatprep.subr.mxu0 0.0
        %5761 = vmatpush1.msra.mxu0 %v5719
        %5762 = vmatprep.subr.mxu0 0.0
        %5763 = vmatpush1.msra.mxu0 %v5720
        %5764 = vmatprep.subr.mxu0 0.0
        %5765 = vmatpush1.msra.mxu0 %v5721
        %5766 = vmatprep.subr.mxu0 0.0
        %5767 = vmatpush1.msra.mxu0 %v5758
        %5768 = vmatprep.subr.mxu0 0.0
        %5769 = vmatpush1.msra.mxu0 0.0
        %5770 = vmatprep.subr.mxu0 0.0
        %5771 = vmatpush1.msra.mxu0 0.0
        %5772 = vmatprep.subr.mxu0 0.0
        %5773 = vmatpush1.msra.mxu0 0.0
        %5774 = vmatprep.subr.mxu0 0.0
        %5775 = vmatpush1.msra.mxu0 0.0
        %5776 = vmatprep.subr.mxu0 0.0
        %5777 = vmatpush1.msra.mxu0 0.0
        %5778 = vmatprep.subr.mxu0 0.0
        %5779 = vmatpush1.msra.mxu0 0.0
        %5780 = vmatprep.subr.mxu0 0.0
        %5781 = vmatpush1.msra.mxu0 0.0
        %5782 = vmatprep.subr.mxu0 0.0
        %5783 = vmatpush1.msra.mxu0 0.0
        %5784 = vmatprep.subr.mxu0 0.0
        %5785 = vmatpush1.msra.mxu0 0.0
        %5786 = vmatprep.subr.mxu0 0.0
        %5787 = vmatpush1.msra.mxu0 0.0
        %5788 = vmatprep.subr.mxu0 0.0
        %5789 = vmatpush1.msra.mxu0 0.0
        %5790 = vmatprep.subr.mxu0 0.0
        %5791 = vmatpush1.msra.mxu0 0.0
        %5792 = vmatprep.subr.mxu0 0.0
        %5793 = vmatpush1.msra.mxu0 0.0
        %5794 = vmatprep.subr.mxu0 0.0
        %5795 = vmatpush1.msra.mxu0 0.0
        %5796 = vmatprep.subr.mxu0 0.0
        %5797 = vmatpush1.msra.mxu0 0.0
        %5798 = vmatprep.subr.mxu0 0.0
        %5799 = vmatpush1.msra.mxu0 0.0
        %5800 = vmatprep.subr.mxu0 0.0
        %5801 = vmatpush1.msra.mxu0 0.0
        %5802 = vmatprep.subr.mxu0 0.0
        %5803 = vmatpush1.msra.mxu0 0.0
        %5804 = vmatprep.subr.mxu0 0.0
        %5805 = vmatpush1.msra.mxu0 0.0
        %5806 = vmatprep.subr.mxu0 0.0
        %5807 = vmatpush1.msra.mxu0 0.0
        %5808 = vmatprep.subr.mxu0 0.0
        %5809 = vmatpush1.msra.mxu0 0.0
        %5810 = vmatprep.subr.mxu0 0.0
        %5811 = vmatpush1.msra.mxu0 0.0
        %5812 = vmatprep.subr.mxu0 0.0
        %5813 = vmatpush1.msra.mxu0 0.0
        %5814 = vmatprep.subr.mxu0 0.0
        %5815 = vmatpush1.msra.mxu0 0.0
        %5816 = vmatprep.subr.mxu0 0.0
        %5817 = vmatpush1.msra.mxu0 0.0
        %5818 = vmatprep.subr.mxu0 0.0
        %5819 = vmatpush1.msra.mxu0 0.0
        %5820 = vmatprep.subr.mxu0 0.0
        %5821 = vmatpush1.msra.mxu0 0.0
        %5822 = vmatprep.subr.mxu0 0.0
        %5823 = vmatpush1.msra.mxu0 0.0
        %5824 = vmatprep.mubr.f32.mxu0 0.0
        %5825 = vmatmul.mubr.f32.gmra.mrb[0].mxu0 %v5755
        %v5826 = vpop.f32.mrb[0].mxu0
        %v5827 = vadd.f32 %v5753, %v5826
        %v5828 = vpop.f32.mrb[0].mxu0
        %5829 = vdwg.mxu0
        %v5830 = vmul.f32 %v5827, 0.57735026
        %v5831 = vadd.f32 %v5830, %v720
        %v5832 = vsel %vm847, %v5831, -inf
        %5833 = vmax.xlane.f32.xlu0 %v5832
        %v5834 = vpop.xlane.xlu0 %5833
        %v5835 = vsub.f32 %v5831, %v5834
        %v5836 = vmul.f32 %v5835, 1.442695
        %v5837 = vpow.pop %v5836
        %v5838 = vsel %vm847, %v5837, 0.0
        %5839 = vadd.xlane.f32.xlu0 %v5838
        %v5840 = vpop.xlane.xlu0 %5839
        %v5841 = vrcp.pop %v5840
        %v5842 = vmul.f32 %v5837, %v5841
        %s5843 = scalar_lea.vmem %s664, 80
        %v5844 = vld [vmem:[%s5843] sm:$0xff]
        %v5846 = vsel %vm847, %v5842, 0
        %5848 = vmatprep.subr.mxu0 0.0
        %5849 = vmatpush1.msra.mxu0 %v5844
        %5850 = vmatprep.subr.mxu0 0.0
        %5851 = vmatpush1.msra.mxu0 0.0
        %5852 = vmatprep.subr.mxu0 0.0
        %5853 = vmatpush1.msra.mxu0 0.0
        %5854 = vmatprep.subr.mxu0 0.0
        %5855 = vmatpush1.msra.mxu0 0.0
        %5856 = vmatprep.subr.mxu0 0.0
        %5857 = vmatpush1.msra.mxu0 0.0
        %5858 = vmatprep.subr.mxu0 0.0
        %5859 = vmatpush1.msra.mxu0 0.0
        %5860 = vmatprep.subr.mxu0 0.0
        %5861 = vmatpush1.msra.mxu0 0.0
        %5862 = vmatprep.subr.mxu0 0.0
        %5863 = vmatpush1.msra.mxu0 0.0
        %5864 = vmatprep.subr.mxu0 0.0
        %5865 = vmatpush1.msra.mxu0 0.0
        %5866 = vmatprep.subr.mxu0 0.0
        %5867 = vmatpush1.msra.mxu0 0.0
        %5868 = vmatprep.subr.mxu0 0.0
        %5869 = vmatpush1.msra.mxu0 0.0
        %5870 = vmatprep.subr.mxu0 0.0
        %5871 = vmatpush1.msra.mxu0 0.0
        %5872 = vmatprep.subr.mxu0 0.0
        %5873 = vmatpush1.msra.mxu0 0.0
        %5874 = vmatprep.subr.mxu0 0.0
        %5875 = vmatpush1.msra.mxu0 0.0
        %5876 = vmatprep.subr.mxu0 0.0
        %5877 = vmatpush1.msra.mxu0 0.0
        %5878 = vmatprep.subr.mxu0 0.0
        %5879 = vmatpush1.msra.mxu0 0.0
        %5880 = vmatprep.subr.mxu0 0.0
        %5881 = vmatpush1.msra.mxu0 0.0
        %5882 = vmatprep.subr.mxu0 0.0
        %5883 = vmatpush1.msra.mxu0 0.0
        %5884 = vmatprep.subr.mxu0 0.0
        %5885 = vmatpush1.msra.mxu0 0.0
        %5886 = vmatprep.subr.mxu0 0.0
        %5887 = vmatpush1.msra.mxu0 0.0
        %5888 = vmatprep.subr.mxu0 0.0
        %5889 = vmatpush1.msra.mxu0 0.0
        %5890 = vmatprep.subr.mxu0 0.0
        %5891 = vmatpush1.msra.mxu0 0.0
        %5892 = vmatprep.subr.mxu0 0.0
        %5893 = vmatpush1.msra.mxu0 0.0
        %5894 = vmatprep.subr.mxu0 0.0
        %5895 = vmatpush1.msra.mxu0 0.0
        %5896 = vmatprep.subr.mxu0 0.0
        %5897 = vmatpush1.msra.mxu0 0.0
        %5898 = vmatprep.subr.mxu0 0.0
        %5899 = vmatpush1.msra.mxu0 0.0
        %5900 = vmatprep.subr.mxu0 0.0
        %5901 = vmatpush1.msra.mxu0 0.0
        %5902 = vmatprep.subr.mxu0 0.0
        %5903 = vmatpush1.msra.mxu0 0.0
        %5904 = vmatprep.subr.mxu0 0.0
        %5905 = vmatpush1.msra.mxu0 0.0
        %5906 = vmatprep.subr.mxu0 0.0
        %5907 = vmatpush1.msra.mxu0 0.0
        %5908 = vmatprep.subr.mxu0 0.0
        %5909 = vmatpush1.msra.mxu0 0.0
        %5910 = vmatprep.subr.mxu0 0.0
        %5911 = vmatpush1.msra.mxu0 0.0
        %5912 = vmatprep.mubr.f32.mxu0 0.0
        %5913 = vmatmul.mubr.f32.gmra.mrb[0].mxu0 %v5846
        %v5914 = vpop.f32.mrb[0].mxu0
        %v5915 = vadd.f32 0.0, %v5914
        %v5916 = vpop.f32.mrb[0].mxu0
        %5917 = vdwg.mxu0
        %v5918 = vsub.f32 %v5915, %v936
        %v5919 = vsub.f32 %v5915, %v941
        %v5920 = vsub.f32 %v5915, %v946
        %v5921 = vmul.f32 %v5842, %v721
        %v5922 = vmul.f32 %v5842, %v722
        %v5923 = vmul.f32 %v5842, %v723
        %v5924 = vmul.f32 %v5842, %v724
        %v5925 = vmul.f32 %v5842, %v725
        %v5926 = vmul.f32 %v5842, %v726
        %v5927 = vmul.f32 %v5842, %v727
        %v5928 = vmul.f32 %v5842, %v728
        %v5929 = vsel %vm847, %v5921, 0.0
        %5930 = vadd.xlane.f32.xlu0 %v5929
        %v5931 = vpop.xlane.xlu0 %5930
        %v5932 = vsel %vm847, %v5922, 0.0
        %5933 = vadd.xlane.f32.xlu0 %v5932
        %v5934 = vpop.xlane.xlu0 %5933
        %v5935 = vsel %vm847, %v5923, 0.0
        %5936 = vadd.xlane.f32.xlu0 %v5935
        %v5937 = vpop.xlane.xlu0 %5936
        %v5938 = vsel %vm847, %v5924, 0.0
        %5939 = vadd.xlane.f32.xlu0 %v5938
        %v5940 = vpop.xlane.xlu0 %5939
        %v5941 = vsel %vm847, %v5925, 0.0
        %5942 = vadd.xlane.f32.xlu0 %v5941
        %v5943 = vpop.xlane.xlu0 %5942
        %v5944 = vsel %vm847, %v5926, 0.0
        %5945 = vadd.xlane.f32.xlu0 %v5944
        %v5946 = vpop.xlane.xlu0 %5945
        %v5947 = vsel %vm847, %v5927, 0.0
        %5948 = vadd.xlane.f32.xlu0 %v5947
        %v5949 = vpop.xlane.xlu0 %5948
        %v5950 = vsel %vm847, %v5928, 0.0
        %5951 = vadd.xlane.f32.xlu0 %v5950
        %v5952 = vpop.xlane.xlu0 %5951
        %v5961 = vlaneseq
        %v5962 = vshrl.u32 %v5961, 7
        %v5963 = vsub.s32 %v990, %v5962
        %v5964 = vrot.slane %v5931, %v5963
        %v5965 = vlaneseq
        %v5966 = vshrl.u32 %v5965, 7
        %v5967 = vsub.s32 %v990, %v5966
        %v5968 = vrot.slane %v5934, %v5967
        %v5969 = vlaneseq
        %v5970 = vshrl.u32 %v5969, 7
        %v5971 = vsub.s32 %v990, %v5970
        %v5972 = vrot.slane %v5937, %v5971
        %v5973 = vlaneseq
        %v5974 = vshrl.u32 %v5973, 7
        %v5975 = vsub.s32 %v990, %v5974
        %v5976 = vrot.slane %v5940, %v5975
        %v5977 = vlaneseq
        %v5978 = vshrl.u32 %v5977, 7
        %v5979 = vsub.s32 %v990, %v5978
        %v5980 = vrot.slane %v5943, %v5979
        %v5981 = vlaneseq
        %v5982 = vshrl.u32 %v5981, 7
        %v5983 = vsub.s32 %v990, %v5982
        %v5984 = vrot.slane %v5946, %v5983
        %v5985 = vlaneseq
        %v5986 = vshrl.u32 %v5985, 7
        %v5987 = vsub.s32 %v990, %v5986
        %v5988 = vrot.slane %v5949, %v5987
        %v5989 = vlaneseq
        %v5990 = vshrl.u32 %v5989, 7
        %v5991 = vsub.s32 %v990, %v5990
        %v5992 = vrot.slane %v5952, %v5991
        %v5993 = vsel %vm1023, %v5968, %v5964
        %v5994 = vsel %vm1025, %v5972, %v5993
        %v5995 = vsel %vm1027, %v5976, %v5994
        %v5996 = vsel %vm1029, %v5980, %v5995
        %v5997 = vsel %vm1031, %v5984, %v5996
        %v5998 = vsel %vm1033, %v5988, %v5997
        %v5999 = vsel %vm1035, %v5992, %v5998
        %6001 = vxpose.xlu0.b32.start [1/16] %v5999, 128
        %6002 = vxpose.xlu0.b32.cont [2/16] 0.0, 128
        %6003 = vxpose.xlu0.b32.cont [3/16] 0.0, 128
        %6004 = vxpose.xlu0.b32.cont [4/16] 0.0, 128
        %6005 = vxpose.xlu0.b32.cont [5/16] 0.0, 128
        %6006 = vxpose.xlu0.b32.cont [6/16] 0.0, 128
        %6007 = vxpose.xlu0.b32.cont [7/16] 0.0, 128
        %6008 = vxpose.xlu0.b32.cont [8/16] 0.0, 128
        %6009 = vxpose.xlu0.b32.cont [9/16] 0.0, 128
        %6010 = vxpose.xlu0.b32.cont [10/16] 0.0, 128
        %6011 = vxpose.xlu0.b32.cont [11/16] 0.0, 128
        %6012 = vxpose.xlu0.b32.cont [12/16] 0.0, 128
        %6013 = vxpose.xlu0.b32.cont [13/16] 0.0, 128
        %6014 = vxpose.xlu0.b32.cont [14/16] 0.0, 128
        %6015 = vxpose.xlu0.b32.cont [15/16] 0.0, 128
        %6016 = vxpose.xlu0.b32.end [16/16] 0.0, 128
        %v6017 = vpop.trf.xlu0
        %v6018 = vpop.trf.xlu0
        %v6019 = vpop.trf.xlu0
        %v6020 = vpop.trf.xlu0
        %v6021 = vpop.trf.xlu0
        %v6022 = vpop.trf.xlu0
        %v6023 = vpop.trf.xlu0
        %v6024 = vpop.trf.xlu0
        %v6025 = vpop.trf.xlu0
        %v6026 = vpop.trf.xlu0
        %v6027 = vpop.trf.xlu0
        %v6028 = vpop.trf.xlu0
        %v6029 = vpop.trf.xlu0
        %v6030 = vpop.trf.xlu0
        %v6031 = vpop.trf.xlu0
        %v6032 = vpop.trf.xlu0
        %v6033 = vmul.f32 %v1073, %v5918
        %v6034 = vmul.f32 %v1078, %v5919
        %6036 = vrot.lane.b32.xlu0 %v6034, 124
        %v6037 = vpop.permute.xlu0 %6036
        %v6039 = vadd.f32 %v6033, %v6037
        %v6040 = vmul.f32 %v1088, %v5920
        %6042 = vrot.lane.b32.xlu0 %v6040, 120
        %v6043 = vpop.permute.xlu0 %6042
        %v6045 = vadd.f32 %v6039, %v6043
        %v6046 = vmul.f32 %v1098, %v5918
        %v6047 = vmul.f32 %v1103, %v5919
        %6049 = vrot.lane.b32.xlu0 %v6047, 124
        %v6050 = vpop.permute.xlu0 %6049
        %v6052 = vadd.f32 %v6046, %v6050
        %v6053 = vmul.f32 %v1113, %v5920
        %6055 = vrot.lane.b32.xlu0 %v6053, 120
        %v6056 = vpop.permute.xlu0 %6055
        %v6058 = vadd.f32 %v6052, %v6056
        %v6059 = vmul.f32 %v1123, %v5918
        %v6060 = vmul.f32 %v1128, %v5919
        %6062 = vrot.lane.b32.xlu0 %v6060, 124
        %v6063 = vpop.permute.xlu0 %6062
        %v6065 = vadd.f32 %v6059, %v6063
        %v6066 = vmul.f32 %v1138, %v5920
        %6068 = vrot.lane.b32.xlu0 %v6066, 120
        %v6069 = vpop.permute.xlu0 %6068
        %v6071 = vadd.f32 %v6065, %v6069
        %v6072 = vmul.f32 %v6045, %v6045
        %v6073 = vmul.f32 %v6058, %v6058
        %v6074 = vadd.f32 %v6072, %v6073
        %v6075 = vmul.f32 %v6071, %v6071
        %v6076 = vadd.f32 %v6074, %v6075
        %v6077 = vadd.f32 %v6076, 1e-12
        %v6078 = vrsqrt.pop %v6077
        %v6079 = vmul.f32 %v6076, %v6078
        %v6080 = vmul.f32 %v6045, %v6078
        %v6081 = vmul.f32 %v6058, %v6078
        %v6082 = vmul.f32 %v6071, %v6078
        %6084 = vrot.lane.b32.xlu0 %v5915, 8
        %v6085 = vpop.permute.xlu0 %6084
        %6088 = vrot.lane.b32.xlu0 %v6045, 8
        %v6089 = vpop.permute.xlu0 %6088
        %6092 = vrot.lane.b32.xlu0 %v6058, 12
        %v6093 = vpop.permute.xlu0 %6092
        %6096 = vrot.lane.b32.xlu0 %v6071, 16
        %v6097 = vpop.permute.xlu0 %6096
        %6100 = vrot.lane.b32.xlu0 %v6079, 20
        %v6101 = vpop.permute.xlu0 %6100
        %6104 = vrot.lane.b32.xlu0 %v6080, 24
        %v6105 = vpop.permute.xlu0 %6104
        %6108 = vrot.lane.b32.xlu0 %v6081, 28
        %v6109 = vpop.permute.xlu0 %6108
        %6112 = vrot.lane.b32.xlu0 %v6082, 32
        %v6113 = vpop.permute.xlu0 %6112
        %v6115 = vsel %vm847, %v6017, %v6085
        %v6116 = vsel %vm1190, %v6115, %v6089
        %v6117 = vsel %vm1192, %v6116, %v6093
        %v6118 = vsel %vm1194, %v6117, %v6097
        %v6119 = vsel %vm1196, %v6118, %v6101
        %v6120 = vsel %vm1198, %v6119, %v6105
        %v6121 = vsel %vm1200, %v6120, %v6109
        %v6122 = vsel %vm1202, %v6121, %v6113
        %s6123 = scalar_lea.vmem %s10, 560
        %v6124 = vld [vmem:[%s6123] sm:$0xff]
        %v6125 = vld [vmem:[%s6123 + $0x8] sm:$0xff]
        %v6126 = vld [vmem:[%s6123 + $0x10] sm:$0xff]
        %v6127 = vld [vmem:[%s6123 + $0x18] sm:$0xff]
        %v6128 = vld [vmem:[%s6123 + $0x20] sm:$0xff]
        %v6129 = vld [vmem:[%s6123 + $0x28] sm:$0xff]
        %v6130 = vld [vmem:[%s6123 + $0x30] sm:$0xf]
        %v6132 = vsel %vm1626, %v6122, 0
        %v6135 = vsel %vm1630, %v6130, 0
        %6137 = vmatprep.subr.mxu0 0.0
        %6138 = vmatpush1.msra.mxu0 %v6124
        %6139 = vmatprep.subr.mxu0 0.0
        %6140 = vmatpush1.msra.mxu0 %v6125
        %6141 = vmatprep.subr.mxu0 0.0
        %6142 = vmatpush1.msra.mxu0 %v6126
        %6143 = vmatprep.subr.mxu0 0.0
        %6144 = vmatpush1.msra.mxu0 %v6127
        %6145 = vmatprep.subr.mxu0 0.0
        %6146 = vmatpush1.msra.mxu0 %v6128
        %6147 = vmatprep.subr.mxu0 0.0
        %6148 = vmatpush1.msra.mxu0 %v6129
        %6149 = vmatprep.subr.mxu0 0.0
        %6150 = vmatpush1.msra.mxu0 %v6135
        %6151 = vmatprep.subr.mxu0 0.0
        %6152 = vmatpush1.msra.mxu0 0.0
        %6153 = vmatprep.subr.mxu0 0.0
        %6154 = vmatpush1.msra.mxu0 0.0
        %6155 = vmatprep.subr.mxu0 0.0
        %6156 = vmatpush1.msra.mxu0 0.0
        %6157 = vmatprep.subr.mxu0 0.0
        %6158 = vmatpush1.msra.mxu0 0.0
        %6159 = vmatprep.subr.mxu0 0.0
        %6160 = vmatpush1.msra.mxu0 0.0
        %6161 = vmatprep.subr.mxu0 0.0
        %6162 = vmatpush1.msra.mxu0 0.0
        %6163 = vmatprep.subr.mxu0 0.0
        %6164 = vmatpush1.msra.mxu0 0.0
        %6165 = vmatprep.subr.mxu0 0.0
        %6166 = vmatpush1.msra.mxu0 0.0
        %6167 = vmatprep.subr.mxu0 0.0
        %6168 = vmatpush1.msra.mxu0 0.0
        %6169 = vmatprep.subr.mxu0 0.0
        %6170 = vmatpush1.msra.mxu0 0.0
        %6171 = vmatprep.subr.mxu0 0.0
        %6172 = vmatpush1.msra.mxu0 0.0
        %6173 = vmatprep.subr.mxu0 0.0
        %6174 = vmatpush1.msra.mxu0 0.0
        %6175 = vmatprep.subr.mxu0 0.0
        %6176 = vmatpush1.msra.mxu0 0.0
        %6177 = vmatprep.subr.mxu0 0.0
        %6178 = vmatpush1.msra.mxu0 0.0
        %6179 = vmatprep.subr.mxu0 0.0
        %6180 = vmatpush1.msra.mxu0 0.0
        %6181 = vmatprep.subr.mxu0 0.0
        %6182 = vmatpush1.msra.mxu0 0.0
        %6183 = vmatprep.subr.mxu0 0.0
        %6184 = vmatpush1.msra.mxu0 0.0
        %6185 = vmatprep.subr.mxu0 0.0
        %6186 = vmatpush1.msra.mxu0 0.0
        %6187 = vmatprep.subr.mxu0 0.0
        %6188 = vmatpush1.msra.mxu0 0.0
        %6189 = vmatprep.subr.mxu0 0.0
        %6190 = vmatpush1.msra.mxu0 0.0
        %6191 = vmatprep.subr.mxu0 0.0
        %6192 = vmatpush1.msra.mxu0 0.0
        %6193 = vmatprep.subr.mxu0 0.0
        %6194 = vmatpush1.msra.mxu0 0.0
        %6195 = vmatprep.subr.mxu0 0.0
        %6196 = vmatpush1.msra.mxu0 0.0
        %6197 = vmatprep.subr.mxu0 0.0
        %6198 = vmatpush1.msra.mxu0 0.0
        %6199 = vmatprep.subr.mxu0 0.0
        %6200 = vmatpush1.msra.mxu0 0.0
        %6201 = vmatprep.mubr.f32.mxu0 0.0
        %6202 = vmatmul.mubr.f32.gmra.mrb[0].mxu0 %v6132
        %v6203 = vpop.f32.mrb[0].mxu0
        %v6204 = vadd.f32 0.0, %v6203
        %v6205 = vpop.f32.mrb[0].mxu0
        %6206 = vdwg.mxu0
        %v6207 = vadd.f32 %v5715, %v6204
        %s6208 = scalar_lea.vmem %s654, 88
        %v6209 = vld [vmem:[%s6208] sm:$0xff]
        %s6210 = scalar_lea.vmem %s659, 352
        %v6211 = vld [vmem:[%s6210] sm:$0xff]
        %v6212 = vld [vmem:[%s6210 + $0x8] sm:$0xff]
        %v6213 = vld [vmem:[%s6210 + $0x10] sm:$0xff]
        %v6214 = vld [vmem:[%s6210 + $0x18] sm:$0x3f]
        %s6215 = sld [smem:[#allocation2 + $0x580]]
        %v6216 = vstv %s6215
        %v6217 = vmul.f32 %v6216, %v721
        %s6218 = sld [smem:[#allocation2 + $0x581]]
        %v6219 = vstv %s6218
        %v6220 = vmul.f32 %v6219, %v722
        %v6221 = vadd.f32 %v6217, %v6220
        %s6222 = sld [smem:[#allocation2 + $0x582]]
        %v6223 = vstv %s6222
        %v6224 = vmul.f32 %v6223, %v723
        %v6225 = vadd.f32 %v6221, %v6224
        %s6226 = sld [smem:[#allocation2 + $0x583]]
        %v6227 = vstv %s6226
        %v6228 = vmul.f32 %v6227, %v724
        %v6229 = vadd.f32 %v6225, %v6228
        %s6230 = sld [smem:[#allocation2 + $0x584]]
        %v6231 = vstv %s6230
        %v6232 = vmul.f32 %v6231, %v725
        %v6233 = vadd.f32 %v6229, %v6232
        %s6234 = sld [smem:[#allocation2 + $0x585]]
        %v6235 = vstv %s6234
        %v6236 = vmul.f32 %v6235, %v726
        %v6237 = vadd.f32 %v6233, %v6236
        %s6238 = sld [smem:[#allocation2 + $0x586]]
        %v6239 = vstv %s6238
        %v6240 = vmul.f32 %v6239, %v727
        %v6241 = vadd.f32 %v6237, %v6240
        %s6242 = sld [smem:[#allocation2 + $0x587]]
        %v6243 = vstv %s6242
        %v6244 = vmul.f32 %v6243, %v728
        %v6245 = vadd.f32 %v6241, %v6244
        %v6247 = vsel %vm767, %v6209, 0
        %v6250 = vsel %vm771, %v6214, 0
        %6252 = vmatprep.subr.mxu0 0.0
        %6253 = vmatpush1.msra.mxu0 %v6211
        %6254 = vmatprep.subr.mxu0 0.0
        %6255 = vmatpush1.msra.mxu0 %v6212
        %6256 = vmatprep.subr.mxu0 0.0
        %6257 = vmatpush1.msra.mxu0 %v6213
        %6258 = vmatprep.subr.mxu0 0.0
        %6259 = vmatpush1.msra.mxu0 %v6250
        %6260 = vmatprep.subr.mxu0 0.0
        %6261 = vmatpush1.msra.mxu0 0.0
        %6262 = vmatprep.subr.mxu0 0.0
        %6263 = vmatpush1.msra.mxu0 0.0
        %6264 = vmatprep.subr.mxu0 0.0
        %6265 = vmatpush1.msra.mxu0 0.0
        %6266 = vmatprep.subr.mxu0 0.0
        %6267 = vmatpush1.msra.mxu0 0.0
        %6268 = vmatprep.subr.mxu0 0.0
        %6269 = vmatpush1.msra.mxu0 0.0
        %6270 = vmatprep.subr.mxu0 0.0
        %6271 = vmatpush1.msra.mxu0 0.0
        %6272 = vmatprep.subr.mxu0 0.0
        %6273 = vmatpush1.msra.mxu0 0.0
        %6274 = vmatprep.subr.mxu0 0.0
        %6275 = vmatpush1.msra.mxu0 0.0
        %6276 = vmatprep.subr.mxu0 0.0
        %6277 = vmatpush1.msra.mxu0 0.0
        %6278 = vmatprep.subr.mxu0 0.0
        %6279 = vmatpush1.msra.mxu0 0.0
        %6280 = vmatprep.subr.mxu0 0.0
        %6281 = vmatpush1.msra.mxu0 0.0
        %6282 = vmatprep.subr.mxu0 0.0
        %6283 = vmatpush1.msra.mxu0 0.0
        %6284 = vmatprep.subr.mxu0 0.0
        %6285 = vmatpush1.msra.mxu0 0.0
        %6286 = vmatprep.subr.mxu0 0.0
        %6287 = vmatpush1.msra.mxu0 0.0
        %6288 = vmatprep.subr.mxu0 0.0
        %6289 = vmatpush1.msra.mxu0 0.0
        %6290 = vmatprep.subr.mxu0 0.0
        %6291 = vmatpush1.msra.mxu0 0.0
        %6292 = vmatprep.subr.mxu0 0.0
        %6293 = vmatpush1.msra.mxu0 0.0
        %6294 = vmatprep.subr.mxu0 0.0
        %6295 = vmatpush1.msra.mxu0 0.0
        %6296 = vmatprep.subr.mxu0 0.0
        %6297 = vmatpush1.msra.mxu0 0.0
        %6298 = vmatprep.subr.mxu0 0.0
        %6299 = vmatpush1.msra.mxu0 0.0
        %6300 = vmatprep.subr.mxu0 0.0
        %6301 = vmatpush1.msra.mxu0 0.0
        %6302 = vmatprep.subr.mxu0 0.0
        %6303 = vmatpush1.msra.mxu0 0.0
        %6304 = vmatprep.subr.mxu0 0.0
        %6305 = vmatpush1.msra.mxu0 0.0
        %6306 = vmatprep.subr.mxu0 0.0
        %6307 = vmatpush1.msra.mxu0 0.0
        %6308 = vmatprep.subr.mxu0 0.0
        %6309 = vmatpush1.msra.mxu0 0.0
        %6310 = vmatprep.subr.mxu0 0.0
        %6311 = vmatpush1.msra.mxu0 0.0
        %6312 = vmatprep.subr.mxu0 0.0
        %6313 = vmatpush1.msra.mxu0 0.0
        %6314 = vmatprep.subr.mxu0 0.0
        %6315 = vmatpush1.msra.mxu0 0.0
        %6316 = vmatprep.mubr.f32.mxu0 0.0
        %6317 = vmatmul.mubr.f32.gmra.mrb[0].mxu0 %v6247
        %v6318 = vpop.f32.mrb[0].mxu0
        %v6319 = vadd.f32 %v6245, %v6318
        %v6320 = vpop.f32.mrb[0].mxu0
        %6321 = vdwg.mxu0
        %v6322 = vmul.f32 %v6319, 0.57735026
        %v6323 = vadd.f32 %v6322, %v720
        %v6324 = vsel %vm847, %v6323, -inf
        %6325 = vmax.xlane.f32.xlu0 %v6324
        %v6326 = vpop.xlane.xlu0 %6325
        %v6327 = vsub.f32 %v6323, %v6326
        %v6328 = vmul.f32 %v6327, 1.442695
        %v6329 = vpow.pop %v6328
        %v6330 = vsel %vm847, %v6329, 0.0
        %6331 = vadd.xlane.f32.xlu0 %v6330
        %v6332 = vpop.xlane.xlu0 %6331
        %v6333 = vrcp.pop %v6332
        %v6334 = vmul.f32 %v6329, %v6333
        %s6335 = scalar_lea.vmem %s664, 88
        %v6336 = vld [vmem:[%s6335] sm:$0xff]
        %v6338 = vsel %vm847, %v6334, 0
        %6340 = vmatprep.subr.mxu0 0.0
        %6341 = vmatpush1.msra.mxu0 %v6336
        %6342 = vmatprep.subr.mxu0 0.0
        %6343 = vmatpush1.msra.mxu0 0.0
        %6344 = vmatprep.subr.mxu0 0.0
        %6345 = vmatpush1.msra.mxu0 0.0
        %6346 = vmatprep.subr.mxu0 0.0
        %6347 = vmatpush1.msra.mxu0 0.0
        %6348 = vmatprep.subr.mxu0 0.0
        %6349 = vmatpush1.msra.mxu0 0.0
        %6350 = vmatprep.subr.mxu0 0.0
        %6351 = vmatpush1.msra.mxu0 0.0
        %6352 = vmatprep.subr.mxu0 0.0
        %6353 = vmatpush1.msra.mxu0 0.0
        %6354 = vmatprep.subr.mxu0 0.0
        %6355 = vmatpush1.msra.mxu0 0.0
        %6356 = vmatprep.subr.mxu0 0.0
        %6357 = vmatpush1.msra.mxu0 0.0
        %6358 = vmatprep.subr.mxu0 0.0
        %6359 = vmatpush1.msra.mxu0 0.0
        %6360 = vmatprep.subr.mxu0 0.0
        %6361 = vmatpush1.msra.mxu0 0.0
        %6362 = vmatprep.subr.mxu0 0.0
        %6363 = vmatpush1.msra.mxu0 0.0
        %6364 = vmatprep.subr.mxu0 0.0
        %6365 = vmatpush1.msra.mxu0 0.0
        %6366 = vmatprep.subr.mxu0 0.0
        %6367 = vmatpush1.msra.mxu0 0.0
        %6368 = vmatprep.subr.mxu0 0.0
        %6369 = vmatpush1.msra.mxu0 0.0
        %6370 = vmatprep.subr.mxu0 0.0
        %6371 = vmatpush1.msra.mxu0 0.0
        %6372 = vmatprep.subr.mxu0 0.0
        %6373 = vmatpush1.msra.mxu0 0.0
        %6374 = vmatprep.subr.mxu0 0.0
        %6375 = vmatpush1.msra.mxu0 0.0
        %6376 = vmatprep.subr.mxu0 0.0
        %6377 = vmatpush1.msra.mxu0 0.0
        %6378 = vmatprep.subr.mxu0 0.0
        %6379 = vmatpush1.msra.mxu0 0.0
        %6380 = vmatprep.subr.mxu0 0.0
        %6381 = vmatpush1.msra.mxu0 0.0
        %6382 = vmatprep.subr.mxu0 0.0
        %6383 = vmatpush1.msra.mxu0 0.0
        %6384 = vmatprep.subr.mxu0 0.0
        %6385 = vmatpush1.msra.mxu0 0.0
        %6386 = vmatprep.subr.mxu0 0.0
        %6387 = vmatpush1.msra.mxu0 0.0
        %6388 = vmatprep.subr.mxu0 0.0
        %6389 = vmatpush1.msra.mxu0 0.0
        %6390 = vmatprep.subr.mxu0 0.0
        %6391 = vmatpush1.msra.mxu0 0.0
        %6392 = vmatprep.subr.mxu0 0.0
        %6393 = vmatpush1.msra.mxu0 0.0
        %6394 = vmatprep.subr.mxu0 0.0
        %6395 = vmatpush1.msra.mxu0 0.0
        %6396 = vmatprep.subr.mxu0 0.0
        %6397 = vmatpush1.msra.mxu0 0.0
        %6398 = vmatprep.subr.mxu0 0.0
        %6399 = vmatpush1.msra.mxu0 0.0
        %6400 = vmatprep.subr.mxu0 0.0
        %6401 = vmatpush1.msra.mxu0 0.0
        %6402 = vmatprep.subr.mxu0 0.0
        %6403 = vmatpush1.msra.mxu0 0.0
        %6404 = vmatprep.mubr.f32.mxu0 0.0
        %6405 = vmatmul.mubr.f32.gmra.mrb[0].mxu0 %v6338
        %v6406 = vpop.f32.mrb[0].mxu0
        %v6407 = vadd.f32 0.0, %v6406
        %v6408 = vpop.f32.mrb[0].mxu0
        %6409 = vdwg.mxu0
        %v6410 = vsub.f32 %v6407, %v936
        %v6411 = vsub.f32 %v6407, %v941
        %v6412 = vsub.f32 %v6407, %v946
        %v6413 = vmul.f32 %v6334, %v721
        %v6414 = vmul.f32 %v6334, %v722
        %v6415 = vmul.f32 %v6334, %v723
        %v6416 = vmul.f32 %v6334, %v724
        %v6417 = vmul.f32 %v6334, %v725
        %v6418 = vmul.f32 %v6334, %v726
        %v6419 = vmul.f32 %v6334, %v727
        %v6420 = vmul.f32 %v6334, %v728
        %v6421 = vsel %vm847, %v6413, 0.0
        %6422 = vadd.xlane.f32.xlu0 %v6421
        %v6423 = vpop.xlane.xlu0 %6422
        %v6424 = vsel %vm847, %v6414, 0.0
        %6425 = vadd.xlane.f32.xlu0 %v6424
        %v6426 = vpop.xlane.xlu0 %6425
        %v6427 = vsel %vm847, %v6415, 0.0
        %6428 = vadd.xlane.f32.xlu0 %v6427
        %v6429 = vpop.xlane.xlu0 %6428
        %v6430 = vsel %vm847, %v6416, 0.0
        %6431 = vadd.xlane.f32.xlu0 %v6430
        %v6432 = vpop.xlane.xlu0 %6431
        %v6433 = vsel %vm847, %v6417, 0.0
        %6434 = vadd.xlane.f32.xlu0 %v6433
        %v6435 = vpop.xlane.xlu0 %6434
        %v6436 = vsel %vm847, %v6418, 0.0
        %6437 = vadd.xlane.f32.xlu0 %v6436
        %v6438 = vpop.xlane.xlu0 %6437
        %v6439 = vsel %vm847, %v6419, 0.0
        %6440 = vadd.xlane.f32.xlu0 %v6439
        %v6441 = vpop.xlane.xlu0 %6440
        %v6442 = vsel %vm847, %v6420, 0.0
        %6443 = vadd.xlane.f32.xlu0 %v6442
        %v6444 = vpop.xlane.xlu0 %6443
        %v6453 = vlaneseq
        %v6454 = vshrl.u32 %v6453, 7
        %v6455 = vsub.s32 %v990, %v6454
        %v6456 = vrot.slane %v6423, %v6455
        %v6457 = vlaneseq
        %v6458 = vshrl.u32 %v6457, 7
        %v6459 = vsub.s32 %v990, %v6458
        %v6460 = vrot.slane %v6426, %v6459
        %v6461 = vlaneseq
        %v6462 = vshrl.u32 %v6461, 7
        %v6463 = vsub.s32 %v990, %v6462
        %v6464 = vrot.slane %v6429, %v6463
        %v6465 = vlaneseq
        %v6466 = vshrl.u32 %v6465, 7
        %v6467 = vsub.s32 %v990, %v6466
        %v6468 = vrot.slane %v6432, %v6467
        %v6469 = vlaneseq
        %v6470 = vshrl.u32 %v6469, 7
        %v6471 = vsub.s32 %v990, %v6470
        %v6472 = vrot.slane %v6435, %v6471
        %v6473 = vlaneseq
        %v6474 = vshrl.u32 %v6473, 7
        %v6475 = vsub.s32 %v990, %v6474
        %v6476 = vrot.slane %v6438, %v6475
        %v6477 = vlaneseq
        %v6478 = vshrl.u32 %v6477, 7
        %v6479 = vsub.s32 %v990, %v6478
        %v6480 = vrot.slane %v6441, %v6479
        %v6481 = vlaneseq
        %v6482 = vshrl.u32 %v6481, 7
        %v6483 = vsub.s32 %v990, %v6482
        %v6484 = vrot.slane %v6444, %v6483
        %v6485 = vsel %vm1023, %v6460, %v6456
        %v6486 = vsel %vm1025, %v6464, %v6485
        %v6487 = vsel %vm1027, %v6468, %v6486
        %v6488 = vsel %vm1029, %v6472, %v6487
        %v6489 = vsel %vm1031, %v6476, %v6488
        %v6490 = vsel %vm1033, %v6480, %v6489
        %v6491 = vsel %vm1035, %v6484, %v6490
        %6493 = vxpose.xlu0.b32.start [1/16] %v6491, 128
        %6494 = vxpose.xlu0.b32.cont [2/16] 0.0, 128
        %6495 = vxpose.xlu0.b32.cont [3/16] 0.0, 128
        %6496 = vxpose.xlu0.b32.cont [4/16] 0.0, 128
        %6497 = vxpose.xlu0.b32.cont [5/16] 0.0, 128
        %6498 = vxpose.xlu0.b32.cont [6/16] 0.0, 128
        %6499 = vxpose.xlu0.b32.cont [7/16] 0.0, 128
        %6500 = vxpose.xlu0.b32.cont [8/16] 0.0, 128
        %6501 = vxpose.xlu0.b32.cont [9/16] 0.0, 128
        %6502 = vxpose.xlu0.b32.cont [10/16] 0.0, 128
        %6503 = vxpose.xlu0.b32.cont [11/16] 0.0, 128
        %6504 = vxpose.xlu0.b32.cont [12/16] 0.0, 128
        %6505 = vxpose.xlu0.b32.cont [13/16] 0.0, 128
        %6506 = vxpose.xlu0.b32.cont [14/16] 0.0, 128
        %6507 = vxpose.xlu0.b32.cont [15/16] 0.0, 128
        %6508 = vxpose.xlu0.b32.end [16/16] 0.0, 128
        %v6509 = vpop.trf.xlu0
        %v6510 = vpop.trf.xlu0
        %v6511 = vpop.trf.xlu0
        %v6512 = vpop.trf.xlu0
        %v6513 = vpop.trf.xlu0
        %v6514 = vpop.trf.xlu0
        %v6515 = vpop.trf.xlu0
        %v6516 = vpop.trf.xlu0
        %v6517 = vpop.trf.xlu0
        %v6518 = vpop.trf.xlu0
        %v6519 = vpop.trf.xlu0
        %v6520 = vpop.trf.xlu0
        %v6521 = vpop.trf.xlu0
        %v6522 = vpop.trf.xlu0
        %v6523 = vpop.trf.xlu0
        %v6524 = vpop.trf.xlu0
        %v6525 = vmul.f32 %v1073, %v6410
        %v6526 = vmul.f32 %v1078, %v6411
        %6528 = vrot.lane.b32.xlu0 %v6526, 124
        %v6529 = vpop.permute.xlu0 %6528
        %v6531 = vadd.f32 %v6525, %v6529
        %v6532 = vmul.f32 %v1088, %v6412
        %6534 = vrot.lane.b32.xlu0 %v6532, 120
        %v6535 = vpop.permute.xlu0 %6534
        %v6537 = vadd.f32 %v6531, %v6535
        %v6538 = vmul.f32 %v1098, %v6410
        %v6539 = vmul.f32 %v1103, %v6411
        %6541 = vrot.lane.b32.xlu0 %v6539, 124
        %v6542 = vpop.permute.xlu0 %6541
        %v6544 = vadd.f32 %v6538, %v6542
        %v6545 = vmul.f32 %v1113, %v6412
        %6547 = vrot.lane.b32.xlu0 %v6545, 120
        %v6548 = vpop.permute.xlu0 %6547
        %v6550 = vadd.f32 %v6544, %v6548
        %v6551 = vmul.f32 %v1123, %v6410
        %v6552 = vmul.f32 %v1128, %v6411
        %6554 = vrot.lane.b32.xlu0 %v6552, 124
        %v6555 = vpop.permute.xlu0 %6554
        %v6557 = vadd.f32 %v6551, %v6555
        %v6558 = vmul.f32 %v1138, %v6412
        %6560 = vrot.lane.b32.xlu0 %v6558, 120
        %v6561 = vpop.permute.xlu0 %6560
        %v6563 = vadd.f32 %v6557, %v6561
        %v6564 = vmul.f32 %v6537, %v6537
        %v6565 = vmul.f32 %v6550, %v6550
        %v6566 = vadd.f32 %v6564, %v6565
        %v6567 = vmul.f32 %v6563, %v6563
        %v6568 = vadd.f32 %v6566, %v6567
        %v6569 = vadd.f32 %v6568, 1e-12
        %v6570 = vrsqrt.pop %v6569
        %v6571 = vmul.f32 %v6568, %v6570
        %v6572 = vmul.f32 %v6537, %v6570
        %v6573 = vmul.f32 %v6550, %v6570
        %v6574 = vmul.f32 %v6563, %v6570
        %6576 = vrot.lane.b32.xlu0 %v6407, 8
        %v6577 = vpop.permute.xlu0 %6576
        %6580 = vrot.lane.b32.xlu0 %v6537, 8
        %v6581 = vpop.permute.xlu0 %6580
        %6584 = vrot.lane.b32.xlu0 %v6550, 12
        %v6585 = vpop.permute.xlu0 %6584
        %6588 = vrot.lane.b32.xlu0 %v6563, 16
        %v6589 = vpop.permute.xlu0 %6588
        %6592 = vrot.lane.b32.xlu0 %v6571, 20
        %v6593 = vpop.permute.xlu0 %6592
        %6596 = vrot.lane.b32.xlu0 %v6572, 24
        %v6597 = vpop.permute.xlu0 %6596
        %6600 = vrot.lane.b32.xlu0 %v6573, 28
        %v6601 = vpop.permute.xlu0 %6600
        %6604 = vrot.lane.b32.xlu0 %v6574, 32
        %v6605 = vpop.permute.xlu0 %6604
        %v6607 = vsel %vm847, %v6509, %v6577
        %v6608 = vsel %vm1190, %v6607, %v6581
        %v6609 = vsel %vm1192, %v6608, %v6585
        %v6610 = vsel %vm1194, %v6609, %v6589
        %v6611 = vsel %vm1196, %v6610, %v6593
        %v6612 = vsel %vm1198, %v6611, %v6597
        %v6613 = vsel %vm1200, %v6612, %v6601
        %v6614 = vsel %vm1202, %v6613, %v6605
        %s6615 = scalar_lea.vmem %s10, 616
        %v6616 = vld [vmem:[%s6615] sm:$0xff]
        %v6617 = vld [vmem:[%s6615 + $0x8] sm:$0xff]
        %v6618 = vld [vmem:[%s6615 + $0x10] sm:$0xff]
        %v6619 = vld [vmem:[%s6615 + $0x18] sm:$0xff]
        %v6620 = vld [vmem:[%s6615 + $0x20] sm:$0xff]
        %v6621 = vld [vmem:[%s6615 + $0x28] sm:$0xff]
        %v6622 = vld [vmem:[%s6615 + $0x30] sm:$0xf]
        %v6624 = vsel %vm1626, %v6614, 0
        %v6627 = vsel %vm1630, %v6622, 0
        %6629 = vmatprep.subr.mxu0 0.0
        %6630 = vmatpush1.msra.mxu0 %v6616
        %6631 = vmatprep.subr.mxu0 0.0
        %6632 = vmatpush1.msra.mxu0 %v6617
        %6633 = vmatprep.subr.mxu0 0.0
        %6634 = vmatpush1.msra.mxu0 %v6618
        %6635 = vmatprep.subr.mxu0 0.0
        %6636 = vmatpush1.msra.mxu0 %v6619
        %6637 = vmatprep.subr.mxu0 0.0
        %6638 = vmatpush1.msra.mxu0 %v6620
        %6639 = vmatprep.subr.mxu0 0.0
        %6640 = vmatpush1.msra.mxu0 %v6621
        %6641 = vmatprep.subr.mxu0 0.0
        %6642 = vmatpush1.msra.mxu0 %v6627
        %6643 = vmatprep.subr.mxu0 0.0
        %6644 = vmatpush1.msra.mxu0 0.0
        %6645 = vmatprep.subr.mxu0 0.0
        %6646 = vmatpush1.msra.mxu0 0.0
        %6647 = vmatprep.subr.mxu0 0.0
        %6648 = vmatpush1.msra.mxu0 0.0
        %6649 = vmatprep.subr.mxu0 0.0
        %6650 = vmatpush1.msra.mxu0 0.0
        %6651 = vmatprep.subr.mxu0 0.0
        %6652 = vmatpush1.msra.mxu0 0.0
        %6653 = vmatprep.subr.mxu0 0.0
        %6654 = vmatpush1.msra.mxu0 0.0
        %6655 = vmatprep.subr.mxu0 0.0
        %6656 = vmatpush1.msra.mxu0 0.0
        %6657 = vmatprep.subr.mxu0 0.0
        %6658 = vmatpush1.msra.mxu0 0.0
        %6659 = vmatprep.subr.mxu0 0.0
        %6660 = vmatpush1.msra.mxu0 0.0
        %6661 = vmatprep.subr.mxu0 0.0
        %6662 = vmatpush1.msra.mxu0 0.0
        %6663 = vmatprep.subr.mxu0 0.0
        %6664 = vmatpush1.msra.mxu0 0.0
        %6665 = vmatprep.subr.mxu0 0.0
        %6666 = vmatpush1.msra.mxu0 0.0
        %6667 = vmatprep.subr.mxu0 0.0
        %6668 = vmatpush1.msra.mxu0 0.0
        %6669 = vmatprep.subr.mxu0 0.0
        %6670 = vmatpush1.msra.mxu0 0.0
        %6671 = vmatprep.subr.mxu0 0.0
        %6672 = vmatpush1.msra.mxu0 0.0
        %6673 = vmatprep.subr.mxu0 0.0
        %6674 = vmatpush1.msra.mxu0 0.0
        %6675 = vmatprep.subr.mxu0 0.0
        %6676 = vmatpush1.msra.mxu0 0.0
        %6677 = vmatprep.subr.mxu0 0.0
        %6678 = vmatpush1.msra.mxu0 0.0
        %6679 = vmatprep.subr.mxu0 0.0
        %6680 = vmatpush1.msra.mxu0 0.0
        %6681 = vmatprep.subr.mxu0 0.0
        %6682 = vmatpush1.msra.mxu0 0.0
        %6683 = vmatprep.subr.mxu0 0.0
        %6684 = vmatpush1.msra.mxu0 0.0
        %6685 = vmatprep.subr.mxu0 0.0
        %6686 = vmatpush1.msra.mxu0 0.0
        %6687 = vmatprep.subr.mxu0 0.0
        %6688 = vmatpush1.msra.mxu0 0.0
        %6689 = vmatprep.subr.mxu0 0.0
        %6690 = vmatpush1.msra.mxu0 0.0
        %6691 = vmatprep.subr.mxu0 0.0
        %6692 = vmatpush1.msra.mxu0 0.0
        %6693 = vmatprep.mubr.f32.mxu0 0.0
        %6694 = vmatmul.mubr.f32.gmra.mrb[0].mxu0 %v6624
        %v6695 = vpop.f32.mrb[0].mxu0
        %v6696 = vadd.f32 0.0, %v6695
        %v6697 = vpop.f32.mrb[0].mxu0
        %6698 = vdwg.mxu0
        %v6699 = vadd.f32 %v6207, %v6696
        %v6700 = vld [vmem:[%s11] sm:$0x1]
        %v6701 = vld [vmem:[%s11 + $0x1] sm:$0x1]
        %v6702 = vld [vmem:[%s11 + $0x2] sm:$0x1]
        %v6703 = vld [vmem:[%s11 + $0x3] sm:$0x1]
        %v6704 = vld [vmem:[%s11 + $0x4] sm:$0x1]
        %v6705 = vld [vmem:[%s11 + $0x5] sm:$0x1]
        %v6706 = vld [vmem:[%s11 + $0x6] sm:$0x1]
        %v6707 = vld [vmem:[%s11 + $0x7] sm:$0x1]
        %v6708 = vld [vmem:[%s11 + $0x8] sm:$0x1]
        %v6709 = vlaneseq
        %v6710 = vshrl.u32 %v6709, 7
        %v6711 = vsub.s32 0, %v6710
        %v6712 = vrot.slane %v6700, %v6711
        %v6713 = vadd.f32 %v6699, %v6712
        %v6714 = vsel %vm706, 1, 0
        %6715 = vset.pattern.permute.xlu0 0
        %6716 = vperm.xlu0 %6715, %v6714
        %v6717 = vpop.permute.xlu0 %6716
        %vm6718 = vcmp.eq.s32.totalorder %v6717, 1
        %v6719 = vsel %vm6718, %v6713, 0.0
        %v6720 = vld [vmem:[%s679] sm:$0xff]
        %v6721 = vadd.f32 %v6720, %v6719
        %v6722 = vsel %vm1194, %v6721, 0.0
        %6723 = vadd.xlane.f32.xlu0 %v6722
        %v6724 = vpop.xlane.xlu0 %6723
        %v6725 = vrcp.pop 32.0
        %v6726 = vmul.f32 %v6724, %v6725
        %v6727 = vsub.f32 %v6721, %v6726
        %v6728 = vmul.f32 %v6727, %v6727
        %v6729 = vsel %vm1194, %v6728, 0.0
        %6730 = vadd.xlane.f32.xlu0 %v6729
        %v6731 = vpop.xlane.xlu0 %6730
        %v6732 = vmul.f32 %v6731, %v6725
        %v6733 = vadd.f32 %v6732, 1e-05
        %v6734 = vrsqrt.pop %v6733
        %v6735 = vmul.f32 %v6727, %v6734
        %v6736 = vlaneseq
        %v6737 = vshrl.u32 %v6736, 7
        %v6738 = vsub.s32 0, %v6737
        %v6739 = vrot.slane %v6701, %v6738
        %v6740 = vmul.f32 %v6735, %v6739
        %v6741 = vlaneseq
        %v6742 = vshrl.u32 %v6741, 7
        %v6743 = vsub.s32 0, %v6742
        %v6744 = vrot.slane %v6702, %v6743
        %v6745 = vadd.f32 %v6740, %v6744
        %v6746 = vld [vmem:[%s12] sm:$0xff]
        %v6747 = vld [vmem:[%s12 + $0x8] sm:$0xff]
        %v6748 = vld [vmem:[%s12 + $0x10] sm:$0xff]
        %v6749 = vld [vmem:[%s12 + $0x18] sm:$0xff]
        %v6750 = vld [vmem:[%s12 + $0x20] sm:$0xff]
        %v6751 = vld [vmem:[%s12 + $0x28] sm:$0xff]
        %v6752 = vld [vmem:[%s12 + $0x30] sm:$0xff]
        %v6753 = vld [vmem:[%s12 + $0x38] sm:$0xff]
        %v6754 = vld [vmem:[%s12 + $0x40] sm:$0xff]
        %v6755 = vld [vmem:[%s12 + $0x48] sm:$0xff]
        %v6756 = vld [vmem:[%s12 + $0x50] sm:$0xff]
        %v6757 = vld [vmem:[%s12 + $0x58] sm:$0xff]
        %v6758 = vlaneseq
        %v6759 = vshrl.u32 %v6758, 7
        %v6760 = vsub.s32 0, %v6759
        %v6761 = vrot.slane %v6703, %v6760
        %v6763 = vsel %vm1194, %v6745, 0
        %6765 = vmatprep.subr.mxu0 0.0
        %6766 = vmatpush1.msra.mxu0 %v6746
        %6767 = vmatprep.subr.mxu0 0.0
        %6768 = vmatpush1.msra.mxu0 %v6747
        %6769 = vmatprep.subr.mxu0 0.0
        %6770 = vmatpush1.msra.mxu0 %v6748
        %6771 = vmatprep.subr.mxu0 0.0
        %6772 = vmatpush1.msra.mxu0 %v6749
        %6773 = vmatprep.subr.mxu0 0.0
        %6774 = vmatpush1.msra.mxu0 0.0
        %6775 = vmatprep.subr.mxu0 0.0
        %6776 = vmatpush1.msra.mxu0 0.0
        %6777 = vmatprep.subr.mxu0 0.0
        %6778 = vmatpush1.msra.mxu0 0.0
        %6779 = vmatprep.subr.mxu0 0.0
        %6780 = vmatpush1.msra.mxu0 0.0
        %6781 = vmatprep.subr.mxu0 0.0
        %6782 = vmatpush1.msra.mxu0 0.0
        %6783 = vmatprep.subr.mxu0 0.0
        %6784 = vmatpush1.msra.mxu0 0.0
        %6785 = vmatprep.subr.mxu0 0.0
        %6786 = vmatpush1.msra.mxu0 0.0
        %6787 = vmatprep.subr.mxu0 0.0
        %6788 = vmatpush1.msra.mxu0 0.0
        %6789 = vmatprep.subr.mxu0 0.0
        %6790 = vmatpush1.msra.mxu0 0.0
        %6791 = vmatprep.subr.mxu0 0.0
        %6792 = vmatpush1.msra.mxu0 0.0
        %6793 = vmatprep.subr.mxu0 0.0
        %6794 = vmatpush1.msra.mxu0 0.0
        %6795 = vmatprep.subr.mxu0 0.0
        %6796 = vmatpush1.msra.mxu0 0.0
        %6797 = vmatprep.subr.mxu0 0.0
        %6798 = vmatpush1.msra.mxu0 0.0
        %6799 = vmatprep.subr.mxu0 0.0
        %6800 = vmatpush1.msra.mxu0 0.0
        %6801 = vmatprep.subr.mxu0 0.0
        %6802 = vmatpush1.msra.mxu0 0.0
        %6803 = vmatprep.subr.mxu0 0.0
        %6804 = vmatpush1.msra.mxu0 0.0
        %6805 = vmatprep.subr.mxu0 0.0
        %6806 = vmatpush1.msra.mxu0 0.0
        %6807 = vmatprep.subr.mxu0 0.0
        %6808 = vmatpush1.msra.mxu0 0.0
        %6809 = vmatprep.subr.mxu0 0.0
        %6810 = vmatpush1.msra.mxu0 0.0
        %6811 = vmatprep.subr.mxu0 0.0
        %6812 = vmatpush1.msra.mxu0 0.0
        %6813 = vmatprep.subr.mxu0 0.0
        %6814 = vmatpush1.msra.mxu0 0.0
        %6815 = vmatprep.subr.mxu0 0.0
        %6816 = vmatpush1.msra.mxu0 0.0
        %6817 = vmatprep.subr.mxu0 0.0
        %6818 = vmatpush1.msra.mxu0 0.0
        %6819 = vmatprep.subr.mxu0 0.0
        %6820 = vmatpush1.msra.mxu0 0.0
        %6821 = vmatprep.subr.mxu0 0.0
        %6822 = vmatpush1.msra.mxu0 0.0
        %6823 = vmatprep.subr.mxu0 0.0
        %6824 = vmatpush1.msra.mxu0 0.0
        %6825 = vmatprep.subr.mxu0 0.0
        %6826 = vmatpush1.msra.mxu0 0.0
        %6827 = vmatprep.subr.mxu0 0.0
        %6828 = vmatpush1.msra.mxu0 0.0
        %6829 = vmatprep.mubr.f32.mxu0 0.0
        %6830 = vmatmul.mubr.f32.gmra.mrb[0].mxu0 %v6763
        %v6831 = vpop.f32.mrb[0].mxu0
        %v6832 = vadd.f32 %v6761, %v6831
        %v6833 = vpop.f32.mrb[0].mxu0
        %6834 = vdwg.mxu0
        %v6835 = vmax.f32 %v6832, 0.0
        %v6836 = vlaneseq
        %v6837 = vshrl.u32 %v6836, 7
        %v6838 = vsub.s32 0, %v6837
        %v6839 = vrot.slane %v6704, %v6838
        %v6841 = vsel %vm1194, %v6835, 0
        %6843 = vmatprep.subr.mxu0 0.0
        %6844 = vmatpush1.msra.mxu0 %v6750
        %6845 = vmatprep.subr.mxu0 0.0
        %6846 = vmatpush1.msra.mxu0 %v6751
        %6847 = vmatprep.subr.mxu0 0.0
        %6848 = vmatpush1.msra.mxu0 %v6752
        %6849 = vmatprep.subr.mxu0 0.0
        %6850 = vmatpush1.msra.mxu0 %v6753
        %6851 = vmatprep.subr.mxu0 0.0
        %6852 = vmatpush1.msra.mxu0 0.0
        %6853 = vmatprep.subr.mxu0 0.0
        %6854 = vmatpush1.msra.mxu0 0.0
        %6855 = vmatprep.subr.mxu0 0.0
        %6856 = vmatpush1.msra.mxu0 0.0
        %6857 = vmatprep.subr.mxu0 0.0
        %6858 = vmatpush1.msra.mxu0 0.0
        %6859 = vmatprep.subr.mxu0 0.0
        %6860 = vmatpush1.msra.mxu0 0.0
        %6861 = vmatprep.subr.mxu0 0.0
        %6862 = vmatpush1.msra.mxu0 0.0
        %6863 = vmatprep.subr.mxu0 0.0
        %6864 = vmatpush1.msra.mxu0 0.0
        %6865 = vmatprep.subr.mxu0 0.0
        %6866 = vmatpush1.msra.mxu0 0.0
        %6867 = vmatprep.subr.mxu0 0.0
        %6868 = vmatpush1.msra.mxu0 0.0
        %6869 = vmatprep.subr.mxu0 0.0
        %6870 = vmatpush1.msra.mxu0 0.0
        %6871 = vmatprep.subr.mxu0 0.0
        %6872 = vmatpush1.msra.mxu0 0.0
        %6873 = vmatprep.subr.mxu0 0.0
        %6874 = vmatpush1.msra.mxu0 0.0
        %6875 = vmatprep.subr.mxu0 0.0
        %6876 = vmatpush1.msra.mxu0 0.0
        %6877 = vmatprep.subr.mxu0 0.0
        %6878 = vmatpush1.msra.mxu0 0.0
        %6879 = vmatprep.subr.mxu0 0.0
        %6880 = vmatpush1.msra.mxu0 0.0
        %6881 = vmatprep.subr.mxu0 0.0
        %6882 = vmatpush1.msra.mxu0 0.0
        %6883 = vmatprep.subr.mxu0 0.0
        %6884 = vmatpush1.msra.mxu0 0.0
        %6885 = vmatprep.subr.mxu0 0.0
        %6886 = vmatpush1.msra.mxu0 0.0
        %6887 = vmatprep.subr.mxu0 0.0
        %6888 = vmatpush1.msra.mxu0 0.0
        %6889 = vmatprep.subr.mxu0 0.0
        %6890 = vmatpush1.msra.mxu0 0.0
        %6891 = vmatprep.subr.mxu0 0.0
        %6892 = vmatpush1.msra.mxu0 0.0
        %6893 = vmatprep.subr.mxu0 0.0
        %6894 = vmatpush1.msra.mxu0 0.0
        %6895 = vmatprep.subr.mxu0 0.0
        %6896 = vmatpush1.msra.mxu0 0.0
        %6897 = vmatprep.subr.mxu0 0.0
        %6898 = vmatpush1.msra.mxu0 0.0
        %6899 = vmatprep.subr.mxu0 0.0
        %6900 = vmatpush1.msra.mxu0 0.0
        %6901 = vmatprep.subr.mxu0 0.0
        %6902 = vmatpush1.msra.mxu0 0.0
        %6903 = vmatprep.subr.mxu0 0.0
        %6904 = vmatpush1.msra.mxu0 0.0
        %6905 = vmatprep.subr.mxu0 0.0
        %6906 = vmatpush1.msra.mxu0 0.0
        %6907 = vmatprep.mubr.f32.mxu0 0.0
        %6908 = vmatmul.mubr.f32.gmra.mrb[0].mxu0 %v6841
        %v6909 = vpop.f32.mrb[0].mxu0
        %v6910 = vadd.f32 %v6839, %v6909
        %v6911 = vpop.f32.mrb[0].mxu0
        %6912 = vdwg.mxu0
        %v6913 = vmax.f32 %v6910, 0.0
        %v6914 = vlaneseq
        %v6915 = vshrl.u32 %v6914, 7
        %v6916 = vsub.s32 0, %v6915
        %v6917 = vrot.slane %v6705, %v6916
        %v6919 = vsel %vm1194, %v6913, 0
        %6921 = vmatprep.subr.mxu0 0.0
        %6922 = vmatpush1.msra.mxu0 %v6754
        %6923 = vmatprep.subr.mxu0 0.0
        %6924 = vmatpush1.msra.mxu0 %v6755
        %6925 = vmatprep.subr.mxu0 0.0
        %6926 = vmatpush1.msra.mxu0 %v6756
        %6927 = vmatprep.subr.mxu0 0.0
        %6928 = vmatpush1.msra.mxu0 %v6757
        %6929 = vmatprep.subr.mxu0 0.0
        %6930 = vmatpush1.msra.mxu0 0.0
        %6931 = vmatprep.subr.mxu0 0.0
        %6932 = vmatpush1.msra.mxu0 0.0
        %6933 = vmatprep.subr.mxu0 0.0
        %6934 = vmatpush1.msra.mxu0 0.0
        %6935 = vmatprep.subr.mxu0 0.0
        %6936 = vmatpush1.msra.mxu0 0.0
        %6937 = vmatprep.subr.mxu0 0.0
        %6938 = vmatpush1.msra.mxu0 0.0
        %6939 = vmatprep.subr.mxu0 0.0
        %6940 = vmatpush1.msra.mxu0 0.0
        %6941 = vmatprep.subr.mxu0 0.0
        %6942 = vmatpush1.msra.mxu0 0.0
        %6943 = vmatprep.subr.mxu0 0.0
        %6944 = vmatpush1.msra.mxu0 0.0
        %6945 = vmatprep.subr.mxu0 0.0
        %6946 = vmatpush1.msra.mxu0 0.0
        %6947 = vmatprep.subr.mxu0 0.0
        %6948 = vmatpush1.msra.mxu0 0.0
        %6949 = vmatprep.subr.mxu0 0.0
        %6950 = vmatpush1.msra.mxu0 0.0
        %6951 = vmatprep.subr.mxu0 0.0
        %6952 = vmatpush1.msra.mxu0 0.0
        %6953 = vmatprep.subr.mxu0 0.0
        %6954 = vmatpush1.msra.mxu0 0.0
        %6955 = vmatprep.subr.mxu0 0.0
        %6956 = vmatpush1.msra.mxu0 0.0
        %6957 = vmatprep.subr.mxu0 0.0
        %6958 = vmatpush1.msra.mxu0 0.0
        %6959 = vmatprep.subr.mxu0 0.0
        %6960 = vmatpush1.msra.mxu0 0.0
        %6961 = vmatprep.subr.mxu0 0.0
        %6962 = vmatpush1.msra.mxu0 0.0
        %6963 = vmatprep.subr.mxu0 0.0
        %6964 = vmatpush1.msra.mxu0 0.0
        %6965 = vmatprep.subr.mxu0 0.0
        %6966 = vmatpush1.msra.mxu0 0.0
        %6967 = vmatprep.subr.mxu0 0.0
        %6968 = vmatpush1.msra.mxu0 0.0
        %6969 = vmatprep.subr.mxu0 0.0
        %6970 = vmatpush1.msra.mxu0 0.0
        %6971 = vmatprep.subr.mxu0 0.0
        %6972 = vmatpush1.msra.mxu0 0.0
        %6973 = vmatprep.subr.mxu0 0.0
        %6974 = vmatpush1.msra.mxu0 0.0
        %6975 = vmatprep.subr.mxu0 0.0
        %6976 = vmatpush1.msra.mxu0 0.0
        %6977 = vmatprep.subr.mxu0 0.0
        %6978 = vmatpush1.msra.mxu0 0.0
        %6979 = vmatprep.subr.mxu0 0.0
        %6980 = vmatpush1.msra.mxu0 0.0
        %6981 = vmatprep.subr.mxu0 0.0
        %6982 = vmatpush1.msra.mxu0 0.0
        %6983 = vmatprep.subr.mxu0 0.0
        %6984 = vmatpush1.msra.mxu0 0.0
        %6985 = vmatprep.mubr.f32.mxu0 0.0
        %6986 = vmatmul.mubr.f32.gmra.mrb[0].mxu0 %v6919
        %v6987 = vpop.f32.mrb[0].mxu0
        %v6988 = vadd.f32 %v6917, %v6987
        %v6989 = vpop.f32.mrb[0].mxu0
        %6990 = vdwg.mxu0
        %v6991 = vadd.f32 %v6745, %v6988
        %v6992 = vsel %vm1194, %v6991, 0.0
        %6993 = vadd.xlane.f32.xlu0 %v6992
        %v6994 = vpop.xlane.xlu0 %6993
        %v6995 = vmul.f32 %v6994, %v6725
        %v6996 = vsub.f32 %v6991, %v6995
        %v6997 = vmul.f32 %v6996, %v6996
        %v6998 = vsel %vm1194, %v6997, 0.0
        %6999 = vadd.xlane.f32.xlu0 %v6998
        %v7000 = vpop.xlane.xlu0 %6999
        %v7001 = vmul.f32 %v7000, %v6725
        %v7002 = vadd.f32 %v7001, 1e-05
        %v7003 = vrsqrt.pop %v7002
        %v7004 = vmul.f32 %v6996, %v7003
        %v7005 = vlaneseq
        %v7006 = vshrl.u32 %v7005, 7
        %v7007 = vsub.s32 0, %v7006
        %v7008 = vrot.slane %v6706, %v7007
        %v7009 = vmul.f32 %v7004, %v7008
        %v7010 = vlaneseq
        %v7011 = vshrl.u32 %v7010, 7
        %v7012 = vsub.s32 0, %v7011
        %v7013 = vrot.slane %v6707, %v7012
        %v7014 = vadd.f32 %v7009, %v7013
        %v7015 = vld [vmem:[%s13] sm:$0xff]
        %v7016 = vld [vmem:[%s13 + $0x8] sm:$0xff]
        %v7017 = vld [vmem:[%s13 + $0x10] sm:$0xff]
        %v7018 = vld [vmem:[%s13 + $0x18] sm:$0xff]
        %v7019 = vlaneseq
        %v7020 = vshrl.u32 %v7019, 7
        %v7021 = vsub.s32 0, %v7020
        %v7022 = vrot.slane %v6708, %v7021
        %v7024 = vsel %vm1194, %v7014, 0
        %7026 = vmatprep.subr.mxu0 0.0
        %7027 = vmatpush1.msra.mxu0 %v7015
        %7028 = vmatprep.subr.mxu0 0.0
        %7029 = vmatpush1.msra.mxu0 %v7016
        %7030 = vmatprep.subr.mxu0 0.0
        %7031 = vmatpush1.msra.mxu0 %v7017
        %7032 = vmatprep.subr.mxu0 0.0
        %7033 = vmatpush1.msra.mxu0 %v7018
        %7034 = vmatprep.subr.mxu0 0.0
        %7035 = vmatpush1.msra.mxu0 0.0
        %7036 = vmatprep.subr.mxu0 0.0
        %7037 = vmatpush1.msra.mxu0 0.0
        %7038 = vmatprep.subr.mxu0 0.0
        %7039 = vmatpush1.msra.mxu0 0.0
        %7040 = vmatprep.subr.mxu0 0.0
        %7041 = vmatpush1.msra.mxu0 0.0
        %7042 = vmatprep.subr.mxu0 0.0
        %7043 = vmatpush1.msra.mxu0 0.0
        %7044 = vmatprep.subr.mxu0 0.0
        %7045 = vmatpush1.msra.mxu0 0.0
        %7046 = vmatprep.subr.mxu0 0.0
        %7047 = vmatpush1.msra.mxu0 0.0
        %7048 = vmatprep.subr.mxu0 0.0
        %7049 = vmatpush1.msra.mxu0 0.0
        %7050 = vmatprep.subr.mxu0 0.0
        %7051 = vmatpush1.msra.mxu0 0.0
        %7052 = vmatprep.subr.mxu0 0.0
        %7053 = vmatpush1.msra.mxu0 0.0
        %7054 = vmatprep.subr.mxu0 0.0
        %7055 = vmatpush1.msra.mxu0 0.0
        %7056 = vmatprep.subr.mxu0 0.0
        %7057 = vmatpush1.msra.mxu0 0.0
        %7058 = vmatprep.subr.mxu0 0.0
        %7059 = vmatpush1.msra.mxu0 0.0
        %7060 = vmatprep.subr.mxu0 0.0
        %7061 = vmatpush1.msra.mxu0 0.0
        %7062 = vmatprep.subr.mxu0 0.0
        %7063 = vmatpush1.msra.mxu0 0.0
        %7064 = vmatprep.subr.mxu0 0.0
        %7065 = vmatpush1.msra.mxu0 0.0
        %7066 = vmatprep.subr.mxu0 0.0
        %7067 = vmatpush1.msra.mxu0 0.0
        %7068 = vmatprep.subr.mxu0 0.0
        %7069 = vmatpush1.msra.mxu0 0.0
        %7070 = vmatprep.subr.mxu0 0.0
        %7071 = vmatpush1.msra.mxu0 0.0
        %7072 = vmatprep.subr.mxu0 0.0
        %7073 = vmatpush1.msra.mxu0 0.0
        %7074 = vmatprep.subr.mxu0 0.0
        %7075 = vmatpush1.msra.mxu0 0.0
        %7076 = vmatprep.subr.mxu0 0.0
        %7077 = vmatpush1.msra.mxu0 0.0
        %7078 = vmatprep.subr.mxu0 0.0
        %7079 = vmatpush1.msra.mxu0 0.0
        %7080 = vmatprep.subr.mxu0 0.0
        %7081 = vmatpush1.msra.mxu0 0.0
        %7082 = vmatprep.subr.mxu0 0.0
        %7083 = vmatpush1.msra.mxu0 0.0
        %7084 = vmatprep.subr.mxu0 0.0
        %7085 = vmatpush1.msra.mxu0 0.0
        %7086 = vmatprep.subr.mxu0 0.0
        %7087 = vmatpush1.msra.mxu0 0.0
        %7088 = vmatprep.subr.mxu0 0.0
        %7089 = vmatpush1.msra.mxu0 0.0
        %7090 = vmatprep.mubr.f32.mxu0 0.0
        %7091 = vmatmul.mubr.f32.gmra.mrb[0].mxu0 %v7024
        %v7092 = vpop.f32.mrb[0].mxu0
        %v7093 = vadd.f32 %v7022, %v7092
        %v7094 = vpop.f32.mrb[0].mxu0
        %7095 = vdwg.mxu0
        %7097 = vrot.lane.b32.xlu0 %v7093, 32
        %v7098 = vpop.permute.xlu0 %7097
        %v7100 = vsel %vm1194, %v7014, %v7098
        %vm7101 = vcmask 523264
        %7102 = vst.msk [vmem:[%s646] sm:$0xff] %vm7101, %v7100
        %s7103 = sand.u32 %s402, 1
        %s7104 = scalar_lea.sflag [#allocation3], %s7103
        %s7105 = sand.u32 %s402, 1
        %s7106 = smul.addr %s7105, 8
        %s7107 = scalar_lea.vmem [#allocation5], %s7106
        // Predicated region
        $region81: #{tpu_custom_call.1} parent=75 // pred_check
          %p7108 = pneg %p412
        $region82: #{tpu_custom_call.1} parent=75 // pred_check_branch
          %7110 = sbr.rel (%p7108) target = $region84
        $region83: #{tpu_custom_call.1} parent=75 // pred_region
          %s7112 = ssub.s32 128, 128
          %7113 = vsyncadd %s7104, %s7112
          %s7114 = sadd.s32 %s34, %s33
          %s7115 = smul.addr %s7114, 128
          %s7116 = scalar_lea.hbm %s14, %s7115
          %s7118 = sshll.u32 %s7107, 4
          %s7119 = int_to_ptr.vmem [resolvable:$true] %s7118
          %7121 = dma.vmem_to_hbm [thread:$0]  %s7119, 128, %s7116, %s7104
        $region84: #{tpu_custom_call.1} parent=75 // pred_fallthru
          _
      $region76: #{tpu_custom_call.1} parent=5 // pred_fallthru
        _
      %p7122 = scmp.le.s32.totalorder 2, %s24
      // Predicated region
      $region85: #{tpu_custom_call.1} parent=5 // pred_check
        %p7123 = pneg %p7122
      $region86: #{tpu_custom_call.1} parent=5 // pred_check_branch
        %7125 = sbr.rel (%p7123) target = $region88
      $region87: #{tpu_custom_call.1} parent=5 // pred_region
        %s7126 = ssub.s32 %s24, 2
        // Predicated region
        $region89: #{tpu_custom_call.1} parent=87 // pred_check
          %p7127 = pneg %p418
        $region90: #{tpu_custom_call.1} parent=87 // pred_check_branch
          %7129 = sbr.rel (%p7127) target = $region92
        $region91: #{tpu_custom_call.1} parent=87 // pred_region
          %s7130 = sand.u32 %s403, 1
          %s7131 = scalar_lea.sflag [#allocation3], %s7130
          %s7132 = sand.u32 %s403, 1
          %s7133 = smul.addr %s7132, 8
          %s7134 = scalar_lea.vmem [#allocation5], %s7133
          %7135 = dma.done %s7131, 128
        $region92: #{tpu_custom_call.1} parent=87 // pred_fallthru
          _
      $region88: #{tpu_custom_call.1} parent=5 // pred_fallthru
        _
    $region6: #{tpu_custom_call.1} parent=1 // loop_footer
      %s28 = sadd.s32 1, %s24
    $region7: #{tpu_custom_call.1} parent=1 // loop_footer_branch
      %23 = sbr.rel target = $region3
    $region8: #{tpu_custom_call.1} parent=1 // loop_exit
      _
    %7136 = vsyncpa [#allocation3], 1
    %s7137 = scalar_lea.sflag [#allocation3], 1
    %7138 = vsyncpa %s7137, 1
    %7139 = vsyncpa [#allocation4], 1
    %s7140 = scalar_lea.sflag [#allocation4], 1
    %7141 = vsyncpa %s7140, 1

</llo_original>
